<compile_context>
chip_gen: v7x
topology: tpu7x:2x2x1
jax: 0.10.0
libtpu: 0.0.40
codegen_flags: <defaults>
</compile_context>

<pallas_src>
import functools

import jax
import jax.numpy as jnp
from jax.experimental import pallas as pl
from jax.experimental.pallas import tpu as pltpu


def _round_up(x, m):
    return ((x + m - 1) // m) * m


def _deconv_phase_kernel(x_ref, w_ref, b_ref, o_ref, *, Kc, tile_q, Qw_pad,
                         apply_relu):
    """One row-tile of the phase-decomposed transposed convolution.

    x_ref : (1, tile_q + Kc - 1, Cin, WpP)  input rows, W in lanes
    w_ref : (Kc*Kc, P, Cin)                 per-tap phase-packed weights
    b_ref : (P, 1)                          phase-packed bias
    o_ref : (1, tile_q, P, Qw_pad)          lane-dense output slab
    """
    n_taps = Kc * Kc
    # Tiny weight / bias blocks stay resident across the row loop.
    w_taps = [w_ref[t] for t in range(n_taps)]            # (P, Cin) each
    bias = b_ref[...].astype(jnp.float32)                 # (P, 1)

    # Unrolled row loop (tile_q is capped small); all indices are static.
    for a in range(tile_q):
        acc = None
        for dh in range(Kc):
            for dw in range(Kc):
                # Fused im2col: tap expansion is a VMEM load, not HBM traffic.
                xs = x_ref[0, a + dh, :, dw:dw + Qw_pad]   # (Cin, Qw_pad)
                part = jnp.dot(w_taps[dh * Kc + dw], xs,
                               preferred_element_type=jnp.float32)
                acc = part if acc is None else acc + part
        acc = acc + bias                                   # broadcast over lanes
        if apply_relu:
            acc = jnp.maximum(acc, 0.0)
        o_ref[0, a] = acc.astype(o_ref.dtype)              # (P, Qw_pad) wide store


def deconv_forward(x_nchw, weight, bias, *, stride=2, padding=0,
                   output_padding=0, act=False, compute_dtype=jnp.float32,
                   max_tile_q=32, vmem_budget_bytes=4 * 1024 * 1024):
    """ConvTranspose2d(+ReLU) forward, PyTorch semantics, NCHW in / NCHW out.

    x_nchw : (N, Cin, H, W)
    weight : (Cin, Cout, K, K)   -- PyTorch ConvTranspose2d weight layout
    bias   : (Cout,)
    """
    N, Cin, H, W = x_nchw.shape
    Cin_w, Cout, K, K2 = weight.shape
    assert Cin_w == Cin and K == K2
    s = int(stride)
    assert padding <= K - 1, "padding > K-1 not supported by this lowering"

    H_out = (H - 1) * s - 2 * padding + K + output_padding
    W_out = (W - 1) * s - 2 * padding + K + output_padding

    Kc = -(-K // s)                               # taps per phase = ceil(K / s)
    q_min = padding // s
    Qh = (H_out - 1 + padding) // s - q_min + 1   # base-grid rows
    Qw = (W_out - 1 + padding) // s - q_min + 1   # base-grid cols
    P = s * s * Cout                              # phase-packed output channels

    bpe = jnp.dtype(compute_dtype).itemsize

    # Lane-dense output: last dim of the out block is a multiple of 128.
    Qw_pad = _round_up(max(Qw, 1), 128)
    WpP = Qw_pad + Kc - 1

    # Row tile chosen under an explicit VMEM budget (generation-aware; v7x = 64 MiB).
    per_row_bytes = Cin * WpP * bpe + 2 * P * Qw_pad * 4
    tile_q = int(max(1, min(Qh, max_tile_q,
                            vmem_budget_bytes // max(per_row_bytes, 1))))
    Qh_pad = _round_up(Qh, tile_q)
    num_q_tiles = Qh_pad // tile_q
    Hq_t = tile_q + Kc - 1
    NT = N * num_q_tiles

    # ---- wrapper glue: layout only (no K*K im2col, no zero-dilation) --------
    # (N, Cin, H, W) -> (N, H, Cin, W): W stays minor (lanes), Cin on sublanes.
    x = jnp.transpose(x_nchw.astype(compute_dtype), (0, 2, 1, 3))
    tp = Kc - 1 - q_min
    pad_bot = Qh_pad + Kc - 1 - tp - H
    pad_right = WpP - tp - W
    x_pad = jnp.pad(x, ((0, 0), (tp, pad_bot), (0, 0), (tp, pad_right)))

    if num_q_tiles == 1:
        x_tiles = x_pad
    else:
        # Overlapping row tiles (halo = Kc-1 rows, ~(1 + (Kc-1)/tile_q)x of x).
        x_tiles = jnp.stack(
            [x_pad[:, t * tile_q: t * tile_q + Hq_t, :, :]
             for t in range(num_q_tiles)], axis=1)
    x_tiles = x_tiles.reshape(NT, Hq_t, Cin, WpP)

    # Phase-packed weights: tap (dh, dw) maps to ConvTranspose tap
    # (kh, kw) = (rh + (Kc-1-dh)*s, rw + (Kc-1-dw)*s); out-of-range taps are 0.
    wf = weight.astype(jnp.float32)
    w6 = jnp.zeros((s, s, Cout, Kc, Kc, Cin), jnp.float32)
    for rh in range(s):
        for rw in range(s):
            for dh in range(Kc):
                for dw in range(Kc):
                    kh = rh + (Kc - 1 - dh) * s
                    kw = rw + (Kc - 1 - dw) * s
                    if kh < K and kw < K:
                        w6 = w6.at[rh, rw, :, dh, dw, :].set(wf[:, :, kh, kw].T)
    # (taps, P, Cin): tap index = dh*Kc + dw ; P index = (rh*s + rw)*Cout + co
    w_t = jnp.transpose(w6, (3, 4, 0, 1, 2, 5)).reshape(Kc * Kc, P, Cin)
    w_t = w_t.astype(compute_dtype)
    b_t = jnp.tile(bias.astype(jnp.float32), (s * s,)).reshape(P, 1)

    kernel = functools.partial(_deconv_phase_kernel, Kc=Kc, tile_q=tile_q,
                               Qw_pad=Qw_pad, apply_relu=act)

    in_block_bytes = Hq_t * Cin * WpP * bpe
    out_block_bytes = tile_q * P * Qw_pad * 4
    vmem_limit = int(min(48 * 1024 * 1024,
                         max(16 * 1024 * 1024,
                             4 * (in_block_bytes + out_block_bytes))))

    flops = 2 * NT * tile_q * (Kc * Kc) * P * Cin * Qw_pad
    bytes_accessed = (NT * Hq_t * Cin * WpP * bpe
                      + Kc * Kc * P * Cin * bpe + P * 4
                      + NT * tile_q * P * Qw_pad * 4)

    out_raw = pl.pallas_call(
        kernel,
        out_shape=jax.ShapeDtypeStruct((NT, tile_q, P, Qw_pad), jnp.float32),
        grid=(NT,),
        in_specs=[
            pl.BlockSpec((1, Hq_t, Cin, WpP), lambda i: (i, 0, 0, 0)),
            pl.BlockSpec((Kc * Kc, P, Cin), lambda i: (0, 0, 0)),
            pl.BlockSpec((P, 1), lambda i: (0, 0)),
        ],
        out_specs=pl.BlockSpec((1, tile_q, P, Qw_pad), lambda i: (i, 0, 0, 0)),
        compiler_params=pltpu.CompilerParams(
            dimension_semantics=("parallel",),
            vmem_limit_bytes=vmem_limit),
        cost_estimate=pl.CostEstimate(flops=flops, transcendentals=0,
                                      bytes_accessed=bytes_accessed),
    )(x_tiles, w_t, b_t)

    # ---- phase interleave back to NCHW (wrapper glue) ------------------------
    out7 = out_raw.reshape(N, num_q_tiles, tile_q, s, s, Cout, Qw_pad)
    out7 = jnp.transpose(out7, (0, 5, 1, 2, 3, 6, 4))
    grid_full = out7.reshape(N, Cout, Qh_pad * s, Qw_pad * s)
    off = padding % s
    return grid_full[:, :, off:off + H_out, off:off + W_out]


def _reference(x_nchw, weight, bias, *, stride, padding, output_padding, act):
    """Pure-XLA reference for ConvTranspose2d (lhs-dilated conv, flipped kernel)."""
    K = weight.shape[2]
    pad_lo = K - 1 - padding
    pad_hi = K - 1 - padding + output_padding
    x = jnp.transpose(x_nchw, (0, 2, 3, 1)).astype(jnp.float32)
    ref = jax.lax.conv_general_dilated(
        x, weight[:, :, ::-1, ::-1].astype(jnp.float32),
        window_strides=(1, 1),
        padding=[(pad_lo, pad_hi), (pad_lo, pad_hi)],
        lhs_dilation=(stride, stride),
        dimension_numbers=("NHWC", "IOHW", "NHWC"))
    ref = ref + bias.astype(jnp.float32)[None, None, None, :]
    if act:
        ref = jnp.maximum(ref, 0.0)
    return jnp.transpose(ref, (0, 3, 1, 2))


if __name__ == "__main__":
    # Module config: Deconv(input_channels=4, n_feats=8, kernel_size=3,
    #                       stride=2, padding=0, output_padding=0, bias=True, act=False)
    N, Cin, H, W = 2, 4, 16, 16
    Cout, K = 8, 3
    stride, padding, output_padding, act = 2, 0, 0, False

    key = jax.random.PRNGKey(0)
    kx, kw, kb = jax.random.split(key, 3)
    fan_in = Cin * K * K
    bound = 1.0 / (fan_in ** 0.5)
    weight = jax.random.uniform(kw, (Cin, Cout, K, K), minval=-bound,
                                maxval=bound, dtype=jnp.float32)
    bias = jax.random.uniform(kb, (Cout,), minval=-bound, maxval=bound,
                              dtype=jnp.float32)
    x = jax.random.normal(kx, (N, Cin, H, W), dtype=jnp.float32)

    fwd = jax.jit(functools.partial(deconv_forward, stride=stride,
                                    padding=padding,
                                    output_padding=output_padding, act=act))
    out = jax.block_until_ready(fwd(x, weight, bias))

    ref = jax.block_until_ready(
        _reference(x, weight, bias, stride=stride, padding=padding,
                   output_padding=output_padding, act=act))

    H_out = (H - 1) * stride - 2 * padding + K + output_padding
    W_out = (W - 1) * stride - 2 * padding + K + output_padding
    assert out.shape == (N, Cout, H_out, W_out), out.shape
    err = float(jnp.max(jnp.abs(out - ref)))
    assert jnp.allclose(out, ref, atol=1e-4, rtol=1e-4), err

    print("KERNEL_OK")
</pallas_src>

<mosaic_0001>
module attributes {stable_mosaic.version = 11 : i64} {
  func.func @_deconv_phase_kernel(%arg0: i32, %arg1: memref<1x18x4x129xf32, #tpu.memory_space<vmem>>, %arg2: memref<4x32x4xf32, #tpu.memory_space<vmem>>, %arg3: memref<32x1xf32, #tpu.memory_space<vmem>>, %arg4: memref<1x17x32x128xf32, #tpu.memory_space<vmem>>) attributes {dimension_semantics = [#tpu.dimension_semantics<parallel>], iteration_bounds = array<i64: 2>, scalar_prefetch = 0 : i64, scratch_operands = 0 : i64, tpu.core_type = #tpu.core_type<tc>, window_params = [{transform_indices = @transform_0, window_bounds = array<i64: 1, 18, 4, 129>}, {pipeline_mode = #tpu.pipeline_mode<synchronous>, transform_indices = @transform_1, window_bounds = array<i64: 4, 32, 4>}, {pipeline_mode = #tpu.pipeline_mode<synchronous>, transform_indices = @transform_2, window_bounds = array<i64: 32, 1>}, {transform_indices = @transform_3, window_bounds = array<i64: 1, 17, 32, 128>}]} {
    %c0 = arith.constant 0 : index
    %c0_0 = arith.constant 0 : index
    %c0_1 = arith.constant 0 : index
    %0 = vector.load %arg2[%c0, %c0_0, %c0_1] : memref<4x32x4xf32, #tpu.memory_space<vmem>>, vector<1x32x4xf32>
    %1 = vector.shape_cast %0 : vector<1x32x4xf32> to vector<32x4xf32>
    %c1 = arith.constant 1 : index
    %c0_2 = arith.constant 0 : index
    %c0_3 = arith.constant 0 : index
    %2 = vector.load %arg2[%c1, %c0_2, %c0_3] : memref<4x32x4xf32, #tpu.memory_space<vmem>>, vector<1x32x4xf32>
    %3 = vector.shape_cast %2 : vector<1x32x4xf32> to vector<32x4xf32>
    %c2 = arith.constant 2 : index
    %c0_4 = arith.constant 0 : index
    %c0_5 = arith.constant 0 : index
    %4 = vector.load %arg2[%c2, %c0_4, %c0_5] : memref<4x32x4xf32, #tpu.memory_space<vmem>>, vector<1x32x4xf32>
    %5 = vector.shape_cast %4 : vector<1x32x4xf32> to vector<32x4xf32>
    %c3 = arith.constant 3 : index
    %c0_6 = arith.constant 0 : index
    %c0_7 = arith.constant 0 : index
    %6 = vector.load %arg2[%c3, %c0_6, %c0_7] : memref<4x32x4xf32, #tpu.memory_space<vmem>>, vector<1x32x4xf32>
    %7 = vector.shape_cast %6 : vector<1x32x4xf32> to vector<32x4xf32>
    %c0_8 = arith.constant 0 : index
    %c0_9 = arith.constant 0 : index
    %8 = vector.load %arg3[%c0_8, %c0_9] : memref<32x1xf32, #tpu.memory_space<vmem>>, vector<32x1xf32>
    %c0_10 = arith.constant 0 : index
    %c0_11 = arith.constant 0 : index
    %c0_12 = arith.constant 0 : index
    %c0_13 = arith.constant 0 : index
    %9 = vector.load %arg1[%c0_10, %c0_11, %c0_12, %c0_13] : memref<1x18x4x129xf32, #tpu.memory_space<vmem>>, vector<1x1x4x128xf32>
    %10 = vector.shape_cast %9 : vector<1x1x4x128xf32> to vector<4x128xf32>
    %cst = arith.constant dense<0.000000e+00> : vector<32x128xf32>
    %11 = tpu.matmul %1, %10, %cst {dimension_numbers = #tpu.dot_dimension_numbers<[1], [0], [0], [1], [0, 0, 1, 1], [], []>} : vector<32x4xf32>, vector<4x128xf32>, vector<32x128xf32> -> vector<32x128xf32>
    %c0_14 = arith.constant 0 : index
    %c0_15 = arith.constant 0 : index
    %c0_16 = arith.constant 0 : index
    %c1_17 = arith.constant 1 : index
    %12 = vector.load %arg1[%c0_14, %c0_15, %c0_16, %c1_17] : memref<1x18x4x129xf32, #tpu.memory_space<vmem>>, vector<1x1x4x128xf32>
    %13 = vector.shape_cast %12 : vector<1x1x4x128xf32> to vector<4x128xf32>
    %cst_18 = arith.constant dense<0.000000e+00> : vector<32x128xf32>
    %14 = tpu.matmul %3, %13, %cst_18 {dimension_numbers = #tpu.dot_dimension_numbers<[1], [0], [0], [1], [0, 0, 1, 1], [], []>} : vector<32x4xf32>, vector<4x128xf32>, vector<32x128xf32> -> vector<32x128xf32>
    %15 = arith.addf %11, %14 : vector<32x128xf32>
    %c0_19 = arith.constant 0 : index
    %c1_20 = arith.constant 1 : index
    %c0_21 = arith.constant 0 : index
    %c0_22 = arith.constant 0 : index
    %16 = vector.load %arg1[%c0_19, %c1_20, %c0_21, %c0_22] : memref<1x18x4x129xf32, #tpu.memory_space<vmem>>, vector<1x1x4x128xf32>
    %17 = vector.shape_cast %16 : vector<1x1x4x128xf32> to vector<4x128xf32>
    %cst_23 = arith.constant dense<0.000000e+00> : vector<32x128xf32>
    %18 = tpu.matmul %5, %17, %cst_23 {dimension_numbers = #tpu.dot_dimension_numbers<[1], [0], [0], [1], [0, 0, 1, 1], [], []>} : vector<32x4xf32>, vector<4x128xf32>, vector<32x128xf32> -> vector<32x128xf32>
    %19 = arith.addf %15, %18 : vector<32x128xf32>
    %c0_24 = arith.constant 0 : index
    %c1_25 = arith.constant 1 : index
    %c0_26 = arith.constant 0 : index
    %c1_27 = arith.constant 1 : index
    %20 = vector.load %arg1[%c0_24, %c1_25, %c0_26, %c1_27] : memref<1x18x4x129xf32, #tpu.memory_space<vmem>>, vector<1x1x4x128xf32>
    %21 = vector.shape_cast %20 : vector<1x1x4x128xf32> to vector<4x128xf32>
    %cst_28 = arith.constant dense<0.000000e+00> : vector<32x128xf32>
    %22 = tpu.matmul %7, %21, %cst_28 {dimension_numbers = #tpu.dot_dimension_numbers<[1], [0], [0], [1], [0, 0, 1, 1], [], []>} : vector<32x4xf32>, vector<4x128xf32>, vector<32x128xf32> -> vector<32x128xf32>
    %23 = arith.addf %19, %22 : vector<32x128xf32>
    %24 = vector.broadcast %8 : vector<32x1xf32> to vector<32x128xf32>
    %25 = arith.addf %23, %24 : vector<32x128xf32>
    %c0_29 = arith.constant 0 : index
    %c0_30 = arith.constant 0 : index
    %c0_31 = arith.constant 0 : index
    %c0_32 = arith.constant 0 : index
    %26 = vector.load %arg4[%c0_29, %c0_30, %c0_31, %c0_32] : memref<1x17x32x128xf32, #tpu.memory_space<vmem>>, vector<1x1x32x128xf32>
    %27 = vector.shape_cast %26 : vector<1x1x32x128xf32> to vector<32x128xf32>
    %28 = vector.shape_cast %25 : vector<32x128xf32> to vector<1x1x32x128xf32>
    tpu.vector_store %arg4[%c0_29, %c0_30, %c0_31, %c0_32], %28 {strides = array<i32>} : memref<1x17x32x128xf32, #tpu.memory_space<vmem>>, vector<1x1x32x128xf32>,
    %c0_33 = arith.constant 0 : index
    %c1_34 = arith.constant 1 : index
    %c0_35 = arith.constant 0 : index
    %c0_36 = arith.constant 0 : index
    %29 = vector.load %arg1[%c0_33, %c1_34, %c0_35, %c0_36] : memref<1x18x4x129xf32, #tpu.memory_space<vmem>>, vector<1x1x4x128xf32>
    %30 = vector.shape_cast %29 : vector<1x1x4x128xf32> to vector<4x128xf32>
    %cst_37 = arith.constant dense<0.000000e+00> : vector<32x128xf32>
    %31 = tpu.matmul %1, %30, %cst_37 {dimension_numbers = #tpu.dot_dimension_numbers<[1], [0], [0], [1], [0, 0, 1, 1], [], []>} : vector<32x4xf32>, vector<4x128xf32>, vector<32x128xf32> -> vector<32x128xf32>
    %c0_38 = arith.constant 0 : index
    %c1_39 = arith.constant 1 : index
    %c0_40 = arith.constant 0 : index
    %c1_41 = arith.constant 1 : index
    %32 = vector.load %arg1[%c0_38, %c1_39, %c0_40, %c1_41] : memref<1x18x4x129xf32, #tpu.memory_space<vmem>>, vector<1x1x4x128xf32>
    %33 = vector.shape_cast %32 : vector<1x1x4x128xf32> to vector<4x128xf32>
    %cst_42 = arith.constant dense<0.000000e+00> : vector<32x128xf32>
    %34 = tpu.matmul %3, %33, %cst_42 {dimension_numbers = #tpu.dot_dimension_numbers<[1], [0], [0], [1], [0, 0, 1, 1], [], []>} : vector<32x4xf32>, vector<4x128xf32>, vector<32x128xf32> -> vector<32x128xf32>
    %35 = arith.addf %31, %34 : vector<32x128xf32>
    %c0_43 = arith.constant 0 : index
    %c2_44 = arith.constant 2 : index
    %c0_45 = arith.constant 0 : index
    %c0_46 = arith.constant 0 : index
    %36 = vector.load %arg1[%c0_43, %c2_44, %c0_45, %c0_46] : memref<1x18x4x129xf32, #tpu.memory_space<vmem>>, vector<1x1x4x128xf32>
    %37 = vector.shape_cast %36 : vector<1x1x4x128xf32> to vector<4x128xf32>
    %cst_47 = arith.constant dense<0.000000e+00> : vector<32x128xf32>
    %38 = tpu.matmul %5, %37, %cst_47 {dimension_numbers = #tpu.dot_dimension_numbers<[1], [0], [0], [1], [0, 0, 1, 1], [], []>} : vector<32x4xf32>, vector<4x128xf32>, vector<32x128xf32> -> vector<32x128xf32>
    %39 = arith.addf %35, %38 : vector<32x128xf32>
    %c0_48 = arith.constant 0 : index
    %c2_49 = arith.constant 2 : index
    %c0_50 = arith.constant 0 : index
    %c1_51 = arith.constant 1 : index
    %40 = vector.load %arg1[%c0_48, %c2_49, %c0_50, %c1_51] : memref<1x18x4x129xf32, #tpu.memory_space<vmem>>, vector<1x1x4x128xf32>
    %41 = vector.shape_cast %40 : vector<1x1x4x128xf32> to vector<4x128xf32>
    %cst_52 = arith.constant dense<0.000000e+00> : vector<32x128xf32>
    %42 = tpu.matmul %7, %41, %cst_52 {dimension_numbers = #tpu.dot_dimension_numbers<[1], [0], [0], [1], [0, 0, 1, 1], [], []>} : vector<32x4xf32>, vector<4x128xf32>, vector<32x128xf32> -> vector<32x128xf32>
    %43 = arith.addf %39, %42 : vector<32x128xf32>
    %44 = vector.broadcast %8 : vector<32x1xf32> to vector<32x128xf32>
    %45 = arith.addf %43, %44 : vector<32x128xf32>
    %c0_53 = arith.constant 0 : index
    %c1_54 = arith.constant 1 : index
    %c0_55 = arith.constant 0 : index
    %c0_56 = arith.constant 0 : index
    %46 = vector.load %arg4[%c0_53, %c1_54, %c0_55, %c0_56] : memref<1x17x32x128xf32, #tpu.memory_space<vmem>>, vector<1x1x32x128xf32>
    %47 = vector.shape_cast %46 : vector<1x1x32x128xf32> to vector<32x128xf32>
    %48 = vector.shape_cast %45 : vector<32x128xf32> to vector<1x1x32x128xf32>
    tpu.vector_store %arg4[%c0_53, %c1_54, %c0_55, %c0_56], %48 {strides = array<i32>} : memref<1x17x32x128xf32, #tpu.memory_space<vmem>>, vector<1x1x32x128xf32>,
    %c0_57 = arith.constant 0 : index
    %c2_58 = arith.constant 2 : index
    %c0_59 = arith.constant 0 : index
    %c0_60 = arith.constant 0 : index
    %49 = vector.load %arg1[%c0_57, %c2_58, %c0_59, %c0_60] : memref<1x18x4x129xf32, #tpu.memory_space<vmem>>, vector<1x1x4x128xf32>
    %50 = vector.shape_cast %49 : vector<1x1x4x128xf32> to vector<4x128xf32>
    %cst_61 = arith.constant dense<0.000000e+00> : vector<32x128xf32>
    %51 = tpu.matmul %1, %50, %cst_61 {dimension_numbers = #tpu.dot_dimension_numbers<[1], [0], [0], [1], [0, 0, 1, 1], [], []>} : vector<32x4xf32>, vector<4x128xf32>, vector<32x128xf32> -> vector<32x128xf32>
    %c0_62 = arith.constant 0 : index
    %c2_63 = arith.constant 2 : index
    %c0_64 = arith.constant 0 : index
    %c1_65 = arith.constant 1 : index
    %52 = vector.load %arg1[%c0_62, %c2_63, %c0_64, %c1_65] : memref<1x18x4x129xf32, #tpu.memory_space<vmem>>, vector<1x1x4x128xf32>
    %53 = vector.shape_cast %52 : vector<1x1x4x128xf32> to vector<4x128xf32>
    %cst_66 = arith.constant dense<0.000000e+00> : vector<32x128xf32>
    %54 = tpu.matmul %3, %53, %cst_66 {dimension_numbers = #tpu.dot_dimension_numbers<[1], [0], [0], [1], [0, 0, 1, 1], [], []>} : vector<32x4xf32>, vector<4x128xf32>, vector<32x128xf32> -> vector<32x128xf32>
    %55 = arith.addf %51, %54 : vector<32x128xf32>
    %c0_67 = arith.constant 0 : index
    %c3_68 = arith.constant 3 : index
    %c0_69 = arith.constant 0 : index
    %c0_70 = arith.constant 0 : index
    %56 = vector.load %arg1[%c0_67, %c3_68, %c0_69, %c0_70] : memref<1x18x4x129xf32, #tpu.memory_space<vmem>>, vector<1x1x4x128xf32>
    %57 = vector.shape_cast %56 : vector<1x1x4x128xf32> to vector<4x128xf32>
    %cst_71 = arith.constant dense<0.000000e+00> : vector<32x128xf32>
    %58 = tpu.matmul %5, %57, %cst_71 {dimension_numbers = #tpu.dot_dimension_numbers<[1], [0], [0], [1], [0, 0, 1, 1], [], []>} : vector<32x4xf32>, vector<4x128xf32>, vector<32x128xf32> -> vector<32x128xf32>
    %59 = arith.addf %55, %58 : vector<32x128xf32>
    %c0_72 = arith.constant 0 : index
    %c3_73 = arith.constant 3 : index
    %c0_74 = arith.constant 0 : index
    %c1_75 = arith.constant 1 : index
    %60 = vector.load %arg1[%c0_72, %c3_73, %c0_74, %c1_75] : memref<1x18x4x129xf32, #tpu.memory_space<vmem>>, vector<1x1x4x128xf32>
    %61 = vector.shape_cast %60 : vector<1x1x4x128xf32> to vector<4x128xf32>
    %cst_76 = arith.constant dense<0.000000e+00> : vector<32x128xf32>
    %62 = tpu.matmul %7, %61, %cst_76 {dimension_numbers = #tpu.dot_dimension_numbers<[1], [0], [0], [1], [0, 0, 1, 1], [], []>} : vector<32x4xf32>, vector<4x128xf32>, vector<32x128xf32> -> vector<32x128xf32>
    %63 = arith.addf %59, %62 : vector<32x128xf32>
    %64 = vector.broadcast %8 : vector<32x1xf32> to vector<32x128xf32>
    %65 = arith.addf %63, %64 : vector<32x128xf32>
    %c0_77 = arith.constant 0 : index
    %c2_78 = arith.constant 2 : index
    %c0_79 = arith.constant 0 : index
    %c0_80 = arith.constant 0 : index
    %66 = vector.load %arg4[%c0_77, %c2_78, %c0_79, %c0_80] : memref<1x17x32x128xf32, #tpu.memory_space<vmem>>, vector<1x1x32x128xf32>
    %67 = vector.shape_cast %66 : vector<1x1x32x128xf32> to vector<32x128xf32>
    %68 = vector.shape_cast %65 : vector<32x128xf32> to vector<1x1x32x128xf32>
    tpu.vector_store %arg4[%c0_77, %c2_78, %c0_79, %c0_80], %68 {strides = array<i32>} : memref<1x17x32x128xf32, #tpu.memory_space<vmem>>, vector<1x1x32x128xf32>,
    %c0_81 = arith.constant 0 : index
    %c3_82 = arith.constant 3 : index
    %c0_83 = arith.constant 0 : index
    %c0_84 = arith.constant 0 : index
    %69 = vector.load %arg1[%c0_81, %c3_82, %c0_83, %c0_84] : memref<1x18x4x129xf32, #tpu.memory_space<vmem>>, vector<1x1x4x128xf32>
    %70 = vector.shape_cast %69 : vector<1x1x4x128xf32> to vector<4x128xf32>
    %cst_85 = arith.constant dense<0.000000e+00> : vector<32x128xf32>
    %71 = tpu.matmul %1, %70, %cst_85 {dimension_numbers = #tpu.dot_dimension_numbers<[1], [0], [0], [1], [0, 0, 1, 1], [], []>} : vector<32x4xf32>, vector<4x128xf32>, vector<32x128xf32> -> vector<32x128xf32>
    %c0_86 = arith.constant 0 : index
    %c3_87 = arith.constant 3 : index
    %c0_88 = arith.constant 0 : index
    %c1_89 = arith.constant 1 : index
    %72 = vector.load %arg1[%c0_86, %c3_87, %c0_88, %c1_89] : memref<1x18x4x129xf32, #tpu.memory_space<vmem>>, vector<1x1x4x128xf32>
    %73 = vector.shape_cast %72 : vector<1x1x4x128xf32> to vector<4x128xf32>
    %cst_90 = arith.constant dense<0.000000e+00> : vector<32x128xf32>
    %74 = tpu.matmul %3, %73, %cst_90 {dimension_numbers = #tpu.dot_dimension_numbers<[1], [0], [0], [1], [0, 0, 1, 1], [], []>} : vector<32x4xf32>, vector<4x128xf32>, vector<32x128xf32> -> vector<32x128xf32>
    %75 = arith.addf %71, %74 : vector<32x128xf32>
    %c0_91 = arith.constant 0 : index
    %c4 = arith.constant 4 : index
    %c0_92 = arith.constant 0 : index
    %c0_93 = arith.constant 0 : index
    %76 = vector.load %arg1[%c0_91, %c4, %c0_92, %c0_93] : memref<1x18x4x129xf32, #tpu.memory_space<vmem>>, vector<1x1x4x128xf32>
    %77 = vector.shape_cast %76 : vector<1x1x4x128xf32> to vector<4x128xf32>
    %cst_94 = arith.constant dense<0.000000e+00> : vector<32x128xf32>
    %78 = tpu.matmul %5, %77, %cst_94 {dimension_numbers = #tpu.dot_dimension_numbers<[1], [0], [0], [1], [0, 0, 1, 1], [], []>} : vector<32x4xf32>, vector<4x128xf32>, vector<32x128xf32> -> vector<32x128xf32>
    %79 = arith.addf %75, %78 : vector<32x128xf32>
    %c0_95 = arith.constant 0 : index
    %c4_96 = arith.constant 4 : index
    %c0_97 = arith.constant 0 : index
    %c1_98 = arith.constant 1 : index
    %80 = vector.load %arg1[%c0_95, %c4_96, %c0_97, %c1_98] : memref<1x18x4x129xf32, #tpu.memory_space<vmem>>, vector<1x1x4x128xf32>
    %81 = vector.shape_cast %80 : vector<1x1x4x128xf32> to vector<4x128xf32>
    %cst_99 = arith.constant dense<0.000000e+00> : vector<32x128xf32>
    %82 = tpu.matmul %7, %81, %cst_99 {dimension_numbers = #tpu.dot_dimension_numbers<[1], [0], [0], [1], [0, 0, 1, 1], [], []>} : vector<32x4xf32>, vector<4x128xf32>, vector<32x128xf32> -> vector<32x128xf32>
    %83 = arith.addf %79, %82 : vector<32x128xf32>
    %84 = vector.broadcast %8 : vector<32x1xf32> to vector<32x128xf32>
    %85 = arith.addf %83, %84 : vector<32x128xf32>
    %c0_100 = arith.constant 0 : index
    %c3_101 = arith.constant 3 : index
    %c0_102 = arith.constant 0 : index
    %c0_103 = arith.constant 0 : index
    %86 = vector.load %arg4[%c0_100, %c3_101, %c0_102, %c0_103] : memref<1x17x32x128xf32, #tpu.memory_space<vmem>>, vector<1x1x32x128xf32>
    %87 = vector.shape_cast %86 : vector<1x1x32x128xf32> to vector<32x128xf32>
    %88 = vector.shape_cast %85 : vector<32x128xf32> to vector<1x1x32x128xf32>
    tpu.vector_store %arg4[%c0_100, %c3_101, %c0_102, %c0_103], %88 {strides = array<i32>} : memref<1x17x32x128xf32, #tpu.memory_space<vmem>>, vector<1x1x32x128xf32>,
    %c0_104 = arith.constant 0 : index
    %c4_105 = arith.constant 4 : index
    %c0_106 = arith.constant 0 : index
    %c0_107 = arith.constant 0 : index
    %89 = vector.load %arg1[%c0_104, %c4_105, %c0_106, %c0_107] : memref<1x18x4x129xf32, #tpu.memory_space<vmem>>, vector<1x1x4x128xf32>
    %90 = vector.shape_cast %89 : vector<1x1x4x128xf32> to vector<4x128xf32>
    %cst_108 = arith.constant dense<0.000000e+00> : vector<32x128xf32>
    %91 = tpu.matmul %1, %90, %cst_108 {dimension_numbers = #tpu.dot_dimension_numbers<[1], [0], [0], [1], [0, 0, 1, 1], [], []>} : vector<32x4xf32>, vector<4x128xf32>, vector<32x128xf32> -> vector<32x128xf32>
    %c0_109 = arith.constant 0 : index
    %c4_110 = arith.constant 4 : index
    %c0_111 = arith.constant 0 : index
    %c1_112 = arith.constant 1 : index
    %92 = vector.load %arg1[%c0_109, %c4_110, %c0_111, %c1_112] : memref<1x18x4x129xf32, #tpu.memory_space<vmem>>, vector<1x1x4x128xf32>
    %93 = vector.shape_cast %92 : vector<1x1x4x128xf32> to vector<4x128xf32>
    %cst_113 = arith.constant dense<0.000000e+00> : vector<32x128xf32>
    %94 = tpu.matmul %3, %93, %cst_113 {dimension_numbers = #tpu.dot_dimension_numbers<[1], [0], [0], [1], [0, 0, 1, 1], [], []>} : vector<32x4xf32>, vector<4x128xf32>, vector<32x128xf32> -> vector<32x128xf32>
    %95 = arith.addf %91, %94 : vector<32x128xf32>
    %c0_114 = arith.constant 0 : index
    %c5 = arith.constant 5 : index
    %c0_115 = arith.constant 0 : index
    %c0_116 = arith.constant 0 : index
    %96 = vector.load %arg1[%c0_114, %c5, %c0_115, %c0_116] : memref<1x18x4x129xf32, #tpu.memory_space<vmem>>, vector<1x1x4x128xf32>
    %97 = vector.shape_cast %96 : vector<1x1x4x128xf32> to vector<4x128xf32>
    %cst_117 = arith.constant dense<0.000000e+00> : vector<32x128xf32>
    %98 = tpu.matmul %5, %97, %cst_117 {dimension_numbers = #tpu.dot_dimension_numbers<[1], [0], [0], [1], [0, 0, 1, 1], [], []>} : vector<32x4xf32>, vector<4x128xf32>, vector<32x128xf32> -> vector<32x128xf32>
    %99 = arith.addf %95, %98 : vector<32x128xf32>
    %c0_118 = arith.constant 0 : index
    %c5_119 = arith.constant 5 : index
    %c0_120 = arith.constant 0 : index
    %c1_121 = arith.constant 1 : index
    %100 = vector.load %arg1[%c0_118, %c5_119, %c0_120, %c1_121] : memref<1x18x4x129xf32, #tpu.memory_space<vmem>>, vector<1x1x4x128xf32>
    %101 = vector.shape_cast %100 : vector<1x1x4x128xf32> to vector<4x128xf32>
    %cst_122 = arith.constant dense<0.000000e+00> : vector<32x128xf32>
    %102 = tpu.matmul %7, %101, %cst_122 {dimension_numbers = #tpu.dot_dimension_numbers<[1], [0], [0], [1], [0, 0, 1, 1], [], []>} : vector<32x4xf32>, vector<4x128xf32>, vector<32x128xf32> -> vector<32x128xf32>
    %103 = arith.addf %99, %102 : vector<32x128xf32>
    %104 = vector.broadcast %8 : vector<32x1xf32> to vector<32x128xf32>
    %105 = arith.addf %103, %104 : vector<32x128xf32>
    %c0_123 = arith.constant 0 : index
    %c4_124 = arith.constant 4 : index
    %c0_125 = arith.constant 0 : index
    %c0_126 = arith.constant 0 : index
    %106 = vector.load %arg4[%c0_123, %c4_124, %c0_125, %c0_126] : memref<1x17x32x128xf32, #tpu.memory_space<vmem>>, vector<1x1x32x128xf32>
    %107 = vector.shape_cast %106 : vector<1x1x32x128xf32> to vector<32x128xf32>
    %108 = vector.shape_cast %105 : vector<32x128xf32> to vector<1x1x32x128xf32>
    tpu.vector_store %arg4[%c0_123, %c4_124, %c0_125, %c0_126], %108 {strides = array<i32>} : memref<1x17x32x128xf32, #tpu.memory_space<vmem>>, vector<1x1x32x128xf32>,
    %c0_127 = arith.constant 0 : index
    %c5_128 = arith.constant 5 : index
    %c0_129 = arith.constant 0 : index
    %c0_130 = arith.constant 0 : index
    %109 = vector.load %arg1[%c0_127, %c5_128, %c0_129, %c0_130] : memref<1x18x4x129xf32, #tpu.memory_space<vmem>>, vector<1x1x4x128xf32>
    %110 = vector.shape_cast %109 : vector<1x1x4x128xf32> to vector<4x128xf32>
    %cst_131 = arith.constant dense<0.000000e+00> : vector<32x128xf32>
    %111 = tpu.matmul %1, %110, %cst_131 {dimension_numbers = #tpu.dot_dimension_numbers<[1], [0], [0], [1], [0, 0, 1, 1], [], []>} : vector<32x4xf32>, vector<4x128xf32>, vector<32x128xf32> -> vector<32x128xf32>
    %c0_132 = arith.constant 0 : index
    %c5_133 = arith.constant 5 : index
    %c0_134 = arith.constant 0 : index
    %c1_135 = arith.constant 1 : index
    %112 = vector.load %arg1[%c0_132, %c5_133, %c0_134, %c1_135] : memref<1x18x4x129xf32, #tpu.memory_space<vmem>>, vector<1x1x4x128xf32>
    %113 = vector.shape_cast %112 : vector<1x1x4x128xf32> to vector<4x128xf32>
    %cst_136 = arith.constant dense<0.000000e+00> : vector<32x128xf32>
    %114 = tpu.matmul %3, %113, %cst_136 {dimension_numbers = #tpu.dot_dimension_numbers<[1], [0], [0], [1], [0, 0, 1, 1], [], []>} : vector<32x4xf32>, vector<4x128xf32>, vector<32x128xf32> -> vector<32x128xf32>
    %115 = arith.addf %111, %114 : vector<32x128xf32>
    %c0_137 = arith.constant 0 : index
    %c6 = arith.constant 6 : index
    %c0_138 = arith.constant 0 : index
    %c0_139 = arith.constant 0 : index
    %116 = vector.load %arg1[%c0_137, %c6, %c0_138, %c0_139] : memref<1x18x4x129xf32, #tpu.memory_space<vmem>>, vector<1x1x4x128xf32>
    %117 = vector.shape_cast %116 : vector<1x1x4x128xf32> to vector<4x128xf32>
    %cst_140 = arith.constant dense<0.000000e+00> : vector<32x128xf32>
    %118 = tpu.matmul %5, %117, %cst_140 {dimension_numbers = #tpu.dot_dimension_numbers<[1], [0], [0], [1], [0, 0, 1, 1], [], []>} : vector<32x4xf32>, vector<4x128xf32>, vector<32x128xf32> -> vector<32x128xf32>
    %119 = arith.addf %115, %118 : vector<32x128xf32>
    %c0_141 = arith.constant 0 : index
    %c6_142 = arith.constant 6 : index
    %c0_143 = arith.constant 0 : index
    %c1_144 = arith.constant 1 : index
    %120 = vector.load %arg1[%c0_141, %c6_142, %c0_143, %c1_144] : memref<1x18x4x129xf32, #tpu.memory_space<vmem>>, vector<1x1x4x128xf32>
    %121 = vector.shape_cast %120 : vector<1x1x4x128xf32> to vector<4x128xf32>
    %cst_145 = arith.constant dense<0.000000e+00> : vector<32x128xf32>
    %122 = tpu.matmul %7, %121, %cst_145 {dimension_numbers = #tpu.dot_dimension_numbers<[1], [0], [0], [1], [0, 0, 1, 1], [], []>} : vector<32x4xf32>, vector<4x128xf32>, vector<32x128xf32> -> vector<32x128xf32>
    %123 = arith.addf %119, %122 : vector<32x128xf32>
    %124 = vector.broadcast %8 : vector<32x1xf32> to vector<32x128xf32>
    %125 = arith.addf %123, %124 : vector<32x128xf32>
    %c0_146 = arith.constant 0 : index
    %c5_147 = arith.constant 5 : index
    %c0_148 = arith.constant 0 : index
    %c0_149 = arith.constant 0 : index
    %126 = vector.load %arg4[%c0_146, %c5_147, %c0_148, %c0_149] : memref<1x17x32x128xf32, #tpu.memory_space<vmem>>, vector<1x1x32x128xf32>
    %127 = vector.shape_cast %126 : vector<1x1x32x128xf32> to vector<32x128xf32>
    %128 = vector.shape_cast %125 : vector<32x128xf32> to vector<1x1x32x128xf32>
    tpu.vector_store %arg4[%c0_146, %c5_147, %c0_148, %c0_149], %128 {strides = array<i32>} : memref<1x17x32x128xf32, #tpu.memory_space<vmem>>, vector<1x1x32x128xf32>,
    %c0_150 = arith.constant 0 : index
    %c6_151 = arith.constant 6 : index
    %c0_152 = arith.constant 0 : index
    %c0_153 = arith.constant 0 : index
    %129 = vector.load %arg1[%c0_150, %c6_151, %c0_152, %c0_153] : memref<1x18x4x129xf32, #tpu.memory_space<vmem>>, vector<1x1x4x128xf32>
    %130 = vector.shape_cast %129 : vector<1x1x4x128xf32> to vector<4x128xf32>
    %cst_154 = arith.constant dense<0.000000e+00> : vector<32x128xf32>
    %131 = tpu.matmul %1, %130, %cst_154 {dimension_numbers = #tpu.dot_dimension_numbers<[1], [0], [0], [1], [0, 0, 1, 1], [], []>} : vector<32x4xf32>, vector<4x128xf32>, vector<32x128xf32> -> vector<32x128xf32>
    %c0_155 = arith.constant 0 : index
    %c6_156 = arith.constant 6 : index
    %c0_157 = arith.constant 0 : index
    %c1_158 = arith.constant 1 : index
    %132 = vector.load %arg1[%c0_155, %c6_156, %c0_157, %c1_158] : memref<1x18x4x129xf32, #tpu.memory_space<vmem>>, vector<1x1x4x128xf32>
    %133 = vector.shape_cast %132 : vector<1x1x4x128xf32> to vector<4x128xf32>
    %cst_159 = arith.constant dense<0.000000e+00> : vector<32x128xf32>
    %134 = tpu.matmul %3, %133, %cst_159 {dimension_numbers = #tpu.dot_dimension_numbers<[1], [0], [0], [1], [0, 0, 1, 1], [], []>} : vector<32x4xf32>, vector<4x128xf32>, vector<32x128xf32> -> vector<32x128xf32>
    %135 = arith.addf %131, %134 : vector<32x128xf32>
    %c0_160 = arith.constant 0 : index
    %c7 = arith.constant 7 : index
    %c0_161 = arith.constant 0 : index
    %c0_162 = arith.constant 0 : index
    %136 = vector.load %arg1[%c0_160, %c7, %c0_161, %c0_162] : memref<1x18x4x129xf32, #tpu.memory_space<vmem>>, vector<1x1x4x128xf32>
    %137 = vector.shape_cast %136 : vector<1x1x4x128xf32> to vector<4x128xf32>
    %cst_163 = arith.constant dense<0.000000e+00> : vector<32x128xf32>
    %138 = tpu.matmul %5, %137, %cst_163 {dimension_numbers = #tpu.dot_dimension_numbers<[1], [0], [0], [1], [0, 0, 1, 1], [], []>} : vector<32x4xf32>, vector<4x128xf32>, vector<32x128xf32> -> vector<32x128xf32>
    %139 = arith.addf %135, %138 : vector<32x128xf32>
    %c0_164 = arith.constant 0 : index
    %c7_165 = arith.constant 7 : index
    %c0_166 = arith.constant 0 : index
    %c1_167 = arith.constant 1 : index
    %140 = vector.load %arg1[%c0_164, %c7_165, %c0_166, %c1_167] : memref<1x18x4x129xf32, #tpu.memory_space<vmem>>, vector<1x1x4x128xf32>
    %141 = vector.shape_cast %140 : vector<1x1x4x128xf32> to vector<4x128xf32>
    %cst_168 = arith.constant dense<0.000000e+00> : vector<32x128xf32>
    %142 = tpu.matmul %7, %141, %cst_168 {dimension_numbers = #tpu.dot_dimension_numbers<[1], [0], [0], [1], [0, 0, 1, 1], [], []>} : vector<32x4xf32>, vector<4x128xf32>, vector<32x128xf32> -> vector<32x128xf32>
    %143 = arith.addf %139, %142 : vector<32x128xf32>
    %144 = vector.broadcast %8 : vector<32x1xf32> to vector<32x128xf32>
    %145 = arith.addf %143, %144 : vector<32x128xf32>
    %c0_169 = arith.constant 0 : index
    %c6_170 = arith.constant 6 : index
    %c0_171 = arith.constant 0 : index
    %c0_172 = arith.constant 0 : index
    %146 = vector.load %arg4[%c0_169, %c6_170, %c0_171, %c0_172] : memref<1x17x32x128xf32, #tpu.memory_space<vmem>>, vector<1x1x32x128xf32>
    %147 = vector.shape_cast %146 : vector<1x1x32x128xf32> to vector<32x128xf32>
    %148 = vector.shape_cast %145 : vector<32x128xf32> to vector<1x1x32x128xf32>
    tpu.vector_store %arg4[%c0_169, %c6_170, %c0_171, %c0_172], %148 {strides = array<i32>} : memref<1x17x32x128xf32, #tpu.memory_space<vmem>>, vector<1x1x32x128xf32>,
    %c0_173 = arith.constant 0 : index
    %c7_174 = arith.constant 7 : index
    %c0_175 = arith.constant 0 : index
    %c0_176 = arith.constant 0 : index
    %149 = vector.load %arg1[%c0_173, %c7_174, %c0_175, %c0_176] : memref<1x18x4x129xf32, #tpu.memory_space<vmem>>, vector<1x1x4x128xf32>
    %150 = vector.shape_cast %149 : vector<1x1x4x128xf32> to vector<4x128xf32>
    %cst_177 = arith.constant dense<0.000000e+00> : vector<32x128xf32>
    %151 = tpu.matmul %1, %150, %cst_177 {dimension_numbers = #tpu.dot_dimension_numbers<[1], [0], [0], [1], [0, 0, 1, 1], [], []>} : vector<32x4xf32>, vector<4x128xf32>, vector<32x128xf32> -> vector<32x128xf32>
    %c0_178 = arith.constant 0 : index
    %c7_179 = arith.constant 7 : index
    %c0_180 = arith.constant 0 : index
    %c1_181 = arith.constant 1 : index
    %152 = vector.load %arg1[%c0_178, %c7_179, %c0_180, %c1_181] : memref<1x18x4x129xf32, #tpu.memory_space<vmem>>, vector<1x1x4x128xf32>
    %153 = vector.shape_cast %152 : vector<1x1x4x128xf32> to vector<4x128xf32>
    %cst_182 = arith.constant dense<0.000000e+00> : vector<32x128xf32>
    %154 = tpu.matmul %3, %153, %cst_182 {dimension_numbers = #tpu.dot_dimension_numbers<[1], [0], [0], [1], [0, 0, 1, 1], [], []>} : vector<32x4xf32>, vector<4x128xf32>, vector<32x128xf32> -> vector<32x128xf32>
    %155 = arith.addf %151, %154 : vector<32x128xf32>
    %c0_183 = arith.constant 0 : index
    %c8 = arith.constant 8 : index
    %c0_184 = arith.constant 0 : index
    %c0_185 = arith.constant 0 : index
    %156 = vector.load %arg1[%c0_183, %c8, %c0_184, %c0_185] : memref<1x18x4x129xf32, #tpu.memory_space<vmem>>, vector<1x1x4x128xf32>
    %157 = vector.shape_cast %156 : vector<1x1x4x128xf32> to vector<4x128xf32>
    %cst_186 = arith.constant dense<0.000000e+00> : vector<32x128xf32>
    %158 = tpu.matmul %5, %157, %cst_186 {dimension_numbers = #tpu.dot_dimension_numbers<[1], [0], [0], [1], [0, 0, 1, 1], [], []>} : vector<32x4xf32>, vector<4x128xf32>, vector<32x128xf32> -> vector<32x128xf32>
    %159 = arith.addf %155, %158 : vector<32x128xf32>
    %c0_187 = arith.constant 0 : index
    %c8_188 = arith.constant 8 : index
    %c0_189 = arith.constant 0 : index
    %c1_190 = arith.constant 1 : index
    %160 = vector.load %arg1[%c0_187, %c8_188, %c0_189, %c1_190] : memref<1x18x4x129xf32, #tpu.memory_space<vmem>>, vector<1x1x4x128xf32>
    %161 = vector.shape_cast %160 : vector<1x1x4x128xf32> to vector<4x128xf32>
    %cst_191 = arith.constant dense<0.000000e+00> : vector<32x128xf32>
    %162 = tpu.matmul %7, %161, %cst_191 {dimension_numbers = #tpu.dot_dimension_numbers<[1], [0], [0], [1], [0, 0, 1, 1], [], []>} : vector<32x4xf32>, vector<4x128xf32>, vector<32x128xf32> -> vector<32x128xf32>
    %163 = arith.addf %159, %162 : vector<32x128xf32>
    %164 = vector.broadcast %8 : vector<32x1xf32> to vector<32x128xf32>
    %165 = arith.addf %163, %164 : vector<32x128xf32>
    %c0_192 = arith.constant 0 : index
    %c7_193 = arith.constant 7 : index
    %c0_194 = arith.constant 0 : index
    %c0_195 = arith.constant 0 : index
    %166 = vector.load %arg4[%c0_192, %c7_193, %c0_194, %c0_195] : memref<1x17x32x128xf32, #tpu.memory_space<vmem>>, vector<1x1x32x128xf32>
    %167 = vector.shape_cast %166 : vector<1x1x32x128xf32> to vector<32x128xf32>
    %168 = vector.shape_cast %165 : vector<32x128xf32> to vector<1x1x32x128xf32>
    tpu.vector_store %arg4[%c0_192, %c7_193, %c0_194, %c0_195], %168 {strides = array<i32>} : memref<1x17x32x128xf32, #tpu.memory_space<vmem>>, vector<1x1x32x128xf32>,
    %c0_196 = arith.constant 0 : index
    %c8_197 = arith.constant 8 : index
    %c0_198 = arith.constant 0 : index
    %c0_199 = arith.constant 0 : index
    %169 = vector.load %arg1[%c0_196, %c8_197, %c0_198, %c0_199] : memref<1x18x4x129xf32, #tpu.memory_space<vmem>>, vector<1x1x4x128xf32>
    %170 = vector.shape_cast %169 : vector<1x1x4x128xf32> to vector<4x128xf32>
    %cst_200 = arith.constant dense<0.000000e+00> : vector<32x128xf32>
    %171 = tpu.matmul %1, %170, %cst_200 {dimension_numbers = #tpu.dot_dimension_numbers<[1], [0], [0], [1], [0, 0, 1, 1], [], []>} : vector<32x4xf32>, vector<4x128xf32>, vector<32x128xf32> -> vector<32x128xf32>
    %c0_201 = arith.constant 0 : index
    %c8_202 = arith.constant 8 : index
    %c0_203 = arith.constant 0 : index
    %c1_204 = arith.constant 1 : index
    %172 = vector.load %arg1[%c0_201, %c8_202, %c0_203, %c1_204] : memref<1x18x4x129xf32, #tpu.memory_space<vmem>>, vector<1x1x4x128xf32>
    %173 = vector.shape_cast %172 : vector<1x1x4x128xf32> to vector<4x128xf32>
    %cst_205 = arith.constant dense<0.000000e+00> : vector<32x128xf32>
    %174 = tpu.matmul %3, %173, %cst_205 {dimension_numbers = #tpu.dot_dimension_numbers<[1], [0], [0], [1], [0, 0, 1, 1], [], []>} : vector<32x4xf32>, vector<4x128xf32>, vector<32x128xf32> -> vector<32x128xf32>
    %175 = arith.addf %171, %174 : vector<32x128xf32>
    %c0_206 = arith.constant 0 : index
    %c9 = arith.constant 9 : index
    %c0_207 = arith.constant 0 : index
    %c0_208 = arith.constant 0 : index
    %176 = vector.load %arg1[%c0_206, %c9, %c0_207, %c0_208] : memref<1x18x4x129xf32, #tpu.memory_space<vmem>>, vector<1x1x4x128xf32>
    %177 = vector.shape_cast %176 : vector<1x1x4x128xf32> to vector<4x128xf32>
    %cst_209 = arith.constant dense<0.000000e+00> : vector<32x128xf32>
    %178 = tpu.matmul %5, %177, %cst_209 {dimension_numbers = #tpu.dot_dimension_numbers<[1], [0], [0], [1], [0, 0, 1, 1], [], []>} : vector<32x4xf32>, vector<4x128xf32>, vector<32x128xf32> -> vector<32x128xf32>
    %179 = arith.addf %175, %178 : vector<32x128xf32>
    %c0_210 = arith.constant 0 : index
    %c9_211 = arith.constant 9 : index
    %c0_212 = arith.constant 0 : index
    %c1_213 = arith.constant 1 : index
    %180 = vector.load %arg1[%c0_210, %c9_211, %c0_212, %c1_213] : memref<1x18x4x129xf32, #tpu.memory_space<vmem>>, vector<1x1x4x128xf32>
    %181 = vector.shape_cast %180 : vector<1x1x4x128xf32> to vector<4x128xf32>
    %cst_214 = arith.constant dense<0.000000e+00> : vector<32x128xf32>
    %182 = tpu.matmul %7, %181, %cst_214 {dimension_numbers = #tpu.dot_dimension_numbers<[1], [0], [0], [1], [0, 0, 1, 1], [], []>} : vector<32x4xf32>, vector<4x128xf32>, vector<32x128xf32> -> vector<32x128xf32>
    %183 = arith.addf %179, %182 : vector<32x128xf32>
    %184 = vector.broadcast %8 : vector<32x1xf32> to vector<32x128xf32>
    %185 = arith.addf %183, %184 : vector<32x128xf32>
    %c0_215 = arith.constant 0 : index
    %c8_216 = arith.constant 8 : index
    %c0_217 = arith.constant 0 : index
    %c0_218 = arith.constant 0 : index
    %186 = vector.load %arg4[%c0_215, %c8_216, %c0_217, %c0_218] : memref<1x17x32x128xf32, #tpu.memory_space<vmem>>, vector<1x1x32x128xf32>
    %187 = vector.shape_cast %186 : vector<1x1x32x128xf32> to vector<32x128xf32>
    %188 = vector.shape_cast %185 : vector<32x128xf32> to vector<1x1x32x128xf32>
    tpu.vector_store %arg4[%c0_215, %c8_216, %c0_217, %c0_218], %188 {strides = array<i32>} : memref<1x17x32x128xf32, #tpu.memory_space<vmem>>, vector<1x1x32x128xf32>,
    %c0_219 = arith.constant 0 : index
    %c9_220 = arith.constant 9 : index
    %c0_221 = arith.constant 0 : index
    %c0_222 = arith.constant 0 : index
    %189 = vector.load %arg1[%c0_219, %c9_220, %c0_221, %c0_222] : memref<1x18x4x129xf32, #tpu.memory_space<vmem>>, vector<1x1x4x128xf32>
    %190 = vector.shape_cast %189 : vector<1x1x4x128xf32> to vector<4x128xf32>
    %cst_223 = arith.constant dense<0.000000e+00> : vector<32x128xf32>
    %191 = tpu.matmul %1, %190, %cst_223 {dimension_numbers = #tpu.dot_dimension_numbers<[1], [0], [0], [1], [0, 0, 1, 1], [], []>} : vector<32x4xf32>, vector<4x128xf32>, vector<32x128xf32> -> vector<32x128xf32>
    %c0_224 = arith.constant 0 : index
    %c9_225 = arith.constant 9 : index
    %c0_226 = arith.constant 0 : index
    %c1_227 = arith.constant 1 : index
    %192 = vector.load %arg1[%c0_224, %c9_225, %c0_226, %c1_227] : memref<1x18x4x129xf32, #tpu.memory_space<vmem>>, vector<1x1x4x128xf32>
    %193 = vector.shape_cast %192 : vector<1x1x4x128xf32> to vector<4x128xf32>
    %cst_228 = arith.constant dense<0.000000e+00> : vector<32x128xf32>
    %194 = tpu.matmul %3, %193, %cst_228 {dimension_numbers = #tpu.dot_dimension_numbers<[1], [0], [0], [1], [0, 0, 1, 1], [], []>} : vector<32x4xf32>, vector<4x128xf32>, vector<32x128xf32> -> vector<32x128xf32>
    %195 = arith.addf %191, %194 : vector<32x128xf32>
    %c0_229 = arith.constant 0 : index
    %c10 = arith.constant 10 : index
    %c0_230 = arith.constant 0 : index
    %c0_231 = arith.constant 0 : index
    %196 = vector.load %arg1[%c0_229, %c10, %c0_230, %c0_231] : memref<1x18x4x129xf32, #tpu.memory_space<vmem>>, vector<1x1x4x128xf32>
    %197 = vector.shape_cast %196 : vector<1x1x4x128xf32> to vector<4x128xf32>
    %cst_232 = arith.constant dense<0.000000e+00> : vector<32x128xf32>
    %198 = tpu.matmul %5, %197, %cst_232 {dimension_numbers = #tpu.dot_dimension_numbers<[1], [0], [0], [1], [0, 0, 1, 1], [], []>} : vector<32x4xf32>, vector<4x128xf32>, vector<32x128xf32> -> vector<32x128xf32>
    %199 = arith.addf %195, %198 : vector<32x128xf32>
    %c0_233 = arith.constant 0 : index
    %c10_234 = arith.constant 10 : index
    %c0_235 = arith.constant 0 : index
    %c1_236 = arith.constant 1 : index
    %200 = vector.load %arg1[%c0_233, %c10_234, %c0_235, %c1_236] : memref<1x18x4x129xf32, #tpu.memory_space<vmem>>, vector<1x1x4x128xf32>
    %201 = vector.shape_cast %200 : vector<1x1x4x128xf32> to vector<4x128xf32>
    %cst_237 = arith.constant dense<0.000000e+00> : vector<32x128xf32>
    %202 = tpu.matmul %7, %201, %cst_237 {dimension_numbers = #tpu.dot_dimension_numbers<[1], [0], [0], [1], [0, 0, 1, 1], [], []>} : vector<32x4xf32>, vector<4x128xf32>, vector<32x128xf32> -> vector<32x128xf32>
    %203 = arith.addf %199, %202 : vector<32x128xf32>
    %204 = vector.broadcast %8 : vector<32x1xf32> to vector<32x128xf32>
    %205 = arith.addf %203, %204 : vector<32x128xf32>
    %c0_238 = arith.constant 0 : index
    %c9_239 = arith.constant 9 : index
    %c0_240 = arith.constant 0 : index
    %c0_241 = arith.constant 0 : index
    %206 = vector.load %arg4[%c0_238, %c9_239, %c0_240, %c0_241] : memref<1x17x32x128xf32, #tpu.memory_space<vmem>>, vector<1x1x32x128xf32>
    %207 = vector.shape_cast %206 : vector<1x1x32x128xf32> to vector<32x128xf32>
    %208 = vector.shape_cast %205 : vector<32x128xf32> to vector<1x1x32x128xf32>
    tpu.vector_store %arg4[%c0_238, %c9_239, %c0_240, %c0_241], %208 {strides = array<i32>} : memref<1x17x32x128xf32, #tpu.memory_space<vmem>>, vector<1x1x32x128xf32>,
    %c0_242 = arith.constant 0 : index
    %c10_243 = arith.constant 10 : index
    %c0_244 = arith.constant 0 : index
    %c0_245 = arith.constant 0 : index
    %209 = vector.load %arg1[%c0_242, %c10_243, %c0_244, %c0_245] : memref<1x18x4x129xf32, #tpu.memory_space<vmem>>, vector<1x1x4x128xf32>
    %210 = vector.shape_cast %209 : vector<1x1x4x128xf32> to vector<4x128xf32>
    %cst_246 = arith.constant dense<0.000000e+00> : vector<32x128xf32>
    %211 = tpu.matmul %1, %210, %cst_246 {dimension_numbers = #tpu.dot_dimension_numbers<[1], [0], [0], [1], [0, 0, 1, 1], [], []>} : vector<32x4xf32>, vector<4x128xf32>, vector<32x128xf32> -> vector<32x128xf32>
    %c0_247 = arith.constant 0 : index
    %c10_248 = arith.constant 10 : index
    %c0_249 = arith.constant 0 : index
    %c1_250 = arith.constant 1 : index
    %212 = vector.load %arg1[%c0_247, %c10_248, %c0_249, %c1_250] : memref<1x18x4x129xf32, #tpu.memory_space<vmem>>, vector<1x1x4x128xf32>
    %213 = vector.shape_cast %212 : vector<1x1x4x128xf32> to vector<4x128xf32>
    %cst_251 = arith.constant dense<0.000000e+00> : vector<32x128xf32>
    %214 = tpu.matmul %3, %213, %cst_251 {dimension_numbers = #tpu.dot_dimension_numbers<[1], [0], [0], [1], [0, 0, 1, 1], [], []>} : vector<32x4xf32>, vector<4x128xf32>, vector<32x128xf32> -> vector<32x128xf32>
    %215 = arith.addf %211, %214 : vector<32x128xf32>
    %c0_252 = arith.constant 0 : index
    %c11 = arith.constant 11 : index
    %c0_253 = arith.constant 0 : index
    %c0_254 = arith.constant 0 : index
    %216 = vector.load %arg1[%c0_252, %c11, %c0_253, %c0_254] : memref<1x18x4x129xf32, #tpu.memory_space<vmem>>, vector<1x1x4x128xf32>
    %217 = vector.shape_cast %216 : vector<1x1x4x128xf32> to vector<4x128xf32>
    %cst_255 = arith.constant dense<0.000000e+00> : vector<32x128xf32>
    %218 = tpu.matmul %5, %217, %cst_255 {dimension_numbers = #tpu.dot_dimension_numbers<[1], [0], [0], [1], [0, 0, 1, 1], [], []>} : vector<32x4xf32>, vector<4x128xf32>, vector<32x128xf32> -> vector<32x128xf32>
    %219 = arith.addf %215, %218 : vector<32x128xf32>
    %c0_256 = arith.constant 0 : index
    %c11_257 = arith.constant 11 : index
    %c0_258 = arith.constant 0 : index
    %c1_259 = arith.constant 1 : index
    %220 = vector.load %arg1[%c0_256, %c11_257, %c0_258, %c1_259] : memref<1x18x4x129xf32, #tpu.memory_space<vmem>>, vector<1x1x4x128xf32>
    %221 = vector.shape_cast %220 : vector<1x1x4x128xf32> to vector<4x128xf32>
    %cst_260 = arith.constant dense<0.000000e+00> : vector<32x128xf32>
    %222 = tpu.matmul %7, %221, %cst_260 {dimension_numbers = #tpu.dot_dimension_numbers<[1], [0], [0], [1], [0, 0, 1, 1], [], []>} : vector<32x4xf32>, vector<4x128xf32>, vector<32x128xf32> -> vector<32x128xf32>
    %223 = arith.addf %219, %222 : vector<32x128xf32>
    %224 = vector.broadcast %8 : vector<32x1xf32> to vector<32x128xf32>
    %225 = arith.addf %223, %224 : vector<32x128xf32>
    %c0_261 = arith.constant 0 : index
    %c10_262 = arith.constant 10 : index
    %c0_263 = arith.constant 0 : index
    %c0_264 = arith.constant 0 : index
    %226 = vector.load %arg4[%c0_261, %c10_262, %c0_263, %c0_264] : memref<1x17x32x128xf32, #tpu.memory_space<vmem>>, vector<1x1x32x128xf32>
    %227 = vector.shape_cast %226 : vector<1x1x32x128xf32> to vector<32x128xf32>
    %228 = vector.shape_cast %225 : vector<32x128xf32> to vector<1x1x32x128xf32>
    tpu.vector_store %arg4[%c0_261, %c10_262, %c0_263, %c0_264], %228 {strides = array<i32>} : memref<1x17x32x128xf32, #tpu.memory_space<vmem>>, vector<1x1x32x128xf32>,
    %c0_265 = arith.constant 0 : index
    %c11_266 = arith.constant 11 : index
    %c0_267 = arith.constant 0 : index
    %c0_268 = arith.constant 0 : index
    %229 = vector.load %arg1[%c0_265, %c11_266, %c0_267, %c0_268] : memref<1x18x4x129xf32, #tpu.memory_space<vmem>>, vector<1x1x4x128xf32>
    %230 = vector.shape_cast %229 : vector<1x1x4x128xf32> to vector<4x128xf32>
    %cst_269 = arith.constant dense<0.000000e+00> : vector<32x128xf32>
    %231 = tpu.matmul %1, %230, %cst_269 {dimension_numbers = #tpu.dot_dimension_numbers<[1], [0], [0], [1], [0, 0, 1, 1], [], []>} : vector<32x4xf32>, vector<4x128xf32>, vector<32x128xf32> -> vector<32x128xf32>
    %c0_270 = arith.constant 0 : index
    %c11_271 = arith.constant 11 : index
    %c0_272 = arith.constant 0 : index
    %c1_273 = arith.constant 1 : index
    %232 = vector.load %arg1[%c0_270, %c11_271, %c0_272, %c1_273] : memref<1x18x4x129xf32, #tpu.memory_space<vmem>>, vector<1x1x4x128xf32>
    %233 = vector.shape_cast %232 : vector<1x1x4x128xf32> to vector<4x128xf32>
    %cst_274 = arith.constant dense<0.000000e+00> : vector<32x128xf32>
    %234 = tpu.matmul %3, %233, %cst_274 {dimension_numbers = #tpu.dot_dimension_numbers<[1], [0], [0], [1], [0, 0, 1, 1], [], []>} : vector<32x4xf32>, vector<4x128xf32>, vector<32x128xf32> -> vector<32x128xf32>
    %235 = arith.addf %231, %234 : vector<32x128xf32>
    %c0_275 = arith.constant 0 : index
    %c12 = arith.constant 12 : index
    %c0_276 = arith.constant 0 : index
    %c0_277 = arith.constant 0 : index
    %236 = vector.load %arg1[%c0_275, %c12, %c0_276, %c0_277] : memref<1x18x4x129xf32, #tpu.memory_space<vmem>>, vector<1x1x4x128xf32>
    %237 = vector.shape_cast %236 : vector<1x1x4x128xf32> to vector<4x128xf32>
    %cst_278 = arith.constant dense<0.000000e+00> : vector<32x128xf32>
    %238 = tpu.matmul %5, %237, %cst_278 {dimension_numbers = #tpu.dot_dimension_numbers<[1], [0], [0], [1], [0, 0, 1, 1], [], []>} : vector<32x4xf32>, vector<4x128xf32>, vector<32x128xf32> -> vector<32x128xf32>
    %239 = arith.addf %235, %238 : vector<32x128xf32>
    %c0_279 = arith.constant 0 : index
    %c12_280 = arith.constant 12 : index
    %c0_281 = arith.constant 0 : index
    %c1_282 = arith.constant 1 : index
    %240 = vector.load %arg1[%c0_279, %c12_280, %c0_281, %c1_282] : memref<1x18x4x129xf32, #tpu.memory_space<vmem>>, vector<1x1x4x128xf32>
    %241 = vector.shape_cast %240 : vector<1x1x4x128xf32> to vector<4x128xf32>
    %cst_283 = arith.constant dense<0.000000e+00> : vector<32x128xf32>
    %242 = tpu.matmul %7, %241, %cst_283 {dimension_numbers = #tpu.dot_dimension_numbers<[1], [0], [0], [1], [0, 0, 1, 1], [], []>} : vector<32x4xf32>, vector<4x128xf32>, vector<32x128xf32> -> vector<32x128xf32>
    %243 = arith.addf %239, %242 : vector<32x128xf32>
    %244 = vector.broadcast %8 : vector<32x1xf32> to vector<32x128xf32>
    %245 = arith.addf %243, %244 : vector<32x128xf32>
    %c0_284 = arith.constant 0 : index
    %c11_285 = arith.constant 11 : index
    %c0_286 = arith.constant 0 : index
    %c0_287 = arith.constant 0 : index
    %246 = vector.load %arg4[%c0_284, %c11_285, %c0_286, %c0_287] : memref<1x17x32x128xf32, #tpu.memory_space<vmem>>, vector<1x1x32x128xf32>
    %247 = vector.shape_cast %246 : vector<1x1x32x128xf32> to vector<32x128xf32>
    %248 = vector.shape_cast %245 : vector<32x128xf32> to vector<1x1x32x128xf32>
    tpu.vector_store %arg4[%c0_284, %c11_285, %c0_286, %c0_287], %248 {strides = array<i32>} : memref<1x17x32x128xf32, #tpu.memory_space<vmem>>, vector<1x1x32x128xf32>,
    %c0_288 = arith.constant 0 : index
    %c12_289 = arith.constant 12 : index
    %c0_290 = arith.constant 0 : index
    %c0_291 = arith.constant 0 : index
    %249 = vector.load %arg1[%c0_288, %c12_289, %c0_290, %c0_291] : memref<1x18x4x129xf32, #tpu.memory_space<vmem>>, vector<1x1x4x128xf32>
    %250 = vector.shape_cast %249 : vector<1x1x4x128xf32> to vector<4x128xf32>
    %cst_292 = arith.constant dense<0.000000e+00> : vector<32x128xf32>
    %251 = tpu.matmul %1, %250, %cst_292 {dimension_numbers = #tpu.dot_dimension_numbers<[1], [0], [0], [1], [0, 0, 1, 1], [], []>} : vector<32x4xf32>, vector<4x128xf32>, vector<32x128xf32> -> vector<32x128xf32>
    %c0_293 = arith.constant 0 : index
    %c12_294 = arith.constant 12 : index
    %c0_295 = arith.constant 0 : index
    %c1_296 = arith.constant 1 : index
    %252 = vector.load %arg1[%c0_293, %c12_294, %c0_295, %c1_296] : memref<1x18x4x129xf32, #tpu.memory_space<vmem>>, vector<1x1x4x128xf32>
    %253 = vector.shape_cast %252 : vector<1x1x4x128xf32> to vector<4x128xf32>
    %cst_297 = arith.constant dense<0.000000e+00> : vector<32x128xf32>
    %254 = tpu.matmul %3, %253, %cst_297 {dimension_numbers = #tpu.dot_dimension_numbers<[1], [0], [0], [1], [0, 0, 1, 1], [], []>} : vector<32x4xf32>, vector<4x128xf32>, vector<32x128xf32> -> vector<32x128xf32>
    %255 = arith.addf %251, %254 : vector<32x128xf32>
    %c0_298 = arith.constant 0 : index
    %c13 = arith.constant 13 : index
    %c0_299 = arith.constant 0 : index
    %c0_300 = arith.constant 0 : index
    %256 = vector.load %arg1[%c0_298, %c13, %c0_299, %c0_300] : memref<1x18x4x129xf32, #tpu.memory_space<vmem>>, vector<1x1x4x128xf32>
    %257 = vector.shape_cast %256 : vector<1x1x4x128xf32> to vector<4x128xf32>
    %cst_301 = arith.constant dense<0.000000e+00> : vector<32x128xf32>
    %258 = tpu.matmul %5, %257, %cst_301 {dimension_numbers = #tpu.dot_dimension_numbers<[1], [0], [0], [1], [0, 0, 1, 1], [], []>} : vector<32x4xf32>, vector<4x128xf32>, vector<32x128xf32> -> vector<32x128xf32>
    %259 = arith.addf %255, %258 : vector<32x128xf32>
    %c0_302 = arith.constant 0 : index
    %c13_303 = arith.constant 13 : index
    %c0_304 = arith.constant 0 : index
    %c1_305 = arith.constant 1 : index
    %260 = vector.load %arg1[%c0_302, %c13_303, %c0_304, %c1_305] : memref<1x18x4x129xf32, #tpu.memory_space<vmem>>, vector<1x1x4x128xf32>
    %261 = vector.shape_cast %260 : vector<1x1x4x128xf32> to vector<4x128xf32>
    %cst_306 = arith.constant dense<0.000000e+00> : vector<32x128xf32>
    %262 = tpu.matmul %7, %261, %cst_306 {dimension_numbers = #tpu.dot_dimension_numbers<[1], [0], [0], [1], [0, 0, 1, 1], [], []>} : vector<32x4xf32>, vector<4x128xf32>, vector<32x128xf32> -> vector<32x128xf32>
    %263 = arith.addf %259, %262 : vector<32x128xf32>
    %264 = vector.broadcast %8 : vector<32x1xf32> to vector<32x128xf32>
    %265 = arith.addf %263, %264 : vector<32x128xf32>
    %c0_307 = arith.constant 0 : index
    %c12_308 = arith.constant 12 : index
    %c0_309 = arith.constant 0 : index
    %c0_310 = arith.constant 0 : index
    %266 = vector.load %arg4[%c0_307, %c12_308, %c0_309, %c0_310] : memref<1x17x32x128xf32, #tpu.memory_space<vmem>>, vector<1x1x32x128xf32>
    %267 = vector.shape_cast %266 : vector<1x1x32x128xf32> to vector<32x128xf32>
    %268 = vector.shape_cast %265 : vector<32x128xf32> to vector<1x1x32x128xf32>
    tpu.vector_store %arg4[%c0_307, %c12_308, %c0_309, %c0_310], %268 {strides = array<i32>} : memref<1x17x32x128xf32, #tpu.memory_space<vmem>>, vector<1x1x32x128xf32>,
    %c0_311 = arith.constant 0 : index
    %c13_312 = arith.constant 13 : index
    %c0_313 = arith.constant 0 : index
    %c0_314 = arith.constant 0 : index
    %269 = vector.load %arg1[%c0_311, %c13_312, %c0_313, %c0_314] : memref<1x18x4x129xf32, #tpu.memory_space<vmem>>, vector<1x1x4x128xf32>
    %270 = vector.shape_cast %269 : vector<1x1x4x128xf32> to vector<4x128xf32>
    %cst_315 = arith.constant dense<0.000000e+00> : vector<32x128xf32>
    %271 = tpu.matmul %1, %270, %cst_315 {dimension_numbers = #tpu.dot_dimension_numbers<[1], [0], [0], [1], [0, 0, 1, 1], [], []>} : vector<32x4xf32>, vector<4x128xf32>, vector<32x128xf32> -> vector<32x128xf32>
    %c0_316 = arith.constant 0 : index
    %c13_317 = arith.constant 13 : index
    %c0_318 = arith.constant 0 : index
    %c1_319 = arith.constant 1 : index
    %272 = vector.load %arg1[%c0_316, %c13_317, %c0_318, %c1_319] : memref<1x18x4x129xf32, #tpu.memory_space<vmem>>, vector<1x1x4x128xf32>
    %273 = vector.shape_cast %272 : vector<1x1x4x128xf32> to vector<4x128xf32>
    %cst_320 = arith.constant dense<0.000000e+00> : vector<32x128xf32>
    %274 = tpu.matmul %3, %273, %cst_320 {dimension_numbers = #tpu.dot_dimension_numbers<[1], [0], [0], [1], [0, 0, 1, 1], [], []>} : vector<32x4xf32>, vector<4x128xf32>, vector<32x128xf32> -> vector<32x128xf32>
    %275 = arith.addf %271, %274 : vector<32x128xf32>
    %c0_321 = arith.constant 0 : index
    %c14 = arith.constant 14 : index
    %c0_322 = arith.constant 0 : index
    %c0_323 = arith.constant 0 : index
    %276 = vector.load %arg1[%c0_321, %c14, %c0_322, %c0_323] : memref<1x18x4x129xf32, #tpu.memory_space<vmem>>, vector<1x1x4x128xf32>
    %277 = vector.shape_cast %276 : vector<1x1x4x128xf32> to vector<4x128xf32>
    %cst_324 = arith.constant dense<0.000000e+00> : vector<32x128xf32>
    %278 = tpu.matmul %5, %277, %cst_324 {dimension_numbers = #tpu.dot_dimension_numbers<[1], [0], [0], [1], [0, 0, 1, 1], [], []>} : vector<32x4xf32>, vector<4x128xf32>, vector<32x128xf32> -> vector<32x128xf32>
    %279 = arith.addf %275, %278 : vector<32x128xf32>
    %c0_325 = arith.constant 0 : index
    %c14_326 = arith.constant 14 : index
    %c0_327 = arith.constant 0 : index
    %c1_328 = arith.constant 1 : index
    %280 = vector.load %arg1[%c0_325, %c14_326, %c0_327, %c1_328] : memref<1x18x4x129xf32, #tpu.memory_space<vmem>>, vector<1x1x4x128xf32>
    %281 = vector.shape_cast %280 : vector<1x1x4x128xf32> to vector<4x128xf32>
    %cst_329 = arith.constant dense<0.000000e+00> : vector<32x128xf32>
    %282 = tpu.matmul %7, %281, %cst_329 {dimension_numbers = #tpu.dot_dimension_numbers<[1], [0], [0], [1], [0, 0, 1, 1], [], []>} : vector<32x4xf32>, vector<4x128xf32>, vector<32x128xf32> -> vector<32x128xf32>
    %283 = arith.addf %279, %282 : vector<32x128xf32>
    %284 = vector.broadcast %8 : vector<32x1xf32> to vector<32x128xf32>
    %285 = arith.addf %283, %284 : vector<32x128xf32>
    %c0_330 = arith.constant 0 : index
    %c13_331 = arith.constant 13 : index
    %c0_332 = arith.constant 0 : index
    %c0_333 = arith.constant 0 : index
    %286 = vector.load %arg4[%c0_330, %c13_331, %c0_332, %c0_333] : memref<1x17x32x128xf32, #tpu.memory_space<vmem>>, vector<1x1x32x128xf32>
    %287 = vector.shape_cast %286 : vector<1x1x32x128xf32> to vector<32x128xf32>
    %288 = vector.shape_cast %285 : vector<32x128xf32> to vector<1x1x32x128xf32>
    tpu.vector_store %arg4[%c0_330, %c13_331, %c0_332, %c0_333], %288 {strides = array<i32>} : memref<1x17x32x128xf32, #tpu.memory_space<vmem>>, vector<1x1x32x128xf32>,
    %c0_334 = arith.constant 0 : index
    %c14_335 = arith.constant 14 : index
    %c0_336 = arith.constant 0 : index
    %c0_337 = arith.constant 0 : index
    %289 = vector.load %arg1[%c0_334, %c14_335, %c0_336, %c0_337] : memref<1x18x4x129xf32, #tpu.memory_space<vmem>>, vector<1x1x4x128xf32>
    %290 = vector.shape_cast %289 : vector<1x1x4x128xf32> to vector<4x128xf32>
    %cst_338 = arith.constant dense<0.000000e+00> : vector<32x128xf32>
    %291 = tpu.matmul %1, %290, %cst_338 {dimension_numbers = #tpu.dot_dimension_numbers<[1], [0], [0], [1], [0, 0, 1, 1], [], []>} : vector<32x4xf32>, vector<4x128xf32>, vector<32x128xf32> -> vector<32x128xf32>
    %c0_339 = arith.constant 0 : index
    %c14_340 = arith.constant 14 : index
    %c0_341 = arith.constant 0 : index
    %c1_342 = arith.constant 1 : index
    %292 = vector.load %arg1[%c0_339, %c14_340, %c0_341, %c1_342] : memref<1x18x4x129xf32, #tpu.memory_space<vmem>>, vector<1x1x4x128xf32>
    %293 = vector.shape_cast %292 : vector<1x1x4x128xf32> to vector<4x128xf32>
    %cst_343 = arith.constant dense<0.000000e+00> : vector<32x128xf32>
    %294 = tpu.matmul %3, %293, %cst_343 {dimension_numbers = #tpu.dot_dimension_numbers<[1], [0], [0], [1], [0, 0, 1, 1], [], []>} : vector<32x4xf32>, vector<4x128xf32>, vector<32x128xf32> -> vector<32x128xf32>
    %295 = arith.addf %291, %294 : vector<32x128xf32>
    %c0_344 = arith.constant 0 : index
    %c15 = arith.constant 15 : index
    %c0_345 = arith.constant 0 : index
    %c0_346 = arith.constant 0 : index
    %296 = vector.load %arg1[%c0_344, %c15, %c0_345, %c0_346] : memref<1x18x4x129xf32, #tpu.memory_space<vmem>>, vector<1x1x4x128xf32>
    %297 = vector.shape_cast %296 : vector<1x1x4x128xf32> to vector<4x128xf32>
    %cst_347 = arith.constant dense<0.000000e+00> : vector<32x128xf32>
    %298 = tpu.matmul %5, %297, %cst_347 {dimension_numbers = #tpu.dot_dimension_numbers<[1], [0], [0], [1], [0, 0, 1, 1], [], []>} : vector<32x4xf32>, vector<4x128xf32>, vector<32x128xf32> -> vector<32x128xf32>
    %299 = arith.addf %295, %298 : vector<32x128xf32>
    %c0_348 = arith.constant 0 : index
    %c15_349 = arith.constant 15 : index
    %c0_350 = arith.constant 0 : index
    %c1_351 = arith.constant 1 : index
    %300 = vector.load %arg1[%c0_348, %c15_349, %c0_350, %c1_351] : memref<1x18x4x129xf32, #tpu.memory_space<vmem>>, vector<1x1x4x128xf32>
    %301 = vector.shape_cast %300 : vector<1x1x4x128xf32> to vector<4x128xf32>
    %cst_352 = arith.constant dense<0.000000e+00> : vector<32x128xf32>
    %302 = tpu.matmul %7, %301, %cst_352 {dimension_numbers = #tpu.dot_dimension_numbers<[1], [0], [0], [1], [0, 0, 1, 1], [], []>} : vector<32x4xf32>, vector<4x128xf32>, vector<32x128xf32> -> vector<32x128xf32>
    %303 = arith.addf %299, %302 : vector<32x128xf32>
    %304 = vector.broadcast %8 : vector<32x1xf32> to vector<32x128xf32>
    %305 = arith.addf %303, %304 : vector<32x128xf32>
    %c0_353 = arith.constant 0 : index
    %c14_354 = arith.constant 14 : index
    %c0_355 = arith.constant 0 : index
    %c0_356 = arith.constant 0 : index
    %306 = vector.load %arg4[%c0_353, %c14_354, %c0_355, %c0_356] : memref<1x17x32x128xf32, #tpu.memory_space<vmem>>, vector<1x1x32x128xf32>
    %307 = vector.shape_cast %306 : vector<1x1x32x128xf32> to vector<32x128xf32>
    %308 = vector.shape_cast %305 : vector<32x128xf32> to vector<1x1x32x128xf32>
    tpu.vector_store %arg4[%c0_353, %c14_354, %c0_355, %c0_356], %308 {strides = array<i32>} : memref<1x17x32x128xf32, #tpu.memory_space<vmem>>, vector<1x1x32x128xf32>,
    %c0_357 = arith.constant 0 : index
    %c15_358 = arith.constant 15 : index
    %c0_359 = arith.constant 0 : index
    %c0_360 = arith.constant 0 : index
    %309 = vector.load %arg1[%c0_357, %c15_358, %c0_359, %c0_360] : memref<1x18x4x129xf32, #tpu.memory_space<vmem>>, vector<1x1x4x128xf32>
    %310 = vector.shape_cast %309 : vector<1x1x4x128xf32> to vector<4x128xf32>
    %cst_361 = arith.constant dense<0.000000e+00> : vector<32x128xf32>
    %311 = tpu.matmul %1, %310, %cst_361 {dimension_numbers = #tpu.dot_dimension_numbers<[1], [0], [0], [1], [0, 0, 1, 1], [], []>} : vector<32x4xf32>, vector<4x128xf32>, vector<32x128xf32> -> vector<32x128xf32>
    %c0_362 = arith.constant 0 : index
    %c15_363 = arith.constant 15 : index
    %c0_364 = arith.constant 0 : index
    %c1_365 = arith.constant 1 : index
    %312 = vector.load %arg1[%c0_362, %c15_363, %c0_364, %c1_365] : memref<1x18x4x129xf32, #tpu.memory_space<vmem>>, vector<1x1x4x128xf32>
    %313 = vector.shape_cast %312 : vector<1x1x4x128xf32> to vector<4x128xf32>
    %cst_366 = arith.constant dense<0.000000e+00> : vector<32x128xf32>
    %314 = tpu.matmul %3, %313, %cst_366 {dimension_numbers = #tpu.dot_dimension_numbers<[1], [0], [0], [1], [0, 0, 1, 1], [], []>} : vector<32x4xf32>, vector<4x128xf32>, vector<32x128xf32> -> vector<32x128xf32>
    %315 = arith.addf %311, %314 : vector<32x128xf32>
    %c0_367 = arith.constant 0 : index
    %c16 = arith.constant 16 : index
    %c0_368 = arith.constant 0 : index
    %c0_369 = arith.constant 0 : index
    %316 = vector.load %arg1[%c0_367, %c16, %c0_368, %c0_369] : memref<1x18x4x129xf32, #tpu.memory_space<vmem>>, vector<1x1x4x128xf32>
    %317 = vector.shape_cast %316 : vector<1x1x4x128xf32> to vector<4x128xf32>
    %cst_370 = arith.constant dense<0.000000e+00> : vector<32x128xf32>
    %318 = tpu.matmul %5, %317, %cst_370 {dimension_numbers = #tpu.dot_dimension_numbers<[1], [0], [0], [1], [0, 0, 1, 1], [], []>} : vector<32x4xf32>, vector<4x128xf32>, vector<32x128xf32> -> vector<32x128xf32>
    %319 = arith.addf %315, %318 : vector<32x128xf32>
    %c0_371 = arith.constant 0 : index
    %c16_372 = arith.constant 16 : index
    %c0_373 = arith.constant 0 : index
    %c1_374 = arith.constant 1 : index
    %320 = vector.load %arg1[%c0_371, %c16_372, %c0_373, %c1_374] : memref<1x18x4x129xf32, #tpu.memory_space<vmem>>, vector<1x1x4x128xf32>
    %321 = vector.shape_cast %320 : vector<1x1x4x128xf32> to vector<4x128xf32>
    %cst_375 = arith.constant dense<0.000000e+00> : vector<32x128xf32>
    %322 = tpu.matmul %7, %321, %cst_375 {dimension_numbers = #tpu.dot_dimension_numbers<[1], [0], [0], [1], [0, 0, 1, 1], [], []>} : vector<32x4xf32>, vector<4x128xf32>, vector<32x128xf32> -> vector<32x128xf32>
    %323 = arith.addf %319, %322 : vector<32x128xf32>
    %324 = vector.broadcast %8 : vector<32x1xf32> to vector<32x128xf32>
    %325 = arith.addf %323, %324 : vector<32x128xf32>
    %c0_376 = arith.constant 0 : index
    %c15_377 = arith.constant 15 : index
    %c0_378 = arith.constant 0 : index
    %c0_379 = arith.constant 0 : index
    %326 = vector.load %arg4[%c0_376, %c15_377, %c0_378, %c0_379] : memref<1x17x32x128xf32, #tpu.memory_space<vmem>>, vector<1x1x32x128xf32>
    %327 = vector.shape_cast %326 : vector<1x1x32x128xf32> to vector<32x128xf32>
    %328 = vector.shape_cast %325 : vector<32x128xf32> to vector<1x1x32x128xf32>
    tpu.vector_store %arg4[%c0_376, %c15_377, %c0_378, %c0_379], %328 {strides = array<i32>} : memref<1x17x32x128xf32, #tpu.memory_space<vmem>>, vector<1x1x32x128xf32>,
    %c0_380 = arith.constant 0 : index
    %c16_381 = arith.constant 16 : index
    %c0_382 = arith.constant 0 : index
    %c0_383 = arith.constant 0 : index
    %329 = vector.load %arg1[%c0_380, %c16_381, %c0_382, %c0_383] : memref<1x18x4x129xf32, #tpu.memory_space<vmem>>, vector<1x1x4x128xf32>
    %330 = vector.shape_cast %329 : vector<1x1x4x128xf32> to vector<4x128xf32>
    %cst_384 = arith.constant dense<0.000000e+00> : vector<32x128xf32>
    %331 = tpu.matmul %1, %330, %cst_384 {dimension_numbers = #tpu.dot_dimension_numbers<[1], [0], [0], [1], [0, 0, 1, 1], [], []>} : vector<32x4xf32>, vector<4x128xf32>, vector<32x128xf32> -> vector<32x128xf32>
    %c0_385 = arith.constant 0 : index
    %c16_386 = arith.constant 16 : index
    %c0_387 = arith.constant 0 : index
    %c1_388 = arith.constant 1 : index
    %332 = vector.load %arg1[%c0_385, %c16_386, %c0_387, %c1_388] : memref<1x18x4x129xf32, #tpu.memory_space<vmem>>, vector<1x1x4x128xf32>
    %333 = vector.shape_cast %332 : vector<1x1x4x128xf32> to vector<4x128xf32>
    %cst_389 = arith.constant dense<0.000000e+00> : vector<32x128xf32>
    %334 = tpu.matmul %3, %333, %cst_389 {dimension_numbers = #tpu.dot_dimension_numbers<[1], [0], [0], [1], [0, 0, 1, 1], [], []>} : vector<32x4xf32>, vector<4x128xf32>, vector<32x128xf32> -> vector<32x128xf32>
    %335 = arith.addf %331, %334 : vector<32x128xf32>
    %c0_390 = arith.constant 0 : index
    %c17 = arith.constant 17 : index
    %c0_391 = arith.constant 0 : index
    %c0_392 = arith.constant 0 : index
    %336 = vector.load %arg1[%c0_390, %c17, %c0_391, %c0_392] : memref<1x18x4x129xf32, #tpu.memory_space<vmem>>, vector<1x1x4x128xf32>
    %337 = vector.shape_cast %336 : vector<1x1x4x128xf32> to vector<4x128xf32>
    %cst_393 = arith.constant dense<0.000000e+00> : vector<32x128xf32>
    %338 = tpu.matmul %5, %337, %cst_393 {dimension_numbers = #tpu.dot_dimension_numbers<[1], [0], [0], [1], [0, 0, 1, 1], [], []>} : vector<32x4xf32>, vector<4x128xf32>, vector<32x128xf32> -> vector<32x128xf32>
    %339 = arith.addf %335, %338 : vector<32x128xf32>
    %c0_394 = arith.constant 0 : index
    %c17_395 = arith.constant 17 : index
    %c0_396 = arith.constant 0 : index
    %c1_397 = arith.constant 1 : index
    %340 = vector.load %arg1[%c0_394, %c17_395, %c0_396, %c1_397] : memref<1x18x4x129xf32, #tpu.memory_space<vmem>>, vector<1x1x4x128xf32>
    %341 = vector.shape_cast %340 : vector<1x1x4x128xf32> to vector<4x128xf32>
    %cst_398 = arith.constant dense<0.000000e+00> : vector<32x128xf32>
    %342 = tpu.matmul %7, %341, %cst_398 {dimension_numbers = #tpu.dot_dimension_numbers<[1], [0], [0], [1], [0, 0, 1, 1], [], []>} : vector<32x4xf32>, vector<4x128xf32>, vector<32x128xf32> -> vector<32x128xf32>
    %343 = arith.addf %339, %342 : vector<32x128xf32>
    %344 = vector.broadcast %8 : vector<32x1xf32> to vector<32x128xf32>
    %345 = arith.addf %343, %344 : vector<32x128xf32>
    %c0_399 = arith.constant 0 : index
    %c16_400 = arith.constant 16 : index
    %c0_401 = arith.constant 0 : index
    %c0_402 = arith.constant 0 : index
    %346 = vector.load %arg4[%c0_399, %c16_400, %c0_401, %c0_402] : memref<1x17x32x128xf32, #tpu.memory_space<vmem>>, vector<1x1x32x128xf32>
    %347 = vector.shape_cast %346 : vector<1x1x32x128xf32> to vector<32x128xf32>
    %348 = vector.shape_cast %345 : vector<32x128xf32> to vector<1x1x32x128xf32>
    tpu.vector_store %arg4[%c0_399, %c16_400, %c0_401, %c0_402], %348 {strides = array<i32>} : memref<1x17x32x128xf32, #tpu.memory_space<vmem>>, vector<1x1x32x128xf32>,
    return
  }
  func.func @transform_0(%arg0: i32) -> (i32, i32, i32, i32) {
    %c0_i32 = arith.constant 0 : i32
    %c0_i32_0 = arith.constant 0 : i32
    %c0_i32_1 = arith.constant 0 : i32
    %c0_i32_2 = arith.constant 0 : i32
    return %arg0, %c0_i32, %c0_i32_0, %c0_i32_1 : i32, i32, i32, i32
  }
  func.func @transform_1(%arg0: i32) -> (i32, i32, i32) {
    %c0_i32 = arith.constant 0 : i32
    %c0_i32_0 = arith.constant 0 : i32
    %c0_i32_1 = arith.constant 0 : i32
    %c0_i32_2 = arith.constant 0 : i32
    return %c0_i32, %c0_i32_0, %c0_i32_1 : i32, i32, i32
  }
  func.func @transform_2(%arg0: i32) -> (i32, i32) {
    %c0_i32 = arith.constant 0 : i32
    %c0_i32_0 = arith.constant 0 : i32
    %c0_i32_1 = arith.constant 0 : i32
    return %c0_i32, %c0_i32_0 : i32, i32
  }
  func.func @transform_3(%arg0: i32) -> (i32, i32, i32, i32) {
    %c0_i32 = arith.constant 0 : i32
    %c0_i32_0 = arith.constant 0 : i32
    %c0_i32_1 = arith.constant 0 : i32
    %c0_i32_2 = arith.constant 0 : i32
    return %arg0, %c0_i32, %c0_i32_0, %c0_i32_1 : i32, i32, i32, i32
  }
}

</mosaic_0001>

<llo_original>
// kernel: tile.8
$region0: #{tile.8}
  #allocation2 [shape = 's32[1]{0}', space=sflag, size = 0x4, scoped, tag = 'scoped memory for tile.8']
  %s0 = inlined_call_operand.hbm [shape: f32[8], index: 0, kind: input, shape index: {}]
  %s1 = inlined_call_operand.vmem [shape: f32[4,8], index: 1, kind: output, shape index: {}]
  $region1: #{tile.8} parent=0
    #allocation0 [shape = 'u8[512]{0}', space=vmem, size = 0x400, scoped, tag = 'operand span for operand 0']
    #allocation1 [shape = 's32[1]{0}', space=sflag, size = 0x4, scoped, tag = 'scoped memory for tile.8']
    %2 = vsyncpa [#allocation1], 0
    // Predicated region
    $region2: #{tile.8} parent=1 // pred_check
      _
    $region3: #{tile.8} parent=1 // pred_check_branch
      %4 = sbr.rel (0) target = $region5
    $region4: #{tile.8} parent=1 // pred_region
      %s6 = ssub.s32 16, 16
      %7 = vsyncadd [#allocation1], %s6
      %s9 = sshll.u32 [#allocation0], 4
      %s10 = int_to_ptr.vmem [resolvable:$true] %s9
      %12 = dma.hbm_to_vmem [thread:$0]  %s0, 16, %s10, [#allocation1]
    $region5: #{tile.8} parent=1 // pred_fallthru
      _
    // Predicated region
    $region6: #{tile.8} parent=1 // pred_check
      _
    $region7: #{tile.8} parent=1 // pred_check_branch
      %14 = sbr.rel (0) target = $region9
    $region8: #{tile.8} parent=1 // pred_region
      %15 = dma.done [#allocation1], 16
    $region9: #{tile.8} parent=1 // pred_fallthru
      _
    %v16 = vld [vmem:[#allocation0] ss:$0 sm:$0xff]
    %17 = vst [vmem:[%s1] sm:$0xf] %v16
    %18 = vsyncpa [#allocation1], 1

// kernel: tile.0
$region0: #{tile.0}
  %s0 = inlined_call_operand.vmem [shape: f32[4,8], index: 0, kind: input, shape index: {}]
  %s1 = inlined_call_operand.vmem [shape: f32[32,1], index: 1, kind: output, shape index: {}]
  $region1: #{tile.0} parent=0
    #allocation0 [shape = 'u8[4096]{0}', space=vmem, size = 0x1000, scoped, tag = 'scoped mem for input reshape']
    %s3 = sshllo.u32 0, 4
    %v4 = vld [vmem:[%s0] sm:%s3]
    %5 = vst [vmem:[#allocation0] sm:%s3] %v4
    %v6 = vld [vmem:[#allocation0] sm:$0xf]
    %vm7 = vcmask 7168
    %8 = vst.msk [vmem:[%s1] ss:$8 sm:$0xf] %vm7, %v6
    %v9 = vld [vmem:[#allocation0] sm:$0xf]
    %10 = vrot.lane.b32.xlu0 %v9, 127
    %v11 = vpop.permute.xlu0 %10
    %vm12 = vcmask 7168
    %s13 = scalar_lea.vmem %s1, 1
    %14 = vst.msk [vmem:[%s13] ss:$8 sm:$0xf] %vm12, %v11
    %v15 = vld [vmem:[#allocation0] sm:$0xf]
    %16 = vrot.lane.b32.xlu0 %v15, 126
    %v17 = vpop.permute.xlu0 %16
    %vm18 = vcmask 7168
    %s19 = scalar_lea.vmem %s1, 2
    %20 = vst.msk [vmem:[%s19] ss:$8 sm:$0xf] %vm18, %v17
    %v21 = vld [vmem:[#allocation0] sm:$0xf]
    %22 = vrot.lane.b32.xlu0 %v21, 125
    %v23 = vpop.permute.xlu0 %22
    %vm24 = vcmask 7168
    %s25 = scalar_lea.vmem %s1, 3
    %26 = vst.msk [vmem:[%s25] ss:$8 sm:$0xf] %vm24, %v23
    %v27 = vld [vmem:[#allocation0] sm:$0xf]
    %28 = vrot.lane.b32.xlu0 %v27, 124
    %v29 = vpop.permute.xlu0 %28
    %vm30 = vcmask 7168
    %s31 = scalar_lea.vmem %s1, 4
    %32 = vst.msk [vmem:[%s31] ss:$8 sm:$0xf] %vm30, %v29
    %v33 = vld [vmem:[#allocation0] sm:$0xf]
    %34 = vrot.lane.b32.xlu0 %v33, 123
    %v35 = vpop.permute.xlu0 %34
    %vm36 = vcmask 7168
    %s37 = scalar_lea.vmem %s1, 5
    %38 = vst.msk [vmem:[%s37] ss:$8 sm:$0xf] %vm36, %v35
    %v39 = vld [vmem:[#allocation0] sm:$0xf]
    %40 = vrot.lane.b32.xlu0 %v39, 122
    %v41 = vpop.permute.xlu0 %40
    %vm42 = vcmask 7168
    %s43 = scalar_lea.vmem %s1, 6
    %44 = vst.msk [vmem:[%s43] ss:$8 sm:$0xf] %vm42, %v41
    %v45 = vld [vmem:[#allocation0] sm:$0xf]
    %46 = vrot.lane.b32.xlu0 %v45, 121
    %v47 = vpop.permute.xlu0 %46
    %vm48 = vcmask 7168
    %s49 = scalar_lea.vmem %s1, 7
    %50 = vst.msk [vmem:[%s49] ss:$8 sm:$0xf] %vm48, %v47

// kernel: deconv_forward.1
$region0: #{deconv_forward.1}
  #allocation0 [shape = 'u32[]', space=smem, size = 0x4, offset = 0x4, fixed_abs, tag = 'smem constant byte address 0x4 - core index']
  #allocation1 [shape = 'u32[144,128]{1,0:T(1,128)}', space=vmem, size = 0x12000, scoped, tag = 'internal scratch']
  %s0 = inlined_call_operand.vmem [shape: f32[2,18,4,129], index: 0, kind: input, shape index: {}]
  %s1 = inlined_call_operand.vmem [shape: f32[4,32,4], index: 1, kind: input, shape index: {}]
  %s2 = inlined_call_operand.vmem [shape: f32[32,1], index: 2, kind: input, shape index: {}]
  %s3 = inlined_call_operand.vmem [shape: f32[2,17,32,128], index: 3, kind: output, shape index: {}]
  %s4 = sld [smem:[#allocation0]]
  $region45: #{deconv_forward.1} parent=0
    _
  %s6 = ssub.s32 1, %s4
  %s7 = scalar_select 0, %s6, %s4
  loop: start=0, step=1, limit=4
  $region2: #{deconv_forward.1} parent=0 // loop_pre_header
    _
  $region3: #{deconv_forward.1} parent=0 // loop_header
    %s9 = sphi 0, %s13
    %p10 = scmp.ge.s32.totalorder %s9, 4
    %s19 = sphi 0, %s21
    %s22 = sphi 0, %s19
    %s23 = sphi 0, %s22
    %s39 = sphi 0, %s23
    %s43 = sphi 0, %s43
    %s45 = sphi 0, %s43
    %s46 = sphi 0, %s45
    %s60 = sphi 0, %s46
    %s64 = sphi 0, %s64
    %s66 = sphi 0, %s64
    %s67 = sphi 0, %s66
    %s81 = sphi 0, %s67
    %s87 = sphi 0, %s89
    %s90 = sphi 0, %s87
    %s91 = sphi 0, %s90
    %s107 = sphi 0, %s91
  $region4: #{deconv_forward.1} parent=0 // loop_header_branch
    %12 = sbr.rel (%p10) target = $region8
  $region5: #{deconv_forward.1} parent=0 // loop_body
    %s14 = ssub.s32 %s9, 1
    %s15 = ssub.s32 %s9, 2
    %s16 = sadd.s32 %s9, 1
    %s17 = ssub.s32 %s9, %s16
    %p18 = scmp.eq.s32.totalorder %s17, 0
    %s20 = sadd.s32 %s19, 1
    %s21 = scalar_select %p18, %s19, %s20
    %p24 = pneg %p18
    %p25 = scmp.eq.s32.totalorder %s9, 1
    %p26 = por %p24, %p25
    %p27 = scmp.ne.s32.totalorder %s19, %s22
    %p28 = scmp.eq.s32.totalorder %s9, 0
    %p29 = por %p27, %p28
    %p30 = scmp.ne.s32.totalorder %s19, %s22
    %p31 = scmp.eq.s32.totalorder %s14, 1
    %p32 = por %p30, %p31
    %p33 = scmp.ne.s32.totalorder %s22, %s23
    %p34 = scmp.eq.s32.totalorder %s14, 0
    %p35 = por %p33, %p34
    %p36 = scmp.ne.s32.totalorder %s22, %s23
    %p37 = scmp.eq.s32.totalorder %s15, 1
    %p38 = por %p36, %p37
    %p40 = scmp.ne.s32.totalorder %s23, %s39
    %p41 = scmp.eq.s32.totalorder %s15, 0
    %p42 = por %p40, %p41
    %s44 = sadd.s32 %s43, 1
    %p47 = scmp.eq.s32.totalorder %s9, 1
    %p48 = scmp.ne.s32.totalorder %s43, %s45
    %p49 = scmp.eq.s32.totalorder %s9, 0
    %p50 = por %p48, %p49
    %p51 = scmp.ne.s32.totalorder %s43, %s45
    %p52 = scmp.eq.s32.totalorder %s14, 1
    %p53 = por %p51, %p52
    %p54 = scmp.ne.s32.totalorder %s45, %s46
    %p55 = scmp.eq.s32.totalorder %s14, 0
    %p56 = por %p54, %p55
    %p57 = scmp.ne.s32.totalorder %s45, %s46
    %p58 = scmp.eq.s32.totalorder %s15, 1
    %p59 = por %p57, %p58
    %p61 = scmp.ne.s32.totalorder %s46, %s60
    %p62 = scmp.eq.s32.totalorder %s15, 0
    %p63 = por %p61, %p62
    %s65 = sadd.s32 %s64, 1
    %p68 = scmp.eq.s32.totalorder %s9, 1
    %p69 = scmp.ne.s32.totalorder %s64, %s66
    %p70 = scmp.eq.s32.totalorder %s9, 0
    %p71 = por %p69, %p70
    %p72 = scmp.ne.s32.totalorder %s64, %s66
    %p73 = scmp.eq.s32.totalorder %s14, 1
    %p74 = por %p72, %p73
    %p75 = scmp.ne.s32.totalorder %s66, %s67
    %p76 = scmp.eq.s32.totalorder %s14, 0
    %p77 = por %p75, %p76
    %p78 = scmp.ne.s32.totalorder %s66, %s67
    %p79 = scmp.eq.s32.totalorder %s15, 1
    %p80 = por %p78, %p79
    %p82 = scmp.ne.s32.totalorder %s67, %s81
    %p83 = scmp.eq.s32.totalorder %s15, 0
    %p84 = por %p82, %p83
    %s85 = ssub.s32 %s9, %s16
    %p86 = scmp.eq.s32.totalorder %s85, 0
    %s88 = sadd.s32 %s87, 1
    %s89 = scalar_select %p86, %s87, %s88
    %p92 = pneg %p86
    %p93 = scmp.eq.s32.totalorder %s9, 1
    %p94 = por %p92, %p93
    %p95 = scmp.ne.s32.totalorder %s87, %s90
    %p96 = scmp.eq.s32.totalorder %s9, 0
    %p97 = por %p95, %p96
    %p98 = scmp.ne.s32.totalorder %s87, %s90
    %p99 = scmp.eq.s32.totalorder %s14, 1
    %p100 = por %p98, %p99
    %p101 = scmp.ne.s32.totalorder %s90, %s91
    %p102 = scmp.eq.s32.totalorder %s14, 0
    %p103 = por %p101, %p102
    %p104 = scmp.ne.s32.totalorder %s90, %s91
    %p105 = scmp.eq.s32.totalorder %s15, 1
    %p106 = por %p104, %p105
    %p108 = scmp.ne.s32.totalorder %s91, %s107
    %p109 = scmp.eq.s32.totalorder %s15, 0
    %p110 = por %p108, %p109
    %p111 = scmp.le.s32.totalorder 1, %s9
    %p112 = scmp.lt.s32.totalorder %s9, 3
    %p113 = pnand %p111, %p112
    %p114 = pneg %p113
    // Predicated region
    $region9: #{deconv_forward.1} parent=5 // pred_check
      _
    $region10: #{deconv_forward.1} parent=5 // pred_check_branch
      %116 = sbr.rel (%p113) target = $region12
    $region11: #{deconv_forward.1} parent=5 // pred_region
      %s117 = ssub.s32 %s9, 1
      // Predicated region
      $region13: #{deconv_forward.1} parent=11 // pred_check
        %p118 = pneg %p56
      $region14: #{deconv_forward.1} parent=11 // pred_check_branch
        %120 = sbr.rel (%p118) target = $region16
      $region15: #{deconv_forward.1} parent=11 // pred_region
        _
      $region16: #{deconv_forward.1} parent=11 // pred_fallthru
        _
      // Predicated region
      $region17: #{deconv_forward.1} parent=11 // pred_check
        %p121 = pneg %p77
      $region18: #{deconv_forward.1} parent=11 // pred_check_branch
        %123 = sbr.rel (%p121) target = $region20
      $region19: #{deconv_forward.1} parent=11 // pred_region
        _
      $region20: #{deconv_forward.1} parent=11 // pred_fallthru
        _
    $region12: #{deconv_forward.1} parent=5 // pred_fallthru
      _
    %p124 = scmp.lt.s32.totalorder %s9, 2
    // Predicated region
    $region21: #{deconv_forward.1} parent=5 // pred_check
      %p125 = pneg %p124
    $region22: #{deconv_forward.1} parent=5 // pred_check_branch
      %127 = sbr.rel (%p125) target = $region24
    $region23: #{deconv_forward.1} parent=5 // pred_region
      // Predicated region
      $region25: #{deconv_forward.1} parent=23 // pred_check
        %p128 = pneg %p29
      $region26: #{deconv_forward.1} parent=23 // pred_check_branch
        %130 = sbr.rel (%p128) target = $region28
      $region27: #{deconv_forward.1} parent=23 // pred_region
        %p131 = scmp.lt.s32.totalorder %s9, 1
        %s132 = scalar_select %p131, %s9, 1
        %s133 = smul.addr %s132, 36
        %s134 = smul.addr %s133, 4
        %s135 = scalar_lea.vmem %s0, %s134
      $region28: #{deconv_forward.1} parent=23 // pred_fallthru
        _
    $region24: #{deconv_forward.1} parent=5 // pred_fallthru
      _
    %p136 = scmp.le.s32.totalorder 1, %s9
    %p137 = scmp.lt.s32.totalorder %s9, 3
    %p138 = pnand %p136, %p137
    %p139 = pneg %p138
    // Predicated region
    $region29: #{deconv_forward.1} parent=5 // pred_check
      _
    $region30: #{deconv_forward.1} parent=5 // pred_check_branch
      %141 = sbr.rel (%p138) target = $region32
    $region31: #{deconv_forward.1} parent=5 // pred_region
      %s142 = ssub.s32 %s9, 1
      %p143 = scmp.lt.s32.totalorder %s14, 1
      %s144 = scalar_select %p143, %s14, 1
      %s145 = smul.addr %s144, 36
      %s146 = smul.addr %s145, 4
      %s147 = scalar_lea.vmem %s0, %s146
      %p148 = pneg %p35
      %p149 = pneg %p32
      %p150 = pneg %p56
      %p151 = pneg %p53
      %p152 = pneg %p77
      %p153 = pneg %p74
      %p154 = pneg %p103
      %p155 = pneg %p100
      %p156 = scmp.lt.s32.totalorder %s14, 1
      %s157 = scalar_select %p156, %s14, 1
      %s158 = smul.addr %s157, 68
      %s159 = smul.addr %s158, 8
      %s160 = scalar_lea.vmem %s3, %s159
      %p161 = scmp.lt.s32.totalorder %s14, 1
      %s162 = scalar_select %p161, %s14, 1
      %s163 = smul.addr %s162, 36
      %s164 = smul.addr %s163, 4
      %s165 = scalar_lea.vmem %s0, %s164
      %p166 = scmp.lt.s32.totalorder %s14, 1
      %s167 = scalar_select %p166, %s14, 1
      %s168 = smul.addr %s167, 68
      %s169 = smul.addr %s168, 8
      %s170 = scalar_lea.vmem %s3, %s169
      %v171 = vld [vmem:[%s1] sm:$0xff]
      %v172 = vld [vmem:[%s1 + $0x8] sm:$0xff]
      %v173 = vld [vmem:[%s1 + $0x10] sm:$0xff]
      %v174 = vld [vmem:[%s1 + $0x18] sm:$0xff]
      %s175 = scalar_lea.vmem %s1, 32
      %v176 = vld [vmem:[%s175] sm:$0xff]
      %v177 = vld [vmem:[%s175 + $0x8] sm:$0xff]
      %v178 = vld [vmem:[%s175 + $0x10] sm:$0xff]
      %v179 = vld [vmem:[%s175 + $0x18] sm:$0xff]
      %s180 = scalar_lea.vmem %s1, 64
      %v181 = vld [vmem:[%s180] sm:$0xff]
      %v182 = vld [vmem:[%s180 + $0x8] sm:$0xff]
      %v183 = vld [vmem:[%s180 + $0x10] sm:$0xff]
      %v184 = vld [vmem:[%s180 + $0x18] sm:$0xff]
      %s185 = scalar_lea.vmem %s1, 96
      %v186 = vld [vmem:[%s185] sm:$0xff]
      %v187 = vld [vmem:[%s185 + $0x8] sm:$0xff]
      %v188 = vld [vmem:[%s185 + $0x10] sm:$0xff]
      %v189 = vld [vmem:[%s185 + $0x18] sm:$0xff]
      %v190 = vld [vmem:[%s2] sm:$0xff]
      %v191 = vld [vmem:[%s2 + $0x8] sm:$0xff]
      %v192 = vld [vmem:[%s2 + $0x10] sm:$0xff]
      %v193 = vld [vmem:[%s2 + $0x18] sm:$0xff]
      %v194 = vld [vmem:[%s165] sm:$0xf]
      %v195 = vld [vmem:[%s165] sm:$0xff]
      %v197 = vcombine.high %v195, %v195
      %198 = vrot.lane.b32.xlu0 %v195, 127
      %v199 = vpop.permute.xlu0 %198
      %200 = vrot.lane.b32.xlu0 %v197, 127
      %v201 = vpop.permute.xlu0 %200
      %vm202 = vcmask 1039360
      %v203 = vsel %vm202, %v199, %v201
      %vm204 = vcmask 31744
      %v206 = vsel %vm204, %v176, 0
      %v209 = vsel %vm204, %v177, 0
      %v212 = vsel %vm204, %v178, 0
      %v215 = vsel %vm204, %v179, 0
      %vm217 = vcmask 1043456
      %v218 = vsel %vm217, %v203, 0
      %220 = vmatprep.subr.mxu0 0.0
      %221 = vmatpush1.msra.mxu0 %v218
      %222 = vmatprep.subr.mxu0 0.0
      %223 = vmatpush1.msra.mxu0 0.0
      %224 = vmatprep.subr.mxu0 0.0
      %225 = vmatpush1.msra.mxu0 0.0
      %226 = vmatprep.subr.mxu0 0.0
      %227 = vmatpush1.msra.mxu0 0.0
      %228 = vmatprep.subr.mxu0 0.0
      %229 = vmatpush1.msra.mxu0 0.0
      %230 = vmatprep.subr.mxu0 0.0
      %231 = vmatpush1.msra.mxu0 0.0
      %232 = vmatprep.subr.mxu0 0.0
      %233 = vmatpush1.msra.mxu0 0.0
      %234 = vmatprep.subr.mxu0 0.0
      %235 = vmatpush1.msra.mxu0 0.0
      %236 = vmatprep.subr.mxu0 0.0
      %237 = vmatpush1.msra.mxu0 0.0
      %238 = vmatprep.subr.mxu0 0.0
      %239 = vmatpush1.msra.mxu0 0.0
      %240 = vmatprep.subr.mxu0 0.0
      %241 = vmatpush1.msra.mxu0 0.0
      %242 = vmatprep.subr.mxu0 0.0
      %243 = vmatpush1.msra.mxu0 0.0
      %244 = vmatprep.subr.mxu0 0.0
      %245 = vmatpush1.msra.mxu0 0.0
      %246 = vmatprep.subr.mxu0 0.0
      %247 = vmatpush1.msra.mxu0 0.0
      %248 = vmatprep.subr.mxu0 0.0
      %249 = vmatpush1.msra.mxu0 0.0
      %250 = vmatprep.subr.mxu0 0.0
      %251 = vmatpush1.msra.mxu0 0.0
      %252 = vmatprep.subr.mxu0 0.0
      %253 = vmatpush1.msra.mxu0 0.0
      %254 = vmatprep.subr.mxu0 0.0
      %255 = vmatpush1.msra.mxu0 0.0
      %256 = vmatprep.subr.mxu0 0.0
      %257 = vmatpush1.msra.mxu0 0.0
      %258 = vmatprep.subr.mxu0 0.0
      %259 = vmatpush1.msra.mxu0 0.0
      %260 = vmatprep.subr.mxu0 0.0
      %261 = vmatpush1.msra.mxu0 0.0
      %262 = vmatprep.subr.mxu0 0.0
      %263 = vmatpush1.msra.mxu0 0.0
      %264 = vmatprep.subr.mxu0 0.0
      %265 = vmatpush1.msra.mxu0 0.0
      %266 = vmatprep.subr.mxu0 0.0
      %267 = vmatpush1.msra.mxu0 0.0
      %268 = vmatprep.subr.mxu0 0.0
      %269 = vmatpush1.msra.mxu0 0.0
      %270 = vmatprep.subr.mxu0 0.0
      %271 = vmatpush1.msra.mxu0 0.0
      %272 = vmatprep.subr.mxu0 0.0
      %273 = vmatpush1.msra.mxu0 0.0
      %274 = vmatprep.subr.mxu0 0.0
      %275 = vmatpush1.msra.mxu0 0.0
      %276 = vmatprep.subr.mxu0 0.0
      %277 = vmatpush1.msra.mxu0 0.0
      %278 = vmatprep.subr.mxu0 0.0
      %279 = vmatpush1.msra.mxu0 0.0
      %280 = vmatprep.subr.mxu0 0.0
      %281 = vmatpush1.msra.mxu0 0.0
      %282 = vmatprep.subr.mxu0 0.0
      %283 = vmatpush1.msra.mxu0 0.0
      %284 = vmatprep.mubr.f32.mxu0 0.0
      %285 = vmatmul.mubr.f32.gmra.mrb[0].mxu0 %v206
      %v286 = vpop.f32.mrb[0].mxu0
      %v287 = vadd.f32 0.0, %v286
      %v288 = vpop.f32.mrb[0].mxu0
      %289 = vmatprep.mubr.f32.mxu0 0.0
      %290 = vmatmul.mubr.f32.gmra.mrb[0].mxu0 %v209
      %v291 = vpop.f32.mrb[0].mxu0
      %v292 = vadd.f32 0.0, %v291
      %v293 = vpop.f32.mrb[0].mxu0
      %294 = vmatprep.mubr.f32.mxu0 0.0
      %295 = vmatmul.mubr.f32.gmra.mrb[0].mxu0 %v212
      %v296 = vpop.f32.mrb[0].mxu0
      %v297 = vadd.f32 0.0, %v296
      %v298 = vpop.f32.mrb[0].mxu0
      %299 = vmatprep.mubr.f32.mxu0 0.0
      %300 = vmatmul.mubr.f32.gmra.mrb[0].mxu0 %v215
      %v301 = vpop.f32.mrb[0].mxu0
      %v302 = vadd.f32 0.0, %v301
      %v303 = vpop.f32.mrb[0].mxu0
      %304 = vdwg.mxu0
      %v306 = vsel %vm204, %v171, 0
      %v309 = vsel %vm204, %v172, 0
      %v312 = vsel %vm204, %v173, 0
      %v315 = vsel %vm204, %v174, 0
      %v318 = vsel %vm217, %v194, 0
      %320 = vmatprep.subr.mxu0 0.0
      %321 = vmatpush1.msra.mxu0 %v318
      %322 = vmatprep.subr.mxu0 0.0
      %323 = vmatpush1.msra.mxu0 0.0
      %324 = vmatprep.subr.mxu0 0.0
      %325 = vmatpush1.msra.mxu0 0.0
      %326 = vmatprep.subr.mxu0 0.0
      %327 = vmatpush1.msra.mxu0 0.0
      %328 = vmatprep.subr.mxu0 0.0
      %329 = vmatpush1.msra.mxu0 0.0
      %330 = vmatprep.subr.mxu0 0.0
      %331 = vmatpush1.msra.mxu0 0.0
      %332 = vmatprep.subr.mxu0 0.0
      %333 = vmatpush1.msra.mxu0 0.0
      %334 = vmatprep.subr.mxu0 0.0
      %335 = vmatpush1.msra.mxu0 0.0
      %336 = vmatprep.subr.mxu0 0.0
      %337 = vmatpush1.msra.mxu0 0.0
      %338 = vmatprep.subr.mxu0 0.0
      %339 = vmatpush1.msra.mxu0 0.0
      %340 = vmatprep.subr.mxu0 0.0
      %341 = vmatpush1.msra.mxu0 0.0
      %342 = vmatprep.subr.mxu0 0.0
      %343 = vmatpush1.msra.mxu0 0.0
      %344 = vmatprep.subr.mxu0 0.0
      %345 = vmatpush1.msra.mxu0 0.0
      %346 = vmatprep.subr.mxu0 0.0
      %347 = vmatpush1.msra.mxu0 0.0
      %348 = vmatprep.subr.mxu0 0.0
      %349 = vmatpush1.msra.mxu0 0.0
      %350 = vmatprep.subr.mxu0 0.0
      %351 = vmatpush1.msra.mxu0 0.0
      %352 = vmatprep.subr.mxu0 0.0
      %353 = vmatpush1.msra.mxu0 0.0
      %354 = vmatprep.subr.mxu0 0.0
      %355 = vmatpush1.msra.mxu0 0.0
      %356 = vmatprep.subr.mxu0 0.0
      %357 = vmatpush1.msra.mxu0 0.0
      %358 = vmatprep.subr.mxu0 0.0
      %359 = vmatpush1.msra.mxu0 0.0
      %360 = vmatprep.subr.mxu0 0.0
      %361 = vmatpush1.msra.mxu0 0.0
      %362 = vmatprep.subr.mxu0 0.0
      %363 = vmatpush1.msra.mxu0 0.0
      %364 = vmatprep.subr.mxu0 0.0
      %365 = vmatpush1.msra.mxu0 0.0
      %366 = vmatprep.subr.mxu0 0.0
      %367 = vmatpush1.msra.mxu0 0.0
      %368 = vmatprep.subr.mxu0 0.0
      %369 = vmatpush1.msra.mxu0 0.0
      %370 = vmatprep.subr.mxu0 0.0
      %371 = vmatpush1.msra.mxu0 0.0
      %372 = vmatprep.subr.mxu0 0.0
      %373 = vmatpush1.msra.mxu0 0.0
      %374 = vmatprep.subr.mxu0 0.0
      %375 = vmatpush1.msra.mxu0 0.0
      %376 = vmatprep.subr.mxu0 0.0
      %377 = vmatpush1.msra.mxu0 0.0
      %378 = vmatprep.subr.mxu0 0.0
      %379 = vmatpush1.msra.mxu0 0.0
      %380 = vmatprep.subr.mxu0 0.0
      %381 = vmatpush1.msra.mxu0 0.0
      %382 = vmatprep.subr.mxu0 0.0
      %383 = vmatpush1.msra.mxu0 0.0
      %384 = vmatprep.mubr.f32.mxu0 0.0
      %385 = vmatmul.mubr.f32.gmra.mrb[0].mxu0 %v306
      %v386 = vpop.f32.mrb[0].mxu0
      %v387 = vadd.f32 %v287, %v386
      %v388 = vpop.f32.mrb[0].mxu0
      %389 = vmatprep.mubr.f32.mxu0 0.0
      %390 = vmatmul.mubr.f32.gmra.mrb[0].mxu0 %v309
      %v391 = vpop.f32.mrb[0].mxu0
      %v392 = vadd.f32 %v292, %v391
      %v393 = vpop.f32.mrb[0].mxu0
      %394 = vmatprep.mubr.f32.mxu0 0.0
      %395 = vmatmul.mubr.f32.gmra.mrb[0].mxu0 %v312
      %v396 = vpop.f32.mrb[0].mxu0
      %v397 = vadd.f32 %v297, %v396
      %v398 = vpop.f32.mrb[0].mxu0
      %399 = vmatprep.mubr.f32.mxu0 0.0
      %400 = vmatmul.mubr.f32.gmra.mrb[0].mxu0 %v315
      %v401 = vpop.f32.mrb[0].mxu0
      %v402 = vadd.f32 %v302, %v401
      %v403 = vpop.f32.mrb[0].mxu0
      %404 = vdwg.mxu0
      %s405 = scalar_lea.vmem %s165, 8
      %v406 = vld [vmem:[%s405] sm:$0xf]
      %v408 = vsel %vm204, %v181, 0
      %v411 = vsel %vm204, %v182, 0
      %v414 = vsel %vm204, %v183, 0
      %v417 = vsel %vm204, %v184, 0
      %v420 = vsel %vm217, %v406, 0
      %422 = vmatprep.subr.mxu0 0.0
      %423 = vmatpush1.msra.mxu0 %v420
      %424 = vmatprep.subr.mxu0 0.0
      %425 = vmatpush1.msra.mxu0 0.0
      %426 = vmatprep.subr.mxu0 0.0
      %427 = vmatpush1.msra.mxu0 0.0
      %428 = vmatprep.subr.mxu0 0.0
      %429 = vmatpush1.msra.mxu0 0.0
      %430 = vmatprep.subr.mxu0 0.0
      %431 = vmatpush1.msra.mxu0 0.0
      %432 = vmatprep.subr.mxu0 0.0
      %433 = vmatpush1.msra.mxu0 0.0
      %434 = vmatprep.subr.mxu0 0.0
      %435 = vmatpush1.msra.mxu0 0.0
      %436 = vmatprep.subr.mxu0 0.0
      %437 = vmatpush1.msra.mxu0 0.0
      %438 = vmatprep.subr.mxu0 0.0
      %439 = vmatpush1.msra.mxu0 0.0
      %440 = vmatprep.subr.mxu0 0.0
      %441 = vmatpush1.msra.mxu0 0.0
      %442 = vmatprep.subr.mxu0 0.0
      %443 = vmatpush1.msra.mxu0 0.0
      %444 = vmatprep.subr.mxu0 0.0
      %445 = vmatpush1.msra.mxu0 0.0
      %446 = vmatprep.subr.mxu0 0.0
      %447 = vmatpush1.msra.mxu0 0.0
      %448 = vmatprep.subr.mxu0 0.0
      %449 = vmatpush1.msra.mxu0 0.0
      %450 = vmatprep.subr.mxu0 0.0
      %451 = vmatpush1.msra.mxu0 0.0
      %452 = vmatprep.subr.mxu0 0.0
      %453 = vmatpush1.msra.mxu0 0.0
      %454 = vmatprep.subr.mxu0 0.0
      %455 = vmatpush1.msra.mxu0 0.0
      %456 = vmatprep.subr.mxu0 0.0
      %457 = vmatpush1.msra.mxu0 0.0
      %458 = vmatprep.subr.mxu0 0.0
      %459 = vmatpush1.msra.mxu0 0.0
      %460 = vmatprep.subr.mxu0 0.0
      %461 = vmatpush1.msra.mxu0 0.0
      %462 = vmatprep.subr.mxu0 0.0
      %463 = vmatpush1.msra.mxu0 0.0
      %464 = vmatprep.subr.mxu0 0.0
      %465 = vmatpush1.msra.mxu0 0.0
      %466 = vmatprep.subr.mxu0 0.0
      %467 = vmatpush1.msra.mxu0 0.0
      %468 = vmatprep.subr.mxu0 0.0
      %469 = vmatpush1.msra.mxu0 0.0
      %470 = vmatprep.subr.mxu0 0.0
      %471 = vmatpush1.msra.mxu0 0.0
      %472 = vmatprep.subr.mxu0 0.0
      %473 = vmatpush1.msra.mxu0 0.0
      %474 = vmatprep.subr.mxu0 0.0
      %475 = vmatpush1.msra.mxu0 0.0
      %476 = vmatprep.subr.mxu0 0.0
      %477 = vmatpush1.msra.mxu0 0.0
      %478 = vmatprep.subr.mxu0 0.0
      %479 = vmatpush1.msra.mxu0 0.0
      %480 = vmatprep.subr.mxu0 0.0
      %481 = vmatpush1.msra.mxu0 0.0
      %482 = vmatprep.subr.mxu0 0.0
      %483 = vmatpush1.msra.mxu0 0.0
      %484 = vmatprep.subr.mxu0 0.0
      %485 = vmatpush1.msra.mxu0 0.0
      %486 = vmatprep.mubr.f32.mxu0 0.0
      %487 = vmatmul.mubr.f32.gmra.mrb[0].mxu0 %v408
      %v488 = vpop.f32.mrb[0].mxu0
      %v489 = vadd.f32 0.0, %v488
      %v490 = vpop.f32.mrb[0].mxu0
      %491 = vmatprep.mubr.f32.mxu0 0.0
      %492 = vmatmul.mubr.f32.gmra.mrb[0].mxu0 %v411
      %v493 = vpop.f32.mrb[0].mxu0
      %v494 = vadd.f32 0.0, %v493
      %v495 = vpop.f32.mrb[0].mxu0
      %496 = vmatprep.mubr.f32.mxu0 0.0
      %497 = vmatmul.mubr.f32.gmra.mrb[0].mxu0 %v414
      %v498 = vpop.f32.mrb[0].mxu0
      %v499 = vadd.f32 0.0, %v498
      %v500 = vpop.f32.mrb[0].mxu0
      %501 = vmatprep.mubr.f32.mxu0 0.0
      %502 = vmatmul.mubr.f32.gmra.mrb[0].mxu0 %v417
      %v503 = vpop.f32.mrb[0].mxu0
      %v504 = vadd.f32 0.0, %v503
      %v505 = vpop.f32.mrb[0].mxu0
      %506 = vdwg.mxu0
      %v507 = vadd.f32 %v387, %v489
      %v508 = vadd.f32 %v392, %v494
      %v509 = vadd.f32 %v397, %v499
      %v510 = vadd.f32 %v402, %v504
      %v511 = vld [vmem:[%s405] sm:$0xff]
      %v513 = vcombine.high %v511, %v511
      %514 = vrot.lane.b32.xlu0 %v511, 127
      %v515 = vpop.permute.xlu0 %514
      %516 = vrot.lane.b32.xlu0 %v513, 127
      %v517 = vpop.permute.xlu0 %516
      %v518 = vsel %vm202, %v515, %v517
      %v520 = vsel %vm204, %v186, 0
      %v523 = vsel %vm204, %v187, 0
      %v526 = vsel %vm204, %v188, 0
      %v529 = vsel %vm204, %v189, 0
      %v531 = vsel %vm217, %v518, 0
      %533 = vmatprep.subr.mxu0 0.0
      %534 = vmatpush1.msra.mxu0 %v531
      %535 = vmatprep.subr.mxu0 0.0
      %536 = vmatpush1.msra.mxu0 0.0
      %537 = vmatprep.subr.mxu0 0.0
      %538 = vmatpush1.msra.mxu0 0.0
      %539 = vmatprep.subr.mxu0 0.0
      %540 = vmatpush1.msra.mxu0 0.0
      %541 = vmatprep.subr.mxu0 0.0
      %542 = vmatpush1.msra.mxu0 0.0
      %543 = vmatprep.subr.mxu0 0.0
      %544 = vmatpush1.msra.mxu0 0.0
      %545 = vmatprep.subr.mxu0 0.0
      %546 = vmatpush1.msra.mxu0 0.0
      %547 = vmatprep.subr.mxu0 0.0
      %548 = vmatpush1.msra.mxu0 0.0
      %549 = vmatprep.subr.mxu0 0.0
      %550 = vmatpush1.msra.mxu0 0.0
      %551 = vmatprep.subr.mxu0 0.0
      %552 = vmatpush1.msra.mxu0 0.0
      %553 = vmatprep.subr.mxu0 0.0
      %554 = vmatpush1.msra.mxu0 0.0
      %555 = vmatprep.subr.mxu0 0.0
      %556 = vmatpush1.msra.mxu0 0.0
      %557 = vmatprep.subr.mxu0 0.0
      %558 = vmatpush1.msra.mxu0 0.0
      %559 = vmatprep.subr.mxu0 0.0
      %560 = vmatpush1.msra.mxu0 0.0
      %561 = vmatprep.subr.mxu0 0.0
      %562 = vmatpush1.msra.mxu0 0.0
      %563 = vmatprep.subr.mxu0 0.0
      %564 = vmatpush1.msra.mxu0 0.0
      %565 = vmatprep.subr.mxu0 0.0
      %566 = vmatpush1.msra.mxu0 0.0
      %567 = vmatprep.subr.mxu0 0.0
      %568 = vmatpush1.msra.mxu0 0.0
      %569 = vmatprep.subr.mxu0 0.0
      %570 = vmatpush1.msra.mxu0 0.0
      %571 = vmatprep.subr.mxu0 0.0
      %572 = vmatpush1.msra.mxu0 0.0
      %573 = vmatprep.subr.mxu0 0.0
      %574 = vmatpush1.msra.mxu0 0.0
      %575 = vmatprep.subr.mxu0 0.0
      %576 = vmatpush1.msra.mxu0 0.0
      %577 = vmatprep.subr.mxu0 0.0
      %578 = vmatpush1.msra.mxu0 0.0
      %579 = vmatprep.subr.mxu0 0.0
      %580 = vmatpush1.msra.mxu0 0.0
      %581 = vmatprep.subr.mxu0 0.0
      %582 = vmatpush1.msra.mxu0 0.0
      %583 = vmatprep.subr.mxu0 0.0
      %584 = vmatpush1.msra.mxu0 0.0
      %585 = vmatprep.subr.mxu0 0.0
      %586 = vmatpush1.msra.mxu0 0.0
      %587 = vmatprep.subr.mxu0 0.0
      %588 = vmatpush1.msra.mxu0 0.0
      %589 = vmatprep.subr.mxu0 0.0
      %590 = vmatpush1.msra.mxu0 0.0
      %591 = vmatprep.subr.mxu0 0.0
      %592 = vmatpush1.msra.mxu0 0.0
      %593 = vmatprep.subr.mxu0 0.0
      %594 = vmatpush1.msra.mxu0 0.0
      %595 = vmatprep.subr.mxu0 0.0
      %596 = vmatpush1.msra.mxu0 0.0
      %597 = vmatprep.mubr.f32.mxu0 0.0
      %598 = vmatmul.mubr.f32.gmra.mrb[0].mxu0 %v520
      %v599 = vpop.f32.mrb[0].mxu0
      %v600 = vadd.f32 0.0, %v599
      %v601 = vpop.f32.mrb[0].mxu0
      %602 = vmatprep.mubr.f32.mxu0 0.0
      %603 = vmatmul.mubr.f32.gmra.mrb[0].mxu0 %v523
      %v604 = vpop.f32.mrb[0].mxu0
      %v605 = vadd.f32 0.0, %v604
      %v606 = vpop.f32.mrb[0].mxu0
      %607 = vmatprep.mubr.f32.mxu0 0.0
      %608 = vmatmul.mubr.f32.gmra.mrb[0].mxu0 %v526
      %v609 = vpop.f32.mrb[0].mxu0
      %v610 = vadd.f32 0.0, %v609
      %v611 = vpop.f32.mrb[0].mxu0
      %612 = vmatprep.mubr.f32.mxu0 0.0
      %613 = vmatmul.mubr.f32.gmra.mrb[0].mxu0 %v529
      %v614 = vpop.f32.mrb[0].mxu0
      %v615 = vadd.f32 0.0, %v614
      %v616 = vpop.f32.mrb[0].mxu0
      %617 = vdwg.mxu0
      %v618 = vadd.f32 %v507, %v600
      %v619 = vadd.f32 %v508, %v605
      %v620 = vadd.f32 %v509, %v610
      %v621 = vadd.f32 %v510, %v615
      %623 = vset.pattern.permute.xlu0 0
      %624 = vperm.xlu0 %623, %v190
      %v625 = vpop.permute.xlu0 %624
      %628 = vset.pattern.permute.xlu0 0
      %629 = vperm.xlu0 %628, %v191
      %v630 = vpop.permute.xlu0 %629
      %633 = vset.pattern.permute.xlu0 0
      %634 = vperm.xlu0 %633, %v192
      %v635 = vpop.permute.xlu0 %634
      %638 = vset.pattern.permute.xlu0 0
      %639 = vperm.xlu0 %638, %v193
      %v640 = vpop.permute.xlu0 %639
      %v642 = vadd.f32 %v618, %v625
      %v643 = vadd.f32 %v619, %v630
      %v644 = vadd.f32 %v620, %v635
      %v645 = vadd.f32 %v621, %v640
      %646 = vst [vmem:[%s170] sm:$0xff] %v642
      %647 = vst [vmem:[%s170 + $0x8] sm:$0xff] %v643
      %648 = vst [vmem:[%s170 + $0x10] sm:$0xff] %v644
      %649 = vst [vmem:[%s170 + $0x18] sm:$0xff] %v645
      %v650 = vld [vmem:[%s405] sm:$0xf]
      %v651 = vld [vmem:[%s405] sm:$0xff]
      %v653 = vcombine.high %v651, %v651
      %654 = vrot.lane.b32.xlu0 %v651, 127
      %v655 = vpop.permute.xlu0 %654
      %656 = vrot.lane.b32.xlu0 %v653, 127
      %v657 = vpop.permute.xlu0 %656
      %v658 = vsel %vm202, %v655, %v657
      %v659 = vsel %vm217, %v658, 0
      %661 = vmatprep.subr.mxu0 0.0
      %662 = vmatpush1.msra.mxu0 %v659
      %663 = vmatprep.subr.mxu0 0.0
      %664 = vmatpush1.msra.mxu0 0.0
      %665 = vmatprep.subr.mxu0 0.0
      %666 = vmatpush1.msra.mxu0 0.0
      %667 = vmatprep.subr.mxu0 0.0
      %668 = vmatpush1.msra.mxu0 0.0
      %669 = vmatprep.subr.mxu0 0.0
      %670 = vmatpush1.msra.mxu0 0.0
      %671 = vmatprep.subr.mxu0 0.0
      %672 = vmatpush1.msra.mxu0 0.0
      %673 = vmatprep.subr.mxu0 0.0
      %674 = vmatpush1.msra.mxu0 0.0
      %675 = vmatprep.subr.mxu0 0.0
      %676 = vmatpush1.msra.mxu0 0.0
      %677 = vmatprep.subr.mxu0 0.0
      %678 = vmatpush1.msra.mxu0 0.0
      %679 = vmatprep.subr.mxu0 0.0
      %680 = vmatpush1.msra.mxu0 0.0
      %681 = vmatprep.subr.mxu0 0.0
      %682 = vmatpush1.msra.mxu0 0.0
      %683 = vmatprep.subr.mxu0 0.0
      %684 = vmatpush1.msra.mxu0 0.0
      %685 = vmatprep.subr.mxu0 0.0
      %686 = vmatpush1.msra.mxu0 0.0
      %687 = vmatprep.subr.mxu0 0.0
      %688 = vmatpush1.msra.mxu0 0.0
      %689 = vmatprep.subr.mxu0 0.0
      %690 = vmatpush1.msra.mxu0 0.0
      %691 = vmatprep.subr.mxu0 0.0
      %692 = vmatpush1.msra.mxu0 0.0
      %693 = vmatprep.subr.mxu0 0.0
      %694 = vmatpush1.msra.mxu0 0.0
      %695 = vmatprep.subr.mxu0 0.0
      %696 = vmatpush1.msra.mxu0 0.0
      %697 = vmatprep.subr.mxu0 0.0
      %698 = vmatpush1.msra.mxu0 0.0
      %699 = vmatprep.subr.mxu0 0.0
      %700 = vmatpush1.msra.mxu0 0.0
      %701 = vmatprep.subr.mxu0 0.0
      %702 = vmatpush1.msra.mxu0 0.0
      %703 = vmatprep.subr.mxu0 0.0
      %704 = vmatpush1.msra.mxu0 0.0
      %705 = vmatprep.subr.mxu0 0.0
      %706 = vmatpush1.msra.mxu0 0.0
      %707 = vmatprep.subr.mxu0 0.0
      %708 = vmatpush1.msra.mxu0 0.0
      %709 = vmatprep.subr.mxu0 0.0
      %710 = vmatpush1.msra.mxu0 0.0
      %711 = vmatprep.subr.mxu0 0.0
      %712 = vmatpush1.msra.mxu0 0.0
      %713 = vmatprep.subr.mxu0 0.0
      %714 = vmatpush1.msra.mxu0 0.0
      %715 = vmatprep.subr.mxu0 0.0
      %716 = vmatpush1.msra.mxu0 0.0
      %717 = vmatprep.subr.mxu0 0.0
      %718 = vmatpush1.msra.mxu0 0.0
      %719 = vmatprep.subr.mxu0 0.0
      %720 = vmatpush1.msra.mxu0 0.0
      %721 = vmatprep.subr.mxu0 0.0
      %722 = vmatpush1.msra.mxu0 0.0
      %723 = vmatprep.subr.mxu0 0.0
      %724 = vmatpush1.msra.mxu0 0.0
      %725 = vmatprep.mubr.f32.mxu0 0.0
      %726 = vmatmul.mubr.f32.gmra.mrb[0].mxu0 %v206
      %v727 = vpop.f32.mrb[0].mxu0
      %v728 = vadd.f32 0.0, %v727
      %v729 = vpop.f32.mrb[0].mxu0
      %730 = vmatprep.mubr.f32.mxu0 0.0
      %731 = vmatmul.mubr.f32.gmra.mrb[0].mxu0 %v209
      %v732 = vpop.f32.mrb[0].mxu0
      %v733 = vadd.f32 0.0, %v732
      %v734 = vpop.f32.mrb[0].mxu0
      %735 = vmatprep.mubr.f32.mxu0 0.0
      %736 = vmatmul.mubr.f32.gmra.mrb[0].mxu0 %v212
      %v737 = vpop.f32.mrb[0].mxu0
      %v738 = vadd.f32 0.0, %v737
      %v739 = vpop.f32.mrb[0].mxu0
      %740 = vmatprep.mubr.f32.mxu0 0.0
      %741 = vmatmul.mubr.f32.gmra.mrb[0].mxu0 %v215
      %v742 = vpop.f32.mrb[0].mxu0
      %v743 = vadd.f32 0.0, %v742
      %v744 = vpop.f32.mrb[0].mxu0
      %745 = vdwg.mxu0
      %v747 = vsel %vm217, %v650, 0
      %749 = vmatprep.subr.mxu0 0.0
      %750 = vmatpush1.msra.mxu0 %v747
      %751 = vmatprep.subr.mxu0 0.0
      %752 = vmatpush1.msra.mxu0 0.0
      %753 = vmatprep.subr.mxu0 0.0
      %754 = vmatpush1.msra.mxu0 0.0
      %755 = vmatprep.subr.mxu0 0.0
      %756 = vmatpush1.msra.mxu0 0.0
      %757 = vmatprep.subr.mxu0 0.0
      %758 = vmatpush1.msra.mxu0 0.0
      %759 = vmatprep.subr.mxu0 0.0
      %760 = vmatpush1.msra.mxu0 0.0
      %761 = vmatprep.subr.mxu0 0.0
      %762 = vmatpush1.msra.mxu0 0.0
      %763 = vmatprep.subr.mxu0 0.0
      %764 = vmatpush1.msra.mxu0 0.0
      %765 = vmatprep.subr.mxu0 0.0
      %766 = vmatpush1.msra.mxu0 0.0
      %767 = vmatprep.subr.mxu0 0.0
      %768 = vmatpush1.msra.mxu0 0.0
      %769 = vmatprep.subr.mxu0 0.0
      %770 = vmatpush1.msra.mxu0 0.0
      %771 = vmatprep.subr.mxu0 0.0
      %772 = vmatpush1.msra.mxu0 0.0
      %773 = vmatprep.subr.mxu0 0.0
      %774 = vmatpush1.msra.mxu0 0.0
      %775 = vmatprep.subr.mxu0 0.0
      %776 = vmatpush1.msra.mxu0 0.0
      %777 = vmatprep.subr.mxu0 0.0
      %778 = vmatpush1.msra.mxu0 0.0
      %779 = vmatprep.subr.mxu0 0.0
      %780 = vmatpush1.msra.mxu0 0.0
      %781 = vmatprep.subr.mxu0 0.0
      %782 = vmatpush1.msra.mxu0 0.0
      %783 = vmatprep.subr.mxu0 0.0
      %784 = vmatpush1.msra.mxu0 0.0
      %785 = vmatprep.subr.mxu0 0.0
      %786 = vmatpush1.msra.mxu0 0.0
      %787 = vmatprep.subr.mxu0 0.0
      %788 = vmatpush1.msra.mxu0 0.0
      %789 = vmatprep.subr.mxu0 0.0
      %790 = vmatpush1.msra.mxu0 0.0
      %791 = vmatprep.subr.mxu0 0.0
      %792 = vmatpush1.msra.mxu0 0.0
      %793 = vmatprep.subr.mxu0 0.0
      %794 = vmatpush1.msra.mxu0 0.0
      %795 = vmatprep.subr.mxu0 0.0
      %796 = vmatpush1.msra.mxu0 0.0
      %797 = vmatprep.subr.mxu0 0.0
      %798 = vmatpush1.msra.mxu0 0.0
      %799 = vmatprep.subr.mxu0 0.0
      %800 = vmatpush1.msra.mxu0 0.0
      %801 = vmatprep.subr.mxu0 0.0
      %802 = vmatpush1.msra.mxu0 0.0
      %803 = vmatprep.subr.mxu0 0.0
      %804 = vmatpush1.msra.mxu0 0.0
      %805 = vmatprep.subr.mxu0 0.0
      %806 = vmatpush1.msra.mxu0 0.0
      %807 = vmatprep.subr.mxu0 0.0
      %808 = vmatpush1.msra.mxu0 0.0
      %809 = vmatprep.subr.mxu0 0.0
      %810 = vmatpush1.msra.mxu0 0.0
      %811 = vmatprep.subr.mxu0 0.0
      %812 = vmatpush1.msra.mxu0 0.0
      %813 = vmatprep.mubr.f32.mxu0 0.0
      %814 = vmatmul.mubr.f32.gmra.mrb[0].mxu0 %v306
      %v815 = vpop.f32.mrb[0].mxu0
      %v816 = vadd.f32 %v728, %v815
      %v817 = vpop.f32.mrb[0].mxu0
      %818 = vmatprep.mubr.f32.mxu0 0.0
      %819 = vmatmul.mubr.f32.gmra.mrb[0].mxu0 %v309
      %v820 = vpop.f32.mrb[0].mxu0
      %v821 = vadd.f32 %v733, %v820
      %v822 = vpop.f32.mrb[0].mxu0
      %823 = vmatprep.mubr.f32.mxu0 0.0
      %824 = vmatmul.mubr.f32.gmra.mrb[0].mxu0 %v312
      %v825 = vpop.f32.mrb[0].mxu0
      %v826 = vadd.f32 %v738, %v825
      %v827 = vpop.f32.mrb[0].mxu0
      %828 = vmatprep.mubr.f32.mxu0 0.0
      %829 = vmatmul.mubr.f32.gmra.mrb[0].mxu0 %v315
      %v830 = vpop.f32.mrb[0].mxu0
      %v831 = vadd.f32 %v743, %v830
      %v832 = vpop.f32.mrb[0].mxu0
      %833 = vdwg.mxu0
      %s834 = scalar_lea.vmem %s165, 16
      %v835 = vld [vmem:[%s834] sm:$0xf]
      %v837 = vsel %vm217, %v835, 0
      %839 = vmatprep.subr.mxu0 0.0
      %840 = vmatpush1.msra.mxu0 %v837
      %841 = vmatprep.subr.mxu0 0.0
      %842 = vmatpush1.msra.mxu0 0.0
      %843 = vmatprep.subr.mxu0 0.0
      %844 = vmatpush1.msra.mxu0 0.0
      %845 = vmatprep.subr.mxu0 0.0
      %846 = vmatpush1.msra.mxu0 0.0
      %847 = vmatprep.subr.mxu0 0.0
      %848 = vmatpush1.msra.mxu0 0.0
      %849 = vmatprep.subr.mxu0 0.0
      %850 = vmatpush1.msra.mxu0 0.0
      %851 = vmatprep.subr.mxu0 0.0
      %852 = vmatpush1.msra.mxu0 0.0
      %853 = vmatprep.subr.mxu0 0.0
      %854 = vmatpush1.msra.mxu0 0.0
      %855 = vmatprep.subr.mxu0 0.0
      %856 = vmatpush1.msra.mxu0 0.0
      %857 = vmatprep.subr.mxu0 0.0
      %858 = vmatpush1.msra.mxu0 0.0
      %859 = vmatprep.subr.mxu0 0.0
      %860 = vmatpush1.msra.mxu0 0.0
      %861 = vmatprep.subr.mxu0 0.0
      %862 = vmatpush1.msra.mxu0 0.0
      %863 = vmatprep.subr.mxu0 0.0
      %864 = vmatpush1.msra.mxu0 0.0
      %865 = vmatprep.subr.mxu0 0.0
      %866 = vmatpush1.msra.mxu0 0.0
      %867 = vmatprep.subr.mxu0 0.0
      %868 = vmatpush1.msra.mxu0 0.0
      %869 = vmatprep.subr.mxu0 0.0
      %870 = vmatpush1.msra.mxu0 0.0
      %871 = vmatprep.subr.mxu0 0.0
      %872 = vmatpush1.msra.mxu0 0.0
      %873 = vmatprep.subr.mxu0 0.0
      %874 = vmatpush1.msra.mxu0 0.0
      %875 = vmatprep.subr.mxu0 0.0
      %876 = vmatpush1.msra.mxu0 0.0
      %877 = vmatprep.subr.mxu0 0.0
      %878 = vmatpush1.msra.mxu0 0.0
      %879 = vmatprep.subr.mxu0 0.0
      %880 = vmatpush1.msra.mxu0 0.0
      %881 = vmatprep.subr.mxu0 0.0
      %882 = vmatpush1.msra.mxu0 0.0
      %883 = vmatprep.subr.mxu0 0.0
      %884 = vmatpush1.msra.mxu0 0.0
      %885 = vmatprep.subr.mxu0 0.0
      %886 = vmatpush1.msra.mxu0 0.0
      %887 = vmatprep.subr.mxu0 0.0
      %888 = vmatpush1.msra.mxu0 0.0
      %889 = vmatprep.subr.mxu0 0.0
      %890 = vmatpush1.msra.mxu0 0.0
      %891 = vmatprep.subr.mxu0 0.0
      %892 = vmatpush1.msra.mxu0 0.0
      %893 = vmatprep.subr.mxu0 0.0
      %894 = vmatpush1.msra.mxu0 0.0
      %895 = vmatprep.subr.mxu0 0.0
      %896 = vmatpush1.msra.mxu0 0.0
      %897 = vmatprep.subr.mxu0 0.0
      %898 = vmatpush1.msra.mxu0 0.0
      %899 = vmatprep.subr.mxu0 0.0
      %900 = vmatpush1.msra.mxu0 0.0
      %901 = vmatprep.subr.mxu0 0.0
      %902 = vmatpush1.msra.mxu0 0.0
      %903 = vmatprep.mubr.f32.mxu0 0.0
      %904 = vmatmul.mubr.f32.gmra.mrb[0].mxu0 %v408
      %v905 = vpop.f32.mrb[0].mxu0
      %v906 = vadd.f32 0.0, %v905
      %v907 = vpop.f32.mrb[0].mxu0
      %908 = vmatprep.mubr.f32.mxu0 0.0
      %909 = vmatmul.mubr.f32.gmra.mrb[0].mxu0 %v411
      %v910 = vpop.f32.mrb[0].mxu0
      %v911 = vadd.f32 0.0, %v910
      %v912 = vpop.f32.mrb[0].mxu0
      %913 = vmatprep.mubr.f32.mxu0 0.0
      %914 = vmatmul.mubr.f32.gmra.mrb[0].mxu0 %v414
      %v915 = vpop.f32.mrb[0].mxu0
      %v916 = vadd.f32 0.0, %v915
      %v917 = vpop.f32.mrb[0].mxu0
      %918 = vmatprep.mubr.f32.mxu0 0.0
      %919 = vmatmul.mubr.f32.gmra.mrb[0].mxu0 %v417
      %v920 = vpop.f32.mrb[0].mxu0
      %v921 = vadd.f32 0.0, %v920
      %v922 = vpop.f32.mrb[0].mxu0
      %923 = vdwg.mxu0
      %v924 = vadd.f32 %v816, %v906
      %v925 = vadd.f32 %v821, %v911
      %v926 = vadd.f32 %v826, %v916
      %v927 = vadd.f32 %v831, %v921
      %v928 = vld [vmem:[%s834] sm:$0xff]
      %v930 = vcombine.high %v928, %v928
      %931 = vrot.lane.b32.xlu0 %v928, 127
      %v932 = vpop.permute.xlu0 %931
      %933 = vrot.lane.b32.xlu0 %v930, 127
      %v934 = vpop.permute.xlu0 %933
      %v935 = vsel %vm202, %v932, %v934
      %v936 = vsel %vm217, %v935, 0
      %938 = vmatprep.subr.mxu0 0.0
      %939 = vmatpush1.msra.mxu0 %v936
      %940 = vmatprep.subr.mxu0 0.0
      %941 = vmatpush1.msra.mxu0 0.0
      %942 = vmatprep.subr.mxu0 0.0
      %943 = vmatpush1.msra.mxu0 0.0
      %944 = vmatprep.subr.mxu0 0.0
      %945 = vmatpush1.msra.mxu0 0.0
      %946 = vmatprep.subr.mxu0 0.0
      %947 = vmatpush1.msra.mxu0 0.0
      %948 = vmatprep.subr.mxu0 0.0
      %949 = vmatpush1.msra.mxu0 0.0
      %950 = vmatprep.subr.mxu0 0.0
      %951 = vmatpush1.msra.mxu0 0.0
      %952 = vmatprep.subr.mxu0 0.0
      %953 = vmatpush1.msra.mxu0 0.0
      %954 = vmatprep.subr.mxu0 0.0
      %955 = vmatpush1.msra.mxu0 0.0
      %956 = vmatprep.subr.mxu0 0.0
      %957 = vmatpush1.msra.mxu0 0.0
      %958 = vmatprep.subr.mxu0 0.0
      %959 = vmatpush1.msra.mxu0 0.0
      %960 = vmatprep.subr.mxu0 0.0
      %961 = vmatpush1.msra.mxu0 0.0
      %962 = vmatprep.subr.mxu0 0.0
      %963 = vmatpush1.msra.mxu0 0.0
      %964 = vmatprep.subr.mxu0 0.0
      %965 = vmatpush1.msra.mxu0 0.0
      %966 = vmatprep.subr.mxu0 0.0
      %967 = vmatpush1.msra.mxu0 0.0
      %968 = vmatprep.subr.mxu0 0.0
      %969 = vmatpush1.msra.mxu0 0.0
      %970 = vmatprep.subr.mxu0 0.0
      %971 = vmatpush1.msra.mxu0 0.0
      %972 = vmatprep.subr.mxu0 0.0
      %973 = vmatpush1.msra.mxu0 0.0
      %974 = vmatprep.subr.mxu0 0.0
      %975 = vmatpush1.msra.mxu0 0.0
      %976 = vmatprep.subr.mxu0 0.0
      %977 = vmatpush1.msra.mxu0 0.0
      %978 = vmatprep.subr.mxu0 0.0
      %979 = vmatpush1.msra.mxu0 0.0
      %980 = vmatprep.subr.mxu0 0.0
      %981 = vmatpush1.msra.mxu0 0.0
      %982 = vmatprep.subr.mxu0 0.0
      %983 = vmatpush1.msra.mxu0 0.0
      %984 = vmatprep.subr.mxu0 0.0
      %985 = vmatpush1.msra.mxu0 0.0
      %986 = vmatprep.subr.mxu0 0.0
      %987 = vmatpush1.msra.mxu0 0.0
      %988 = vmatprep.subr.mxu0 0.0
      %989 = vmatpush1.msra.mxu0 0.0
      %990 = vmatprep.subr.mxu0 0.0
      %991 = vmatpush1.msra.mxu0 0.0
      %992 = vmatprep.subr.mxu0 0.0
      %993 = vmatpush1.msra.mxu0 0.0
      %994 = vmatprep.subr.mxu0 0.0
      %995 = vmatpush1.msra.mxu0 0.0
      %996 = vmatprep.subr.mxu0 0.0
      %997 = vmatpush1.msra.mxu0 0.0
      %998 = vmatprep.subr.mxu0 0.0
      %999 = vmatpush1.msra.mxu0 0.0
      %1000 = vmatprep.subr.mxu0 0.0
      %1001 = vmatpush1.msra.mxu0 0.0
      %1002 = vmatprep.mubr.f32.mxu0 0.0
      %1003 = vmatmul.mubr.f32.gmra.mrb[0].mxu0 %v520
      %v1004 = vpop.f32.mrb[0].mxu0
      %v1005 = vadd.f32 0.0, %v1004
      %v1006 = vpop.f32.mrb[0].mxu0
      %1007 = vmatprep.mubr.f32.mxu0 0.0
      %1008 = vmatmul.mubr.f32.gmra.mrb[0].mxu0 %v523
      %v1009 = vpop.f32.mrb[0].mxu0
      %v1010 = vadd.f32 0.0, %v1009
      %v1011 = vpop.f32.mrb[0].mxu0
      %1012 = vmatprep.mubr.f32.mxu0 0.0
      %1013 = vmatmul.mubr.f32.gmra.mrb[0].mxu0 %v526
      %v1014 = vpop.f32.mrb[0].mxu0
      %v1015 = vadd.f32 0.0, %v1014
      %v1016 = vpop.f32.mrb[0].mxu0
      %1017 = vmatprep.mubr.f32.mxu0 0.0
      %1018 = vmatmul.mubr.f32.gmra.mrb[0].mxu0 %v529
      %v1019 = vpop.f32.mrb[0].mxu0
      %v1020 = vadd.f32 0.0, %v1019
      %v1021 = vpop.f32.mrb[0].mxu0
      %1022 = vdwg.mxu0
      %v1023 = vadd.f32 %v924, %v1005
      %v1024 = vadd.f32 %v925, %v1010
      %v1025 = vadd.f32 %v926, %v1015
      %v1026 = vadd.f32 %v927, %v1020
      %v1027 = vadd.f32 %v1023, %v625
      %v1028 = vadd.f32 %v1024, %v630
      %v1029 = vadd.f32 %v1025, %v635
      %v1030 = vadd.f32 %v1026, %v640
      %s1031 = scalar_lea.vmem %s170, 32
      %1032 = vst [vmem:[%s1031] sm:$0xff] %v1027
      %1033 = vst [vmem:[%s1031 + $0x8] sm:$0xff] %v1028
      %1034 = vst [vmem:[%s1031 + $0x10] sm:$0xff] %v1029
      %1035 = vst [vmem:[%s1031 + $0x18] sm:$0xff] %v1030
      %v1036 = vld [vmem:[%s834] sm:$0xf]
      %v1037 = vld [vmem:[%s834] sm:$0xff]
      %v1039 = vcombine.high %v1037, %v1037
      %1040 = vrot.lane.b32.xlu0 %v1037, 127
      %v1041 = vpop.permute.xlu0 %1040
      %1042 = vrot.lane.b32.xlu0 %v1039, 127
      %v1043 = vpop.permute.xlu0 %1042
      %v1044 = vsel %vm202, %v1041, %v1043
      %v1045 = vsel %vm217, %v1044, 0
      %1047 = vmatprep.subr.mxu0 0.0
      %1048 = vmatpush1.msra.mxu0 %v1045
      %1049 = vmatprep.subr.mxu0 0.0
      %1050 = vmatpush1.msra.mxu0 0.0
      %1051 = vmatprep.subr.mxu0 0.0
      %1052 = vmatpush1.msra.mxu0 0.0
      %1053 = vmatprep.subr.mxu0 0.0
      %1054 = vmatpush1.msra.mxu0 0.0
      %1055 = vmatprep.subr.mxu0 0.0
      %1056 = vmatpush1.msra.mxu0 0.0
      %1057 = vmatprep.subr.mxu0 0.0
      %1058 = vmatpush1.msra.mxu0 0.0
      %1059 = vmatprep.subr.mxu0 0.0
      %1060 = vmatpush1.msra.mxu0 0.0
      %1061 = vmatprep.subr.mxu0 0.0
      %1062 = vmatpush1.msra.mxu0 0.0
      %1063 = vmatprep.subr.mxu0 0.0
      %1064 = vmatpush1.msra.mxu0 0.0
      %1065 = vmatprep.subr.mxu0 0.0
      %1066 = vmatpush1.msra.mxu0 0.0
      %1067 = vmatprep.subr.mxu0 0.0
      %1068 = vmatpush1.msra.mxu0 0.0
      %1069 = vmatprep.subr.mxu0 0.0
      %1070 = vmatpush1.msra.mxu0 0.0
      %1071 = vmatprep.subr.mxu0 0.0
      %1072 = vmatpush1.msra.mxu0 0.0
      %1073 = vmatprep.subr.mxu0 0.0
      %1074 = vmatpush1.msra.mxu0 0.0
      %1075 = vmatprep.subr.mxu0 0.0
      %1076 = vmatpush1.msra.mxu0 0.0
      %1077 = vmatprep.subr.mxu0 0.0
      %1078 = vmatpush1.msra.mxu0 0.0
      %1079 = vmatprep.subr.mxu0 0.0
      %1080 = vmatpush1.msra.mxu0 0.0
      %1081 = vmatprep.subr.mxu0 0.0
      %1082 = vmatpush1.msra.mxu0 0.0
      %1083 = vmatprep.subr.mxu0 0.0
      %1084 = vmatpush1.msra.mxu0 0.0
      %1085 = vmatprep.subr.mxu0 0.0
      %1086 = vmatpush1.msra.mxu0 0.0
      %1087 = vmatprep.subr.mxu0 0.0
      %1088 = vmatpush1.msra.mxu0 0.0
      %1089 = vmatprep.subr.mxu0 0.0
      %1090 = vmatpush1.msra.mxu0 0.0
      %1091 = vmatprep.subr.mxu0 0.0
      %1092 = vmatpush1.msra.mxu0 0.0
      %1093 = vmatprep.subr.mxu0 0.0
      %1094 = vmatpush1.msra.mxu0 0.0
      %1095 = vmatprep.subr.mxu0 0.0
      %1096 = vmatpush1.msra.mxu0 0.0
      %1097 = vmatprep.subr.mxu0 0.0
      %1098 = vmatpush1.msra.mxu0 0.0
      %1099 = vmatprep.subr.mxu0 0.0
      %1100 = vmatpush1.msra.mxu0 0.0
      %1101 = vmatprep.subr.mxu0 0.0
      %1102 = vmatpush1.msra.mxu0 0.0
      %1103 = vmatprep.subr.mxu0 0.0
      %1104 = vmatpush1.msra.mxu0 0.0
      %1105 = vmatprep.subr.mxu0 0.0
      %1106 = vmatpush1.msra.mxu0 0.0
      %1107 = vmatprep.subr.mxu0 0.0
      %1108 = vmatpush1.msra.mxu0 0.0
      %1109 = vmatprep.subr.mxu0 0.0
      %1110 = vmatpush1.msra.mxu0 0.0
      %1111 = vmatprep.mubr.f32.mxu0 0.0
      %1112 = vmatmul.mubr.f32.gmra.mrb[0].mxu0 %v206
      %v1113 = vpop.f32.mrb[0].mxu0
      %v1114 = vadd.f32 0.0, %v1113
      %v1115 = vpop.f32.mrb[0].mxu0
      %1116 = vmatprep.mubr.f32.mxu0 0.0
      %1117 = vmatmul.mubr.f32.gmra.mrb[0].mxu0 %v209
      %v1118 = vpop.f32.mrb[0].mxu0
      %v1119 = vadd.f32 0.0, %v1118
      %v1120 = vpop.f32.mrb[0].mxu0
      %1121 = vmatprep.mubr.f32.mxu0 0.0
      %1122 = vmatmul.mubr.f32.gmra.mrb[0].mxu0 %v212
      %v1123 = vpop.f32.mrb[0].mxu0
      %v1124 = vadd.f32 0.0, %v1123
      %v1125 = vpop.f32.mrb[0].mxu0
      %1126 = vmatprep.mubr.f32.mxu0 0.0
      %1127 = vmatmul.mubr.f32.gmra.mrb[0].mxu0 %v215
      %v1128 = vpop.f32.mrb[0].mxu0
      %v1129 = vadd.f32 0.0, %v1128
      %v1130 = vpop.f32.mrb[0].mxu0
      %1131 = vdwg.mxu0
      %v1133 = vsel %vm217, %v1036, 0
      %1135 = vmatprep.subr.mxu0 0.0
      %1136 = vmatpush1.msra.mxu0 %v1133
      %1137 = vmatprep.subr.mxu0 0.0
      %1138 = vmatpush1.msra.mxu0 0.0
      %1139 = vmatprep.subr.mxu0 0.0
      %1140 = vmatpush1.msra.mxu0 0.0
      %1141 = vmatprep.subr.mxu0 0.0
      %1142 = vmatpush1.msra.mxu0 0.0
      %1143 = vmatprep.subr.mxu0 0.0
      %1144 = vmatpush1.msra.mxu0 0.0
      %1145 = vmatprep.subr.mxu0 0.0
      %1146 = vmatpush1.msra.mxu0 0.0
      %1147 = vmatprep.subr.mxu0 0.0
      %1148 = vmatpush1.msra.mxu0 0.0
      %1149 = vmatprep.subr.mxu0 0.0
      %1150 = vmatpush1.msra.mxu0 0.0
      %1151 = vmatprep.subr.mxu0 0.0
      %1152 = vmatpush1.msra.mxu0 0.0
      %1153 = vmatprep.subr.mxu0 0.0
      %1154 = vmatpush1.msra.mxu0 0.0
      %1155 = vmatprep.subr.mxu0 0.0
      %1156 = vmatpush1.msra.mxu0 0.0
      %1157 = vmatprep.subr.mxu0 0.0
      %1158 = vmatpush1.msra.mxu0 0.0
      %1159 = vmatprep.subr.mxu0 0.0
      %1160 = vmatpush1.msra.mxu0 0.0
      %1161 = vmatprep.subr.mxu0 0.0
      %1162 = vmatpush1.msra.mxu0 0.0
      %1163 = vmatprep.subr.mxu0 0.0
      %1164 = vmatpush1.msra.mxu0 0.0
      %1165 = vmatprep.subr.mxu0 0.0
      %1166 = vmatpush1.msra.mxu0 0.0
      %1167 = vmatprep.subr.mxu0 0.0
      %1168 = vmatpush1.msra.mxu0 0.0
      %1169 = vmatprep.subr.mxu0 0.0
      %1170 = vmatpush1.msra.mxu0 0.0
      %1171 = vmatprep.subr.mxu0 0.0
      %1172 = vmatpush1.msra.mxu0 0.0
      %1173 = vmatprep.subr.mxu0 0.0
      %1174 = vmatpush1.msra.mxu0 0.0
      %1175 = vmatprep.subr.mxu0 0.0
      %1176 = vmatpush1.msra.mxu0 0.0
      %1177 = vmatprep.subr.mxu0 0.0
      %1178 = vmatpush1.msra.mxu0 0.0
      %1179 = vmatprep.subr.mxu0 0.0
      %1180 = vmatpush1.msra.mxu0 0.0
      %1181 = vmatprep.subr.mxu0 0.0
      %1182 = vmatpush1.msra.mxu0 0.0
      %1183 = vmatprep.subr.mxu0 0.0
      %1184 = vmatpush1.msra.mxu0 0.0
      %1185 = vmatprep.subr.mxu0 0.0
      %1186 = vmatpush1.msra.mxu0 0.0
      %1187 = vmatprep.subr.mxu0 0.0
      %1188 = vmatpush1.msra.mxu0 0.0
      %1189 = vmatprep.subr.mxu0 0.0
      %1190 = vmatpush1.msra.mxu0 0.0
      %1191 = vmatprep.subr.mxu0 0.0
      %1192 = vmatpush1.msra.mxu0 0.0
      %1193 = vmatprep.subr.mxu0 0.0
      %1194 = vmatpush1.msra.mxu0 0.0
      %1195 = vmatprep.subr.mxu0 0.0
      %1196 = vmatpush1.msra.mxu0 0.0
      %1197 = vmatprep.subr.mxu0 0.0
      %1198 = vmatpush1.msra.mxu0 0.0
      %1199 = vmatprep.mubr.f32.mxu0 0.0
      %1200 = vmatmul.mubr.f32.gmra.mrb[0].mxu0 %v306
      %v1201 = vpop.f32.mrb[0].mxu0
      %v1202 = vadd.f32 %v1114, %v1201
      %v1203 = vpop.f32.mrb[0].mxu0
      %1204 = vmatprep.mubr.f32.mxu0 0.0
      %1205 = vmatmul.mubr.f32.gmra.mrb[0].mxu0 %v309
      %v1206 = vpop.f32.mrb[0].mxu0
      %v1207 = vadd.f32 %v1119, %v1206
      %v1208 = vpop.f32.mrb[0].mxu0
      %1209 = vmatprep.mubr.f32.mxu0 0.0
      %1210 = vmatmul.mubr.f32.gmra.mrb[0].mxu0 %v312
      %v1211 = vpop.f32.mrb[0].mxu0
      %v1212 = vadd.f32 %v1124, %v1211
      %v1213 = vpop.f32.mrb[0].mxu0
      %1214 = vmatprep.mubr.f32.mxu0 0.0
      %1215 = vmatmul.mubr.f32.gmra.mrb[0].mxu0 %v315
      %v1216 = vpop.f32.mrb[0].mxu0
      %v1217 = vadd.f32 %v1129, %v1216
      %v1218 = vpop.f32.mrb[0].mxu0
      %1219 = vdwg.mxu0
      %s1220 = scalar_lea.vmem %s165, 24
      %v1221 = vld [vmem:[%s1220] sm:$0xf]
      %v1223 = vsel %vm217, %v1221, 0
      %1225 = vmatprep.subr.mxu0 0.0
      %1226 = vmatpush1.msra.mxu0 %v1223
      %1227 = vmatprep.subr.mxu0 0.0
      %1228 = vmatpush1.msra.mxu0 0.0
      %1229 = vmatprep.subr.mxu0 0.0
      %1230 = vmatpush1.msra.mxu0 0.0
      %1231 = vmatprep.subr.mxu0 0.0
      %1232 = vmatpush1.msra.mxu0 0.0
      %1233 = vmatprep.subr.mxu0 0.0
      %1234 = vmatpush1.msra.mxu0 0.0
      %1235 = vmatprep.subr.mxu0 0.0
      %1236 = vmatpush1.msra.mxu0 0.0
      %1237 = vmatprep.subr.mxu0 0.0
      %1238 = vmatpush1.msra.mxu0 0.0
      %1239 = vmatprep.subr.mxu0 0.0
      %1240 = vmatpush1.msra.mxu0 0.0
      %1241 = vmatprep.subr.mxu0 0.0
      %1242 = vmatpush1.msra.mxu0 0.0
      %1243 = vmatprep.subr.mxu0 0.0
      %1244 = vmatpush1.msra.mxu0 0.0
      %1245 = vmatprep.subr.mxu0 0.0
      %1246 = vmatpush1.msra.mxu0 0.0
      %1247 = vmatprep.subr.mxu0 0.0
      %1248 = vmatpush1.msra.mxu0 0.0
      %1249 = vmatprep.subr.mxu0 0.0
      %1250 = vmatpush1.msra.mxu0 0.0
      %1251 = vmatprep.subr.mxu0 0.0
      %1252 = vmatpush1.msra.mxu0 0.0
      %1253 = vmatprep.subr.mxu0 0.0
      %1254 = vmatpush1.msra.mxu0 0.0
      %1255 = vmatprep.subr.mxu0 0.0
      %1256 = vmatpush1.msra.mxu0 0.0
      %1257 = vmatprep.subr.mxu0 0.0
      %1258 = vmatpush1.msra.mxu0 0.0
      %1259 = vmatprep.subr.mxu0 0.0
      %1260 = vmatpush1.msra.mxu0 0.0
      %1261 = vmatprep.subr.mxu0 0.0
      %1262 = vmatpush1.msra.mxu0 0.0
      %1263 = vmatprep.subr.mxu0 0.0
      %1264 = vmatpush1.msra.mxu0 0.0
      %1265 = vmatprep.subr.mxu0 0.0
      %1266 = vmatpush1.msra.mxu0 0.0
      %1267 = vmatprep.subr.mxu0 0.0
      %1268 = vmatpush1.msra.mxu0 0.0
      %1269 = vmatprep.subr.mxu0 0.0
      %1270 = vmatpush1.msra.mxu0 0.0
      %1271 = vmatprep.subr.mxu0 0.0
      %1272 = vmatpush1.msra.mxu0 0.0
      %1273 = vmatprep.subr.mxu0 0.0
      %1274 = vmatpush1.msra.mxu0 0.0
      %1275 = vmatprep.subr.mxu0 0.0
      %1276 = vmatpush1.msra.mxu0 0.0
      %1277 = vmatprep.subr.mxu0 0.0
      %1278 = vmatpush1.msra.mxu0 0.0
      %1279 = vmatprep.subr.mxu0 0.0
      %1280 = vmatpush1.msra.mxu0 0.0
      %1281 = vmatprep.subr.mxu0 0.0
      %1282 = vmatpush1.msra.mxu0 0.0
      %1283 = vmatprep.subr.mxu0 0.0
      %1284 = vmatpush1.msra.mxu0 0.0
      %1285 = vmatprep.subr.mxu0 0.0
      %1286 = vmatpush1.msra.mxu0 0.0
      %1287 = vmatprep.subr.mxu0 0.0
      %1288 = vmatpush1.msra.mxu0 0.0
      %1289 = vmatprep.mubr.f32.mxu0 0.0
      %1290 = vmatmul.mubr.f32.gmra.mrb[0].mxu0 %v408
      %v1291 = vpop.f32.mrb[0].mxu0
      %v1292 = vadd.f32 0.0, %v1291
      %v1293 = vpop.f32.mrb[0].mxu0
      %1294 = vmatprep.mubr.f32.mxu0 0.0
      %1295 = vmatmul.mubr.f32.gmra.mrb[0].mxu0 %v411
      %v1296 = vpop.f32.mrb[0].mxu0
      %v1297 = vadd.f32 0.0, %v1296
      %v1298 = vpop.f32.mrb[0].mxu0
      %1299 = vmatprep.mubr.f32.mxu0 0.0
      %1300 = vmatmul.mubr.f32.gmra.mrb[0].mxu0 %v414
      %v1301 = vpop.f32.mrb[0].mxu0
      %v1302 = vadd.f32 0.0, %v1301
      %v1303 = vpop.f32.mrb[0].mxu0
      %1304 = vmatprep.mubr.f32.mxu0 0.0
      %1305 = vmatmul.mubr.f32.gmra.mrb[0].mxu0 %v417
      %v1306 = vpop.f32.mrb[0].mxu0
      %v1307 = vadd.f32 0.0, %v1306
      %v1308 = vpop.f32.mrb[0].mxu0
      %1309 = vdwg.mxu0
      %v1310 = vadd.f32 %v1202, %v1292
      %v1311 = vadd.f32 %v1207, %v1297
      %v1312 = vadd.f32 %v1212, %v1302
      %v1313 = vadd.f32 %v1217, %v1307
      %v1314 = vld [vmem:[%s1220] sm:$0xff]
      %v1316 = vcombine.high %v1314, %v1314
      %1317 = vrot.lane.b32.xlu0 %v1314, 127
      %v1318 = vpop.permute.xlu0 %1317
      %1319 = vrot.lane.b32.xlu0 %v1316, 127
      %v1320 = vpop.permute.xlu0 %1319
      %v1321 = vsel %vm202, %v1318, %v1320
      %v1322 = vsel %vm217, %v1321, 0
      %1324 = vmatprep.subr.mxu0 0.0
      %1325 = vmatpush1.msra.mxu0 %v1322
      %1326 = vmatprep.subr.mxu0 0.0
      %1327 = vmatpush1.msra.mxu0 0.0
      %1328 = vmatprep.subr.mxu0 0.0
      %1329 = vmatpush1.msra.mxu0 0.0
      %1330 = vmatprep.subr.mxu0 0.0
      %1331 = vmatpush1.msra.mxu0 0.0
      %1332 = vmatprep.subr.mxu0 0.0
      %1333 = vmatpush1.msra.mxu0 0.0
      %1334 = vmatprep.subr.mxu0 0.0
      %1335 = vmatpush1.msra.mxu0 0.0
      %1336 = vmatprep.subr.mxu0 0.0
      %1337 = vmatpush1.msra.mxu0 0.0
      %1338 = vmatprep.subr.mxu0 0.0
      %1339 = vmatpush1.msra.mxu0 0.0
      %1340 = vmatprep.subr.mxu0 0.0
      %1341 = vmatpush1.msra.mxu0 0.0
      %1342 = vmatprep.subr.mxu0 0.0
      %1343 = vmatpush1.msra.mxu0 0.0
      %1344 = vmatprep.subr.mxu0 0.0
      %1345 = vmatpush1.msra.mxu0 0.0
      %1346 = vmatprep.subr.mxu0 0.0
      %1347 = vmatpush1.msra.mxu0 0.0
      %1348 = vmatprep.subr.mxu0 0.0
      %1349 = vmatpush1.msra.mxu0 0.0
      %1350 = vmatprep.subr.mxu0 0.0
      %1351 = vmatpush1.msra.mxu0 0.0
      %1352 = vmatprep.subr.mxu0 0.0
      %1353 = vmatpush1.msra.mxu0 0.0
      %1354 = vmatprep.subr.mxu0 0.0
      %1355 = vmatpush1.msra.mxu0 0.0
      %1356 = vmatprep.subr.mxu0 0.0
      %1357 = vmatpush1.msra.mxu0 0.0
      %1358 = vmatprep.subr.mxu0 0.0
      %1359 = vmatpush1.msra.mxu0 0.0
      %1360 = vmatprep.subr.mxu0 0.0
      %1361 = vmatpush1.msra.mxu0 0.0
      %1362 = vmatprep.subr.mxu0 0.0
      %1363 = vmatpush1.msra.mxu0 0.0
      %1364 = vmatprep.subr.mxu0 0.0
      %1365 = vmatpush1.msra.mxu0 0.0
      %1366 = vmatprep.subr.mxu0 0.0
      %1367 = vmatpush1.msra.mxu0 0.0
      %1368 = vmatprep.subr.mxu0 0.0
      %1369 = vmatpush1.msra.mxu0 0.0
      %1370 = vmatprep.subr.mxu0 0.0
      %1371 = vmatpush1.msra.mxu0 0.0
      %1372 = vmatprep.subr.mxu0 0.0
      %1373 = vmatpush1.msra.mxu0 0.0
      %1374 = vmatprep.subr.mxu0 0.0
      %1375 = vmatpush1.msra.mxu0 0.0
      %1376 = vmatprep.subr.mxu0 0.0
      %1377 = vmatpush1.msra.mxu0 0.0
      %1378 = vmatprep.subr.mxu0 0.0
      %1379 = vmatpush1.msra.mxu0 0.0
      %1380 = vmatprep.subr.mxu0 0.0
      %1381 = vmatpush1.msra.mxu0 0.0
      %1382 = vmatprep.subr.mxu0 0.0
      %1383 = vmatpush1.msra.mxu0 0.0
      %1384 = vmatprep.subr.mxu0 0.0
      %1385 = vmatpush1.msra.mxu0 0.0
      %1386 = vmatprep.subr.mxu0 0.0
      %1387 = vmatpush1.msra.mxu0 0.0
      %1388 = vmatprep.mubr.f32.mxu0 0.0
      %1389 = vmatmul.mubr.f32.gmra.mrb[0].mxu0 %v520
      %v1390 = vpop.f32.mrb[0].mxu0
      %v1391 = vadd.f32 0.0, %v1390
      %v1392 = vpop.f32.mrb[0].mxu0
      %1393 = vmatprep.mubr.f32.mxu0 0.0
      %1394 = vmatmul.mubr.f32.gmra.mrb[0].mxu0 %v523
      %v1395 = vpop.f32.mrb[0].mxu0
      %v1396 = vadd.f32 0.0, %v1395
      %v1397 = vpop.f32.mrb[0].mxu0
      %1398 = vmatprep.mubr.f32.mxu0 0.0
      %1399 = vmatmul.mubr.f32.gmra.mrb[0].mxu0 %v526
      %v1400 = vpop.f32.mrb[0].mxu0
      %v1401 = vadd.f32 0.0, %v1400
      %v1402 = vpop.f32.mrb[0].mxu0
      %1403 = vmatprep.mubr.f32.mxu0 0.0
      %1404 = vmatmul.mubr.f32.gmra.mrb[0].mxu0 %v529
      %v1405 = vpop.f32.mrb[0].mxu0
      %v1406 = vadd.f32 0.0, %v1405
      %v1407 = vpop.f32.mrb[0].mxu0
      %1408 = vdwg.mxu0
      %v1409 = vadd.f32 %v1310, %v1391
      %v1410 = vadd.f32 %v1311, %v1396
      %v1411 = vadd.f32 %v1312, %v1401
      %v1412 = vadd.f32 %v1313, %v1406
      %v1413 = vadd.f32 %v1409, %v625
      %v1414 = vadd.f32 %v1410, %v630
      %v1415 = vadd.f32 %v1411, %v635
      %v1416 = vadd.f32 %v1412, %v640
      %s1417 = scalar_lea.vmem %s170, 64
      %1418 = vst [vmem:[%s1417] sm:$0xff] %v1413
      %1419 = vst [vmem:[%s1417 + $0x8] sm:$0xff] %v1414
      %1420 = vst [vmem:[%s1417 + $0x10] sm:$0xff] %v1415
      %1421 = vst [vmem:[%s1417 + $0x18] sm:$0xff] %v1416
      %v1422 = vld [vmem:[%s1220] sm:$0xf]
      %v1423 = vld [vmem:[%s1220] sm:$0xff]
      %v1425 = vcombine.high %v1423, %v1423
      %1426 = vrot.lane.b32.xlu0 %v1423, 127
      %v1427 = vpop.permute.xlu0 %1426
      %1428 = vrot.lane.b32.xlu0 %v1425, 127
      %v1429 = vpop.permute.xlu0 %1428
      %v1430 = vsel %vm202, %v1427, %v1429
      %v1431 = vsel %vm217, %v1430, 0
      %1433 = vmatprep.subr.mxu0 0.0
      %1434 = vmatpush1.msra.mxu0 %v1431
      %1435 = vmatprep.subr.mxu0 0.0
      %1436 = vmatpush1.msra.mxu0 0.0
      %1437 = vmatprep.subr.mxu0 0.0
      %1438 = vmatpush1.msra.mxu0 0.0
      %1439 = vmatprep.subr.mxu0 0.0
      %1440 = vmatpush1.msra.mxu0 0.0
      %1441 = vmatprep.subr.mxu0 0.0
      %1442 = vmatpush1.msra.mxu0 0.0
      %1443 = vmatprep.subr.mxu0 0.0
      %1444 = vmatpush1.msra.mxu0 0.0
      %1445 = vmatprep.subr.mxu0 0.0
      %1446 = vmatpush1.msra.mxu0 0.0
      %1447 = vmatprep.subr.mxu0 0.0
      %1448 = vmatpush1.msra.mxu0 0.0
      %1449 = vmatprep.subr.mxu0 0.0
      %1450 = vmatpush1.msra.mxu0 0.0
      %1451 = vmatprep.subr.mxu0 0.0
      %1452 = vmatpush1.msra.mxu0 0.0
      %1453 = vmatprep.subr.mxu0 0.0
      %1454 = vmatpush1.msra.mxu0 0.0
      %1455 = vmatprep.subr.mxu0 0.0
      %1456 = vmatpush1.msra.mxu0 0.0
      %1457 = vmatprep.subr.mxu0 0.0
      %1458 = vmatpush1.msra.mxu0 0.0
      %1459 = vmatprep.subr.mxu0 0.0
      %1460 = vmatpush1.msra.mxu0 0.0
      %1461 = vmatprep.subr.mxu0 0.0
      %1462 = vmatpush1.msra.mxu0 0.0
      %1463 = vmatprep.subr.mxu0 0.0
      %1464 = vmatpush1.msra.mxu0 0.0
      %1465 = vmatprep.subr.mxu0 0.0
      %1466 = vmatpush1.msra.mxu0 0.0
      %1467 = vmatprep.subr.mxu0 0.0
      %1468 = vmatpush1.msra.mxu0 0.0
      %1469 = vmatprep.subr.mxu0 0.0
      %1470 = vmatpush1.msra.mxu0 0.0
      %1471 = vmatprep.subr.mxu0 0.0
      %1472 = vmatpush1.msra.mxu0 0.0
      %1473 = vmatprep.subr.mxu0 0.0
      %1474 = vmatpush1.msra.mxu0 0.0
      %1475 = vmatprep.subr.mxu0 0.0
      %1476 = vmatpush1.msra.mxu0 0.0
      %1477 = vmatprep.subr.mxu0 0.0
      %1478 = vmatpush1.msra.mxu0 0.0
      %1479 = vmatprep.subr.mxu0 0.0
      %1480 = vmatpush1.msra.mxu0 0.0
      %1481 = vmatprep.subr.mxu0 0.0
      %1482 = vmatpush1.msra.mxu0 0.0
      %1483 = vmatprep.subr.mxu0 0.0
      %1484 = vmatpush1.msra.mxu0 0.0
      %1485 = vmatprep.subr.mxu0 0.0
      %1486 = vmatpush1.msra.mxu0 0.0
      %1487 = vmatprep.subr.mxu0 0.0
      %1488 = vmatpush1.msra.mxu0 0.0
      %1489 = vmatprep.subr.mxu0 0.0
      %1490 = vmatpush1.msra.mxu0 0.0
      %1491 = vmatprep.subr.mxu0 0.0
      %1492 = vmatpush1.msra.mxu0 0.0
      %1493 = vmatprep.subr.mxu0 0.0
      %1494 = vmatpush1.msra.mxu0 0.0
      %1495 = vmatprep.subr.mxu0 0.0
      %1496 = vmatpush1.msra.mxu0 0.0
      %1497 = vmatprep.mubr.f32.mxu0 0.0
      %1498 = vmatmul.mubr.f32.gmra.mrb[0].mxu0 %v206
      %v1499 = vpop.f32.mrb[0].mxu0
      %v1500 = vadd.f32 0.0, %v1499
      %v1501 = vpop.f32.mrb[0].mxu0
      %1502 = vmatprep.mubr.f32.mxu0 0.0
      %1503 = vmatmul.mubr.f32.gmra.mrb[0].mxu0 %v209
      %v1504 = vpop.f32.mrb[0].mxu0
      %v1505 = vadd.f32 0.0, %v1504
      %v1506 = vpop.f32.mrb[0].mxu0
      %1507 = vmatprep.mubr.f32.mxu0 0.0
      %1508 = vmatmul.mubr.f32.gmra.mrb[0].mxu0 %v212
      %v1509 = vpop.f32.mrb[0].mxu0
      %v1510 = vadd.f32 0.0, %v1509
      %v1511 = vpop.f32.mrb[0].mxu0
      %1512 = vmatprep.mubr.f32.mxu0 0.0
      %1513 = vmatmul.mubr.f32.gmra.mrb[0].mxu0 %v215
      %v1514 = vpop.f32.mrb[0].mxu0
      %v1515 = vadd.f32 0.0, %v1514
      %v1516 = vpop.f32.mrb[0].mxu0
      %1517 = vdwg.mxu0
      %v1519 = vsel %vm217, %v1422, 0
      %1521 = vmatprep.subr.mxu0 0.0
      %1522 = vmatpush1.msra.mxu0 %v1519
      %1523 = vmatprep.subr.mxu0 0.0
      %1524 = vmatpush1.msra.mxu0 0.0
      %1525 = vmatprep.subr.mxu0 0.0
      %1526 = vmatpush1.msra.mxu0 0.0
      %1527 = vmatprep.subr.mxu0 0.0
      %1528 = vmatpush1.msra.mxu0 0.0
      %1529 = vmatprep.subr.mxu0 0.0
      %1530 = vmatpush1.msra.mxu0 0.0
      %1531 = vmatprep.subr.mxu0 0.0
      %1532 = vmatpush1.msra.mxu0 0.0
      %1533 = vmatprep.subr.mxu0 0.0
      %1534 = vmatpush1.msra.mxu0 0.0
      %1535 = vmatprep.subr.mxu0 0.0
      %1536 = vmatpush1.msra.mxu0 0.0
      %1537 = vmatprep.subr.mxu0 0.0
      %1538 = vmatpush1.msra.mxu0 0.0
      %1539 = vmatprep.subr.mxu0 0.0
      %1540 = vmatpush1.msra.mxu0 0.0
      %1541 = vmatprep.subr.mxu0 0.0
      %1542 = vmatpush1.msra.mxu0 0.0
      %1543 = vmatprep.subr.mxu0 0.0
      %1544 = vmatpush1.msra.mxu0 0.0
      %1545 = vmatprep.subr.mxu0 0.0
      %1546 = vmatpush1.msra.mxu0 0.0
      %1547 = vmatprep.subr.mxu0 0.0
      %1548 = vmatpush1.msra.mxu0 0.0
      %1549 = vmatprep.subr.mxu0 0.0
      %1550 = vmatpush1.msra.mxu0 0.0
      %1551 = vmatprep.subr.mxu0 0.0
      %1552 = vmatpush1.msra.mxu0 0.0
      %1553 = vmatprep.subr.mxu0 0.0
      %1554 = vmatpush1.msra.mxu0 0.0
      %1555 = vmatprep.subr.mxu0 0.0
      %1556 = vmatpush1.msra.mxu0 0.0
      %1557 = vmatprep.subr.mxu0 0.0
      %1558 = vmatpush1.msra.mxu0 0.0
      %1559 = vmatprep.subr.mxu0 0.0
      %1560 = vmatpush1.msra.mxu0 0.0
      %1561 = vmatprep.subr.mxu0 0.0
      %1562 = vmatpush1.msra.mxu0 0.0
      %1563 = vmatprep.subr.mxu0 0.0
      %1564 = vmatpush1.msra.mxu0 0.0
      %1565 = vmatprep.subr.mxu0 0.0
      %1566 = vmatpush1.msra.mxu0 0.0
      %1567 = vmatprep.subr.mxu0 0.0
      %1568 = vmatpush1.msra.mxu0 0.0
      %1569 = vmatprep.subr.mxu0 0.0
      %1570 = vmatpush1.msra.mxu0 0.0
      %1571 = vmatprep.subr.mxu0 0.0
      %1572 = vmatpush1.msra.mxu0 0.0
      %1573 = vmatprep.subr.mxu0 0.0
      %1574 = vmatpush1.msra.mxu0 0.0
      %1575 = vmatprep.subr.mxu0 0.0
      %1576 = vmatpush1.msra.mxu0 0.0
      %1577 = vmatprep.subr.mxu0 0.0
      %1578 = vmatpush1.msra.mxu0 0.0
      %1579 = vmatprep.subr.mxu0 0.0
      %1580 = vmatpush1.msra.mxu0 0.0
      %1581 = vmatprep.subr.mxu0 0.0
      %1582 = vmatpush1.msra.mxu0 0.0
      %1583 = vmatprep.subr.mxu0 0.0
      %1584 = vmatpush1.msra.mxu0 0.0
      %1585 = vmatprep.mubr.f32.mxu0 0.0
      %1586 = vmatmul.mubr.f32.gmra.mrb[0].mxu0 %v306
      %v1587 = vpop.f32.mrb[0].mxu0
      %v1588 = vadd.f32 %v1500, %v1587
      %v1589 = vpop.f32.mrb[0].mxu0
      %1590 = vmatprep.mubr.f32.mxu0 0.0
      %1591 = vmatmul.mubr.f32.gmra.mrb[0].mxu0 %v309
      %v1592 = vpop.f32.mrb[0].mxu0
      %v1593 = vadd.f32 %v1505, %v1592
      %v1594 = vpop.f32.mrb[0].mxu0
      %1595 = vmatprep.mubr.f32.mxu0 0.0
      %1596 = vmatmul.mubr.f32.gmra.mrb[0].mxu0 %v312
      %v1597 = vpop.f32.mrb[0].mxu0
      %v1598 = vadd.f32 %v1510, %v1597
      %v1599 = vpop.f32.mrb[0].mxu0
      %1600 = vmatprep.mubr.f32.mxu0 0.0
      %1601 = vmatmul.mubr.f32.gmra.mrb[0].mxu0 %v315
      %v1602 = vpop.f32.mrb[0].mxu0
      %v1603 = vadd.f32 %v1515, %v1602
      %v1604 = vpop.f32.mrb[0].mxu0
      %1605 = vdwg.mxu0
      %s1606 = scalar_lea.vmem %s165, 32
      %v1607 = vld [vmem:[%s1606] sm:$0xf]
      %v1609 = vsel %vm217, %v1607, 0
      %1611 = vmatprep.subr.mxu0 0.0
      %1612 = vmatpush1.msra.mxu0 %v1609
      %1613 = vmatprep.subr.mxu0 0.0
      %1614 = vmatpush1.msra.mxu0 0.0
      %1615 = vmatprep.subr.mxu0 0.0
      %1616 = vmatpush1.msra.mxu0 0.0
      %1617 = vmatprep.subr.mxu0 0.0
      %1618 = vmatpush1.msra.mxu0 0.0
      %1619 = vmatprep.subr.mxu0 0.0
      %1620 = vmatpush1.msra.mxu0 0.0
      %1621 = vmatprep.subr.mxu0 0.0
      %1622 = vmatpush1.msra.mxu0 0.0
      %1623 = vmatprep.subr.mxu0 0.0
      %1624 = vmatpush1.msra.mxu0 0.0
      %1625 = vmatprep.subr.mxu0 0.0
      %1626 = vmatpush1.msra.mxu0 0.0
      %1627 = vmatprep.subr.mxu0 0.0
      %1628 = vmatpush1.msra.mxu0 0.0
      %1629 = vmatprep.subr.mxu0 0.0
      %1630 = vmatpush1.msra.mxu0 0.0
      %1631 = vmatprep.subr.mxu0 0.0
      %1632 = vmatpush1.msra.mxu0 0.0
      %1633 = vmatprep.subr.mxu0 0.0
      %1634 = vmatpush1.msra.mxu0 0.0
      %1635 = vmatprep.subr.mxu0 0.0
      %1636 = vmatpush1.msra.mxu0 0.0
      %1637 = vmatprep.subr.mxu0 0.0
      %1638 = vmatpush1.msra.mxu0 0.0
      %1639 = vmatprep.subr.mxu0 0.0
      %1640 = vmatpush1.msra.mxu0 0.0
      %1641 = vmatprep.subr.mxu0 0.0
      %1642 = vmatpush1.msra.mxu0 0.0
      %1643 = vmatprep.subr.mxu0 0.0
      %1644 = vmatpush1.msra.mxu0 0.0
      %1645 = vmatprep.subr.mxu0 0.0
      %1646 = vmatpush1.msra.mxu0 0.0
      %1647 = vmatprep.subr.mxu0 0.0
      %1648 = vmatpush1.msra.mxu0 0.0
      %1649 = vmatprep.subr.mxu0 0.0
      %1650 = vmatpush1.msra.mxu0 0.0
      %1651 = vmatprep.subr.mxu0 0.0
      %1652 = vmatpush1.msra.mxu0 0.0
      %1653 = vmatprep.subr.mxu0 0.0
      %1654 = vmatpush1.msra.mxu0 0.0
      %1655 = vmatprep.subr.mxu0 0.0
      %1656 = vmatpush1.msra.mxu0 0.0
      %1657 = vmatprep.subr.mxu0 0.0
      %1658 = vmatpush1.msra.mxu0 0.0
      %1659 = vmatprep.subr.mxu0 0.0
      %1660 = vmatpush1.msra.mxu0 0.0
      %1661 = vmatprep.subr.mxu0 0.0
      %1662 = vmatpush1.msra.mxu0 0.0
      %1663 = vmatprep.subr.mxu0 0.0
      %1664 = vmatpush1.msra.mxu0 0.0
      %1665 = vmatprep.subr.mxu0 0.0
      %1666 = vmatpush1.msra.mxu0 0.0
      %1667 = vmatprep.subr.mxu0 0.0
      %1668 = vmatpush1.msra.mxu0 0.0
      %1669 = vmatprep.subr.mxu0 0.0
      %1670 = vmatpush1.msra.mxu0 0.0
      %1671 = vmatprep.subr.mxu0 0.0
      %1672 = vmatpush1.msra.mxu0 0.0
      %1673 = vmatprep.subr.mxu0 0.0
      %1674 = vmatpush1.msra.mxu0 0.0
      %1675 = vmatprep.mubr.f32.mxu0 0.0
      %1676 = vmatmul.mubr.f32.gmra.mrb[0].mxu0 %v408
      %v1677 = vpop.f32.mrb[0].mxu0
      %v1678 = vadd.f32 0.0, %v1677
      %v1679 = vpop.f32.mrb[0].mxu0
      %1680 = vmatprep.mubr.f32.mxu0 0.0
      %1681 = vmatmul.mubr.f32.gmra.mrb[0].mxu0 %v411
      %v1682 = vpop.f32.mrb[0].mxu0
      %v1683 = vadd.f32 0.0, %v1682
      %v1684 = vpop.f32.mrb[0].mxu0
      %1685 = vmatprep.mubr.f32.mxu0 0.0
      %1686 = vmatmul.mubr.f32.gmra.mrb[0].mxu0 %v414
      %v1687 = vpop.f32.mrb[0].mxu0
      %v1688 = vadd.f32 0.0, %v1687
      %v1689 = vpop.f32.mrb[0].mxu0
      %1690 = vmatprep.mubr.f32.mxu0 0.0
      %1691 = vmatmul.mubr.f32.gmra.mrb[0].mxu0 %v417
      %v1692 = vpop.f32.mrb[0].mxu0
      %v1693 = vadd.f32 0.0, %v1692
      %v1694 = vpop.f32.mrb[0].mxu0
      %1695 = vdwg.mxu0
      %v1696 = vadd.f32 %v1588, %v1678
      %v1697 = vadd.f32 %v1593, %v1683
      %v1698 = vadd.f32 %v1598, %v1688
      %v1699 = vadd.f32 %v1603, %v1693
      %v1700 = vld [vmem:[%s1606] sm:$0xff]
      %v1702 = vcombine.high %v1700, %v1700
      %1703 = vrot.lane.b32.xlu0 %v1700, 127
      %v1704 = vpop.permute.xlu0 %1703
      %1705 = vrot.lane.b32.xlu0 %v1702, 127
      %v1706 = vpop.permute.xlu0 %1705
      %v1707 = vsel %vm202, %v1704, %v1706
      %v1708 = vsel %vm217, %v1707, 0
      %1710 = vmatprep.subr.mxu0 0.0
      %1711 = vmatpush1.msra.mxu0 %v1708
      %1712 = vmatprep.subr.mxu0 0.0
      %1713 = vmatpush1.msra.mxu0 0.0
      %1714 = vmatprep.subr.mxu0 0.0
      %1715 = vmatpush1.msra.mxu0 0.0
      %1716 = vmatprep.subr.mxu0 0.0
      %1717 = vmatpush1.msra.mxu0 0.0
      %1718 = vmatprep.subr.mxu0 0.0
      %1719 = vmatpush1.msra.mxu0 0.0
      %1720 = vmatprep.subr.mxu0 0.0
      %1721 = vmatpush1.msra.mxu0 0.0
      %1722 = vmatprep.subr.mxu0 0.0
      %1723 = vmatpush1.msra.mxu0 0.0
      %1724 = vmatprep.subr.mxu0 0.0
      %1725 = vmatpush1.msra.mxu0 0.0
      %1726 = vmatprep.subr.mxu0 0.0
      %1727 = vmatpush1.msra.mxu0 0.0
      %1728 = vmatprep.subr.mxu0 0.0
      %1729 = vmatpush1.msra.mxu0 0.0
      %1730 = vmatprep.subr.mxu0 0.0
      %1731 = vmatpush1.msra.mxu0 0.0
      %1732 = vmatprep.subr.mxu0 0.0
      %1733 = vmatpush1.msra.mxu0 0.0
      %1734 = vmatprep.subr.mxu0 0.0
      %1735 = vmatpush1.msra.mxu0 0.0
      %1736 = vmatprep.subr.mxu0 0.0
      %1737 = vmatpush1.msra.mxu0 0.0
      %1738 = vmatprep.subr.mxu0 0.0
      %1739 = vmatpush1.msra.mxu0 0.0
      %1740 = vmatprep.subr.mxu0 0.0
      %1741 = vmatpush1.msra.mxu0 0.0
      %1742 = vmatprep.subr.mxu0 0.0
      %1743 = vmatpush1.msra.mxu0 0.0
      %1744 = vmatprep.subr.mxu0 0.0
      %1745 = vmatpush1.msra.mxu0 0.0
      %1746 = vmatprep.subr.mxu0 0.0
      %1747 = vmatpush1.msra.mxu0 0.0
      %1748 = vmatprep.subr.mxu0 0.0
      %1749 = vmatpush1.msra.mxu0 0.0
      %1750 = vmatprep.subr.mxu0 0.0
      %1751 = vmatpush1.msra.mxu0 0.0
      %1752 = vmatprep.subr.mxu0 0.0
      %1753 = vmatpush1.msra.mxu0 0.0
      %1754 = vmatprep.subr.mxu0 0.0
      %1755 = vmatpush1.msra.mxu0 0.0
      %1756 = vmatprep.subr.mxu0 0.0
      %1757 = vmatpush1.msra.mxu0 0.0
      %1758 = vmatprep.subr.mxu0 0.0
      %1759 = vmatpush1.msra.mxu0 0.0
      %1760 = vmatprep.subr.mxu0 0.0
      %1761 = vmatpush1.msra.mxu0 0.0
      %1762 = vmatprep.subr.mxu0 0.0
      %1763 = vmatpush1.msra.mxu0 0.0
      %1764 = vmatprep.subr.mxu0 0.0
      %1765 = vmatpush1.msra.mxu0 0.0
      %1766 = vmatprep.subr.mxu0 0.0
      %1767 = vmatpush1.msra.mxu0 0.0
      %1768 = vmatprep.subr.mxu0 0.0
      %1769 = vmatpush1.msra.mxu0 0.0
      %1770 = vmatprep.subr.mxu0 0.0
      %1771 = vmatpush1.msra.mxu0 0.0
      %1772 = vmatprep.subr.mxu0 0.0
      %1773 = vmatpush1.msra.mxu0 0.0
      %1774 = vmatprep.mubr.f32.mxu0 0.0
      %1775 = vmatmul.mubr.f32.gmra.mrb[0].mxu0 %v520
      %v1776 = vpop.f32.mrb[0].mxu0
      %v1777 = vadd.f32 0.0, %v1776
      %v1778 = vpop.f32.mrb[0].mxu0
      %1779 = vmatprep.mubr.f32.mxu0 0.0
      %1780 = vmatmul.mubr.f32.gmra.mrb[0].mxu0 %v523
      %v1781 = vpop.f32.mrb[0].mxu0
      %v1782 = vadd.f32 0.0, %v1781
      %v1783 = vpop.f32.mrb[0].mxu0
      %1784 = vmatprep.mubr.f32.mxu0 0.0
      %1785 = vmatmul.mubr.f32.gmra.mrb[0].mxu0 %v526
      %v1786 = vpop.f32.mrb[0].mxu0
      %v1787 = vadd.f32 0.0, %v1786
      %v1788 = vpop.f32.mrb[0].mxu0
      %1789 = vmatprep.mubr.f32.mxu0 0.0
      %1790 = vmatmul.mubr.f32.gmra.mrb[0].mxu0 %v529
      %v1791 = vpop.f32.mrb[0].mxu0
      %v1792 = vadd.f32 0.0, %v1791
      %v1793 = vpop.f32.mrb[0].mxu0
      %1794 = vdwg.mxu0
      %v1795 = vadd.f32 %v1696, %v1777
      %v1796 = vadd.f32 %v1697, %v1782
      %v1797 = vadd.f32 %v1698, %v1787
      %v1798 = vadd.f32 %v1699, %v1792
      %v1799 = vadd.f32 %v1795, %v625
      %v1800 = vadd.f32 %v1796, %v630
      %v1801 = vadd.f32 %v1797, %v635
      %v1802 = vadd.f32 %v1798, %v640
      %s1803 = scalar_lea.vmem %s170, 96
      %1804 = vst [vmem:[%s1803] sm:$0xff] %v1799
      %1805 = vst [vmem:[%s1803 + $0x8] sm:$0xff] %v1800
      %1806 = vst [vmem:[%s1803 + $0x10] sm:$0xff] %v1801
      %1807 = vst [vmem:[%s1803 + $0x18] sm:$0xff] %v1802
      %v1808 = vld [vmem:[%s1606] sm:$0xf]
      %v1809 = vld [vmem:[%s1606] sm:$0xff]
      %v1811 = vcombine.high %v1809, %v1809
      %1812 = vrot.lane.b32.xlu0 %v1809, 127
      %v1813 = vpop.permute.xlu0 %1812
      %1814 = vrot.lane.b32.xlu0 %v1811, 127
      %v1815 = vpop.permute.xlu0 %1814
      %v1816 = vsel %vm202, %v1813, %v1815
      %v1817 = vsel %vm217, %v1816, 0
      %1819 = vmatprep.subr.mxu0 0.0
      %1820 = vmatpush1.msra.mxu0 %v1817
      %1821 = vmatprep.subr.mxu0 0.0
      %1822 = vmatpush1.msra.mxu0 0.0
      %1823 = vmatprep.subr.mxu0 0.0
      %1824 = vmatpush1.msra.mxu0 0.0
      %1825 = vmatprep.subr.mxu0 0.0
      %1826 = vmatpush1.msra.mxu0 0.0
      %1827 = vmatprep.subr.mxu0 0.0
      %1828 = vmatpush1.msra.mxu0 0.0
      %1829 = vmatprep.subr.mxu0 0.0
      %1830 = vmatpush1.msra.mxu0 0.0
      %1831 = vmatprep.subr.mxu0 0.0
      %1832 = vmatpush1.msra.mxu0 0.0
      %1833 = vmatprep.subr.mxu0 0.0
      %1834 = vmatpush1.msra.mxu0 0.0
      %1835 = vmatprep.subr.mxu0 0.0
      %1836 = vmatpush1.msra.mxu0 0.0
      %1837 = vmatprep.subr.mxu0 0.0
      %1838 = vmatpush1.msra.mxu0 0.0
      %1839 = vmatprep.subr.mxu0 0.0
      %1840 = vmatpush1.msra.mxu0 0.0
      %1841 = vmatprep.subr.mxu0 0.0
      %1842 = vmatpush1.msra.mxu0 0.0
      %1843 = vmatprep.subr.mxu0 0.0
      %1844 = vmatpush1.msra.mxu0 0.0
      %1845 = vmatprep.subr.mxu0 0.0
      %1846 = vmatpush1.msra.mxu0 0.0
      %1847 = vmatprep.subr.mxu0 0.0
      %1848 = vmatpush1.msra.mxu0 0.0
      %1849 = vmatprep.subr.mxu0 0.0
      %1850 = vmatpush1.msra.mxu0 0.0
      %1851 = vmatprep.subr.mxu0 0.0
      %1852 = vmatpush1.msra.mxu0 0.0
      %1853 = vmatprep.subr.mxu0 0.0
      %1854 = vmatpush1.msra.mxu0 0.0
      %1855 = vmatprep.subr.mxu0 0.0
      %1856 = vmatpush1.msra.mxu0 0.0
      %1857 = vmatprep.subr.mxu0 0.0
      %1858 = vmatpush1.msra.mxu0 0.0
      %1859 = vmatprep.subr.mxu0 0.0
      %1860 = vmatpush1.msra.mxu0 0.0
      %1861 = vmatprep.subr.mxu0 0.0
      %1862 = vmatpush1.msra.mxu0 0.0
      %1863 = vmatprep.subr.mxu0 0.0
      %1864 = vmatpush1.msra.mxu0 0.0
      %1865 = vmatprep.subr.mxu0 0.0
      %1866 = vmatpush1.msra.mxu0 0.0
      %1867 = vmatprep.subr.mxu0 0.0
      %1868 = vmatpush1.msra.mxu0 0.0
      %1869 = vmatprep.subr.mxu0 0.0
      %1870 = vmatpush1.msra.mxu0 0.0
      %1871 = vmatprep.subr.mxu0 0.0
      %1872 = vmatpush1.msra.mxu0 0.0
      %1873 = vmatprep.subr.mxu0 0.0
      %1874 = vmatpush1.msra.mxu0 0.0
      %1875 = vmatprep.subr.mxu0 0.0
      %1876 = vmatpush1.msra.mxu0 0.0
      %1877 = vmatprep.subr.mxu0 0.0
      %1878 = vmatpush1.msra.mxu0 0.0
      %1879 = vmatprep.subr.mxu0 0.0
      %1880 = vmatpush1.msra.mxu0 0.0
      %1881 = vmatprep.subr.mxu0 0.0
      %1882 = vmatpush1.msra.mxu0 0.0
      %1883 = vmatprep.mubr.f32.mxu0 0.0
      %1884 = vmatmul.mubr.f32.gmra.mrb[0].mxu0 %v206
      %v1885 = vpop.f32.mrb[0].mxu0
      %v1886 = vadd.f32 0.0, %v1885
      %v1887 = vpop.f32.mrb[0].mxu0
      %1888 = vmatprep.mubr.f32.mxu0 0.0
      %1889 = vmatmul.mubr.f32.gmra.mrb[0].mxu0 %v209
      %v1890 = vpop.f32.mrb[0].mxu0
      %v1891 = vadd.f32 0.0, %v1890
      %v1892 = vpop.f32.mrb[0].mxu0
      %1893 = vmatprep.mubr.f32.mxu0 0.0
      %1894 = vmatmul.mubr.f32.gmra.mrb[0].mxu0 %v212
      %v1895 = vpop.f32.mrb[0].mxu0
      %v1896 = vadd.f32 0.0, %v1895
      %v1897 = vpop.f32.mrb[0].mxu0
      %1898 = vmatprep.mubr.f32.mxu0 0.0
      %1899 = vmatmul.mubr.f32.gmra.mrb[0].mxu0 %v215
      %v1900 = vpop.f32.mrb[0].mxu0
      %v1901 = vadd.f32 0.0, %v1900
      %v1902 = vpop.f32.mrb[0].mxu0
      %1903 = vdwg.mxu0
      %v1905 = vsel %vm217, %v1808, 0
      %1907 = vmatprep.subr.mxu0 0.0
      %1908 = vmatpush1.msra.mxu0 %v1905
      %1909 = vmatprep.subr.mxu0 0.0
      %1910 = vmatpush1.msra.mxu0 0.0
      %1911 = vmatprep.subr.mxu0 0.0
      %1912 = vmatpush1.msra.mxu0 0.0
      %1913 = vmatprep.subr.mxu0 0.0
      %1914 = vmatpush1.msra.mxu0 0.0
      %1915 = vmatprep.subr.mxu0 0.0
      %1916 = vmatpush1.msra.mxu0 0.0
      %1917 = vmatprep.subr.mxu0 0.0
      %1918 = vmatpush1.msra.mxu0 0.0
      %1919 = vmatprep.subr.mxu0 0.0
      %1920 = vmatpush1.msra.mxu0 0.0
      %1921 = vmatprep.subr.mxu0 0.0
      %1922 = vmatpush1.msra.mxu0 0.0
      %1923 = vmatprep.subr.mxu0 0.0
      %1924 = vmatpush1.msra.mxu0 0.0
      %1925 = vmatprep.subr.mxu0 0.0
      %1926 = vmatpush1.msra.mxu0 0.0
      %1927 = vmatprep.subr.mxu0 0.0
      %1928 = vmatpush1.msra.mxu0 0.0
      %1929 = vmatprep.subr.mxu0 0.0
      %1930 = vmatpush1.msra.mxu0 0.0
      %1931 = vmatprep.subr.mxu0 0.0
      %1932 = vmatpush1.msra.mxu0 0.0
      %1933 = vmatprep.subr.mxu0 0.0
      %1934 = vmatpush1.msra.mxu0 0.0
      %1935 = vmatprep.subr.mxu0 0.0
      %1936 = vmatpush1.msra.mxu0 0.0
      %1937 = vmatprep.subr.mxu0 0.0
      %1938 = vmatpush1.msra.mxu0 0.0
      %1939 = vmatprep.subr.mxu0 0.0
      %1940 = vmatpush1.msra.mxu0 0.0
      %1941 = vmatprep.subr.mxu0 0.0
      %1942 = vmatpush1.msra.mxu0 0.0
      %1943 = vmatprep.subr.mxu0 0.0
      %1944 = vmatpush1.msra.mxu0 0.0
      %1945 = vmatprep.subr.mxu0 0.0
      %1946 = vmatpush1.msra.mxu0 0.0
      %1947 = vmatprep.subr.mxu0 0.0
      %1948 = vmatpush1.msra.mxu0 0.0
      %1949 = vmatprep.subr.mxu0 0.0
      %1950 = vmatpush1.msra.mxu0 0.0
      %1951 = vmatprep.subr.mxu0 0.0
      %1952 = vmatpush1.msra.mxu0 0.0
      %1953 = vmatprep.subr.mxu0 0.0
      %1954 = vmatpush1.msra.mxu0 0.0
      %1955 = vmatprep.subr.mxu0 0.0
      %1956 = vmatpush1.msra.mxu0 0.0
      %1957 = vmatprep.subr.mxu0 0.0
      %1958 = vmatpush1.msra.mxu0 0.0
      %1959 = vmatprep.subr.mxu0 0.0
      %1960 = vmatpush1.msra.mxu0 0.0
      %1961 = vmatprep.subr.mxu0 0.0
      %1962 = vmatpush1.msra.mxu0 0.0
      %1963 = vmatprep.subr.mxu0 0.0
      %1964 = vmatpush1.msra.mxu0 0.0
      %1965 = vmatprep.subr.mxu0 0.0
      %1966 = vmatpush1.msra.mxu0 0.0
      %1967 = vmatprep.subr.mxu0 0.0
      %1968 = vmatpush1.msra.mxu0 0.0
      %1969 = vmatprep.subr.mxu0 0.0
      %1970 = vmatpush1.msra.mxu0 0.0
      %1971 = vmatprep.mubr.f32.mxu0 0.0
      %1972 = vmatmul.mubr.f32.gmra.mrb[0].mxu0 %v306
      %v1973 = vpop.f32.mrb[0].mxu0
      %v1974 = vadd.f32 %v1886, %v1973
      %v1975 = vpop.f32.mrb[0].mxu0
      %1976 = vmatprep.mubr.f32.mxu0 0.0
      %1977 = vmatmul.mubr.f32.gmra.mrb[0].mxu0 %v309
      %v1978 = vpop.f32.mrb[0].mxu0
      %v1979 = vadd.f32 %v1891, %v1978
      %v1980 = vpop.f32.mrb[0].mxu0
      %1981 = vmatprep.mubr.f32.mxu0 0.0
      %1982 = vmatmul.mubr.f32.gmra.mrb[0].mxu0 %v312
      %v1983 = vpop.f32.mrb[0].mxu0
      %v1984 = vadd.f32 %v1896, %v1983
      %v1985 = vpop.f32.mrb[0].mxu0
      %1986 = vmatprep.mubr.f32.mxu0 0.0
      %1987 = vmatmul.mubr.f32.gmra.mrb[0].mxu0 %v315
      %v1988 = vpop.f32.mrb[0].mxu0
      %v1989 = vadd.f32 %v1901, %v1988
      %v1990 = vpop.f32.mrb[0].mxu0
      %1991 = vdwg.mxu0
      %s1992 = scalar_lea.vmem %s165, 40
      %v1993 = vld [vmem:[%s1992] sm:$0xf]
      %v1995 = vsel %vm217, %v1993, 0
      %1997 = vmatprep.subr.mxu0 0.0
      %1998 = vmatpush1.msra.mxu0 %v1995
      %1999 = vmatprep.subr.mxu0 0.0
      %2000 = vmatpush1.msra.mxu0 0.0
      %2001 = vmatprep.subr.mxu0 0.0
      %2002 = vmatpush1.msra.mxu0 0.0
      %2003 = vmatprep.subr.mxu0 0.0
      %2004 = vmatpush1.msra.mxu0 0.0
      %2005 = vmatprep.subr.mxu0 0.0
      %2006 = vmatpush1.msra.mxu0 0.0
      %2007 = vmatprep.subr.mxu0 0.0
      %2008 = vmatpush1.msra.mxu0 0.0
      %2009 = vmatprep.subr.mxu0 0.0
      %2010 = vmatpush1.msra.mxu0 0.0
      %2011 = vmatprep.subr.mxu0 0.0
      %2012 = vmatpush1.msra.mxu0 0.0
      %2013 = vmatprep.subr.mxu0 0.0
      %2014 = vmatpush1.msra.mxu0 0.0
      %2015 = vmatprep.subr.mxu0 0.0
      %2016 = vmatpush1.msra.mxu0 0.0
      %2017 = vmatprep.subr.mxu0 0.0
      %2018 = vmatpush1.msra.mxu0 0.0
      %2019 = vmatprep.subr.mxu0 0.0
      %2020 = vmatpush1.msra.mxu0 0.0
      %2021 = vmatprep.subr.mxu0 0.0
      %2022 = vmatpush1.msra.mxu0 0.0
      %2023 = vmatprep.subr.mxu0 0.0
      %2024 = vmatpush1.msra.mxu0 0.0
      %2025 = vmatprep.subr.mxu0 0.0
      %2026 = vmatpush1.msra.mxu0 0.0
      %2027 = vmatprep.subr.mxu0 0.0
      %2028 = vmatpush1.msra.mxu0 0.0
      %2029 = vmatprep.subr.mxu0 0.0
      %2030 = vmatpush1.msra.mxu0 0.0
      %2031 = vmatprep.subr.mxu0 0.0
      %2032 = vmatpush1.msra.mxu0 0.0
      %2033 = vmatprep.subr.mxu0 0.0
      %2034 = vmatpush1.msra.mxu0 0.0
      %2035 = vmatprep.subr.mxu0 0.0
      %2036 = vmatpush1.msra.mxu0 0.0
      %2037 = vmatprep.subr.mxu0 0.0
      %2038 = vmatpush1.msra.mxu0 0.0
      %2039 = vmatprep.subr.mxu0 0.0
      %2040 = vmatpush1.msra.mxu0 0.0
      %2041 = vmatprep.subr.mxu0 0.0
      %2042 = vmatpush1.msra.mxu0 0.0
      %2043 = vmatprep.subr.mxu0 0.0
      %2044 = vmatpush1.msra.mxu0 0.0
      %2045 = vmatprep.subr.mxu0 0.0
      %2046 = vmatpush1.msra.mxu0 0.0
      %2047 = vmatprep.subr.mxu0 0.0
      %2048 = vmatpush1.msra.mxu0 0.0
      %2049 = vmatprep.subr.mxu0 0.0
      %2050 = vmatpush1.msra.mxu0 0.0
      %2051 = vmatprep.subr.mxu0 0.0
      %2052 = vmatpush1.msra.mxu0 0.0
      %2053 = vmatprep.subr.mxu0 0.0
      %2054 = vmatpush1.msra.mxu0 0.0
      %2055 = vmatprep.subr.mxu0 0.0
      %2056 = vmatpush1.msra.mxu0 0.0
      %2057 = vmatprep.subr.mxu0 0.0
      %2058 = vmatpush1.msra.mxu0 0.0
      %2059 = vmatprep.subr.mxu0 0.0
      %2060 = vmatpush1.msra.mxu0 0.0
      %2061 = vmatprep.mubr.f32.mxu0 0.0
      %2062 = vmatmul.mubr.f32.gmra.mrb[0].mxu0 %v408
      %v2063 = vpop.f32.mrb[0].mxu0
      %v2064 = vadd.f32 0.0, %v2063
      %v2065 = vpop.f32.mrb[0].mxu0
      %2066 = vmatprep.mubr.f32.mxu0 0.0
      %2067 = vmatmul.mubr.f32.gmra.mrb[0].mxu0 %v411
      %v2068 = vpop.f32.mrb[0].mxu0
      %v2069 = vadd.f32 0.0, %v2068
      %v2070 = vpop.f32.mrb[0].mxu0
      %2071 = vmatprep.mubr.f32.mxu0 0.0
      %2072 = vmatmul.mubr.f32.gmra.mrb[0].mxu0 %v414
      %v2073 = vpop.f32.mrb[0].mxu0
      %v2074 = vadd.f32 0.0, %v2073
      %v2075 = vpop.f32.mrb[0].mxu0
      %2076 = vmatprep.mubr.f32.mxu0 0.0
      %2077 = vmatmul.mubr.f32.gmra.mrb[0].mxu0 %v417
      %v2078 = vpop.f32.mrb[0].mxu0
      %v2079 = vadd.f32 0.0, %v2078
      %v2080 = vpop.f32.mrb[0].mxu0
      %2081 = vdwg.mxu0
      %v2082 = vadd.f32 %v1974, %v2064
      %v2083 = vadd.f32 %v1979, %v2069
      %v2084 = vadd.f32 %v1984, %v2074
      %v2085 = vadd.f32 %v1989, %v2079
      %v2086 = vld [vmem:[%s1992] sm:$0xff]
      %v2088 = vcombine.high %v2086, %v2086
      %2089 = vrot.lane.b32.xlu0 %v2086, 127
      %v2090 = vpop.permute.xlu0 %2089
      %2091 = vrot.lane.b32.xlu0 %v2088, 127
      %v2092 = vpop.permute.xlu0 %2091
      %v2093 = vsel %vm202, %v2090, %v2092
      %v2094 = vsel %vm217, %v2093, 0
      %2096 = vmatprep.subr.mxu0 0.0
      %2097 = vmatpush1.msra.mxu0 %v2094
      %2098 = vmatprep.subr.mxu0 0.0
      %2099 = vmatpush1.msra.mxu0 0.0
      %2100 = vmatprep.subr.mxu0 0.0
      %2101 = vmatpush1.msra.mxu0 0.0
      %2102 = vmatprep.subr.mxu0 0.0
      %2103 = vmatpush1.msra.mxu0 0.0
      %2104 = vmatprep.subr.mxu0 0.0
      %2105 = vmatpush1.msra.mxu0 0.0
      %2106 = vmatprep.subr.mxu0 0.0
      %2107 = vmatpush1.msra.mxu0 0.0
      %2108 = vmatprep.subr.mxu0 0.0
      %2109 = vmatpush1.msra.mxu0 0.0
      %2110 = vmatprep.subr.mxu0 0.0
      %2111 = vmatpush1.msra.mxu0 0.0
      %2112 = vmatprep.subr.mxu0 0.0
      %2113 = vmatpush1.msra.mxu0 0.0
      %2114 = vmatprep.subr.mxu0 0.0
      %2115 = vmatpush1.msra.mxu0 0.0
      %2116 = vmatprep.subr.mxu0 0.0
      %2117 = vmatpush1.msra.mxu0 0.0
      %2118 = vmatprep.subr.mxu0 0.0
      %2119 = vmatpush1.msra.mxu0 0.0
      %2120 = vmatprep.subr.mxu0 0.0
      %2121 = vmatpush1.msra.mxu0 0.0
      %2122 = vmatprep.subr.mxu0 0.0
      %2123 = vmatpush1.msra.mxu0 0.0
      %2124 = vmatprep.subr.mxu0 0.0
      %2125 = vmatpush1.msra.mxu0 0.0
      %2126 = vmatprep.subr.mxu0 0.0
      %2127 = vmatpush1.msra.mxu0 0.0
      %2128 = vmatprep.subr.mxu0 0.0
      %2129 = vmatpush1.msra.mxu0 0.0
      %2130 = vmatprep.subr.mxu0 0.0
      %2131 = vmatpush1.msra.mxu0 0.0
      %2132 = vmatprep.subr.mxu0 0.0
      %2133 = vmatpush1.msra.mxu0 0.0
      %2134 = vmatprep.subr.mxu0 0.0
      %2135 = vmatpush1.msra.mxu0 0.0
      %2136 = vmatprep.subr.mxu0 0.0
      %2137 = vmatpush1.msra.mxu0 0.0
      %2138 = vmatprep.subr.mxu0 0.0
      %2139 = vmatpush1.msra.mxu0 0.0
      %2140 = vmatprep.subr.mxu0 0.0
      %2141 = vmatpush1.msra.mxu0 0.0
      %2142 = vmatprep.subr.mxu0 0.0
      %2143 = vmatpush1.msra.mxu0 0.0
      %2144 = vmatprep.subr.mxu0 0.0
      %2145 = vmatpush1.msra.mxu0 0.0
      %2146 = vmatprep.subr.mxu0 0.0
      %2147 = vmatpush1.msra.mxu0 0.0
      %2148 = vmatprep.subr.mxu0 0.0
      %2149 = vmatpush1.msra.mxu0 0.0
      %2150 = vmatprep.subr.mxu0 0.0
      %2151 = vmatpush1.msra.mxu0 0.0
      %2152 = vmatprep.subr.mxu0 0.0
      %2153 = vmatpush1.msra.mxu0 0.0
      %2154 = vmatprep.subr.mxu0 0.0
      %2155 = vmatpush1.msra.mxu0 0.0
      %2156 = vmatprep.subr.mxu0 0.0
      %2157 = vmatpush1.msra.mxu0 0.0
      %2158 = vmatprep.subr.mxu0 0.0
      %2159 = vmatpush1.msra.mxu0 0.0
      %2160 = vmatprep.mubr.f32.mxu0 0.0
      %2161 = vmatmul.mubr.f32.gmra.mrb[0].mxu0 %v520
      %v2162 = vpop.f32.mrb[0].mxu0
      %v2163 = vadd.f32 0.0, %v2162
      %v2164 = vpop.f32.mrb[0].mxu0
      %2165 = vmatprep.mubr.f32.mxu0 0.0
      %2166 = vmatmul.mubr.f32.gmra.mrb[0].mxu0 %v523
      %v2167 = vpop.f32.mrb[0].mxu0
      %v2168 = vadd.f32 0.0, %v2167
      %v2169 = vpop.f32.mrb[0].mxu0
      %2170 = vmatprep.mubr.f32.mxu0 0.0
      %2171 = vmatmul.mubr.f32.gmra.mrb[0].mxu0 %v526
      %v2172 = vpop.f32.mrb[0].mxu0
      %v2173 = vadd.f32 0.0, %v2172
      %v2174 = vpop.f32.mrb[0].mxu0
      %2175 = vmatprep.mubr.f32.mxu0 0.0
      %2176 = vmatmul.mubr.f32.gmra.mrb[0].mxu0 %v529
      %v2177 = vpop.f32.mrb[0].mxu0
      %v2178 = vadd.f32 0.0, %v2177
      %v2179 = vpop.f32.mrb[0].mxu0
      %2180 = vdwg.mxu0
      %v2181 = vadd.f32 %v2082, %v2163
      %v2182 = vadd.f32 %v2083, %v2168
      %v2183 = vadd.f32 %v2084, %v2173
      %v2184 = vadd.f32 %v2085, %v2178
      %v2185 = vadd.f32 %v2181, %v625
      %v2186 = vadd.f32 %v2182, %v630
      %v2187 = vadd.f32 %v2183, %v635
      %v2188 = vadd.f32 %v2184, %v640
      %s2189 = scalar_lea.vmem %s170, 128
      %2190 = vst [vmem:[%s2189] sm:$0xff] %v2185
      %2191 = vst [vmem:[%s2189 + $0x8] sm:$0xff] %v2186
      %2192 = vst [vmem:[%s2189 + $0x10] sm:$0xff] %v2187
      %2193 = vst [vmem:[%s2189 + $0x18] sm:$0xff] %v2188
      %v2194 = vld [vmem:[%s1992] sm:$0xf]
      %v2195 = vld [vmem:[%s1992] sm:$0xff]
      %v2197 = vcombine.high %v2195, %v2195
      %2198 = vrot.lane.b32.xlu0 %v2195, 127
      %v2199 = vpop.permute.xlu0 %2198
      %2200 = vrot.lane.b32.xlu0 %v2197, 127
      %v2201 = vpop.permute.xlu0 %2200
      %v2202 = vsel %vm202, %v2199, %v2201
      %v2203 = vsel %vm217, %v2202, 0
      %2205 = vmatprep.subr.mxu0 0.0
      %2206 = vmatpush1.msra.mxu0 %v2203
      %2207 = vmatprep.subr.mxu0 0.0
      %2208 = vmatpush1.msra.mxu0 0.0
      %2209 = vmatprep.subr.mxu0 0.0
      %2210 = vmatpush1.msra.mxu0 0.0
      %2211 = vmatprep.subr.mxu0 0.0
      %2212 = vmatpush1.msra.mxu0 0.0
      %2213 = vmatprep.subr.mxu0 0.0
      %2214 = vmatpush1.msra.mxu0 0.0
      %2215 = vmatprep.subr.mxu0 0.0
      %2216 = vmatpush1.msra.mxu0 0.0
      %2217 = vmatprep.subr.mxu0 0.0
      %2218 = vmatpush1.msra.mxu0 0.0
      %2219 = vmatprep.subr.mxu0 0.0
      %2220 = vmatpush1.msra.mxu0 0.0
      %2221 = vmatprep.subr.mxu0 0.0
      %2222 = vmatpush1.msra.mxu0 0.0
      %2223 = vmatprep.subr.mxu0 0.0
      %2224 = vmatpush1.msra.mxu0 0.0
      %2225 = vmatprep.subr.mxu0 0.0
      %2226 = vmatpush1.msra.mxu0 0.0
      %2227 = vmatprep.subr.mxu0 0.0
      %2228 = vmatpush1.msra.mxu0 0.0
      %2229 = vmatprep.subr.mxu0 0.0
      %2230 = vmatpush1.msra.mxu0 0.0
      %2231 = vmatprep.subr.mxu0 0.0
      %2232 = vmatpush1.msra.mxu0 0.0
      %2233 = vmatprep.subr.mxu0 0.0
      %2234 = vmatpush1.msra.mxu0 0.0
      %2235 = vmatprep.subr.mxu0 0.0
      %2236 = vmatpush1.msra.mxu0 0.0
      %2237 = vmatprep.subr.mxu0 0.0
      %2238 = vmatpush1.msra.mxu0 0.0
      %2239 = vmatprep.subr.mxu0 0.0
      %2240 = vmatpush1.msra.mxu0 0.0
      %2241 = vmatprep.subr.mxu0 0.0
      %2242 = vmatpush1.msra.mxu0 0.0
      %2243 = vmatprep.subr.mxu0 0.0
      %2244 = vmatpush1.msra.mxu0 0.0
      %2245 = vmatprep.subr.mxu0 0.0
      %2246 = vmatpush1.msra.mxu0 0.0
      %2247 = vmatprep.subr.mxu0 0.0
      %2248 = vmatpush1.msra.mxu0 0.0
      %2249 = vmatprep.subr.mxu0 0.0
      %2250 = vmatpush1.msra.mxu0 0.0
      %2251 = vmatprep.subr.mxu0 0.0
      %2252 = vmatpush1.msra.mxu0 0.0
      %2253 = vmatprep.subr.mxu0 0.0
      %2254 = vmatpush1.msra.mxu0 0.0
      %2255 = vmatprep.subr.mxu0 0.0
      %2256 = vmatpush1.msra.mxu0 0.0
      %2257 = vmatprep.subr.mxu0 0.0
      %2258 = vmatpush1.msra.mxu0 0.0
      %2259 = vmatprep.subr.mxu0 0.0
      %2260 = vmatpush1.msra.mxu0 0.0
      %2261 = vmatprep.subr.mxu0 0.0
      %2262 = vmatpush1.msra.mxu0 0.0
      %2263 = vmatprep.subr.mxu0 0.0
      %2264 = vmatpush1.msra.mxu0 0.0
      %2265 = vmatprep.subr.mxu0 0.0
      %2266 = vmatpush1.msra.mxu0 0.0
      %2267 = vmatprep.subr.mxu0 0.0
      %2268 = vmatpush1.msra.mxu0 0.0
      %2269 = vmatprep.mubr.f32.mxu0 0.0
      %2270 = vmatmul.mubr.f32.gmra.mrb[0].mxu0 %v206
      %v2271 = vpop.f32.mrb[0].mxu0
      %v2272 = vadd.f32 0.0, %v2271
      %v2273 = vpop.f32.mrb[0].mxu0
      %2274 = vmatprep.mubr.f32.mxu0 0.0
      %2275 = vmatmul.mubr.f32.gmra.mrb[0].mxu0 %v209
      %v2276 = vpop.f32.mrb[0].mxu0
      %v2277 = vadd.f32 0.0, %v2276
      %v2278 = vpop.f32.mrb[0].mxu0
      %2279 = vmatprep.mubr.f32.mxu0 0.0
      %2280 = vmatmul.mubr.f32.gmra.mrb[0].mxu0 %v212
      %v2281 = vpop.f32.mrb[0].mxu0
      %v2282 = vadd.f32 0.0, %v2281
      %v2283 = vpop.f32.mrb[0].mxu0
      %2284 = vmatprep.mubr.f32.mxu0 0.0
      %2285 = vmatmul.mubr.f32.gmra.mrb[0].mxu0 %v215
      %v2286 = vpop.f32.mrb[0].mxu0
      %v2287 = vadd.f32 0.0, %v2286
      %v2288 = vpop.f32.mrb[0].mxu0
      %2289 = vdwg.mxu0
      %v2291 = vsel %vm217, %v2194, 0
      %2293 = vmatprep.subr.mxu0 0.0
      %2294 = vmatpush1.msra.mxu0 %v2291
      %2295 = vmatprep.subr.mxu0 0.0
      %2296 = vmatpush1.msra.mxu0 0.0
      %2297 = vmatprep.subr.mxu0 0.0
      %2298 = vmatpush1.msra.mxu0 0.0
      %2299 = vmatprep.subr.mxu0 0.0
      %2300 = vmatpush1.msra.mxu0 0.0
      %2301 = vmatprep.subr.mxu0 0.0
      %2302 = vmatpush1.msra.mxu0 0.0
      %2303 = vmatprep.subr.mxu0 0.0
      %2304 = vmatpush1.msra.mxu0 0.0
      %2305 = vmatprep.subr.mxu0 0.0
      %2306 = vmatpush1.msra.mxu0 0.0
      %2307 = vmatprep.subr.mxu0 0.0
      %2308 = vmatpush1.msra.mxu0 0.0
      %2309 = vmatprep.subr.mxu0 0.0
      %2310 = vmatpush1.msra.mxu0 0.0
      %2311 = vmatprep.subr.mxu0 0.0
      %2312 = vmatpush1.msra.mxu0 0.0
      %2313 = vmatprep.subr.mxu0 0.0
      %2314 = vmatpush1.msra.mxu0 0.0
      %2315 = vmatprep.subr.mxu0 0.0
      %2316 = vmatpush1.msra.mxu0 0.0
      %2317 = vmatprep.subr.mxu0 0.0
      %2318 = vmatpush1.msra.mxu0 0.0
      %2319 = vmatprep.subr.mxu0 0.0
      %2320 = vmatpush1.msra.mxu0 0.0
      %2321 = vmatprep.subr.mxu0 0.0
      %2322 = vmatpush1.msra.mxu0 0.0
      %2323 = vmatprep.subr.mxu0 0.0
      %2324 = vmatpush1.msra.mxu0 0.0
      %2325 = vmatprep.subr.mxu0 0.0
      %2326 = vmatpush1.msra.mxu0 0.0
      %2327 = vmatprep.subr.mxu0 0.0
      %2328 = vmatpush1.msra.mxu0 0.0
      %2329 = vmatprep.subr.mxu0 0.0
      %2330 = vmatpush1.msra.mxu0 0.0
      %2331 = vmatprep.subr.mxu0 0.0
      %2332 = vmatpush1.msra.mxu0 0.0
      %2333 = vmatprep.subr.mxu0 0.0
      %2334 = vmatpush1.msra.mxu0 0.0
      %2335 = vmatprep.subr.mxu0 0.0
      %2336 = vmatpush1.msra.mxu0 0.0
      %2337 = vmatprep.subr.mxu0 0.0
      %2338 = vmatpush1.msra.mxu0 0.0
      %2339 = vmatprep.subr.mxu0 0.0
      %2340 = vmatpush1.msra.mxu0 0.0
      %2341 = vmatprep.subr.mxu0 0.0
      %2342 = vmatpush1.msra.mxu0 0.0
      %2343 = vmatprep.subr.mxu0 0.0
      %2344 = vmatpush1.msra.mxu0 0.0
      %2345 = vmatprep.subr.mxu0 0.0
      %2346 = vmatpush1.msra.mxu0 0.0
      %2347 = vmatprep.subr.mxu0 0.0
      %2348 = vmatpush1.msra.mxu0 0.0
      %2349 = vmatprep.subr.mxu0 0.0
      %2350 = vmatpush1.msra.mxu0 0.0
      %2351 = vmatprep.subr.mxu0 0.0
      %2352 = vmatpush1.msra.mxu0 0.0
      %2353 = vmatprep.subr.mxu0 0.0
      %2354 = vmatpush1.msra.mxu0 0.0
      %2355 = vmatprep.subr.mxu0 0.0
      %2356 = vmatpush1.msra.mxu0 0.0
      %2357 = vmatprep.mubr.f32.mxu0 0.0
      %2358 = vmatmul.mubr.f32.gmra.mrb[0].mxu0 %v306
      %v2359 = vpop.f32.mrb[0].mxu0
      %v2360 = vadd.f32 %v2272, %v2359
      %v2361 = vpop.f32.mrb[0].mxu0
      %2362 = vmatprep.mubr.f32.mxu0 0.0
      %2363 = vmatmul.mubr.f32.gmra.mrb[0].mxu0 %v309
      %v2364 = vpop.f32.mrb[0].mxu0
      %v2365 = vadd.f32 %v2277, %v2364
      %v2366 = vpop.f32.mrb[0].mxu0
      %2367 = vmatprep.mubr.f32.mxu0 0.0
      %2368 = vmatmul.mubr.f32.gmra.mrb[0].mxu0 %v312
      %v2369 = vpop.f32.mrb[0].mxu0
      %v2370 = vadd.f32 %v2282, %v2369
      %v2371 = vpop.f32.mrb[0].mxu0
      %2372 = vmatprep.mubr.f32.mxu0 0.0
      %2373 = vmatmul.mubr.f32.gmra.mrb[0].mxu0 %v315
      %v2374 = vpop.f32.mrb[0].mxu0
      %v2375 = vadd.f32 %v2287, %v2374
      %v2376 = vpop.f32.mrb[0].mxu0
      %2377 = vdwg.mxu0
      %s2378 = scalar_lea.vmem %s165, 48
      %v2379 = vld [vmem:[%s2378] sm:$0xf]
      %v2381 = vsel %vm217, %v2379, 0
      %2383 = vmatprep.subr.mxu0 0.0
      %2384 = vmatpush1.msra.mxu0 %v2381
      %2385 = vmatprep.subr.mxu0 0.0
      %2386 = vmatpush1.msra.mxu0 0.0
      %2387 = vmatprep.subr.mxu0 0.0
      %2388 = vmatpush1.msra.mxu0 0.0
      %2389 = vmatprep.subr.mxu0 0.0
      %2390 = vmatpush1.msra.mxu0 0.0
      %2391 = vmatprep.subr.mxu0 0.0
      %2392 = vmatpush1.msra.mxu0 0.0
      %2393 = vmatprep.subr.mxu0 0.0
      %2394 = vmatpush1.msra.mxu0 0.0
      %2395 = vmatprep.subr.mxu0 0.0
      %2396 = vmatpush1.msra.mxu0 0.0
      %2397 = vmatprep.subr.mxu0 0.0
      %2398 = vmatpush1.msra.mxu0 0.0
      %2399 = vmatprep.subr.mxu0 0.0
      %2400 = vmatpush1.msra.mxu0 0.0
      %2401 = vmatprep.subr.mxu0 0.0
      %2402 = vmatpush1.msra.mxu0 0.0
      %2403 = vmatprep.subr.mxu0 0.0
      %2404 = vmatpush1.msra.mxu0 0.0
      %2405 = vmatprep.subr.mxu0 0.0
      %2406 = vmatpush1.msra.mxu0 0.0
      %2407 = vmatprep.subr.mxu0 0.0
      %2408 = vmatpush1.msra.mxu0 0.0
      %2409 = vmatprep.subr.mxu0 0.0
      %2410 = vmatpush1.msra.mxu0 0.0
      %2411 = vmatprep.subr.mxu0 0.0
      %2412 = vmatpush1.msra.mxu0 0.0
      %2413 = vmatprep.subr.mxu0 0.0
      %2414 = vmatpush1.msra.mxu0 0.0
      %2415 = vmatprep.subr.mxu0 0.0
      %2416 = vmatpush1.msra.mxu0 0.0
      %2417 = vmatprep.subr.mxu0 0.0
      %2418 = vmatpush1.msra.mxu0 0.0
      %2419 = vmatprep.subr.mxu0 0.0
      %2420 = vmatpush1.msra.mxu0 0.0
      %2421 = vmatprep.subr.mxu0 0.0
      %2422 = vmatpush1.msra.mxu0 0.0
      %2423 = vmatprep.subr.mxu0 0.0
      %2424 = vmatpush1.msra.mxu0 0.0
      %2425 = vmatprep.subr.mxu0 0.0
      %2426 = vmatpush1.msra.mxu0 0.0
      %2427 = vmatprep.subr.mxu0 0.0
      %2428 = vmatpush1.msra.mxu0 0.0
      %2429 = vmatprep.subr.mxu0 0.0
      %2430 = vmatpush1.msra.mxu0 0.0
      %2431 = vmatprep.subr.mxu0 0.0
      %2432 = vmatpush1.msra.mxu0 0.0
      %2433 = vmatprep.subr.mxu0 0.0
      %2434 = vmatpush1.msra.mxu0 0.0
      %2435 = vmatprep.subr.mxu0 0.0
      %2436 = vmatpush1.msra.mxu0 0.0
      %2437 = vmatprep.subr.mxu0 0.0
      %2438 = vmatpush1.msra.mxu0 0.0
      %2439 = vmatprep.subr.mxu0 0.0
      %2440 = vmatpush1.msra.mxu0 0.0
      %2441 = vmatprep.subr.mxu0 0.0
      %2442 = vmatpush1.msra.mxu0 0.0
      %2443 = vmatprep.subr.mxu0 0.0
      %2444 = vmatpush1.msra.mxu0 0.0
      %2445 = vmatprep.subr.mxu0 0.0
      %2446 = vmatpush1.msra.mxu0 0.0
      %2447 = vmatprep.mubr.f32.mxu0 0.0
      %2448 = vmatmul.mubr.f32.gmra.mrb[0].mxu0 %v408
      %v2449 = vpop.f32.mrb[0].mxu0
      %v2450 = vadd.f32 0.0, %v2449
      %v2451 = vpop.f32.mrb[0].mxu0
      %2452 = vmatprep.mubr.f32.mxu0 0.0
      %2453 = vmatmul.mubr.f32.gmra.mrb[0].mxu0 %v411
      %v2454 = vpop.f32.mrb[0].mxu0
      %v2455 = vadd.f32 0.0, %v2454
      %v2456 = vpop.f32.mrb[0].mxu0
      %2457 = vmatprep.mubr.f32.mxu0 0.0
      %2458 = vmatmul.mubr.f32.gmra.mrb[0].mxu0 %v414
      %v2459 = vpop.f32.mrb[0].mxu0
      %v2460 = vadd.f32 0.0, %v2459
      %v2461 = vpop.f32.mrb[0].mxu0
      %2462 = vmatprep.mubr.f32.mxu0 0.0
      %2463 = vmatmul.mubr.f32.gmra.mrb[0].mxu0 %v417
      %v2464 = vpop.f32.mrb[0].mxu0
      %v2465 = vadd.f32 0.0, %v2464
      %v2466 = vpop.f32.mrb[0].mxu0
      %2467 = vdwg.mxu0
      %v2468 = vadd.f32 %v2360, %v2450
      %v2469 = vadd.f32 %v2365, %v2455
      %v2470 = vadd.f32 %v2370, %v2460
      %v2471 = vadd.f32 %v2375, %v2465
      %v2472 = vld [vmem:[%s2378] sm:$0xff]
      %v2474 = vcombine.high %v2472, %v2472
      %2475 = vrot.lane.b32.xlu0 %v2472, 127
      %v2476 = vpop.permute.xlu0 %2475
      %2477 = vrot.lane.b32.xlu0 %v2474, 127
      %v2478 = vpop.permute.xlu0 %2477
      %v2479 = vsel %vm202, %v2476, %v2478
      %v2480 = vsel %vm217, %v2479, 0
      %2482 = vmatprep.subr.mxu0 0.0
      %2483 = vmatpush1.msra.mxu0 %v2480
      %2484 = vmatprep.subr.mxu0 0.0
      %2485 = vmatpush1.msra.mxu0 0.0
      %2486 = vmatprep.subr.mxu0 0.0
      %2487 = vmatpush1.msra.mxu0 0.0
      %2488 = vmatprep.subr.mxu0 0.0
      %2489 = vmatpush1.msra.mxu0 0.0
      %2490 = vmatprep.subr.mxu0 0.0
      %2491 = vmatpush1.msra.mxu0 0.0
      %2492 = vmatprep.subr.mxu0 0.0
      %2493 = vmatpush1.msra.mxu0 0.0
      %2494 = vmatprep.subr.mxu0 0.0
      %2495 = vmatpush1.msra.mxu0 0.0
      %2496 = vmatprep.subr.mxu0 0.0
      %2497 = vmatpush1.msra.mxu0 0.0
      %2498 = vmatprep.subr.mxu0 0.0
      %2499 = vmatpush1.msra.mxu0 0.0
      %2500 = vmatprep.subr.mxu0 0.0
      %2501 = vmatpush1.msra.mxu0 0.0
      %2502 = vmatprep.subr.mxu0 0.0
      %2503 = vmatpush1.msra.mxu0 0.0
      %2504 = vmatprep.subr.mxu0 0.0
      %2505 = vmatpush1.msra.mxu0 0.0
      %2506 = vmatprep.subr.mxu0 0.0
      %2507 = vmatpush1.msra.mxu0 0.0
      %2508 = vmatprep.subr.mxu0 0.0
      %2509 = vmatpush1.msra.mxu0 0.0
      %2510 = vmatprep.subr.mxu0 0.0
      %2511 = vmatpush1.msra.mxu0 0.0
      %2512 = vmatprep.subr.mxu0 0.0
      %2513 = vmatpush1.msra.mxu0 0.0
      %2514 = vmatprep.subr.mxu0 0.0
      %2515 = vmatpush1.msra.mxu0 0.0
      %2516 = vmatprep.subr.mxu0 0.0
      %2517 = vmatpush1.msra.mxu0 0.0
      %2518 = vmatprep.subr.mxu0 0.0
      %2519 = vmatpush1.msra.mxu0 0.0
      %2520 = vmatprep.subr.mxu0 0.0
      %2521 = vmatpush1.msra.mxu0 0.0
      %2522 = vmatprep.subr.mxu0 0.0
      %2523 = vmatpush1.msra.mxu0 0.0
      %2524 = vmatprep.subr.mxu0 0.0
      %2525 = vmatpush1.msra.mxu0 0.0
      %2526 = vmatprep.subr.mxu0 0.0
      %2527 = vmatpush1.msra.mxu0 0.0
      %2528 = vmatprep.subr.mxu0 0.0
      %2529 = vmatpush1.msra.mxu0 0.0
      %2530 = vmatprep.subr.mxu0 0.0
      %2531 = vmatpush1.msra.mxu0 0.0
      %2532 = vmatprep.subr.mxu0 0.0
      %2533 = vmatpush1.msra.mxu0 0.0
      %2534 = vmatprep.subr.mxu0 0.0
      %2535 = vmatpush1.msra.mxu0 0.0
      %2536 = vmatprep.subr.mxu0 0.0
      %2537 = vmatpush1.msra.mxu0 0.0
      %2538 = vmatprep.subr.mxu0 0.0
      %2539 = vmatpush1.msra.mxu0 0.0
      %2540 = vmatprep.subr.mxu0 0.0
      %2541 = vmatpush1.msra.mxu0 0.0
      %2542 = vmatprep.subr.mxu0 0.0
      %2543 = vmatpush1.msra.mxu0 0.0
      %2544 = vmatprep.subr.mxu0 0.0
      %2545 = vmatpush1.msra.mxu0 0.0
      %2546 = vmatprep.mubr.f32.mxu0 0.0
      %2547 = vmatmul.mubr.f32.gmra.mrb[0].mxu0 %v520
      %v2548 = vpop.f32.mrb[0].mxu0
      %v2549 = vadd.f32 0.0, %v2548
      %v2550 = vpop.f32.mrb[0].mxu0
      %2551 = vmatprep.mubr.f32.mxu0 0.0
      %2552 = vmatmul.mubr.f32.gmra.mrb[0].mxu0 %v523
      %v2553 = vpop.f32.mrb[0].mxu0
      %v2554 = vadd.f32 0.0, %v2553
      %v2555 = vpop.f32.mrb[0].mxu0
      %2556 = vmatprep.mubr.f32.mxu0 0.0
      %2557 = vmatmul.mubr.f32.gmra.mrb[0].mxu0 %v526
      %v2558 = vpop.f32.mrb[0].mxu0
      %v2559 = vadd.f32 0.0, %v2558
      %v2560 = vpop.f32.mrb[0].mxu0
      %2561 = vmatprep.mubr.f32.mxu0 0.0
      %2562 = vmatmul.mubr.f32.gmra.mrb[0].mxu0 %v529
      %v2563 = vpop.f32.mrb[0].mxu0
      %v2564 = vadd.f32 0.0, %v2563
      %v2565 = vpop.f32.mrb[0].mxu0
      %2566 = vdwg.mxu0
      %v2567 = vadd.f32 %v2468, %v2549
      %v2568 = vadd.f32 %v2469, %v2554
      %v2569 = vadd.f32 %v2470, %v2559
      %v2570 = vadd.f32 %v2471, %v2564
      %v2571 = vadd.f32 %v2567, %v625
      %v2572 = vadd.f32 %v2568, %v630
      %v2573 = vadd.f32 %v2569, %v635
      %v2574 = vadd.f32 %v2570, %v640
      %s2575 = scalar_lea.vmem %s170, 160
      %2576 = vst [vmem:[%s2575] sm:$0xff] %v2571
      %2577 = vst [vmem:[%s2575 + $0x8] sm:$0xff] %v2572
      %2578 = vst [vmem:[%s2575 + $0x10] sm:$0xff] %v2573
      %2579 = vst [vmem:[%s2575 + $0x18] sm:$0xff] %v2574
      %v2580 = vld [vmem:[%s2378] sm:$0xf]
      %v2581 = vld [vmem:[%s2378] sm:$0xff]
      %v2583 = vcombine.high %v2581, %v2581
      %2584 = vrot.lane.b32.xlu0 %v2581, 127
      %v2585 = vpop.permute.xlu0 %2584
      %2586 = vrot.lane.b32.xlu0 %v2583, 127
      %v2587 = vpop.permute.xlu0 %2586
      %v2588 = vsel %vm202, %v2585, %v2587
      %v2589 = vsel %vm217, %v2588, 0
      %2591 = vmatprep.subr.mxu0 0.0
      %2592 = vmatpush1.msra.mxu0 %v2589
      %2593 = vmatprep.subr.mxu0 0.0
      %2594 = vmatpush1.msra.mxu0 0.0
      %2595 = vmatprep.subr.mxu0 0.0
      %2596 = vmatpush1.msra.mxu0 0.0
      %2597 = vmatprep.subr.mxu0 0.0
      %2598 = vmatpush1.msra.mxu0 0.0
      %2599 = vmatprep.subr.mxu0 0.0
      %2600 = vmatpush1.msra.mxu0 0.0
      %2601 = vmatprep.subr.mxu0 0.0
      %2602 = vmatpush1.msra.mxu0 0.0
      %2603 = vmatprep.subr.mxu0 0.0
      %2604 = vmatpush1.msra.mxu0 0.0
      %2605 = vmatprep.subr.mxu0 0.0
      %2606 = vmatpush1.msra.mxu0 0.0
      %2607 = vmatprep.subr.mxu0 0.0
      %2608 = vmatpush1.msra.mxu0 0.0
      %2609 = vmatprep.subr.mxu0 0.0
      %2610 = vmatpush1.msra.mxu0 0.0
      %2611 = vmatprep.subr.mxu0 0.0
      %2612 = vmatpush1.msra.mxu0 0.0
      %2613 = vmatprep.subr.mxu0 0.0
      %2614 = vmatpush1.msra.mxu0 0.0
      %2615 = vmatprep.subr.mxu0 0.0
      %2616 = vmatpush1.msra.mxu0 0.0
      %2617 = vmatprep.subr.mxu0 0.0
      %2618 = vmatpush1.msra.mxu0 0.0
      %2619 = vmatprep.subr.mxu0 0.0
      %2620 = vmatpush1.msra.mxu0 0.0
      %2621 = vmatprep.subr.mxu0 0.0
      %2622 = vmatpush1.msra.mxu0 0.0
      %2623 = vmatprep.subr.mxu0 0.0
      %2624 = vmatpush1.msra.mxu0 0.0
      %2625 = vmatprep.subr.mxu0 0.0
      %2626 = vmatpush1.msra.mxu0 0.0
      %2627 = vmatprep.subr.mxu0 0.0
      %2628 = vmatpush1.msra.mxu0 0.0
      %2629 = vmatprep.subr.mxu0 0.0
      %2630 = vmatpush1.msra.mxu0 0.0
      %2631 = vmatprep.subr.mxu0 0.0
      %2632 = vmatpush1.msra.mxu0 0.0
      %2633 = vmatprep.subr.mxu0 0.0
      %2634 = vmatpush1.msra.mxu0 0.0
      %2635 = vmatprep.subr.mxu0 0.0
      %2636 = vmatpush1.msra.mxu0 0.0
      %2637 = vmatprep.subr.mxu0 0.0
      %2638 = vmatpush1.msra.mxu0 0.0
      %2639 = vmatprep.subr.mxu0 0.0
      %2640 = vmatpush1.msra.mxu0 0.0
      %2641 = vmatprep.subr.mxu0 0.0
      %2642 = vmatpush1.msra.mxu0 0.0
      %2643 = vmatprep.subr.mxu0 0.0
      %2644 = vmatpush1.msra.mxu0 0.0
      %2645 = vmatprep.subr.mxu0 0.0
      %2646 = vmatpush1.msra.mxu0 0.0
      %2647 = vmatprep.subr.mxu0 0.0
      %2648 = vmatpush1.msra.mxu0 0.0
      %2649 = vmatprep.subr.mxu0 0.0
      %2650 = vmatpush1.msra.mxu0 0.0
      %2651 = vmatprep.subr.mxu0 0.0
      %2652 = vmatpush1.msra.mxu0 0.0
      %2653 = vmatprep.subr.mxu0 0.0
      %2654 = vmatpush1.msra.mxu0 0.0
      %2655 = vmatprep.mubr.f32.mxu0 0.0
      %2656 = vmatmul.mubr.f32.gmra.mrb[0].mxu0 %v206
      %v2657 = vpop.f32.mrb[0].mxu0
      %v2658 = vadd.f32 0.0, %v2657
      %v2659 = vpop.f32.mrb[0].mxu0
      %2660 = vmatprep.mubr.f32.mxu0 0.0
      %2661 = vmatmul.mubr.f32.gmra.mrb[0].mxu0 %v209
      %v2662 = vpop.f32.mrb[0].mxu0
      %v2663 = vadd.f32 0.0, %v2662
      %v2664 = vpop.f32.mrb[0].mxu0
      %2665 = vmatprep.mubr.f32.mxu0 0.0
      %2666 = vmatmul.mubr.f32.gmra.mrb[0].mxu0 %v212
      %v2667 = vpop.f32.mrb[0].mxu0
      %v2668 = vadd.f32 0.0, %v2667
      %v2669 = vpop.f32.mrb[0].mxu0
      %2670 = vmatprep.mubr.f32.mxu0 0.0
      %2671 = vmatmul.mubr.f32.gmra.mrb[0].mxu0 %v215
      %v2672 = vpop.f32.mrb[0].mxu0
      %v2673 = vadd.f32 0.0, %v2672
      %v2674 = vpop.f32.mrb[0].mxu0
      %2675 = vdwg.mxu0
      %v2677 = vsel %vm217, %v2580, 0
      %2679 = vmatprep.subr.mxu0 0.0
      %2680 = vmatpush1.msra.mxu0 %v2677
      %2681 = vmatprep.subr.mxu0 0.0
      %2682 = vmatpush1.msra.mxu0 0.0
      %2683 = vmatprep.subr.mxu0 0.0
      %2684 = vmatpush1.msra.mxu0 0.0
      %2685 = vmatprep.subr.mxu0 0.0
      %2686 = vmatpush1.msra.mxu0 0.0
      %2687 = vmatprep.subr.mxu0 0.0
      %2688 = vmatpush1.msra.mxu0 0.0
      %2689 = vmatprep.subr.mxu0 0.0
      %2690 = vmatpush1.msra.mxu0 0.0
      %2691 = vmatprep.subr.mxu0 0.0
      %2692 = vmatpush1.msra.mxu0 0.0
      %2693 = vmatprep.subr.mxu0 0.0
      %2694 = vmatpush1.msra.mxu0 0.0
      %2695 = vmatprep.subr.mxu0 0.0
      %2696 = vmatpush1.msra.mxu0 0.0
      %2697 = vmatprep.subr.mxu0 0.0
      %2698 = vmatpush1.msra.mxu0 0.0
      %2699 = vmatprep.subr.mxu0 0.0
      %2700 = vmatpush1.msra.mxu0 0.0
      %2701 = vmatprep.subr.mxu0 0.0
      %2702 = vmatpush1.msra.mxu0 0.0
      %2703 = vmatprep.subr.mxu0 0.0
      %2704 = vmatpush1.msra.mxu0 0.0
      %2705 = vmatprep.subr.mxu0 0.0
      %2706 = vmatpush1.msra.mxu0 0.0
      %2707 = vmatprep.subr.mxu0 0.0
      %2708 = vmatpush1.msra.mxu0 0.0
      %2709 = vmatprep.subr.mxu0 0.0
      %2710 = vmatpush1.msra.mxu0 0.0
      %2711 = vmatprep.subr.mxu0 0.0
      %2712 = vmatpush1.msra.mxu0 0.0
      %2713 = vmatprep.subr.mxu0 0.0
      %2714 = vmatpush1.msra.mxu0 0.0
      %2715 = vmatprep.subr.mxu0 0.0
      %2716 = vmatpush1.msra.mxu0 0.0
      %2717 = vmatprep.subr.mxu0 0.0
      %2718 = vmatpush1.msra.mxu0 0.0
      %2719 = vmatprep.subr.mxu0 0.0
      %2720 = vmatpush1.msra.mxu0 0.0
      %2721 = vmatprep.subr.mxu0 0.0
      %2722 = vmatpush1.msra.mxu0 0.0
      %2723 = vmatprep.subr.mxu0 0.0
      %2724 = vmatpush1.msra.mxu0 0.0
      %2725 = vmatprep.subr.mxu0 0.0
      %2726 = vmatpush1.msra.mxu0 0.0
      %2727 = vmatprep.subr.mxu0 0.0
      %2728 = vmatpush1.msra.mxu0 0.0
      %2729 = vmatprep.subr.mxu0 0.0
      %2730 = vmatpush1.msra.mxu0 0.0
      %2731 = vmatprep.subr.mxu0 0.0
      %2732 = vmatpush1.msra.mxu0 0.0
      %2733 = vmatprep.subr.mxu0 0.0
      %2734 = vmatpush1.msra.mxu0 0.0
      %2735 = vmatprep.subr.mxu0 0.0
      %2736 = vmatpush1.msra.mxu0 0.0
      %2737 = vmatprep.subr.mxu0 0.0
      %2738 = vmatpush1.msra.mxu0 0.0
      %2739 = vmatprep.subr.mxu0 0.0
      %2740 = vmatpush1.msra.mxu0 0.0
      %2741 = vmatprep.subr.mxu0 0.0
      %2742 = vmatpush1.msra.mxu0 0.0
      %2743 = vmatprep.mubr.f32.mxu0 0.0
      %2744 = vmatmul.mubr.f32.gmra.mrb[0].mxu0 %v306
      %v2745 = vpop.f32.mrb[0].mxu0
      %v2746 = vadd.f32 %v2658, %v2745
      %v2747 = vpop.f32.mrb[0].mxu0
      %2748 = vmatprep.mubr.f32.mxu0 0.0
      %2749 = vmatmul.mubr.f32.gmra.mrb[0].mxu0 %v309
      %v2750 = vpop.f32.mrb[0].mxu0
      %v2751 = vadd.f32 %v2663, %v2750
      %v2752 = vpop.f32.mrb[0].mxu0
      %2753 = vmatprep.mubr.f32.mxu0 0.0
      %2754 = vmatmul.mubr.f32.gmra.mrb[0].mxu0 %v312
      %v2755 = vpop.f32.mrb[0].mxu0
      %v2756 = vadd.f32 %v2668, %v2755
      %v2757 = vpop.f32.mrb[0].mxu0
      %2758 = vmatprep.mubr.f32.mxu0 0.0
      %2759 = vmatmul.mubr.f32.gmra.mrb[0].mxu0 %v315
      %v2760 = vpop.f32.mrb[0].mxu0
      %v2761 = vadd.f32 %v2673, %v2760
      %v2762 = vpop.f32.mrb[0].mxu0
      %2763 = vdwg.mxu0
      %s2764 = scalar_lea.vmem %s165, 56
      %v2765 = vld [vmem:[%s2764] sm:$0xf]
      %v2767 = vsel %vm217, %v2765, 0
      %2769 = vmatprep.subr.mxu0 0.0
      %2770 = vmatpush1.msra.mxu0 %v2767
      %2771 = vmatprep.subr.mxu0 0.0
      %2772 = vmatpush1.msra.mxu0 0.0
      %2773 = vmatprep.subr.mxu0 0.0
      %2774 = vmatpush1.msra.mxu0 0.0
      %2775 = vmatprep.subr.mxu0 0.0
      %2776 = vmatpush1.msra.mxu0 0.0
      %2777 = vmatprep.subr.mxu0 0.0
      %2778 = vmatpush1.msra.mxu0 0.0
      %2779 = vmatprep.subr.mxu0 0.0
      %2780 = vmatpush1.msra.mxu0 0.0
      %2781 = vmatprep.subr.mxu0 0.0
      %2782 = vmatpush1.msra.mxu0 0.0
      %2783 = vmatprep.subr.mxu0 0.0
      %2784 = vmatpush1.msra.mxu0 0.0
      %2785 = vmatprep.subr.mxu0 0.0
      %2786 = vmatpush1.msra.mxu0 0.0
      %2787 = vmatprep.subr.mxu0 0.0
      %2788 = vmatpush1.msra.mxu0 0.0
      %2789 = vmatprep.subr.mxu0 0.0
      %2790 = vmatpush1.msra.mxu0 0.0
      %2791 = vmatprep.subr.mxu0 0.0
      %2792 = vmatpush1.msra.mxu0 0.0
      %2793 = vmatprep.subr.mxu0 0.0
      %2794 = vmatpush1.msra.mxu0 0.0
      %2795 = vmatprep.subr.mxu0 0.0
      %2796 = vmatpush1.msra.mxu0 0.0
      %2797 = vmatprep.subr.mxu0 0.0
      %2798 = vmatpush1.msra.mxu0 0.0
      %2799 = vmatprep.subr.mxu0 0.0
      %2800 = vmatpush1.msra.mxu0 0.0
      %2801 = vmatprep.subr.mxu0 0.0
      %2802 = vmatpush1.msra.mxu0 0.0
      %2803 = vmatprep.subr.mxu0 0.0
      %2804 = vmatpush1.msra.mxu0 0.0
      %2805 = vmatprep.subr.mxu0 0.0
      %2806 = vmatpush1.msra.mxu0 0.0
      %2807 = vmatprep.subr.mxu0 0.0
      %2808 = vmatpush1.msra.mxu0 0.0
      %2809 = vmatprep.subr.mxu0 0.0
      %2810 = vmatpush1.msra.mxu0 0.0
      %2811 = vmatprep.subr.mxu0 0.0
      %2812 = vmatpush1.msra.mxu0 0.0
      %2813 = vmatprep.subr.mxu0 0.0
      %2814 = vmatpush1.msra.mxu0 0.0
      %2815 = vmatprep.subr.mxu0 0.0
      %2816 = vmatpush1.msra.mxu0 0.0
      %2817 = vmatprep.subr.mxu0 0.0
      %2818 = vmatpush1.msra.mxu0 0.0
      %2819 = vmatprep.subr.mxu0 0.0
      %2820 = vmatpush1.msra.mxu0 0.0
      %2821 = vmatprep.subr.mxu0 0.0
      %2822 = vmatpush1.msra.mxu0 0.0
      %2823 = vmatprep.subr.mxu0 0.0
      %2824 = vmatpush1.msra.mxu0 0.0
      %2825 = vmatprep.subr.mxu0 0.0
      %2826 = vmatpush1.msra.mxu0 0.0
      %2827 = vmatprep.subr.mxu0 0.0
      %2828 = vmatpush1.msra.mxu0 0.0
      %2829 = vmatprep.subr.mxu0 0.0
      %2830 = vmatpush1.msra.mxu0 0.0
      %2831 = vmatprep.subr.mxu0 0.0
      %2832 = vmatpush1.msra.mxu0 0.0
      %2833 = vmatprep.mubr.f32.mxu0 0.0
      %2834 = vmatmul.mubr.f32.gmra.mrb[0].mxu0 %v408
      %v2835 = vpop.f32.mrb[0].mxu0
      %v2836 = vadd.f32 0.0, %v2835
      %v2837 = vpop.f32.mrb[0].mxu0
      %2838 = vmatprep.mubr.f32.mxu0 0.0
      %2839 = vmatmul.mubr.f32.gmra.mrb[0].mxu0 %v411
      %v2840 = vpop.f32.mrb[0].mxu0
      %v2841 = vadd.f32 0.0, %v2840
      %v2842 = vpop.f32.mrb[0].mxu0
      %2843 = vmatprep.mubr.f32.mxu0 0.0
      %2844 = vmatmul.mubr.f32.gmra.mrb[0].mxu0 %v414
      %v2845 = vpop.f32.mrb[0].mxu0
      %v2846 = vadd.f32 0.0, %v2845
      %v2847 = vpop.f32.mrb[0].mxu0
      %2848 = vmatprep.mubr.f32.mxu0 0.0
      %2849 = vmatmul.mubr.f32.gmra.mrb[0].mxu0 %v417
      %v2850 = vpop.f32.mrb[0].mxu0
      %v2851 = vadd.f32 0.0, %v2850
      %v2852 = vpop.f32.mrb[0].mxu0
      %2853 = vdwg.mxu0
      %v2854 = vadd.f32 %v2746, %v2836
      %v2855 = vadd.f32 %v2751, %v2841
      %v2856 = vadd.f32 %v2756, %v2846
      %v2857 = vadd.f32 %v2761, %v2851
      %v2858 = vld [vmem:[%s2764] sm:$0xff]
      %v2860 = vcombine.high %v2858, %v2858
      %2861 = vrot.lane.b32.xlu0 %v2858, 127
      %v2862 = vpop.permute.xlu0 %2861
      %2863 = vrot.lane.b32.xlu0 %v2860, 127
      %v2864 = vpop.permute.xlu0 %2863
      %v2865 = vsel %vm202, %v2862, %v2864
      %v2866 = vsel %vm217, %v2865, 0
      %2868 = vmatprep.subr.mxu0 0.0
      %2869 = vmatpush1.msra.mxu0 %v2866
      %2870 = vmatprep.subr.mxu0 0.0
      %2871 = vmatpush1.msra.mxu0 0.0
      %2872 = vmatprep.subr.mxu0 0.0
      %2873 = vmatpush1.msra.mxu0 0.0
      %2874 = vmatprep.subr.mxu0 0.0
      %2875 = vmatpush1.msra.mxu0 0.0
      %2876 = vmatprep.subr.mxu0 0.0
      %2877 = vmatpush1.msra.mxu0 0.0
      %2878 = vmatprep.subr.mxu0 0.0
      %2879 = vmatpush1.msra.mxu0 0.0
      %2880 = vmatprep.subr.mxu0 0.0
      %2881 = vmatpush1.msra.mxu0 0.0
      %2882 = vmatprep.subr.mxu0 0.0
      %2883 = vmatpush1.msra.mxu0 0.0
      %2884 = vmatprep.subr.mxu0 0.0
      %2885 = vmatpush1.msra.mxu0 0.0
      %2886 = vmatprep.subr.mxu0 0.0
      %2887 = vmatpush1.msra.mxu0 0.0
      %2888 = vmatprep.subr.mxu0 0.0
      %2889 = vmatpush1.msra.mxu0 0.0
      %2890 = vmatprep.subr.mxu0 0.0
      %2891 = vmatpush1.msra.mxu0 0.0
      %2892 = vmatprep.subr.mxu0 0.0
      %2893 = vmatpush1.msra.mxu0 0.0
      %2894 = vmatprep.subr.mxu0 0.0
      %2895 = vmatpush1.msra.mxu0 0.0
      %2896 = vmatprep.subr.mxu0 0.0
      %2897 = vmatpush1.msra.mxu0 0.0
      %2898 = vmatprep.subr.mxu0 0.0
      %2899 = vmatpush1.msra.mxu0 0.0
      %2900 = vmatprep.subr.mxu0 0.0
      %2901 = vmatpush1.msra.mxu0 0.0
      %2902 = vmatprep.subr.mxu0 0.0
      %2903 = vmatpush1.msra.mxu0 0.0
      %2904 = vmatprep.subr.mxu0 0.0
      %2905 = vmatpush1.msra.mxu0 0.0
      %2906 = vmatprep.subr.mxu0 0.0
      %2907 = vmatpush1.msra.mxu0 0.0
      %2908 = vmatprep.subr.mxu0 0.0
      %2909 = vmatpush1.msra.mxu0 0.0
      %2910 = vmatprep.subr.mxu0 0.0
      %2911 = vmatpush1.msra.mxu0 0.0
      %2912 = vmatprep.subr.mxu0 0.0
      %2913 = vmatpush1.msra.mxu0 0.0
      %2914 = vmatprep.subr.mxu0 0.0
      %2915 = vmatpush1.msra.mxu0 0.0
      %2916 = vmatprep.subr.mxu0 0.0
      %2917 = vmatpush1.msra.mxu0 0.0
      %2918 = vmatprep.subr.mxu0 0.0
      %2919 = vmatpush1.msra.mxu0 0.0
      %2920 = vmatprep.subr.mxu0 0.0
      %2921 = vmatpush1.msra.mxu0 0.0
      %2922 = vmatprep.subr.mxu0 0.0
      %2923 = vmatpush1.msra.mxu0 0.0
      %2924 = vmatprep.subr.mxu0 0.0
      %2925 = vmatpush1.msra.mxu0 0.0
      %2926 = vmatprep.subr.mxu0 0.0
      %2927 = vmatpush1.msra.mxu0 0.0
      %2928 = vmatprep.subr.mxu0 0.0
      %2929 = vmatpush1.msra.mxu0 0.0
      %2930 = vmatprep.subr.mxu0 0.0
      %2931 = vmatpush1.msra.mxu0 0.0
      %2932 = vmatprep.mubr.f32.mxu0 0.0
      %2933 = vmatmul.mubr.f32.gmra.mrb[0].mxu0 %v520
      %v2934 = vpop.f32.mrb[0].mxu0
      %v2935 = vadd.f32 0.0, %v2934
      %v2936 = vpop.f32.mrb[0].mxu0
      %2937 = vmatprep.mubr.f32.mxu0 0.0
      %2938 = vmatmul.mubr.f32.gmra.mrb[0].mxu0 %v523
      %v2939 = vpop.f32.mrb[0].mxu0
      %v2940 = vadd.f32 0.0, %v2939
      %v2941 = vpop.f32.mrb[0].mxu0
      %2942 = vmatprep.mubr.f32.mxu0 0.0
      %2943 = vmatmul.mubr.f32.gmra.mrb[0].mxu0 %v526
      %v2944 = vpop.f32.mrb[0].mxu0
      %v2945 = vadd.f32 0.0, %v2944
      %v2946 = vpop.f32.mrb[0].mxu0
      %2947 = vmatprep.mubr.f32.mxu0 0.0
      %2948 = vmatmul.mubr.f32.gmra.mrb[0].mxu0 %v529
      %v2949 = vpop.f32.mrb[0].mxu0
      %v2950 = vadd.f32 0.0, %v2949
      %v2951 = vpop.f32.mrb[0].mxu0
      %2952 = vdwg.mxu0
      %v2953 = vadd.f32 %v2854, %v2935
      %v2954 = vadd.f32 %v2855, %v2940
      %v2955 = vadd.f32 %v2856, %v2945
      %v2956 = vadd.f32 %v2857, %v2950
      %v2957 = vadd.f32 %v2953, %v625
      %v2958 = vadd.f32 %v2954, %v630
      %v2959 = vadd.f32 %v2955, %v635
      %v2960 = vadd.f32 %v2956, %v640
      %s2961 = scalar_lea.vmem %s170, 192
      %2962 = vst [vmem:[%s2961] sm:$0xff] %v2957
      %2963 = vst [vmem:[%s2961 + $0x8] sm:$0xff] %v2958
      %2964 = vst [vmem:[%s2961 + $0x10] sm:$0xff] %v2959
      %2965 = vst [vmem:[%s2961 + $0x18] sm:$0xff] %v2960
      %v2966 = vld [vmem:[%s2764] sm:$0xf]
      %v2967 = vld [vmem:[%s2764] sm:$0xff]
      %v2969 = vcombine.high %v2967, %v2967
      %2970 = vrot.lane.b32.xlu0 %v2967, 127
      %v2971 = vpop.permute.xlu0 %2970
      %2972 = vrot.lane.b32.xlu0 %v2969, 127
      %v2973 = vpop.permute.xlu0 %2972
      %v2974 = vsel %vm202, %v2971, %v2973
      %v2975 = vsel %vm217, %v2974, 0
      %2977 = vmatprep.subr.mxu0 0.0
      %2978 = vmatpush1.msra.mxu0 %v2975
      %2979 = vmatprep.subr.mxu0 0.0
      %2980 = vmatpush1.msra.mxu0 0.0
      %2981 = vmatprep.subr.mxu0 0.0
      %2982 = vmatpush1.msra.mxu0 0.0
      %2983 = vmatprep.subr.mxu0 0.0
      %2984 = vmatpush1.msra.mxu0 0.0
      %2985 = vmatprep.subr.mxu0 0.0
      %2986 = vmatpush1.msra.mxu0 0.0
      %2987 = vmatprep.subr.mxu0 0.0
      %2988 = vmatpush1.msra.mxu0 0.0
      %2989 = vmatprep.subr.mxu0 0.0
      %2990 = vmatpush1.msra.mxu0 0.0
      %2991 = vmatprep.subr.mxu0 0.0
      %2992 = vmatpush1.msra.mxu0 0.0
      %2993 = vmatprep.subr.mxu0 0.0
      %2994 = vmatpush1.msra.mxu0 0.0
      %2995 = vmatprep.subr.mxu0 0.0
      %2996 = vmatpush1.msra.mxu0 0.0
      %2997 = vmatprep.subr.mxu0 0.0
      %2998 = vmatpush1.msra.mxu0 0.0
      %2999 = vmatprep.subr.mxu0 0.0
      %3000 = vmatpush1.msra.mxu0 0.0
      %3001 = vmatprep.subr.mxu0 0.0
      %3002 = vmatpush1.msra.mxu0 0.0
      %3003 = vmatprep.subr.mxu0 0.0
      %3004 = vmatpush1.msra.mxu0 0.0
      %3005 = vmatprep.subr.mxu0 0.0
      %3006 = vmatpush1.msra.mxu0 0.0
      %3007 = vmatprep.subr.mxu0 0.0
      %3008 = vmatpush1.msra.mxu0 0.0
      %3009 = vmatprep.subr.mxu0 0.0
      %3010 = vmatpush1.msra.mxu0 0.0
      %3011 = vmatprep.subr.mxu0 0.0
      %3012 = vmatpush1.msra.mxu0 0.0
      %3013 = vmatprep.subr.mxu0 0.0
      %3014 = vmatpush1.msra.mxu0 0.0
      %3015 = vmatprep.subr.mxu0 0.0
      %3016 = vmatpush1.msra.mxu0 0.0
      %3017 = vmatprep.subr.mxu0 0.0
      %3018 = vmatpush1.msra.mxu0 0.0
      %3019 = vmatprep.subr.mxu0 0.0
      %3020 = vmatpush1.msra.mxu0 0.0
      %3021 = vmatprep.subr.mxu0 0.0
      %3022 = vmatpush1.msra.mxu0 0.0
      %3023 = vmatprep.subr.mxu0 0.0
      %3024 = vmatpush1.msra.mxu0 0.0
      %3025 = vmatprep.subr.mxu0 0.0
      %3026 = vmatpush1.msra.mxu0 0.0
      %3027 = vmatprep.subr.mxu0 0.0
      %3028 = vmatpush1.msra.mxu0 0.0
      %3029 = vmatprep.subr.mxu0 0.0
      %3030 = vmatpush1.msra.mxu0 0.0
      %3031 = vmatprep.subr.mxu0 0.0
      %3032 = vmatpush1.msra.mxu0 0.0
      %3033 = vmatprep.subr.mxu0 0.0
      %3034 = vmatpush1.msra.mxu0 0.0
      %3035 = vmatprep.subr.mxu0 0.0
      %3036 = vmatpush1.msra.mxu0 0.0
      %3037 = vmatprep.subr.mxu0 0.0
      %3038 = vmatpush1.msra.mxu0 0.0
      %3039 = vmatprep.subr.mxu0 0.0
      %3040 = vmatpush1.msra.mxu0 0.0
      %3041 = vmatprep.mubr.f32.mxu0 0.0
      %3042 = vmatmul.mubr.f32.gmra.mrb[0].mxu0 %v206
      %v3043 = vpop.f32.mrb[0].mxu0
      %v3044 = vadd.f32 0.0, %v3043
      %v3045 = vpop.f32.mrb[0].mxu0
      %3046 = vmatprep.mubr.f32.mxu0 0.0
      %3047 = vmatmul.mubr.f32.gmra.mrb[0].mxu0 %v209
      %v3048 = vpop.f32.mrb[0].mxu0
      %v3049 = vadd.f32 0.0, %v3048
      %v3050 = vpop.f32.mrb[0].mxu0
      %3051 = vmatprep.mubr.f32.mxu0 0.0
      %3052 = vmatmul.mubr.f32.gmra.mrb[0].mxu0 %v212
      %v3053 = vpop.f32.mrb[0].mxu0
      %v3054 = vadd.f32 0.0, %v3053
      %v3055 = vpop.f32.mrb[0].mxu0
      %3056 = vmatprep.mubr.f32.mxu0 0.0
      %3057 = vmatmul.mubr.f32.gmra.mrb[0].mxu0 %v215
      %v3058 = vpop.f32.mrb[0].mxu0
      %v3059 = vadd.f32 0.0, %v3058
      %v3060 = vpop.f32.mrb[0].mxu0
      %3061 = vdwg.mxu0
      %v3063 = vsel %vm217, %v2966, 0
      %3065 = vmatprep.subr.mxu0 0.0
      %3066 = vmatpush1.msra.mxu0 %v3063
      %3067 = vmatprep.subr.mxu0 0.0
      %3068 = vmatpush1.msra.mxu0 0.0
      %3069 = vmatprep.subr.mxu0 0.0
      %3070 = vmatpush1.msra.mxu0 0.0
      %3071 = vmatprep.subr.mxu0 0.0
      %3072 = vmatpush1.msra.mxu0 0.0
      %3073 = vmatprep.subr.mxu0 0.0
      %3074 = vmatpush1.msra.mxu0 0.0
      %3075 = vmatprep.subr.mxu0 0.0
      %3076 = vmatpush1.msra.mxu0 0.0
      %3077 = vmatprep.subr.mxu0 0.0
      %3078 = vmatpush1.msra.mxu0 0.0
      %3079 = vmatprep.subr.mxu0 0.0
      %3080 = vmatpush1.msra.mxu0 0.0
      %3081 = vmatprep.subr.mxu0 0.0
      %3082 = vmatpush1.msra.mxu0 0.0
      %3083 = vmatprep.subr.mxu0 0.0
      %3084 = vmatpush1.msra.mxu0 0.0
      %3085 = vmatprep.subr.mxu0 0.0
      %3086 = vmatpush1.msra.mxu0 0.0
      %3087 = vmatprep.subr.mxu0 0.0
      %3088 = vmatpush1.msra.mxu0 0.0
      %3089 = vmatprep.subr.mxu0 0.0
      %3090 = vmatpush1.msra.mxu0 0.0
      %3091 = vmatprep.subr.mxu0 0.0
      %3092 = vmatpush1.msra.mxu0 0.0
      %3093 = vmatprep.subr.mxu0 0.0
      %3094 = vmatpush1.msra.mxu0 0.0
      %3095 = vmatprep.subr.mxu0 0.0
      %3096 = vmatpush1.msra.mxu0 0.0
      %3097 = vmatprep.subr.mxu0 0.0
      %3098 = vmatpush1.msra.mxu0 0.0
      %3099 = vmatprep.subr.mxu0 0.0
      %3100 = vmatpush1.msra.mxu0 0.0
      %3101 = vmatprep.subr.mxu0 0.0
      %3102 = vmatpush1.msra.mxu0 0.0
      %3103 = vmatprep.subr.mxu0 0.0
      %3104 = vmatpush1.msra.mxu0 0.0
      %3105 = vmatprep.subr.mxu0 0.0
      %3106 = vmatpush1.msra.mxu0 0.0
      %3107 = vmatprep.subr.mxu0 0.0
      %3108 = vmatpush1.msra.mxu0 0.0
      %3109 = vmatprep.subr.mxu0 0.0
      %3110 = vmatpush1.msra.mxu0 0.0
      %3111 = vmatprep.subr.mxu0 0.0
      %3112 = vmatpush1.msra.mxu0 0.0
      %3113 = vmatprep.subr.mxu0 0.0
      %3114 = vmatpush1.msra.mxu0 0.0
      %3115 = vmatprep.subr.mxu0 0.0
      %3116 = vmatpush1.msra.mxu0 0.0
      %3117 = vmatprep.subr.mxu0 0.0
      %3118 = vmatpush1.msra.mxu0 0.0
      %3119 = vmatprep.subr.mxu0 0.0
      %3120 = vmatpush1.msra.mxu0 0.0
      %3121 = vmatprep.subr.mxu0 0.0
      %3122 = vmatpush1.msra.mxu0 0.0
      %3123 = vmatprep.subr.mxu0 0.0
      %3124 = vmatpush1.msra.mxu0 0.0
      %3125 = vmatprep.subr.mxu0 0.0
      %3126 = vmatpush1.msra.mxu0 0.0
      %3127 = vmatprep.subr.mxu0 0.0
      %3128 = vmatpush1.msra.mxu0 0.0
      %3129 = vmatprep.mubr.f32.mxu0 0.0
      %3130 = vmatmul.mubr.f32.gmra.mrb[0].mxu0 %v306
      %v3131 = vpop.f32.mrb[0].mxu0
      %v3132 = vadd.f32 %v3044, %v3131
      %v3133 = vpop.f32.mrb[0].mxu0
      %3134 = vmatprep.mubr.f32.mxu0 0.0
      %3135 = vmatmul.mubr.f32.gmra.mrb[0].mxu0 %v309
      %v3136 = vpop.f32.mrb[0].mxu0
      %v3137 = vadd.f32 %v3049, %v3136
      %v3138 = vpop.f32.mrb[0].mxu0
      %3139 = vmatprep.mubr.f32.mxu0 0.0
      %3140 = vmatmul.mubr.f32.gmra.mrb[0].mxu0 %v312
      %v3141 = vpop.f32.mrb[0].mxu0
      %v3142 = vadd.f32 %v3054, %v3141
      %v3143 = vpop.f32.mrb[0].mxu0
      %3144 = vmatprep.mubr.f32.mxu0 0.0
      %3145 = vmatmul.mubr.f32.gmra.mrb[0].mxu0 %v315
      %v3146 = vpop.f32.mrb[0].mxu0
      %v3147 = vadd.f32 %v3059, %v3146
      %v3148 = vpop.f32.mrb[0].mxu0
      %3149 = vdwg.mxu0
      %s3150 = scalar_lea.vmem %s165, 64
      %v3151 = vld [vmem:[%s3150] sm:$0xf]
      %v3153 = vsel %vm217, %v3151, 0
      %3155 = vmatprep.subr.mxu0 0.0
      %3156 = vmatpush1.msra.mxu0 %v3153
      %3157 = vmatprep.subr.mxu0 0.0
      %3158 = vmatpush1.msra.mxu0 0.0
      %3159 = vmatprep.subr.mxu0 0.0
      %3160 = vmatpush1.msra.mxu0 0.0
      %3161 = vmatprep.subr.mxu0 0.0
      %3162 = vmatpush1.msra.mxu0 0.0
      %3163 = vmatprep.subr.mxu0 0.0
      %3164 = vmatpush1.msra.mxu0 0.0
      %3165 = vmatprep.subr.mxu0 0.0
      %3166 = vmatpush1.msra.mxu0 0.0
      %3167 = vmatprep.subr.mxu0 0.0
      %3168 = vmatpush1.msra.mxu0 0.0
      %3169 = vmatprep.subr.mxu0 0.0
      %3170 = vmatpush1.msra.mxu0 0.0
      %3171 = vmatprep.subr.mxu0 0.0
      %3172 = vmatpush1.msra.mxu0 0.0
      %3173 = vmatprep.subr.mxu0 0.0
      %3174 = vmatpush1.msra.mxu0 0.0
      %3175 = vmatprep.subr.mxu0 0.0
      %3176 = vmatpush1.msra.mxu0 0.0
      %3177 = vmatprep.subr.mxu0 0.0
      %3178 = vmatpush1.msra.mxu0 0.0
      %3179 = vmatprep.subr.mxu0 0.0
      %3180 = vmatpush1.msra.mxu0 0.0
      %3181 = vmatprep.subr.mxu0 0.0
      %3182 = vmatpush1.msra.mxu0 0.0
      %3183 = vmatprep.subr.mxu0 0.0
      %3184 = vmatpush1.msra.mxu0 0.0
      %3185 = vmatprep.subr.mxu0 0.0
      %3186 = vmatpush1.msra.mxu0 0.0
      %3187 = vmatprep.subr.mxu0 0.0
      %3188 = vmatpush1.msra.mxu0 0.0
      %3189 = vmatprep.subr.mxu0 0.0
      %3190 = vmatpush1.msra.mxu0 0.0
      %3191 = vmatprep.subr.mxu0 0.0
      %3192 = vmatpush1.msra.mxu0 0.0
      %3193 = vmatprep.subr.mxu0 0.0
      %3194 = vmatpush1.msra.mxu0 0.0
      %3195 = vmatprep.subr.mxu0 0.0
      %3196 = vmatpush1.msra.mxu0 0.0
      %3197 = vmatprep.subr.mxu0 0.0
      %3198 = vmatpush1.msra.mxu0 0.0
      %3199 = vmatprep.subr.mxu0 0.0
      %3200 = vmatpush1.msra.mxu0 0.0
      %3201 = vmatprep.subr.mxu0 0.0
      %3202 = vmatpush1.msra.mxu0 0.0
      %3203 = vmatprep.subr.mxu0 0.0
      %3204 = vmatpush1.msra.mxu0 0.0
      %3205 = vmatprep.subr.mxu0 0.0
      %3206 = vmatpush1.msra.mxu0 0.0
      %3207 = vmatprep.subr.mxu0 0.0
      %3208 = vmatpush1.msra.mxu0 0.0
      %3209 = vmatprep.subr.mxu0 0.0
      %3210 = vmatpush1.msra.mxu0 0.0
      %3211 = vmatprep.subr.mxu0 0.0
      %3212 = vmatpush1.msra.mxu0 0.0
      %3213 = vmatprep.subr.mxu0 0.0
      %3214 = vmatpush1.msra.mxu0 0.0
      %3215 = vmatprep.subr.mxu0 0.0
      %3216 = vmatpush1.msra.mxu0 0.0
      %3217 = vmatprep.subr.mxu0 0.0
      %3218 = vmatpush1.msra.mxu0 0.0
      %3219 = vmatprep.mubr.f32.mxu0 0.0
      %3220 = vmatmul.mubr.f32.gmra.mrb[0].mxu0 %v408
      %v3221 = vpop.f32.mrb[0].mxu0
      %v3222 = vadd.f32 0.0, %v3221
      %v3223 = vpop.f32.mrb[0].mxu0
      %3224 = vmatprep.mubr.f32.mxu0 0.0
      %3225 = vmatmul.mubr.f32.gmra.mrb[0].mxu0 %v411
      %v3226 = vpop.f32.mrb[0].mxu0
      %v3227 = vadd.f32 0.0, %v3226
      %v3228 = vpop.f32.mrb[0].mxu0
      %3229 = vmatprep.mubr.f32.mxu0 0.0
      %3230 = vmatmul.mubr.f32.gmra.mrb[0].mxu0 %v414
      %v3231 = vpop.f32.mrb[0].mxu0
      %v3232 = vadd.f32 0.0, %v3231
      %v3233 = vpop.f32.mrb[0].mxu0
      %3234 = vmatprep.mubr.f32.mxu0 0.0
      %3235 = vmatmul.mubr.f32.gmra.mrb[0].mxu0 %v417
      %v3236 = vpop.f32.mrb[0].mxu0
      %v3237 = vadd.f32 0.0, %v3236
      %v3238 = vpop.f32.mrb[0].mxu0
      %3239 = vdwg.mxu0
      %v3240 = vadd.f32 %v3132, %v3222
      %v3241 = vadd.f32 %v3137, %v3227
      %v3242 = vadd.f32 %v3142, %v3232
      %v3243 = vadd.f32 %v3147, %v3237
      %v3244 = vld [vmem:[%s3150] sm:$0xff]
      %v3246 = vcombine.high %v3244, %v3244
      %3247 = vrot.lane.b32.xlu0 %v3244, 127
      %v3248 = vpop.permute.xlu0 %3247
      %3249 = vrot.lane.b32.xlu0 %v3246, 127
      %v3250 = vpop.permute.xlu0 %3249
      %v3251 = vsel %vm202, %v3248, %v3250
      %v3252 = vsel %vm217, %v3251, 0
      %3254 = vmatprep.subr.mxu0 0.0
      %3255 = vmatpush1.msra.mxu0 %v3252
      %3256 = vmatprep.subr.mxu0 0.0
      %3257 = vmatpush1.msra.mxu0 0.0
      %3258 = vmatprep.subr.mxu0 0.0
      %3259 = vmatpush1.msra.mxu0 0.0
      %3260 = vmatprep.subr.mxu0 0.0
      %3261 = vmatpush1.msra.mxu0 0.0
      %3262 = vmatprep.subr.mxu0 0.0
      %3263 = vmatpush1.msra.mxu0 0.0
      %3264 = vmatprep.subr.mxu0 0.0
      %3265 = vmatpush1.msra.mxu0 0.0
      %3266 = vmatprep.subr.mxu0 0.0
      %3267 = vmatpush1.msra.mxu0 0.0
      %3268 = vmatprep.subr.mxu0 0.0
      %3269 = vmatpush1.msra.mxu0 0.0
      %3270 = vmatprep.subr.mxu0 0.0
      %3271 = vmatpush1.msra.mxu0 0.0
      %3272 = vmatprep.subr.mxu0 0.0
      %3273 = vmatpush1.msra.mxu0 0.0
      %3274 = vmatprep.subr.mxu0 0.0
      %3275 = vmatpush1.msra.mxu0 0.0
      %3276 = vmatprep.subr.mxu0 0.0
      %3277 = vmatpush1.msra.mxu0 0.0
      %3278 = vmatprep.subr.mxu0 0.0
      %3279 = vmatpush1.msra.mxu0 0.0
      %3280 = vmatprep.subr.mxu0 0.0
      %3281 = vmatpush1.msra.mxu0 0.0
      %3282 = vmatprep.subr.mxu0 0.0
      %3283 = vmatpush1.msra.mxu0 0.0
      %3284 = vmatprep.subr.mxu0 0.0
      %3285 = vmatpush1.msra.mxu0 0.0
      %3286 = vmatprep.subr.mxu0 0.0
      %3287 = vmatpush1.msra.mxu0 0.0
      %3288 = vmatprep.subr.mxu0 0.0
      %3289 = vmatpush1.msra.mxu0 0.0
      %3290 = vmatprep.subr.mxu0 0.0
      %3291 = vmatpush1.msra.mxu0 0.0
      %3292 = vmatprep.subr.mxu0 0.0
      %3293 = vmatpush1.msra.mxu0 0.0
      %3294 = vmatprep.subr.mxu0 0.0
      %3295 = vmatpush1.msra.mxu0 0.0
      %3296 = vmatprep.subr.mxu0 0.0
      %3297 = vmatpush1.msra.mxu0 0.0
      %3298 = vmatprep.subr.mxu0 0.0
      %3299 = vmatpush1.msra.mxu0 0.0
      %3300 = vmatprep.subr.mxu0 0.0
      %3301 = vmatpush1.msra.mxu0 0.0
      %3302 = vmatprep.subr.mxu0 0.0
      %3303 = vmatpush1.msra.mxu0 0.0
      %3304 = vmatprep.subr.mxu0 0.0
      %3305 = vmatpush1.msra.mxu0 0.0
      %3306 = vmatprep.subr.mxu0 0.0
      %3307 = vmatpush1.msra.mxu0 0.0
      %3308 = vmatprep.subr.mxu0 0.0
      %3309 = vmatpush1.msra.mxu0 0.0
      %3310 = vmatprep.subr.mxu0 0.0
      %3311 = vmatpush1.msra.mxu0 0.0
      %3312 = vmatprep.subr.mxu0 0.0
      %3313 = vmatpush1.msra.mxu0 0.0
      %3314 = vmatprep.subr.mxu0 0.0
      %3315 = vmatpush1.msra.mxu0 0.0
      %3316 = vmatprep.subr.mxu0 0.0
      %3317 = vmatpush1.msra.mxu0 0.0
      %3318 = vmatprep.mubr.f32.mxu0 0.0
      %3319 = vmatmul.mubr.f32.gmra.mrb[0].mxu0 %v520
      %v3320 = vpop.f32.mrb[0].mxu0
      %v3321 = vadd.f32 0.0, %v3320
      %v3322 = vpop.f32.mrb[0].mxu0
      %3323 = vmatprep.mubr.f32.mxu0 0.0
      %3324 = vmatmul.mubr.f32.gmra.mrb[0].mxu0 %v523
      %v3325 = vpop.f32.mrb[0].mxu0
      %v3326 = vadd.f32 0.0, %v3325
      %v3327 = vpop.f32.mrb[0].mxu0
      %3328 = vmatprep.mubr.f32.mxu0 0.0
      %3329 = vmatmul.mubr.f32.gmra.mrb[0].mxu0 %v526
      %v3330 = vpop.f32.mrb[0].mxu0
      %v3331 = vadd.f32 0.0, %v3330
      %v3332 = vpop.f32.mrb[0].mxu0
      %3333 = vmatprep.mubr.f32.mxu0 0.0
      %3334 = vmatmul.mubr.f32.gmra.mrb[0].mxu0 %v529
      %v3335 = vpop.f32.mrb[0].mxu0
      %v3336 = vadd.f32 0.0, %v3335
      %v3337 = vpop.f32.mrb[0].mxu0
      %3338 = vdwg.mxu0
      %v3339 = vadd.f32 %v3240, %v3321
      %v3340 = vadd.f32 %v3241, %v3326
      %v3341 = vadd.f32 %v3242, %v3331
      %v3342 = vadd.f32 %v3243, %v3336
      %v3343 = vadd.f32 %v3339, %v625
      %v3344 = vadd.f32 %v3340, %v630
      %v3345 = vadd.f32 %v3341, %v635
      %v3346 = vadd.f32 %v3342, %v640
      %s3347 = scalar_lea.vmem %s170, 224
      %3348 = vst [vmem:[%s3347] sm:$0xff] %v3343
      %3349 = vst [vmem:[%s3347 + $0x8] sm:$0xff] %v3344
      %3350 = vst [vmem:[%s3347 + $0x10] sm:$0xff] %v3345
      %3351 = vst [vmem:[%s3347 + $0x18] sm:$0xff] %v3346
      %v3352 = vld [vmem:[%s3150] sm:$0xf]
      %v3353 = vld [vmem:[%s3150] sm:$0xff]
      %v3355 = vcombine.high %v3353, %v3353
      %3356 = vrot.lane.b32.xlu0 %v3353, 127
      %v3357 = vpop.permute.xlu0 %3356
      %3358 = vrot.lane.b32.xlu0 %v3355, 127
      %v3359 = vpop.permute.xlu0 %3358
      %v3360 = vsel %vm202, %v3357, %v3359
      %v3361 = vsel %vm217, %v3360, 0
      %3363 = vmatprep.subr.mxu0 0.0
      %3364 = vmatpush1.msra.mxu0 %v3361
      %3365 = vmatprep.subr.mxu0 0.0
      %3366 = vmatpush1.msra.mxu0 0.0
      %3367 = vmatprep.subr.mxu0 0.0
      %3368 = vmatpush1.msra.mxu0 0.0
      %3369 = vmatprep.subr.mxu0 0.0
      %3370 = vmatpush1.msra.mxu0 0.0
      %3371 = vmatprep.subr.mxu0 0.0
      %3372 = vmatpush1.msra.mxu0 0.0
      %3373 = vmatprep.subr.mxu0 0.0
      %3374 = vmatpush1.msra.mxu0 0.0
      %3375 = vmatprep.subr.mxu0 0.0
      %3376 = vmatpush1.msra.mxu0 0.0
      %3377 = vmatprep.subr.mxu0 0.0
      %3378 = vmatpush1.msra.mxu0 0.0
      %3379 = vmatprep.subr.mxu0 0.0
      %3380 = vmatpush1.msra.mxu0 0.0
      %3381 = vmatprep.subr.mxu0 0.0
      %3382 = vmatpush1.msra.mxu0 0.0
      %3383 = vmatprep.subr.mxu0 0.0
      %3384 = vmatpush1.msra.mxu0 0.0
      %3385 = vmatprep.subr.mxu0 0.0
      %3386 = vmatpush1.msra.mxu0 0.0
      %3387 = vmatprep.subr.mxu0 0.0
      %3388 = vmatpush1.msra.mxu0 0.0
      %3389 = vmatprep.subr.mxu0 0.0
      %3390 = vmatpush1.msra.mxu0 0.0
      %3391 = vmatprep.subr.mxu0 0.0
      %3392 = vmatpush1.msra.mxu0 0.0
      %3393 = vmatprep.subr.mxu0 0.0
      %3394 = vmatpush1.msra.mxu0 0.0
      %3395 = vmatprep.subr.mxu0 0.0
      %3396 = vmatpush1.msra.mxu0 0.0
      %3397 = vmatprep.subr.mxu0 0.0
      %3398 = vmatpush1.msra.mxu0 0.0
      %3399 = vmatprep.subr.mxu0 0.0
      %3400 = vmatpush1.msra.mxu0 0.0
      %3401 = vmatprep.subr.mxu0 0.0
      %3402 = vmatpush1.msra.mxu0 0.0
      %3403 = vmatprep.subr.mxu0 0.0
      %3404 = vmatpush1.msra.mxu0 0.0
      %3405 = vmatprep.subr.mxu0 0.0
      %3406 = vmatpush1.msra.mxu0 0.0
      %3407 = vmatprep.subr.mxu0 0.0
      %3408 = vmatpush1.msra.mxu0 0.0
      %3409 = vmatprep.subr.mxu0 0.0
      %3410 = vmatpush1.msra.mxu0 0.0
      %3411 = vmatprep.subr.mxu0 0.0
      %3412 = vmatpush1.msra.mxu0 0.0
      %3413 = vmatprep.subr.mxu0 0.0
      %3414 = vmatpush1.msra.mxu0 0.0
      %3415 = vmatprep.subr.mxu0 0.0
      %3416 = vmatpush1.msra.mxu0 0.0
      %3417 = vmatprep.subr.mxu0 0.0
      %3418 = vmatpush1.msra.mxu0 0.0
      %3419 = vmatprep.subr.mxu0 0.0
      %3420 = vmatpush1.msra.mxu0 0.0
      %3421 = vmatprep.subr.mxu0 0.0
      %3422 = vmatpush1.msra.mxu0 0.0
      %3423 = vmatprep.subr.mxu0 0.0
      %3424 = vmatpush1.msra.mxu0 0.0
      %3425 = vmatprep.subr.mxu0 0.0
      %3426 = vmatpush1.msra.mxu0 0.0
      %3427 = vmatprep.mubr.f32.mxu0 0.0
      %3428 = vmatmul.mubr.f32.gmra.mrb[0].mxu0 %v206
      %v3429 = vpop.f32.mrb[0].mxu0
      %v3430 = vadd.f32 0.0, %v3429
      %v3431 = vpop.f32.mrb[0].mxu0
      %3432 = vmatprep.mubr.f32.mxu0 0.0
      %3433 = vmatmul.mubr.f32.gmra.mrb[0].mxu0 %v209
      %v3434 = vpop.f32.mrb[0].mxu0
      %v3435 = vadd.f32 0.0, %v3434
      %v3436 = vpop.f32.mrb[0].mxu0
      %3437 = vmatprep.mubr.f32.mxu0 0.0
      %3438 = vmatmul.mubr.f32.gmra.mrb[0].mxu0 %v212
      %v3439 = vpop.f32.mrb[0].mxu0
      %v3440 = vadd.f32 0.0, %v3439
      %v3441 = vpop.f32.mrb[0].mxu0
      %3442 = vmatprep.mubr.f32.mxu0 0.0
      %3443 = vmatmul.mubr.f32.gmra.mrb[0].mxu0 %v215
      %v3444 = vpop.f32.mrb[0].mxu0
      %v3445 = vadd.f32 0.0, %v3444
      %v3446 = vpop.f32.mrb[0].mxu0
      %3447 = vdwg.mxu0
      %v3449 = vsel %vm217, %v3352, 0
      %3451 = vmatprep.subr.mxu0 0.0
      %3452 = vmatpush1.msra.mxu0 %v3449
      %3453 = vmatprep.subr.mxu0 0.0
      %3454 = vmatpush1.msra.mxu0 0.0
      %3455 = vmatprep.subr.mxu0 0.0
      %3456 = vmatpush1.msra.mxu0 0.0
      %3457 = vmatprep.subr.mxu0 0.0
      %3458 = vmatpush1.msra.mxu0 0.0
      %3459 = vmatprep.subr.mxu0 0.0
      %3460 = vmatpush1.msra.mxu0 0.0
      %3461 = vmatprep.subr.mxu0 0.0
      %3462 = vmatpush1.msra.mxu0 0.0
      %3463 = vmatprep.subr.mxu0 0.0
      %3464 = vmatpush1.msra.mxu0 0.0
      %3465 = vmatprep.subr.mxu0 0.0
      %3466 = vmatpush1.msra.mxu0 0.0
      %3467 = vmatprep.subr.mxu0 0.0
      %3468 = vmatpush1.msra.mxu0 0.0
      %3469 = vmatprep.subr.mxu0 0.0
      %3470 = vmatpush1.msra.mxu0 0.0
      %3471 = vmatprep.subr.mxu0 0.0
      %3472 = vmatpush1.msra.mxu0 0.0
      %3473 = vmatprep.subr.mxu0 0.0
      %3474 = vmatpush1.msra.mxu0 0.0
      %3475 = vmatprep.subr.mxu0 0.0
      %3476 = vmatpush1.msra.mxu0 0.0
      %3477 = vmatprep.subr.mxu0 0.0
      %3478 = vmatpush1.msra.mxu0 0.0
      %3479 = vmatprep.subr.mxu0 0.0
      %3480 = vmatpush1.msra.mxu0 0.0
      %3481 = vmatprep.subr.mxu0 0.0
      %3482 = vmatpush1.msra.mxu0 0.0
      %3483 = vmatprep.subr.mxu0 0.0
      %3484 = vmatpush1.msra.mxu0 0.0
      %3485 = vmatprep.subr.mxu0 0.0
      %3486 = vmatpush1.msra.mxu0 0.0
      %3487 = vmatprep.subr.mxu0 0.0
      %3488 = vmatpush1.msra.mxu0 0.0
      %3489 = vmatprep.subr.mxu0 0.0
      %3490 = vmatpush1.msra.mxu0 0.0
      %3491 = vmatprep.subr.mxu0 0.0
      %3492 = vmatpush1.msra.mxu0 0.0
      %3493 = vmatprep.subr.mxu0 0.0
      %3494 = vmatpush1.msra.mxu0 0.0
      %3495 = vmatprep.subr.mxu0 0.0
      %3496 = vmatpush1.msra.mxu0 0.0
      %3497 = vmatprep.subr.mxu0 0.0
      %3498 = vmatpush1.msra.mxu0 0.0
      %3499 = vmatprep.subr.mxu0 0.0
      %3500 = vmatpush1.msra.mxu0 0.0
      %3501 = vmatprep.subr.mxu0 0.0
      %3502 = vmatpush1.msra.mxu0 0.0
      %3503 = vmatprep.subr.mxu0 0.0
      %3504 = vmatpush1.msra.mxu0 0.0
      %3505 = vmatprep.subr.mxu0 0.0
      %3506 = vmatpush1.msra.mxu0 0.0
      %3507 = vmatprep.subr.mxu0 0.0
      %3508 = vmatpush1.msra.mxu0 0.0
      %3509 = vmatprep.subr.mxu0 0.0
      %3510 = vmatpush1.msra.mxu0 0.0
      %3511 = vmatprep.subr.mxu0 0.0
      %3512 = vmatpush1.msra.mxu0 0.0
      %3513 = vmatprep.subr.mxu0 0.0
      %3514 = vmatpush1.msra.mxu0 0.0
      %3515 = vmatprep.mubr.f32.mxu0 0.0
      %3516 = vmatmul.mubr.f32.gmra.mrb[0].mxu0 %v306
      %v3517 = vpop.f32.mrb[0].mxu0
      %v3518 = vadd.f32 %v3430, %v3517
      %v3519 = vpop.f32.mrb[0].mxu0
      %3520 = vmatprep.mubr.f32.mxu0 0.0
      %3521 = vmatmul.mubr.f32.gmra.mrb[0].mxu0 %v309
      %v3522 = vpop.f32.mrb[0].mxu0
      %v3523 = vadd.f32 %v3435, %v3522
      %v3524 = vpop.f32.mrb[0].mxu0
      %3525 = vmatprep.mubr.f32.mxu0 0.0
      %3526 = vmatmul.mubr.f32.gmra.mrb[0].mxu0 %v312
      %v3527 = vpop.f32.mrb[0].mxu0
      %v3528 = vadd.f32 %v3440, %v3527
      %v3529 = vpop.f32.mrb[0].mxu0
      %3530 = vmatprep.mubr.f32.mxu0 0.0
      %3531 = vmatmul.mubr.f32.gmra.mrb[0].mxu0 %v315
      %v3532 = vpop.f32.mrb[0].mxu0
      %v3533 = vadd.f32 %v3445, %v3532
      %v3534 = vpop.f32.mrb[0].mxu0
      %3535 = vdwg.mxu0
      %s3536 = scalar_lea.vmem %s165, 72
      %v3537 = vld [vmem:[%s3536] sm:$0xf]
      %v3539 = vsel %vm217, %v3537, 0
      %3541 = vmatprep.subr.mxu0 0.0
      %3542 = vmatpush1.msra.mxu0 %v3539
      %3543 = vmatprep.subr.mxu0 0.0
      %3544 = vmatpush1.msra.mxu0 0.0
      %3545 = vmatprep.subr.mxu0 0.0
      %3546 = vmatpush1.msra.mxu0 0.0
      %3547 = vmatprep.subr.mxu0 0.0
      %3548 = vmatpush1.msra.mxu0 0.0
      %3549 = vmatprep.subr.mxu0 0.0
      %3550 = vmatpush1.msra.mxu0 0.0
      %3551 = vmatprep.subr.mxu0 0.0
      %3552 = vmatpush1.msra.mxu0 0.0
      %3553 = vmatprep.subr.mxu0 0.0
      %3554 = vmatpush1.msra.mxu0 0.0
      %3555 = vmatprep.subr.mxu0 0.0
      %3556 = vmatpush1.msra.mxu0 0.0
      %3557 = vmatprep.subr.mxu0 0.0
      %3558 = vmatpush1.msra.mxu0 0.0
      %3559 = vmatprep.subr.mxu0 0.0
      %3560 = vmatpush1.msra.mxu0 0.0
      %3561 = vmatprep.subr.mxu0 0.0
      %3562 = vmatpush1.msra.mxu0 0.0
      %3563 = vmatprep.subr.mxu0 0.0
      %3564 = vmatpush1.msra.mxu0 0.0
      %3565 = vmatprep.subr.mxu0 0.0
      %3566 = vmatpush1.msra.mxu0 0.0
      %3567 = vmatprep.subr.mxu0 0.0
      %3568 = vmatpush1.msra.mxu0 0.0
      %3569 = vmatprep.subr.mxu0 0.0
      %3570 = vmatpush1.msra.mxu0 0.0
      %3571 = vmatprep.subr.mxu0 0.0
      %3572 = vmatpush1.msra.mxu0 0.0
      %3573 = vmatprep.subr.mxu0 0.0
      %3574 = vmatpush1.msra.mxu0 0.0
      %3575 = vmatprep.subr.mxu0 0.0
      %3576 = vmatpush1.msra.mxu0 0.0
      %3577 = vmatprep.subr.mxu0 0.0
      %3578 = vmatpush1.msra.mxu0 0.0
      %3579 = vmatprep.subr.mxu0 0.0
      %3580 = vmatpush1.msra.mxu0 0.0
      %3581 = vmatprep.subr.mxu0 0.0
      %3582 = vmatpush1.msra.mxu0 0.0
      %3583 = vmatprep.subr.mxu0 0.0
      %3584 = vmatpush1.msra.mxu0 0.0
      %3585 = vmatprep.subr.mxu0 0.0
      %3586 = vmatpush1.msra.mxu0 0.0
      %3587 = vmatprep.subr.mxu0 0.0
      %3588 = vmatpush1.msra.mxu0 0.0
      %3589 = vmatprep.subr.mxu0 0.0
      %3590 = vmatpush1.msra.mxu0 0.0
      %3591 = vmatprep.subr.mxu0 0.0
      %3592 = vmatpush1.msra.mxu0 0.0
      %3593 = vmatprep.subr.mxu0 0.0
      %3594 = vmatpush1.msra.mxu0 0.0
      %3595 = vmatprep.subr.mxu0 0.0
      %3596 = vmatpush1.msra.mxu0 0.0
      %3597 = vmatprep.subr.mxu0 0.0
      %3598 = vmatpush1.msra.mxu0 0.0
      %3599 = vmatprep.subr.mxu0 0.0
      %3600 = vmatpush1.msra.mxu0 0.0
      %3601 = vmatprep.subr.mxu0 0.0
      %3602 = vmatpush1.msra.mxu0 0.0
      %3603 = vmatprep.subr.mxu0 0.0
      %3604 = vmatpush1.msra.mxu0 0.0
      %3605 = vmatprep.mubr.f32.mxu0 0.0
      %3606 = vmatmul.mubr.f32.gmra.mrb[0].mxu0 %v408
      %v3607 = vpop.f32.mrb[0].mxu0
      %v3608 = vadd.f32 0.0, %v3607
      %v3609 = vpop.f32.mrb[0].mxu0
      %3610 = vmatprep.mubr.f32.mxu0 0.0
      %3611 = vmatmul.mubr.f32.gmra.mrb[0].mxu0 %v411
      %v3612 = vpop.f32.mrb[0].mxu0
      %v3613 = vadd.f32 0.0, %v3612
      %v3614 = vpop.f32.mrb[0].mxu0
      %3615 = vmatprep.mubr.f32.mxu0 0.0
      %3616 = vmatmul.mubr.f32.gmra.mrb[0].mxu0 %v414
      %v3617 = vpop.f32.mrb[0].mxu0
      %v3618 = vadd.f32 0.0, %v3617
      %v3619 = vpop.f32.mrb[0].mxu0
      %3620 = vmatprep.mubr.f32.mxu0 0.0
      %3621 = vmatmul.mubr.f32.gmra.mrb[0].mxu0 %v417
      %v3622 = vpop.f32.mrb[0].mxu0
      %v3623 = vadd.f32 0.0, %v3622
      %v3624 = vpop.f32.mrb[0].mxu0
      %3625 = vdwg.mxu0
      %v3626 = vadd.f32 %v3518, %v3608
      %v3627 = vadd.f32 %v3523, %v3613
      %v3628 = vadd.f32 %v3528, %v3618
      %v3629 = vadd.f32 %v3533, %v3623
      %v3630 = vld [vmem:[%s3536] sm:$0xff]
      %v3632 = vcombine.high %v3630, %v3630
      %3633 = vrot.lane.b32.xlu0 %v3630, 127
      %v3634 = vpop.permute.xlu0 %3633
      %3635 = vrot.lane.b32.xlu0 %v3632, 127
      %v3636 = vpop.permute.xlu0 %3635
      %v3637 = vsel %vm202, %v3634, %v3636
      %v3638 = vsel %vm217, %v3637, 0
      %3640 = vmatprep.subr.mxu0 0.0
      %3641 = vmatpush1.msra.mxu0 %v3638
      %3642 = vmatprep.subr.mxu0 0.0
      %3643 = vmatpush1.msra.mxu0 0.0
      %3644 = vmatprep.subr.mxu0 0.0
      %3645 = vmatpush1.msra.mxu0 0.0
      %3646 = vmatprep.subr.mxu0 0.0
      %3647 = vmatpush1.msra.mxu0 0.0
      %3648 = vmatprep.subr.mxu0 0.0
      %3649 = vmatpush1.msra.mxu0 0.0
      %3650 = vmatprep.subr.mxu0 0.0
      %3651 = vmatpush1.msra.mxu0 0.0
      %3652 = vmatprep.subr.mxu0 0.0
      %3653 = vmatpush1.msra.mxu0 0.0
      %3654 = vmatprep.subr.mxu0 0.0
      %3655 = vmatpush1.msra.mxu0 0.0
      %3656 = vmatprep.subr.mxu0 0.0
      %3657 = vmatpush1.msra.mxu0 0.0
      %3658 = vmatprep.subr.mxu0 0.0
      %3659 = vmatpush1.msra.mxu0 0.0
      %3660 = vmatprep.subr.mxu0 0.0
      %3661 = vmatpush1.msra.mxu0 0.0
      %3662 = vmatprep.subr.mxu0 0.0
      %3663 = vmatpush1.msra.mxu0 0.0
      %3664 = vmatprep.subr.mxu0 0.0
      %3665 = vmatpush1.msra.mxu0 0.0
      %3666 = vmatprep.subr.mxu0 0.0
      %3667 = vmatpush1.msra.mxu0 0.0
      %3668 = vmatprep.subr.mxu0 0.0
      %3669 = vmatpush1.msra.mxu0 0.0
      %3670 = vmatprep.subr.mxu0 0.0
      %3671 = vmatpush1.msra.mxu0 0.0
      %3672 = vmatprep.subr.mxu0 0.0
      %3673 = vmatpush1.msra.mxu0 0.0
      %3674 = vmatprep.subr.mxu0 0.0
      %3675 = vmatpush1.msra.mxu0 0.0
      %3676 = vmatprep.subr.mxu0 0.0
      %3677 = vmatpush1.msra.mxu0 0.0
      %3678 = vmatprep.subr.mxu0 0.0
      %3679 = vmatpush1.msra.mxu0 0.0
      %3680 = vmatprep.subr.mxu0 0.0
      %3681 = vmatpush1.msra.mxu0 0.0
      %3682 = vmatprep.subr.mxu0 0.0
      %3683 = vmatpush1.msra.mxu0 0.0
      %3684 = vmatprep.subr.mxu0 0.0
      %3685 = vmatpush1.msra.mxu0 0.0
      %3686 = vmatprep.subr.mxu0 0.0
      %3687 = vmatpush1.msra.mxu0 0.0
      %3688 = vmatprep.subr.mxu0 0.0
      %3689 = vmatpush1.msra.mxu0 0.0
      %3690 = vmatprep.subr.mxu0 0.0
      %3691 = vmatpush1.msra.mxu0 0.0
      %3692 = vmatprep.subr.mxu0 0.0
      %3693 = vmatpush1.msra.mxu0 0.0
      %3694 = vmatprep.subr.mxu0 0.0
      %3695 = vmatpush1.msra.mxu0 0.0
      %3696 = vmatprep.subr.mxu0 0.0
      %3697 = vmatpush1.msra.mxu0 0.0
      %3698 = vmatprep.subr.mxu0 0.0
      %3699 = vmatpush1.msra.mxu0 0.0
      %3700 = vmatprep.subr.mxu0 0.0
      %3701 = vmatpush1.msra.mxu0 0.0
      %3702 = vmatprep.subr.mxu0 0.0
      %3703 = vmatpush1.msra.mxu0 0.0
      %3704 = vmatprep.mubr.f32.mxu0 0.0
      %3705 = vmatmul.mubr.f32.gmra.mrb[0].mxu0 %v520
      %v3706 = vpop.f32.mrb[0].mxu0
      %v3707 = vadd.f32 0.0, %v3706
      %v3708 = vpop.f32.mrb[0].mxu0
      %3709 = vmatprep.mubr.f32.mxu0 0.0
      %3710 = vmatmul.mubr.f32.gmra.mrb[0].mxu0 %v523
      %v3711 = vpop.f32.mrb[0].mxu0
      %v3712 = vadd.f32 0.0, %v3711
      %v3713 = vpop.f32.mrb[0].mxu0
      %3714 = vmatprep.mubr.f32.mxu0 0.0
      %3715 = vmatmul.mubr.f32.gmra.mrb[0].mxu0 %v526
      %v3716 = vpop.f32.mrb[0].mxu0
      %v3717 = vadd.f32 0.0, %v3716
      %v3718 = vpop.f32.mrb[0].mxu0
      %3719 = vmatprep.mubr.f32.mxu0 0.0
      %3720 = vmatmul.mubr.f32.gmra.mrb[0].mxu0 %v529
      %v3721 = vpop.f32.mrb[0].mxu0
      %v3722 = vadd.f32 0.0, %v3721
      %v3723 = vpop.f32.mrb[0].mxu0
      %3724 = vdwg.mxu0
      %v3725 = vadd.f32 %v3626, %v3707
      %v3726 = vadd.f32 %v3627, %v3712
      %v3727 = vadd.f32 %v3628, %v3717
      %v3728 = vadd.f32 %v3629, %v3722
      %v3729 = vadd.f32 %v3725, %v625
      %v3730 = vadd.f32 %v3726, %v630
      %v3731 = vadd.f32 %v3727, %v635
      %v3732 = vadd.f32 %v3728, %v640
      %s3733 = scalar_lea.vmem %s170, 256
      %3734 = vst [vmem:[%s3733] sm:$0xff] %v3729
      %3735 = vst [vmem:[%s3733 + $0x8] sm:$0xff] %v3730
      %3736 = vst [vmem:[%s3733 + $0x10] sm:$0xff] %v3731
      %3737 = vst [vmem:[%s3733 + $0x18] sm:$0xff] %v3732
      %v3738 = vld [vmem:[%s3536] sm:$0xf]
      %v3739 = vld [vmem:[%s3536] sm:$0xff]
      %v3741 = vcombine.high %v3739, %v3739
      %3742 = vrot.lane.b32.xlu0 %v3739, 127
      %v3743 = vpop.permute.xlu0 %3742
      %3744 = vrot.lane.b32.xlu0 %v3741, 127
      %v3745 = vpop.permute.xlu0 %3744
      %v3746 = vsel %vm202, %v3743, %v3745
      %v3747 = vsel %vm217, %v3746, 0
      %3749 = vmatprep.subr.mxu0 0.0
      %3750 = vmatpush1.msra.mxu0 %v3747
      %3751 = vmatprep.subr.mxu0 0.0
      %3752 = vmatpush1.msra.mxu0 0.0
      %3753 = vmatprep.subr.mxu0 0.0
      %3754 = vmatpush1.msra.mxu0 0.0
      %3755 = vmatprep.subr.mxu0 0.0
      %3756 = vmatpush1.msra.mxu0 0.0
      %3757 = vmatprep.subr.mxu0 0.0
      %3758 = vmatpush1.msra.mxu0 0.0
      %3759 = vmatprep.subr.mxu0 0.0
      %3760 = vmatpush1.msra.mxu0 0.0
      %3761 = vmatprep.subr.mxu0 0.0
      %3762 = vmatpush1.msra.mxu0 0.0
      %3763 = vmatprep.subr.mxu0 0.0
      %3764 = vmatpush1.msra.mxu0 0.0
      %3765 = vmatprep.subr.mxu0 0.0
      %3766 = vmatpush1.msra.mxu0 0.0
      %3767 = vmatprep.subr.mxu0 0.0
      %3768 = vmatpush1.msra.mxu0 0.0
      %3769 = vmatprep.subr.mxu0 0.0
      %3770 = vmatpush1.msra.mxu0 0.0
      %3771 = vmatprep.subr.mxu0 0.0
      %3772 = vmatpush1.msra.mxu0 0.0
      %3773 = vmatprep.subr.mxu0 0.0
      %3774 = vmatpush1.msra.mxu0 0.0
      %3775 = vmatprep.subr.mxu0 0.0
      %3776 = vmatpush1.msra.mxu0 0.0
      %3777 = vmatprep.subr.mxu0 0.0
      %3778 = vmatpush1.msra.mxu0 0.0
      %3779 = vmatprep.subr.mxu0 0.0
      %3780 = vmatpush1.msra.mxu0 0.0
      %3781 = vmatprep.subr.mxu0 0.0
      %3782 = vmatpush1.msra.mxu0 0.0
      %3783 = vmatprep.subr.mxu0 0.0
      %3784 = vmatpush1.msra.mxu0 0.0
      %3785 = vmatprep.subr.mxu0 0.0
      %3786 = vmatpush1.msra.mxu0 0.0
      %3787 = vmatprep.subr.mxu0 0.0
      %3788 = vmatpush1.msra.mxu0 0.0
      %3789 = vmatprep.subr.mxu0 0.0
      %3790 = vmatpush1.msra.mxu0 0.0
      %3791 = vmatprep.subr.mxu0 0.0
      %3792 = vmatpush1.msra.mxu0 0.0
      %3793 = vmatprep.subr.mxu0 0.0
      %3794 = vmatpush1.msra.mxu0 0.0
      %3795 = vmatprep.subr.mxu0 0.0
      %3796 = vmatpush1.msra.mxu0 0.0
      %3797 = vmatprep.subr.mxu0 0.0
      %3798 = vmatpush1.msra.mxu0 0.0
      %3799 = vmatprep.subr.mxu0 0.0
      %3800 = vmatpush1.msra.mxu0 0.0
      %3801 = vmatprep.subr.mxu0 0.0
      %3802 = vmatpush1.msra.mxu0 0.0
      %3803 = vmatprep.subr.mxu0 0.0
      %3804 = vmatpush1.msra.mxu0 0.0
      %3805 = vmatprep.subr.mxu0 0.0
      %3806 = vmatpush1.msra.mxu0 0.0
      %3807 = vmatprep.subr.mxu0 0.0
      %3808 = vmatpush1.msra.mxu0 0.0
      %3809 = vmatprep.subr.mxu0 0.0
      %3810 = vmatpush1.msra.mxu0 0.0
      %3811 = vmatprep.subr.mxu0 0.0
      %3812 = vmatpush1.msra.mxu0 0.0
      %3813 = vmatprep.mubr.f32.mxu0 0.0
      %3814 = vmatmul.mubr.f32.gmra.mrb[0].mxu0 %v206
      %v3815 = vpop.f32.mrb[0].mxu0
      %v3816 = vadd.f32 0.0, %v3815
      %v3817 = vpop.f32.mrb[0].mxu0
      %3818 = vmatprep.mubr.f32.mxu0 0.0
      %3819 = vmatmul.mubr.f32.gmra.mrb[0].mxu0 %v209
      %v3820 = vpop.f32.mrb[0].mxu0
      %v3821 = vadd.f32 0.0, %v3820
      %v3822 = vpop.f32.mrb[0].mxu0
      %3823 = vmatprep.mubr.f32.mxu0 0.0
      %3824 = vmatmul.mubr.f32.gmra.mrb[0].mxu0 %v212
      %v3825 = vpop.f32.mrb[0].mxu0
      %v3826 = vadd.f32 0.0, %v3825
      %v3827 = vpop.f32.mrb[0].mxu0
      %3828 = vmatprep.mubr.f32.mxu0 0.0
      %3829 = vmatmul.mubr.f32.gmra.mrb[0].mxu0 %v215
      %v3830 = vpop.f32.mrb[0].mxu0
      %v3831 = vadd.f32 0.0, %v3830
      %v3832 = vpop.f32.mrb[0].mxu0
      %3833 = vdwg.mxu0
      %v3835 = vsel %vm217, %v3738, 0
      %3837 = vmatprep.subr.mxu0 0.0
      %3838 = vmatpush1.msra.mxu0 %v3835
      %3839 = vmatprep.subr.mxu0 0.0
      %3840 = vmatpush1.msra.mxu0 0.0
      %3841 = vmatprep.subr.mxu0 0.0
      %3842 = vmatpush1.msra.mxu0 0.0
      %3843 = vmatprep.subr.mxu0 0.0
      %3844 = vmatpush1.msra.mxu0 0.0
      %3845 = vmatprep.subr.mxu0 0.0
      %3846 = vmatpush1.msra.mxu0 0.0
      %3847 = vmatprep.subr.mxu0 0.0
      %3848 = vmatpush1.msra.mxu0 0.0
      %3849 = vmatprep.subr.mxu0 0.0
      %3850 = vmatpush1.msra.mxu0 0.0
      %3851 = vmatprep.subr.mxu0 0.0
      %3852 = vmatpush1.msra.mxu0 0.0
      %3853 = vmatprep.subr.mxu0 0.0
      %3854 = vmatpush1.msra.mxu0 0.0
      %3855 = vmatprep.subr.mxu0 0.0
      %3856 = vmatpush1.msra.mxu0 0.0
      %3857 = vmatprep.subr.mxu0 0.0
      %3858 = vmatpush1.msra.mxu0 0.0
      %3859 = vmatprep.subr.mxu0 0.0
      %3860 = vmatpush1.msra.mxu0 0.0
      %3861 = vmatprep.subr.mxu0 0.0
      %3862 = vmatpush1.msra.mxu0 0.0
      %3863 = vmatprep.subr.mxu0 0.0
      %3864 = vmatpush1.msra.mxu0 0.0
      %3865 = vmatprep.subr.mxu0 0.0
      %3866 = vmatpush1.msra.mxu0 0.0
      %3867 = vmatprep.subr.mxu0 0.0
      %3868 = vmatpush1.msra.mxu0 0.0
      %3869 = vmatprep.subr.mxu0 0.0
      %3870 = vmatpush1.msra.mxu0 0.0
      %3871 = vmatprep.subr.mxu0 0.0
      %3872 = vmatpush1.msra.mxu0 0.0
      %3873 = vmatprep.subr.mxu0 0.0
      %3874 = vmatpush1.msra.mxu0 0.0
      %3875 = vmatprep.subr.mxu0 0.0
      %3876 = vmatpush1.msra.mxu0 0.0
      %3877 = vmatprep.subr.mxu0 0.0
      %3878 = vmatpush1.msra.mxu0 0.0
      %3879 = vmatprep.subr.mxu0 0.0
      %3880 = vmatpush1.msra.mxu0 0.0
      %3881 = vmatprep.subr.mxu0 0.0
      %3882 = vmatpush1.msra.mxu0 0.0
      %3883 = vmatprep.subr.mxu0 0.0
      %3884 = vmatpush1.msra.mxu0 0.0
      %3885 = vmatprep.subr.mxu0 0.0
      %3886 = vmatpush1.msra.mxu0 0.0
      %3887 = vmatprep.subr.mxu0 0.0
      %3888 = vmatpush1.msra.mxu0 0.0
      %3889 = vmatprep.subr.mxu0 0.0
      %3890 = vmatpush1.msra.mxu0 0.0
      %3891 = vmatprep.subr.mxu0 0.0
      %3892 = vmatpush1.msra.mxu0 0.0
      %3893 = vmatprep.subr.mxu0 0.0
      %3894 = vmatpush1.msra.mxu0 0.0
      %3895 = vmatprep.subr.mxu0 0.0
      %3896 = vmatpush1.msra.mxu0 0.0
      %3897 = vmatprep.subr.mxu0 0.0
      %3898 = vmatpush1.msra.mxu0 0.0
      %3899 = vmatprep.subr.mxu0 0.0
      %3900 = vmatpush1.msra.mxu0 0.0
      %3901 = vmatprep.mubr.f32.mxu0 0.0
      %3902 = vmatmul.mubr.f32.gmra.mrb[0].mxu0 %v306
      %v3903 = vpop.f32.mrb[0].mxu0
      %v3904 = vadd.f32 %v3816, %v3903
      %v3905 = vpop.f32.mrb[0].mxu0
      %3906 = vmatprep.mubr.f32.mxu0 0.0
      %3907 = vmatmul.mubr.f32.gmra.mrb[0].mxu0 %v309
      %v3908 = vpop.f32.mrb[0].mxu0
      %v3909 = vadd.f32 %v3821, %v3908
      %v3910 = vpop.f32.mrb[0].mxu0
      %3911 = vmatprep.mubr.f32.mxu0 0.0
      %3912 = vmatmul.mubr.f32.gmra.mrb[0].mxu0 %v312
      %v3913 = vpop.f32.mrb[0].mxu0
      %v3914 = vadd.f32 %v3826, %v3913
      %v3915 = vpop.f32.mrb[0].mxu0
      %3916 = vmatprep.mubr.f32.mxu0 0.0
      %3917 = vmatmul.mubr.f32.gmra.mrb[0].mxu0 %v315
      %v3918 = vpop.f32.mrb[0].mxu0
      %v3919 = vadd.f32 %v3831, %v3918
      %v3920 = vpop.f32.mrb[0].mxu0
      %3921 = vdwg.mxu0
      %s3922 = scalar_lea.vmem %s165, 80
      %v3923 = vld [vmem:[%s3922] sm:$0xf]
      %v3925 = vsel %vm217, %v3923, 0
      %3927 = vmatprep.subr.mxu0 0.0
      %3928 = vmatpush1.msra.mxu0 %v3925
      %3929 = vmatprep.subr.mxu0 0.0
      %3930 = vmatpush1.msra.mxu0 0.0
      %3931 = vmatprep.subr.mxu0 0.0
      %3932 = vmatpush1.msra.mxu0 0.0
      %3933 = vmatprep.subr.mxu0 0.0
      %3934 = vmatpush1.msra.mxu0 0.0
      %3935 = vmatprep.subr.mxu0 0.0
      %3936 = vmatpush1.msra.mxu0 0.0
      %3937 = vmatprep.subr.mxu0 0.0
      %3938 = vmatpush1.msra.mxu0 0.0
      %3939 = vmatprep.subr.mxu0 0.0
      %3940 = vmatpush1.msra.mxu0 0.0
      %3941 = vmatprep.subr.mxu0 0.0
      %3942 = vmatpush1.msra.mxu0 0.0
      %3943 = vmatprep.subr.mxu0 0.0
      %3944 = vmatpush1.msra.mxu0 0.0
      %3945 = vmatprep.subr.mxu0 0.0
      %3946 = vmatpush1.msra.mxu0 0.0
      %3947 = vmatprep.subr.mxu0 0.0
      %3948 = vmatpush1.msra.mxu0 0.0
      %3949 = vmatprep.subr.mxu0 0.0
      %3950 = vmatpush1.msra.mxu0 0.0
      %3951 = vmatprep.subr.mxu0 0.0
      %3952 = vmatpush1.msra.mxu0 0.0
      %3953 = vmatprep.subr.mxu0 0.0
      %3954 = vmatpush1.msra.mxu0 0.0
      %3955 = vmatprep.subr.mxu0 0.0
      %3956 = vmatpush1.msra.mxu0 0.0
      %3957 = vmatprep.subr.mxu0 0.0
      %3958 = vmatpush1.msra.mxu0 0.0
      %3959 = vmatprep.subr.mxu0 0.0
      %3960 = vmatpush1.msra.mxu0 0.0
      %3961 = vmatprep.subr.mxu0 0.0
      %3962 = vmatpush1.msra.mxu0 0.0
      %3963 = vmatprep.subr.mxu0 0.0
      %3964 = vmatpush1.msra.mxu0 0.0
      %3965 = vmatprep.subr.mxu0 0.0
      %3966 = vmatpush1.msra.mxu0 0.0
      %3967 = vmatprep.subr.mxu0 0.0
      %3968 = vmatpush1.msra.mxu0 0.0
      %3969 = vmatprep.subr.mxu0 0.0
      %3970 = vmatpush1.msra.mxu0 0.0
      %3971 = vmatprep.subr.mxu0 0.0
      %3972 = vmatpush1.msra.mxu0 0.0
      %3973 = vmatprep.subr.mxu0 0.0
      %3974 = vmatpush1.msra.mxu0 0.0
      %3975 = vmatprep.subr.mxu0 0.0
      %3976 = vmatpush1.msra.mxu0 0.0
      %3977 = vmatprep.subr.mxu0 0.0
      %3978 = vmatpush1.msra.mxu0 0.0
      %3979 = vmatprep.subr.mxu0 0.0
      %3980 = vmatpush1.msra.mxu0 0.0
      %3981 = vmatprep.subr.mxu0 0.0
      %3982 = vmatpush1.msra.mxu0 0.0
      %3983 = vmatprep.subr.mxu0 0.0
      %3984 = vmatpush1.msra.mxu0 0.0
      %3985 = vmatprep.subr.mxu0 0.0
      %3986 = vmatpush1.msra.mxu0 0.0
      %3987 = vmatprep.subr.mxu0 0.0
      %3988 = vmatpush1.msra.mxu0 0.0
      %3989 = vmatprep.subr.mxu0 0.0
      %3990 = vmatpush1.msra.mxu0 0.0
      %3991 = vmatprep.mubr.f32.mxu0 0.0
      %3992 = vmatmul.mubr.f32.gmra.mrb[0].mxu0 %v408
      %v3993 = vpop.f32.mrb[0].mxu0
      %v3994 = vadd.f32 0.0, %v3993
      %v3995 = vpop.f32.mrb[0].mxu0
      %3996 = vmatprep.mubr.f32.mxu0 0.0
      %3997 = vmatmul.mubr.f32.gmra.mrb[0].mxu0 %v411
      %v3998 = vpop.f32.mrb[0].mxu0
      %v3999 = vadd.f32 0.0, %v3998
      %v4000 = vpop.f32.mrb[0].mxu0
      %4001 = vmatprep.mubr.f32.mxu0 0.0
      %4002 = vmatmul.mubr.f32.gmra.mrb[0].mxu0 %v414
      %v4003 = vpop.f32.mrb[0].mxu0
      %v4004 = vadd.f32 0.0, %v4003
      %v4005 = vpop.f32.mrb[0].mxu0
      %4006 = vmatprep.mubr.f32.mxu0 0.0
      %4007 = vmatmul.mubr.f32.gmra.mrb[0].mxu0 %v417
      %v4008 = vpop.f32.mrb[0].mxu0
      %v4009 = vadd.f32 0.0, %v4008
      %v4010 = vpop.f32.mrb[0].mxu0
      %4011 = vdwg.mxu0
      %v4012 = vadd.f32 %v3904, %v3994
      %v4013 = vadd.f32 %v3909, %v3999
      %v4014 = vadd.f32 %v3914, %v4004
      %v4015 = vadd.f32 %v3919, %v4009
      %v4016 = vld [vmem:[%s3922] sm:$0xff]
      %v4018 = vcombine.high %v4016, %v4016
      %4019 = vrot.lane.b32.xlu0 %v4016, 127
      %v4020 = vpop.permute.xlu0 %4019
      %4021 = vrot.lane.b32.xlu0 %v4018, 127
      %v4022 = vpop.permute.xlu0 %4021
      %v4023 = vsel %vm202, %v4020, %v4022
      %v4024 = vsel %vm217, %v4023, 0
      %4026 = vmatprep.subr.mxu0 0.0
      %4027 = vmatpush1.msra.mxu0 %v4024
      %4028 = vmatprep.subr.mxu0 0.0
      %4029 = vmatpush1.msra.mxu0 0.0
      %4030 = vmatprep.subr.mxu0 0.0
      %4031 = vmatpush1.msra.mxu0 0.0
      %4032 = vmatprep.subr.mxu0 0.0
      %4033 = vmatpush1.msra.mxu0 0.0
      %4034 = vmatprep.subr.mxu0 0.0
      %4035 = vmatpush1.msra.mxu0 0.0
      %4036 = vmatprep.subr.mxu0 0.0
      %4037 = vmatpush1.msra.mxu0 0.0
      %4038 = vmatprep.subr.mxu0 0.0
      %4039 = vmatpush1.msra.mxu0 0.0
      %4040 = vmatprep.subr.mxu0 0.0
      %4041 = vmatpush1.msra.mxu0 0.0
      %4042 = vmatprep.subr.mxu0 0.0
      %4043 = vmatpush1.msra.mxu0 0.0
      %4044 = vmatprep.subr.mxu0 0.0
      %4045 = vmatpush1.msra.mxu0 0.0
      %4046 = vmatprep.subr.mxu0 0.0
      %4047 = vmatpush1.msra.mxu0 0.0
      %4048 = vmatprep.subr.mxu0 0.0
      %4049 = vmatpush1.msra.mxu0 0.0
      %4050 = vmatprep.subr.mxu0 0.0
      %4051 = vmatpush1.msra.mxu0 0.0
      %4052 = vmatprep.subr.mxu0 0.0
      %4053 = vmatpush1.msra.mxu0 0.0
      %4054 = vmatprep.subr.mxu0 0.0
      %4055 = vmatpush1.msra.mxu0 0.0
      %4056 = vmatprep.subr.mxu0 0.0
      %4057 = vmatpush1.msra.mxu0 0.0
      %4058 = vmatprep.subr.mxu0 0.0
      %4059 = vmatpush1.msra.mxu0 0.0
      %4060 = vmatprep.subr.mxu0 0.0
      %4061 = vmatpush1.msra.mxu0 0.0
      %4062 = vmatprep.subr.mxu0 0.0
      %4063 = vmatpush1.msra.mxu0 0.0
      %4064 = vmatprep.subr.mxu0 0.0
      %4065 = vmatpush1.msra.mxu0 0.0
      %4066 = vmatprep.subr.mxu0 0.0
      %4067 = vmatpush1.msra.mxu0 0.0
      %4068 = vmatprep.subr.mxu0 0.0
      %4069 = vmatpush1.msra.mxu0 0.0
      %4070 = vmatprep.subr.mxu0 0.0
      %4071 = vmatpush1.msra.mxu0 0.0
      %4072 = vmatprep.subr.mxu0 0.0
      %4073 = vmatpush1.msra.mxu0 0.0
      %4074 = vmatprep.subr.mxu0 0.0
      %4075 = vmatpush1.msra.mxu0 0.0
      %4076 = vmatprep.subr.mxu0 0.0
      %4077 = vmatpush1.msra.mxu0 0.0
      %4078 = vmatprep.subr.mxu0 0.0
      %4079 = vmatpush1.msra.mxu0 0.0
      %4080 = vmatprep.subr.mxu0 0.0
      %4081 = vmatpush1.msra.mxu0 0.0
      %4082 = vmatprep.subr.mxu0 0.0
      %4083 = vmatpush1.msra.mxu0 0.0
      %4084 = vmatprep.subr.mxu0 0.0
      %4085 = vmatpush1.msra.mxu0 0.0
      %4086 = vmatprep.subr.mxu0 0.0
      %4087 = vmatpush1.msra.mxu0 0.0
      %4088 = vmatprep.subr.mxu0 0.0
      %4089 = vmatpush1.msra.mxu0 0.0
      %4090 = vmatprep.mubr.f32.mxu0 0.0
      %4091 = vmatmul.mubr.f32.gmra.mrb[0].mxu0 %v520
      %v4092 = vpop.f32.mrb[0].mxu0
      %v4093 = vadd.f32 0.0, %v4092
      %v4094 = vpop.f32.mrb[0].mxu0
      %4095 = vmatprep.mubr.f32.mxu0 0.0
      %4096 = vmatmul.mubr.f32.gmra.mrb[0].mxu0 %v523
      %v4097 = vpop.f32.mrb[0].mxu0
      %v4098 = vadd.f32 0.0, %v4097
      %v4099 = vpop.f32.mrb[0].mxu0
      %4100 = vmatprep.mubr.f32.mxu0 0.0
      %4101 = vmatmul.mubr.f32.gmra.mrb[0].mxu0 %v526
      %v4102 = vpop.f32.mrb[0].mxu0
      %v4103 = vadd.f32 0.0, %v4102
      %v4104 = vpop.f32.mrb[0].mxu0
      %4105 = vmatprep.mubr.f32.mxu0 0.0
      %4106 = vmatmul.mubr.f32.gmra.mrb[0].mxu0 %v529
      %v4107 = vpop.f32.mrb[0].mxu0
      %v4108 = vadd.f32 0.0, %v4107
      %v4109 = vpop.f32.mrb[0].mxu0
      %4110 = vdwg.mxu0
      %v4111 = vadd.f32 %v4012, %v4093
      %v4112 = vadd.f32 %v4013, %v4098
      %v4113 = vadd.f32 %v4014, %v4103
      %v4114 = vadd.f32 %v4015, %v4108
      %v4115 = vadd.f32 %v4111, %v625
      %v4116 = vadd.f32 %v4112, %v630
      %v4117 = vadd.f32 %v4113, %v635
      %v4118 = vadd.f32 %v4114, %v640
      %s4119 = scalar_lea.vmem %s170, 288
      %4120 = vst [vmem:[%s4119] sm:$0xff] %v4115
      %4121 = vst [vmem:[%s4119 + $0x8] sm:$0xff] %v4116
      %4122 = vst [vmem:[%s4119 + $0x10] sm:$0xff] %v4117
      %4123 = vst [vmem:[%s4119 + $0x18] sm:$0xff] %v4118
      %v4124 = vld [vmem:[%s3922] sm:$0xf]
      %v4125 = vld [vmem:[%s3922] sm:$0xff]
      %v4127 = vcombine.high %v4125, %v4125
      %4128 = vrot.lane.b32.xlu0 %v4125, 127
      %v4129 = vpop.permute.xlu0 %4128
      %4130 = vrot.lane.b32.xlu0 %v4127, 127
      %v4131 = vpop.permute.xlu0 %4130
      %v4132 = vsel %vm202, %v4129, %v4131
      %v4133 = vsel %vm217, %v4132, 0
      %4135 = vmatprep.subr.mxu0 0.0
      %4136 = vmatpush1.msra.mxu0 %v4133
      %4137 = vmatprep.subr.mxu0 0.0
      %4138 = vmatpush1.msra.mxu0 0.0
      %4139 = vmatprep.subr.mxu0 0.0
      %4140 = vmatpush1.msra.mxu0 0.0
      %4141 = vmatprep.subr.mxu0 0.0
      %4142 = vmatpush1.msra.mxu0 0.0
      %4143 = vmatprep.subr.mxu0 0.0
      %4144 = vmatpush1.msra.mxu0 0.0
      %4145 = vmatprep.subr.mxu0 0.0
      %4146 = vmatpush1.msra.mxu0 0.0
      %4147 = vmatprep.subr.mxu0 0.0
      %4148 = vmatpush1.msra.mxu0 0.0
      %4149 = vmatprep.subr.mxu0 0.0
      %4150 = vmatpush1.msra.mxu0 0.0
      %4151 = vmatprep.subr.mxu0 0.0
      %4152 = vmatpush1.msra.mxu0 0.0
      %4153 = vmatprep.subr.mxu0 0.0
      %4154 = vmatpush1.msra.mxu0 0.0
      %4155 = vmatprep.subr.mxu0 0.0
      %4156 = vmatpush1.msra.mxu0 0.0
      %4157 = vmatprep.subr.mxu0 0.0
      %4158 = vmatpush1.msra.mxu0 0.0
      %4159 = vmatprep.subr.mxu0 0.0
      %4160 = vmatpush1.msra.mxu0 0.0
      %4161 = vmatprep.subr.mxu0 0.0
      %4162 = vmatpush1.msra.mxu0 0.0
      %4163 = vmatprep.subr.mxu0 0.0
      %4164 = vmatpush1.msra.mxu0 0.0
      %4165 = vmatprep.subr.mxu0 0.0
      %4166 = vmatpush1.msra.mxu0 0.0
      %4167 = vmatprep.subr.mxu0 0.0
      %4168 = vmatpush1.msra.mxu0 0.0
      %4169 = vmatprep.subr.mxu0 0.0
      %4170 = vmatpush1.msra.mxu0 0.0
      %4171 = vmatprep.subr.mxu0 0.0
      %4172 = vmatpush1.msra.mxu0 0.0
      %4173 = vmatprep.subr.mxu0 0.0
      %4174 = vmatpush1.msra.mxu0 0.0
      %4175 = vmatprep.subr.mxu0 0.0
      %4176 = vmatpush1.msra.mxu0 0.0
      %4177 = vmatprep.subr.mxu0 0.0
      %4178 = vmatpush1.msra.mxu0 0.0
      %4179 = vmatprep.subr.mxu0 0.0
      %4180 = vmatpush1.msra.mxu0 0.0
      %4181 = vmatprep.subr.mxu0 0.0
      %4182 = vmatpush1.msra.mxu0 0.0
      %4183 = vmatprep.subr.mxu0 0.0
      %4184 = vmatpush1.msra.mxu0 0.0
      %4185 = vmatprep.subr.mxu0 0.0
      %4186 = vmatpush1.msra.mxu0 0.0
      %4187 = vmatprep.subr.mxu0 0.0
      %4188 = vmatpush1.msra.mxu0 0.0
      %4189 = vmatprep.subr.mxu0 0.0
      %4190 = vmatpush1.msra.mxu0 0.0
      %4191 = vmatprep.subr.mxu0 0.0
      %4192 = vmatpush1.msra.mxu0 0.0
      %4193 = vmatprep.subr.mxu0 0.0
      %4194 = vmatpush1.msra.mxu0 0.0
      %4195 = vmatprep.subr.mxu0 0.0
      %4196 = vmatpush1.msra.mxu0 0.0
      %4197 = vmatprep.subr.mxu0 0.0
      %4198 = vmatpush1.msra.mxu0 0.0
      %4199 = vmatprep.mubr.f32.mxu0 0.0
      %4200 = vmatmul.mubr.f32.gmra.mrb[0].mxu0 %v206
      %v4201 = vpop.f32.mrb[0].mxu0
      %v4202 = vadd.f32 0.0, %v4201
      %v4203 = vpop.f32.mrb[0].mxu0
      %4204 = vmatprep.mubr.f32.mxu0 0.0
      %4205 = vmatmul.mubr.f32.gmra.mrb[0].mxu0 %v209
      %v4206 = vpop.f32.mrb[0].mxu0
      %v4207 = vadd.f32 0.0, %v4206
      %v4208 = vpop.f32.mrb[0].mxu0
      %4209 = vmatprep.mubr.f32.mxu0 0.0
      %4210 = vmatmul.mubr.f32.gmra.mrb[0].mxu0 %v212
      %v4211 = vpop.f32.mrb[0].mxu0
      %v4212 = vadd.f32 0.0, %v4211
      %v4213 = vpop.f32.mrb[0].mxu0
      %4214 = vmatprep.mubr.f32.mxu0 0.0
      %4215 = vmatmul.mubr.f32.gmra.mrb[0].mxu0 %v215
      %v4216 = vpop.f32.mrb[0].mxu0
      %v4217 = vadd.f32 0.0, %v4216
      %v4218 = vpop.f32.mrb[0].mxu0
      %4219 = vdwg.mxu0
      %v4221 = vsel %vm217, %v4124, 0
      %4223 = vmatprep.subr.mxu0 0.0
      %4224 = vmatpush1.msra.mxu0 %v4221
      %4225 = vmatprep.subr.mxu0 0.0
      %4226 = vmatpush1.msra.mxu0 0.0
      %4227 = vmatprep.subr.mxu0 0.0
      %4228 = vmatpush1.msra.mxu0 0.0
      %4229 = vmatprep.subr.mxu0 0.0
      %4230 = vmatpush1.msra.mxu0 0.0
      %4231 = vmatprep.subr.mxu0 0.0
      %4232 = vmatpush1.msra.mxu0 0.0
      %4233 = vmatprep.subr.mxu0 0.0
      %4234 = vmatpush1.msra.mxu0 0.0
      %4235 = vmatprep.subr.mxu0 0.0
      %4236 = vmatpush1.msra.mxu0 0.0
      %4237 = vmatprep.subr.mxu0 0.0
      %4238 = vmatpush1.msra.mxu0 0.0
      %4239 = vmatprep.subr.mxu0 0.0
      %4240 = vmatpush1.msra.mxu0 0.0
      %4241 = vmatprep.subr.mxu0 0.0
      %4242 = vmatpush1.msra.mxu0 0.0
      %4243 = vmatprep.subr.mxu0 0.0
      %4244 = vmatpush1.msra.mxu0 0.0
      %4245 = vmatprep.subr.mxu0 0.0
      %4246 = vmatpush1.msra.mxu0 0.0
      %4247 = vmatprep.subr.mxu0 0.0
      %4248 = vmatpush1.msra.mxu0 0.0
      %4249 = vmatprep.subr.mxu0 0.0
      %4250 = vmatpush1.msra.mxu0 0.0
      %4251 = vmatprep.subr.mxu0 0.0
      %4252 = vmatpush1.msra.mxu0 0.0
      %4253 = vmatprep.subr.mxu0 0.0
      %4254 = vmatpush1.msra.mxu0 0.0
      %4255 = vmatprep.subr.mxu0 0.0
      %4256 = vmatpush1.msra.mxu0 0.0
      %4257 = vmatprep.subr.mxu0 0.0
      %4258 = vmatpush1.msra.mxu0 0.0
      %4259 = vmatprep.subr.mxu0 0.0
      %4260 = vmatpush1.msra.mxu0 0.0
      %4261 = vmatprep.subr.mxu0 0.0
      %4262 = vmatpush1.msra.mxu0 0.0
      %4263 = vmatprep.subr.mxu0 0.0
      %4264 = vmatpush1.msra.mxu0 0.0
      %4265 = vmatprep.subr.mxu0 0.0
      %4266 = vmatpush1.msra.mxu0 0.0
      %4267 = vmatprep.subr.mxu0 0.0
      %4268 = vmatpush1.msra.mxu0 0.0
      %4269 = vmatprep.subr.mxu0 0.0
      %4270 = vmatpush1.msra.mxu0 0.0
      %4271 = vmatprep.subr.mxu0 0.0
      %4272 = vmatpush1.msra.mxu0 0.0
      %4273 = vmatprep.subr.mxu0 0.0
      %4274 = vmatpush1.msra.mxu0 0.0
      %4275 = vmatprep.subr.mxu0 0.0
      %4276 = vmatpush1.msra.mxu0 0.0
      %4277 = vmatprep.subr.mxu0 0.0
      %4278 = vmatpush1.msra.mxu0 0.0
      %4279 = vmatprep.subr.mxu0 0.0
      %4280 = vmatpush1.msra.mxu0 0.0
      %4281 = vmatprep.subr.mxu0 0.0
      %4282 = vmatpush1.msra.mxu0 0.0
      %4283 = vmatprep.subr.mxu0 0.0
      %4284 = vmatpush1.msra.mxu0 0.0
      %4285 = vmatprep.subr.mxu0 0.0
      %4286 = vmatpush1.msra.mxu0 0.0
      %4287 = vmatprep.mubr.f32.mxu0 0.0
      %4288 = vmatmul.mubr.f32.gmra.mrb[0].mxu0 %v306
      %v4289 = vpop.f32.mrb[0].mxu0
      %v4290 = vadd.f32 %v4202, %v4289
      %v4291 = vpop.f32.mrb[0].mxu0
      %4292 = vmatprep.mubr.f32.mxu0 0.0
      %4293 = vmatmul.mubr.f32.gmra.mrb[0].mxu0 %v309
      %v4294 = vpop.f32.mrb[0].mxu0
      %v4295 = vadd.f32 %v4207, %v4294
      %v4296 = vpop.f32.mrb[0].mxu0
      %4297 = vmatprep.mubr.f32.mxu0 0.0
      %4298 = vmatmul.mubr.f32.gmra.mrb[0].mxu0 %v312
      %v4299 = vpop.f32.mrb[0].mxu0
      %v4300 = vadd.f32 %v4212, %v4299
      %v4301 = vpop.f32.mrb[0].mxu0
      %4302 = vmatprep.mubr.f32.mxu0 0.0
      %4303 = vmatmul.mubr.f32.gmra.mrb[0].mxu0 %v315
      %v4304 = vpop.f32.mrb[0].mxu0
      %v4305 = vadd.f32 %v4217, %v4304
      %v4306 = vpop.f32.mrb[0].mxu0
      %4307 = vdwg.mxu0
      %s4308 = scalar_lea.vmem %s165, 88
      %v4309 = vld [vmem:[%s4308] sm:$0xf]
      %v4311 = vsel %vm217, %v4309, 0
      %4313 = vmatprep.subr.mxu0 0.0
      %4314 = vmatpush1.msra.mxu0 %v4311
      %4315 = vmatprep.subr.mxu0 0.0
      %4316 = vmatpush1.msra.mxu0 0.0
      %4317 = vmatprep.subr.mxu0 0.0
      %4318 = vmatpush1.msra.mxu0 0.0
      %4319 = vmatprep.subr.mxu0 0.0
      %4320 = vmatpush1.msra.mxu0 0.0
      %4321 = vmatprep.subr.mxu0 0.0
      %4322 = vmatpush1.msra.mxu0 0.0
      %4323 = vmatprep.subr.mxu0 0.0
      %4324 = vmatpush1.msra.mxu0 0.0
      %4325 = vmatprep.subr.mxu0 0.0
      %4326 = vmatpush1.msra.mxu0 0.0
      %4327 = vmatprep.subr.mxu0 0.0
      %4328 = vmatpush1.msra.mxu0 0.0
      %4329 = vmatprep.subr.mxu0 0.0
      %4330 = vmatpush1.msra.mxu0 0.0
      %4331 = vmatprep.subr.mxu0 0.0
      %4332 = vmatpush1.msra.mxu0 0.0
      %4333 = vmatprep.subr.mxu0 0.0
      %4334 = vmatpush1.msra.mxu0 0.0
      %4335 = vmatprep.subr.mxu0 0.0
      %4336 = vmatpush1.msra.mxu0 0.0
      %4337 = vmatprep.subr.mxu0 0.0
      %4338 = vmatpush1.msra.mxu0 0.0
      %4339 = vmatprep.subr.mxu0 0.0
      %4340 = vmatpush1.msra.mxu0 0.0
      %4341 = vmatprep.subr.mxu0 0.0
      %4342 = vmatpush1.msra.mxu0 0.0
      %4343 = vmatprep.subr.mxu0 0.0
      %4344 = vmatpush1.msra.mxu0 0.0
      %4345 = vmatprep.subr.mxu0 0.0
      %4346 = vmatpush1.msra.mxu0 0.0
      %4347 = vmatprep.subr.mxu0 0.0
      %4348 = vmatpush1.msra.mxu0 0.0
      %4349 = vmatprep.subr.mxu0 0.0
      %4350 = vmatpush1.msra.mxu0 0.0
      %4351 = vmatprep.subr.mxu0 0.0
      %4352 = vmatpush1.msra.mxu0 0.0
      %4353 = vmatprep.subr.mxu0 0.0
      %4354 = vmatpush1.msra.mxu0 0.0
      %4355 = vmatprep.subr.mxu0 0.0
      %4356 = vmatpush1.msra.mxu0 0.0
      %4357 = vmatprep.subr.mxu0 0.0
      %4358 = vmatpush1.msra.mxu0 0.0
      %4359 = vmatprep.subr.mxu0 0.0
      %4360 = vmatpush1.msra.mxu0 0.0
      %4361 = vmatprep.subr.mxu0 0.0
      %4362 = vmatpush1.msra.mxu0 0.0
      %4363 = vmatprep.subr.mxu0 0.0
      %4364 = vmatpush1.msra.mxu0 0.0
      %4365 = vmatprep.subr.mxu0 0.0
      %4366 = vmatpush1.msra.mxu0 0.0
      %4367 = vmatprep.subr.mxu0 0.0
      %4368 = vmatpush1.msra.mxu0 0.0
      %4369 = vmatprep.subr.mxu0 0.0
      %4370 = vmatpush1.msra.mxu0 0.0
      %4371 = vmatprep.subr.mxu0 0.0
      %4372 = vmatpush1.msra.mxu0 0.0
      %4373 = vmatprep.subr.mxu0 0.0
      %4374 = vmatpush1.msra.mxu0 0.0
      %4375 = vmatprep.subr.mxu0 0.0
      %4376 = vmatpush1.msra.mxu0 0.0
      %4377 = vmatprep.mubr.f32.mxu0 0.0
      %4378 = vmatmul.mubr.f32.gmra.mrb[0].mxu0 %v408
      %v4379 = vpop.f32.mrb[0].mxu0
      %v4380 = vadd.f32 0.0, %v4379
      %v4381 = vpop.f32.mrb[0].mxu0
      %4382 = vmatprep.mubr.f32.mxu0 0.0
      %4383 = vmatmul.mubr.f32.gmra.mrb[0].mxu0 %v411
      %v4384 = vpop.f32.mrb[0].mxu0
      %v4385 = vadd.f32 0.0, %v4384
      %v4386 = vpop.f32.mrb[0].mxu0
      %4387 = vmatprep.mubr.f32.mxu0 0.0
      %4388 = vmatmul.mubr.f32.gmra.mrb[0].mxu0 %v414
      %v4389 = vpop.f32.mrb[0].mxu0
      %v4390 = vadd.f32 0.0, %v4389
      %v4391 = vpop.f32.mrb[0].mxu0
      %4392 = vmatprep.mubr.f32.mxu0 0.0
      %4393 = vmatmul.mubr.f32.gmra.mrb[0].mxu0 %v417
      %v4394 = vpop.f32.mrb[0].mxu0
      %v4395 = vadd.f32 0.0, %v4394
      %v4396 = vpop.f32.mrb[0].mxu0
      %4397 = vdwg.mxu0
      %v4398 = vadd.f32 %v4290, %v4380
      %v4399 = vadd.f32 %v4295, %v4385
      %v4400 = vadd.f32 %v4300, %v4390
      %v4401 = vadd.f32 %v4305, %v4395
      %v4402 = vld [vmem:[%s4308] sm:$0xff]
      %v4404 = vcombine.high %v4402, %v4402
      %4405 = vrot.lane.b32.xlu0 %v4402, 127
      %v4406 = vpop.permute.xlu0 %4405
      %4407 = vrot.lane.b32.xlu0 %v4404, 127
      %v4408 = vpop.permute.xlu0 %4407
      %v4409 = vsel %vm202, %v4406, %v4408
      %v4410 = vsel %vm217, %v4409, 0
      %4412 = vmatprep.subr.mxu0 0.0
      %4413 = vmatpush1.msra.mxu0 %v4410
      %4414 = vmatprep.subr.mxu0 0.0
      %4415 = vmatpush1.msra.mxu0 0.0
      %4416 = vmatprep.subr.mxu0 0.0
      %4417 = vmatpush1.msra.mxu0 0.0
      %4418 = vmatprep.subr.mxu0 0.0
      %4419 = vmatpush1.msra.mxu0 0.0
      %4420 = vmatprep.subr.mxu0 0.0
      %4421 = vmatpush1.msra.mxu0 0.0
      %4422 = vmatprep.subr.mxu0 0.0
      %4423 = vmatpush1.msra.mxu0 0.0
      %4424 = vmatprep.subr.mxu0 0.0
      %4425 = vmatpush1.msra.mxu0 0.0
      %4426 = vmatprep.subr.mxu0 0.0
      %4427 = vmatpush1.msra.mxu0 0.0
      %4428 = vmatprep.subr.mxu0 0.0
      %4429 = vmatpush1.msra.mxu0 0.0
      %4430 = vmatprep.subr.mxu0 0.0
      %4431 = vmatpush1.msra.mxu0 0.0
      %4432 = vmatprep.subr.mxu0 0.0
      %4433 = vmatpush1.msra.mxu0 0.0
      %4434 = vmatprep.subr.mxu0 0.0
      %4435 = vmatpush1.msra.mxu0 0.0
      %4436 = vmatprep.subr.mxu0 0.0
      %4437 = vmatpush1.msra.mxu0 0.0
      %4438 = vmatprep.subr.mxu0 0.0
      %4439 = vmatpush1.msra.mxu0 0.0
      %4440 = vmatprep.subr.mxu0 0.0
      %4441 = vmatpush1.msra.mxu0 0.0
      %4442 = vmatprep.subr.mxu0 0.0
      %4443 = vmatpush1.msra.mxu0 0.0
      %4444 = vmatprep.subr.mxu0 0.0
      %4445 = vmatpush1.msra.mxu0 0.0
      %4446 = vmatprep.subr.mxu0 0.0
      %4447 = vmatpush1.msra.mxu0 0.0
      %4448 = vmatprep.subr.mxu0 0.0
      %4449 = vmatpush1.msra.mxu0 0.0
      %4450 = vmatprep.subr.mxu0 0.0
      %4451 = vmatpush1.msra.mxu0 0.0
      %4452 = vmatprep.subr.mxu0 0.0
      %4453 = vmatpush1.msra.mxu0 0.0
      %4454 = vmatprep.subr.mxu0 0.0
      %4455 = vmatpush1.msra.mxu0 0.0
      %4456 = vmatprep.subr.mxu0 0.0
      %4457 = vmatpush1.msra.mxu0 0.0
      %4458 = vmatprep.subr.mxu0 0.0
      %4459 = vmatpush1.msra.mxu0 0.0
      %4460 = vmatprep.subr.mxu0 0.0
      %4461 = vmatpush1.msra.mxu0 0.0
      %4462 = vmatprep.subr.mxu0 0.0
      %4463 = vmatpush1.msra.mxu0 0.0
      %4464 = vmatprep.subr.mxu0 0.0
      %4465 = vmatpush1.msra.mxu0 0.0
      %4466 = vmatprep.subr.mxu0 0.0
      %4467 = vmatpush1.msra.mxu0 0.0
      %4468 = vmatprep.subr.mxu0 0.0
      %4469 = vmatpush1.msra.mxu0 0.0
      %4470 = vmatprep.subr.mxu0 0.0
      %4471 = vmatpush1.msra.mxu0 0.0
      %4472 = vmatprep.subr.mxu0 0.0
      %4473 = vmatpush1.msra.mxu0 0.0
      %4474 = vmatprep.subr.mxu0 0.0
      %4475 = vmatpush1.msra.mxu0 0.0
      %4476 = vmatprep.mubr.f32.mxu0 0.0
      %4477 = vmatmul.mubr.f32.gmra.mrb[0].mxu0 %v520
      %v4478 = vpop.f32.mrb[0].mxu0
      %v4479 = vadd.f32 0.0, %v4478
      %v4480 = vpop.f32.mrb[0].mxu0
      %4481 = vmatprep.mubr.f32.mxu0 0.0
      %4482 = vmatmul.mubr.f32.gmra.mrb[0].mxu0 %v523
      %v4483 = vpop.f32.mrb[0].mxu0
      %v4484 = vadd.f32 0.0, %v4483
      %v4485 = vpop.f32.mrb[0].mxu0
      %4486 = vmatprep.mubr.f32.mxu0 0.0
      %4487 = vmatmul.mubr.f32.gmra.mrb[0].mxu0 %v526
      %v4488 = vpop.f32.mrb[0].mxu0
      %v4489 = vadd.f32 0.0, %v4488
      %v4490 = vpop.f32.mrb[0].mxu0
      %4491 = vmatprep.mubr.f32.mxu0 0.0
      %4492 = vmatmul.mubr.f32.gmra.mrb[0].mxu0 %v529
      %v4493 = vpop.f32.mrb[0].mxu0
      %v4494 = vadd.f32 0.0, %v4493
      %v4495 = vpop.f32.mrb[0].mxu0
      %4496 = vdwg.mxu0
      %v4497 = vadd.f32 %v4398, %v4479
      %v4498 = vadd.f32 %v4399, %v4484
      %v4499 = vadd.f32 %v4400, %v4489
      %v4500 = vadd.f32 %v4401, %v4494
      %v4501 = vadd.f32 %v4497, %v625
      %v4502 = vadd.f32 %v4498, %v630
      %v4503 = vadd.f32 %v4499, %v635
      %v4504 = vadd.f32 %v4500, %v640
      %s4505 = scalar_lea.vmem %s170, 320
      %4506 = vst [vmem:[%s4505] sm:$0xff] %v4501
      %4507 = vst [vmem:[%s4505 + $0x8] sm:$0xff] %v4502
      %4508 = vst [vmem:[%s4505 + $0x10] sm:$0xff] %v4503
      %4509 = vst [vmem:[%s4505 + $0x18] sm:$0xff] %v4504
      %v4510 = vld [vmem:[%s4308] sm:$0xf]
      %v4511 = vld [vmem:[%s4308] sm:$0xff]
      %v4513 = vcombine.high %v4511, %v4511
      %4514 = vrot.lane.b32.xlu0 %v4511, 127
      %v4515 = vpop.permute.xlu0 %4514
      %4516 = vrot.lane.b32.xlu0 %v4513, 127
      %v4517 = vpop.permute.xlu0 %4516
      %v4518 = vsel %vm202, %v4515, %v4517
      %v4519 = vsel %vm217, %v4518, 0
      %4521 = vmatprep.subr.mxu0 0.0
      %4522 = vmatpush1.msra.mxu0 %v4519
      %4523 = vmatprep.subr.mxu0 0.0
      %4524 = vmatpush1.msra.mxu0 0.0
      %4525 = vmatprep.subr.mxu0 0.0
      %4526 = vmatpush1.msra.mxu0 0.0
      %4527 = vmatprep.subr.mxu0 0.0
      %4528 = vmatpush1.msra.mxu0 0.0
      %4529 = vmatprep.subr.mxu0 0.0
      %4530 = vmatpush1.msra.mxu0 0.0
      %4531 = vmatprep.subr.mxu0 0.0
      %4532 = vmatpush1.msra.mxu0 0.0
      %4533 = vmatprep.subr.mxu0 0.0
      %4534 = vmatpush1.msra.mxu0 0.0
      %4535 = vmatprep.subr.mxu0 0.0
      %4536 = vmatpush1.msra.mxu0 0.0
      %4537 = vmatprep.subr.mxu0 0.0
      %4538 = vmatpush1.msra.mxu0 0.0
      %4539 = vmatprep.subr.mxu0 0.0
      %4540 = vmatpush1.msra.mxu0 0.0
      %4541 = vmatprep.subr.mxu0 0.0
      %4542 = vmatpush1.msra.mxu0 0.0
      %4543 = vmatprep.subr.mxu0 0.0
      %4544 = vmatpush1.msra.mxu0 0.0
      %4545 = vmatprep.subr.mxu0 0.0
      %4546 = vmatpush1.msra.mxu0 0.0
      %4547 = vmatprep.subr.mxu0 0.0
      %4548 = vmatpush1.msra.mxu0 0.0
      %4549 = vmatprep.subr.mxu0 0.0
      %4550 = vmatpush1.msra.mxu0 0.0
      %4551 = vmatprep.subr.mxu0 0.0
      %4552 = vmatpush1.msra.mxu0 0.0
      %4553 = vmatprep.subr.mxu0 0.0
      %4554 = vmatpush1.msra.mxu0 0.0
      %4555 = vmatprep.subr.mxu0 0.0
      %4556 = vmatpush1.msra.mxu0 0.0
      %4557 = vmatprep.subr.mxu0 0.0
      %4558 = vmatpush1.msra.mxu0 0.0
      %4559 = vmatprep.subr.mxu0 0.0
      %4560 = vmatpush1.msra.mxu0 0.0
      %4561 = vmatprep.subr.mxu0 0.0
      %4562 = vmatpush1.msra.mxu0 0.0
      %4563 = vmatprep.subr.mxu0 0.0
      %4564 = vmatpush1.msra.mxu0 0.0
      %4565 = vmatprep.subr.mxu0 0.0
      %4566 = vmatpush1.msra.mxu0 0.0
      %4567 = vmatprep.subr.mxu0 0.0
      %4568 = vmatpush1.msra.mxu0 0.0
      %4569 = vmatprep.subr.mxu0 0.0
      %4570 = vmatpush1.msra.mxu0 0.0
      %4571 = vmatprep.subr.mxu0 0.0
      %4572 = vmatpush1.msra.mxu0 0.0
      %4573 = vmatprep.subr.mxu0 0.0
      %4574 = vmatpush1.msra.mxu0 0.0
      %4575 = vmatprep.subr.mxu0 0.0
      %4576 = vmatpush1.msra.mxu0 0.0
      %4577 = vmatprep.subr.mxu0 0.0
      %4578 = vmatpush1.msra.mxu0 0.0
      %4579 = vmatprep.subr.mxu0 0.0
      %4580 = vmatpush1.msra.mxu0 0.0
      %4581 = vmatprep.subr.mxu0 0.0
      %4582 = vmatpush1.msra.mxu0 0.0
      %4583 = vmatprep.subr.mxu0 0.0
      %4584 = vmatpush1.msra.mxu0 0.0
      %4585 = vmatprep.mubr.f32.mxu0 0.0
      %4586 = vmatmul.mubr.f32.gmra.mrb[0].mxu0 %v206
      %v4587 = vpop.f32.mrb[0].mxu0
      %v4588 = vadd.f32 0.0, %v4587
      %v4589 = vpop.f32.mrb[0].mxu0
      %4590 = vmatprep.mubr.f32.mxu0 0.0
      %4591 = vmatmul.mubr.f32.gmra.mrb[0].mxu0 %v209
      %v4592 = vpop.f32.mrb[0].mxu0
      %v4593 = vadd.f32 0.0, %v4592
      %v4594 = vpop.f32.mrb[0].mxu0
      %4595 = vmatprep.mubr.f32.mxu0 0.0
      %4596 = vmatmul.mubr.f32.gmra.mrb[0].mxu0 %v212
      %v4597 = vpop.f32.mrb[0].mxu0
      %v4598 = vadd.f32 0.0, %v4597
      %v4599 = vpop.f32.mrb[0].mxu0
      %4600 = vmatprep.mubr.f32.mxu0 0.0
      %4601 = vmatmul.mubr.f32.gmra.mrb[0].mxu0 %v215
      %v4602 = vpop.f32.mrb[0].mxu0
      %v4603 = vadd.f32 0.0, %v4602
      %v4604 = vpop.f32.mrb[0].mxu0
      %4605 = vdwg.mxu0
      %v4607 = vsel %vm217, %v4510, 0
      %4609 = vmatprep.subr.mxu0 0.0
      %4610 = vmatpush1.msra.mxu0 %v4607
      %4611 = vmatprep.subr.mxu0 0.0
      %4612 = vmatpush1.msra.mxu0 0.0
      %4613 = vmatprep.subr.mxu0 0.0
      %4614 = vmatpush1.msra.mxu0 0.0
      %4615 = vmatprep.subr.mxu0 0.0
      %4616 = vmatpush1.msra.mxu0 0.0
      %4617 = vmatprep.subr.mxu0 0.0
      %4618 = vmatpush1.msra.mxu0 0.0
      %4619 = vmatprep.subr.mxu0 0.0
      %4620 = vmatpush1.msra.mxu0 0.0
      %4621 = vmatprep.subr.mxu0 0.0
      %4622 = vmatpush1.msra.mxu0 0.0
      %4623 = vmatprep.subr.mxu0 0.0
      %4624 = vmatpush1.msra.mxu0 0.0
      %4625 = vmatprep.subr.mxu0 0.0
      %4626 = vmatpush1.msra.mxu0 0.0
      %4627 = vmatprep.subr.mxu0 0.0
      %4628 = vmatpush1.msra.mxu0 0.0
      %4629 = vmatprep.subr.mxu0 0.0
      %4630 = vmatpush1.msra.mxu0 0.0
      %4631 = vmatprep.subr.mxu0 0.0
      %4632 = vmatpush1.msra.mxu0 0.0
      %4633 = vmatprep.subr.mxu0 0.0
      %4634 = vmatpush1.msra.mxu0 0.0
      %4635 = vmatprep.subr.mxu0 0.0
      %4636 = vmatpush1.msra.mxu0 0.0
      %4637 = vmatprep.subr.mxu0 0.0
      %4638 = vmatpush1.msra.mxu0 0.0
      %4639 = vmatprep.subr.mxu0 0.0
      %4640 = vmatpush1.msra.mxu0 0.0
      %4641 = vmatprep.subr.mxu0 0.0
      %4642 = vmatpush1.msra.mxu0 0.0
      %4643 = vmatprep.subr.mxu0 0.0
      %4644 = vmatpush1.msra.mxu0 0.0
      %4645 = vmatprep.subr.mxu0 0.0
      %4646 = vmatpush1.msra.mxu0 0.0
      %4647 = vmatprep.subr.mxu0 0.0
      %4648 = vmatpush1.msra.mxu0 0.0
      %4649 = vmatprep.subr.mxu0 0.0
      %4650 = vmatpush1.msra.mxu0 0.0
      %4651 = vmatprep.subr.mxu0 0.0
      %4652 = vmatpush1.msra.mxu0 0.0
      %4653 = vmatprep.subr.mxu0 0.0
      %4654 = vmatpush1.msra.mxu0 0.0
      %4655 = vmatprep.subr.mxu0 0.0
      %4656 = vmatpush1.msra.mxu0 0.0
      %4657 = vmatprep.subr.mxu0 0.0
      %4658 = vmatpush1.msra.mxu0 0.0
      %4659 = vmatprep.subr.mxu0 0.0
      %4660 = vmatpush1.msra.mxu0 0.0
      %4661 = vmatprep.subr.mxu0 0.0
      %4662 = vmatpush1.msra.mxu0 0.0
      %4663 = vmatprep.subr.mxu0 0.0
      %4664 = vmatpush1.msra.mxu0 0.0
      %4665 = vmatprep.subr.mxu0 0.0
      %4666 = vmatpush1.msra.mxu0 0.0
      %4667 = vmatprep.subr.mxu0 0.0
      %4668 = vmatpush1.msra.mxu0 0.0
      %4669 = vmatprep.subr.mxu0 0.0
      %4670 = vmatpush1.msra.mxu0 0.0
      %4671 = vmatprep.subr.mxu0 0.0
      %4672 = vmatpush1.msra.mxu0 0.0
      %4673 = vmatprep.mubr.f32.mxu0 0.0
      %4674 = vmatmul.mubr.f32.gmra.mrb[0].mxu0 %v306
      %v4675 = vpop.f32.mrb[0].mxu0
      %v4676 = vadd.f32 %v4588, %v4675
      %v4677 = vpop.f32.mrb[0].mxu0
      %4678 = vmatprep.mubr.f32.mxu0 0.0
      %4679 = vmatmul.mubr.f32.gmra.mrb[0].mxu0 %v309
      %v4680 = vpop.f32.mrb[0].mxu0
      %v4681 = vadd.f32 %v4593, %v4680
      %v4682 = vpop.f32.mrb[0].mxu0
      %4683 = vmatprep.mubr.f32.mxu0 0.0
      %4684 = vmatmul.mubr.f32.gmra.mrb[0].mxu0 %v312
      %v4685 = vpop.f32.mrb[0].mxu0
      %v4686 = vadd.f32 %v4598, %v4685
      %v4687 = vpop.f32.mrb[0].mxu0
      %4688 = vmatprep.mubr.f32.mxu0 0.0
      %4689 = vmatmul.mubr.f32.gmra.mrb[0].mxu0 %v315
      %v4690 = vpop.f32.mrb[0].mxu0
      %v4691 = vadd.f32 %v4603, %v4690
      %v4692 = vpop.f32.mrb[0].mxu0
      %4693 = vdwg.mxu0
      %s4694 = scalar_lea.vmem %s165, 96
      %v4695 = vld [vmem:[%s4694] sm:$0xf]
      %v4697 = vsel %vm217, %v4695, 0
      %4699 = vmatprep.subr.mxu0 0.0
      %4700 = vmatpush1.msra.mxu0 %v4697
      %4701 = vmatprep.subr.mxu0 0.0
      %4702 = vmatpush1.msra.mxu0 0.0
      %4703 = vmatprep.subr.mxu0 0.0
      %4704 = vmatpush1.msra.mxu0 0.0
      %4705 = vmatprep.subr.mxu0 0.0
      %4706 = vmatpush1.msra.mxu0 0.0
      %4707 = vmatprep.subr.mxu0 0.0
      %4708 = vmatpush1.msra.mxu0 0.0
      %4709 = vmatprep.subr.mxu0 0.0
      %4710 = vmatpush1.msra.mxu0 0.0
      %4711 = vmatprep.subr.mxu0 0.0
      %4712 = vmatpush1.msra.mxu0 0.0
      %4713 = vmatprep.subr.mxu0 0.0
      %4714 = vmatpush1.msra.mxu0 0.0
      %4715 = vmatprep.subr.mxu0 0.0
      %4716 = vmatpush1.msra.mxu0 0.0
      %4717 = vmatprep.subr.mxu0 0.0
      %4718 = vmatpush1.msra.mxu0 0.0
      %4719 = vmatprep.subr.mxu0 0.0
      %4720 = vmatpush1.msra.mxu0 0.0
      %4721 = vmatprep.subr.mxu0 0.0
      %4722 = vmatpush1.msra.mxu0 0.0
      %4723 = vmatprep.subr.mxu0 0.0
      %4724 = vmatpush1.msra.mxu0 0.0
      %4725 = vmatprep.subr.mxu0 0.0
      %4726 = vmatpush1.msra.mxu0 0.0
      %4727 = vmatprep.subr.mxu0 0.0
      %4728 = vmatpush1.msra.mxu0 0.0
      %4729 = vmatprep.subr.mxu0 0.0
      %4730 = vmatpush1.msra.mxu0 0.0
      %4731 = vmatprep.subr.mxu0 0.0
      %4732 = vmatpush1.msra.mxu0 0.0
      %4733 = vmatprep.subr.mxu0 0.0
      %4734 = vmatpush1.msra.mxu0 0.0
      %4735 = vmatprep.subr.mxu0 0.0
      %4736 = vmatpush1.msra.mxu0 0.0
      %4737 = vmatprep.subr.mxu0 0.0
      %4738 = vmatpush1.msra.mxu0 0.0
      %4739 = vmatprep.subr.mxu0 0.0
      %4740 = vmatpush1.msra.mxu0 0.0
      %4741 = vmatprep.subr.mxu0 0.0
      %4742 = vmatpush1.msra.mxu0 0.0
      %4743 = vmatprep.subr.mxu0 0.0
      %4744 = vmatpush1.msra.mxu0 0.0
      %4745 = vmatprep.subr.mxu0 0.0
      %4746 = vmatpush1.msra.mxu0 0.0
      %4747 = vmatprep.subr.mxu0 0.0
      %4748 = vmatpush1.msra.mxu0 0.0
      %4749 = vmatprep.subr.mxu0 0.0
      %4750 = vmatpush1.msra.mxu0 0.0
      %4751 = vmatprep.subr.mxu0 0.0
      %4752 = vmatpush1.msra.mxu0 0.0
      %4753 = vmatprep.subr.mxu0 0.0
      %4754 = vmatpush1.msra.mxu0 0.0
      %4755 = vmatprep.subr.mxu0 0.0
      %4756 = vmatpush1.msra.mxu0 0.0
      %4757 = vmatprep.subr.mxu0 0.0
      %4758 = vmatpush1.msra.mxu0 0.0
      %4759 = vmatprep.subr.mxu0 0.0
      %4760 = vmatpush1.msra.mxu0 0.0
      %4761 = vmatprep.subr.mxu0 0.0
      %4762 = vmatpush1.msra.mxu0 0.0
      %4763 = vmatprep.mubr.f32.mxu0 0.0
      %4764 = vmatmul.mubr.f32.gmra.mrb[0].mxu0 %v408
      %v4765 = vpop.f32.mrb[0].mxu0
      %v4766 = vadd.f32 0.0, %v4765
      %v4767 = vpop.f32.mrb[0].mxu0
      %4768 = vmatprep.mubr.f32.mxu0 0.0
      %4769 = vmatmul.mubr.f32.gmra.mrb[0].mxu0 %v411
      %v4770 = vpop.f32.mrb[0].mxu0
      %v4771 = vadd.f32 0.0, %v4770
      %v4772 = vpop.f32.mrb[0].mxu0
      %4773 = vmatprep.mubr.f32.mxu0 0.0
      %4774 = vmatmul.mubr.f32.gmra.mrb[0].mxu0 %v414
      %v4775 = vpop.f32.mrb[0].mxu0
      %v4776 = vadd.f32 0.0, %v4775
      %v4777 = vpop.f32.mrb[0].mxu0
      %4778 = vmatprep.mubr.f32.mxu0 0.0
      %4779 = vmatmul.mubr.f32.gmra.mrb[0].mxu0 %v417
      %v4780 = vpop.f32.mrb[0].mxu0
      %v4781 = vadd.f32 0.0, %v4780
      %v4782 = vpop.f32.mrb[0].mxu0
      %4783 = vdwg.mxu0
      %v4784 = vadd.f32 %v4676, %v4766
      %v4785 = vadd.f32 %v4681, %v4771
      %v4786 = vadd.f32 %v4686, %v4776
      %v4787 = vadd.f32 %v4691, %v4781
      %v4788 = vld [vmem:[%s4694] sm:$0xff]
      %v4790 = vcombine.high %v4788, %v4788
      %4791 = vrot.lane.b32.xlu0 %v4788, 127
      %v4792 = vpop.permute.xlu0 %4791
      %4793 = vrot.lane.b32.xlu0 %v4790, 127
      %v4794 = vpop.permute.xlu0 %4793
      %v4795 = vsel %vm202, %v4792, %v4794
      %v4796 = vsel %vm217, %v4795, 0
      %4798 = vmatprep.subr.mxu0 0.0
      %4799 = vmatpush1.msra.mxu0 %v4796
      %4800 = vmatprep.subr.mxu0 0.0
      %4801 = vmatpush1.msra.mxu0 0.0
      %4802 = vmatprep.subr.mxu0 0.0
      %4803 = vmatpush1.msra.mxu0 0.0
      %4804 = vmatprep.subr.mxu0 0.0
      %4805 = vmatpush1.msra.mxu0 0.0
      %4806 = vmatprep.subr.mxu0 0.0
      %4807 = vmatpush1.msra.mxu0 0.0
      %4808 = vmatprep.subr.mxu0 0.0
      %4809 = vmatpush1.msra.mxu0 0.0
      %4810 = vmatprep.subr.mxu0 0.0
      %4811 = vmatpush1.msra.mxu0 0.0
      %4812 = vmatprep.subr.mxu0 0.0
      %4813 = vmatpush1.msra.mxu0 0.0
      %4814 = vmatprep.subr.mxu0 0.0
      %4815 = vmatpush1.msra.mxu0 0.0
      %4816 = vmatprep.subr.mxu0 0.0
      %4817 = vmatpush1.msra.mxu0 0.0
      %4818 = vmatprep.subr.mxu0 0.0
      %4819 = vmatpush1.msra.mxu0 0.0
      %4820 = vmatprep.subr.mxu0 0.0
      %4821 = vmatpush1.msra.mxu0 0.0
      %4822 = vmatprep.subr.mxu0 0.0
      %4823 = vmatpush1.msra.mxu0 0.0
      %4824 = vmatprep.subr.mxu0 0.0
      %4825 = vmatpush1.msra.mxu0 0.0
      %4826 = vmatprep.subr.mxu0 0.0
      %4827 = vmatpush1.msra.mxu0 0.0
      %4828 = vmatprep.subr.mxu0 0.0
      %4829 = vmatpush1.msra.mxu0 0.0
      %4830 = vmatprep.subr.mxu0 0.0
      %4831 = vmatpush1.msra.mxu0 0.0
      %4832 = vmatprep.subr.mxu0 0.0
      %4833 = vmatpush1.msra.mxu0 0.0
      %4834 = vmatprep.subr.mxu0 0.0
      %4835 = vmatpush1.msra.mxu0 0.0
      %4836 = vmatprep.subr.mxu0 0.0
      %4837 = vmatpush1.msra.mxu0 0.0
      %4838 = vmatprep.subr.mxu0 0.0
      %4839 = vmatpush1.msra.mxu0 0.0
      %4840 = vmatprep.subr.mxu0 0.0
      %4841 = vmatpush1.msra.mxu0 0.0
      %4842 = vmatprep.subr.mxu0 0.0
      %4843 = vmatpush1.msra.mxu0 0.0
      %4844 = vmatprep.subr.mxu0 0.0
      %4845 = vmatpush1.msra.mxu0 0.0
      %4846 = vmatprep.subr.mxu0 0.0
      %4847 = vmatpush1.msra.mxu0 0.0
      %4848 = vmatprep.subr.mxu0 0.0
      %4849 = vmatpush1.msra.mxu0 0.0
      %4850 = vmatprep.subr.mxu0 0.0
      %4851 = vmatpush1.msra.mxu0 0.0
      %4852 = vmatprep.subr.mxu0 0.0
      %4853 = vmatpush1.msra.mxu0 0.0
      %4854 = vmatprep.subr.mxu0 0.0
      %4855 = vmatpush1.msra.mxu0 0.0
      %4856 = vmatprep.subr.mxu0 0.0
      %4857 = vmatpush1.msra.mxu0 0.0
      %4858 = vmatprep.subr.mxu0 0.0
      %4859 = vmatpush1.msra.mxu0 0.0
      %4860 = vmatprep.subr.mxu0 0.0
      %4861 = vmatpush1.msra.mxu0 0.0
      %4862 = vmatprep.mubr.f32.mxu0 0.0
      %4863 = vmatmul.mubr.f32.gmra.mrb[0].mxu0 %v520
      %v4864 = vpop.f32.mrb[0].mxu0
      %v4865 = vadd.f32 0.0, %v4864
      %v4866 = vpop.f32.mrb[0].mxu0
      %4867 = vmatprep.mubr.f32.mxu0 0.0
      %4868 = vmatmul.mubr.f32.gmra.mrb[0].mxu0 %v523
      %v4869 = vpop.f32.mrb[0].mxu0
      %v4870 = vadd.f32 0.0, %v4869
      %v4871 = vpop.f32.mrb[0].mxu0
      %4872 = vmatprep.mubr.f32.mxu0 0.0
      %4873 = vmatmul.mubr.f32.gmra.mrb[0].mxu0 %v526
      %v4874 = vpop.f32.mrb[0].mxu0
      %v4875 = vadd.f32 0.0, %v4874
      %v4876 = vpop.f32.mrb[0].mxu0
      %4877 = vmatprep.mubr.f32.mxu0 0.0
      %4878 = vmatmul.mubr.f32.gmra.mrb[0].mxu0 %v529
      %v4879 = vpop.f32.mrb[0].mxu0
      %v4880 = vadd.f32 0.0, %v4879
      %v4881 = vpop.f32.mrb[0].mxu0
      %4882 = vdwg.mxu0
      %v4883 = vadd.f32 %v4784, %v4865
      %v4884 = vadd.f32 %v4785, %v4870
      %v4885 = vadd.f32 %v4786, %v4875
      %v4886 = vadd.f32 %v4787, %v4880
      %v4887 = vadd.f32 %v4883, %v625
      %v4888 = vadd.f32 %v4884, %v630
      %v4889 = vadd.f32 %v4885, %v635
      %v4890 = vadd.f32 %v4886, %v640
      %s4891 = scalar_lea.vmem %s170, 352
      %4892 = vst [vmem:[%s4891] sm:$0xff] %v4887
      %4893 = vst [vmem:[%s4891 + $0x8] sm:$0xff] %v4888
      %4894 = vst [vmem:[%s4891 + $0x10] sm:$0xff] %v4889
      %4895 = vst [vmem:[%s4891 + $0x18] sm:$0xff] %v4890
      %v4896 = vld [vmem:[%s4694] sm:$0xf]
      %v4897 = vld [vmem:[%s4694] sm:$0xff]
      %v4899 = vcombine.high %v4897, %v4897
      %4900 = vrot.lane.b32.xlu0 %v4897, 127
      %v4901 = vpop.permute.xlu0 %4900
      %4902 = vrot.lane.b32.xlu0 %v4899, 127
      %v4903 = vpop.permute.xlu0 %4902
      %v4904 = vsel %vm202, %v4901, %v4903
      %v4905 = vsel %vm217, %v4904, 0
      %4907 = vmatprep.subr.mxu0 0.0
      %4908 = vmatpush1.msra.mxu0 %v4905
      %4909 = vmatprep.subr.mxu0 0.0
      %4910 = vmatpush1.msra.mxu0 0.0
      %4911 = vmatprep.subr.mxu0 0.0
      %4912 = vmatpush1.msra.mxu0 0.0
      %4913 = vmatprep.subr.mxu0 0.0
      %4914 = vmatpush1.msra.mxu0 0.0
      %4915 = vmatprep.subr.mxu0 0.0
      %4916 = vmatpush1.msra.mxu0 0.0
      %4917 = vmatprep.subr.mxu0 0.0
      %4918 = vmatpush1.msra.mxu0 0.0
      %4919 = vmatprep.subr.mxu0 0.0
      %4920 = vmatpush1.msra.mxu0 0.0
      %4921 = vmatprep.subr.mxu0 0.0
      %4922 = vmatpush1.msra.mxu0 0.0
      %4923 = vmatprep.subr.mxu0 0.0
      %4924 = vmatpush1.msra.mxu0 0.0
      %4925 = vmatprep.subr.mxu0 0.0
      %4926 = vmatpush1.msra.mxu0 0.0
      %4927 = vmatprep.subr.mxu0 0.0
      %4928 = vmatpush1.msra.mxu0 0.0
      %4929 = vmatprep.subr.mxu0 0.0
      %4930 = vmatpush1.msra.mxu0 0.0
      %4931 = vmatprep.subr.mxu0 0.0
      %4932 = vmatpush1.msra.mxu0 0.0
      %4933 = vmatprep.subr.mxu0 0.0
      %4934 = vmatpush1.msra.mxu0 0.0
      %4935 = vmatprep.subr.mxu0 0.0
      %4936 = vmatpush1.msra.mxu0 0.0
      %4937 = vmatprep.subr.mxu0 0.0
      %4938 = vmatpush1.msra.mxu0 0.0
      %4939 = vmatprep.subr.mxu0 0.0
      %4940 = vmatpush1.msra.mxu0 0.0
      %4941 = vmatprep.subr.mxu0 0.0
      %4942 = vmatpush1.msra.mxu0 0.0
      %4943 = vmatprep.subr.mxu0 0.0
      %4944 = vmatpush1.msra.mxu0 0.0
      %4945 = vmatprep.subr.mxu0 0.0
      %4946 = vmatpush1.msra.mxu0 0.0
      %4947 = vmatprep.subr.mxu0 0.0
      %4948 = vmatpush1.msra.mxu0 0.0
      %4949 = vmatprep.subr.mxu0 0.0
      %4950 = vmatpush1.msra.mxu0 0.0
      %4951 = vmatprep.subr.mxu0 0.0
      %4952 = vmatpush1.msra.mxu0 0.0
      %4953 = vmatprep.subr.mxu0 0.0
      %4954 = vmatpush1.msra.mxu0 0.0
      %4955 = vmatprep.subr.mxu0 0.0
      %4956 = vmatpush1.msra.mxu0 0.0
      %4957 = vmatprep.subr.mxu0 0.0
      %4958 = vmatpush1.msra.mxu0 0.0
      %4959 = vmatprep.subr.mxu0 0.0
      %4960 = vmatpush1.msra.mxu0 0.0
      %4961 = vmatprep.subr.mxu0 0.0
      %4962 = vmatpush1.msra.mxu0 0.0
      %4963 = vmatprep.subr.mxu0 0.0
      %4964 = vmatpush1.msra.mxu0 0.0
      %4965 = vmatprep.subr.mxu0 0.0
      %4966 = vmatpush1.msra.mxu0 0.0
      %4967 = vmatprep.subr.mxu0 0.0
      %4968 = vmatpush1.msra.mxu0 0.0
      %4969 = vmatprep.subr.mxu0 0.0
      %4970 = vmatpush1.msra.mxu0 0.0
      %4971 = vmatprep.mubr.f32.mxu0 0.0
      %4972 = vmatmul.mubr.f32.gmra.mrb[0].mxu0 %v206
      %v4973 = vpop.f32.mrb[0].mxu0
      %v4974 = vadd.f32 0.0, %v4973
      %v4975 = vpop.f32.mrb[0].mxu0
      %4976 = vmatprep.mubr.f32.mxu0 0.0
      %4977 = vmatmul.mubr.f32.gmra.mrb[0].mxu0 %v209
      %v4978 = vpop.f32.mrb[0].mxu0
      %v4979 = vadd.f32 0.0, %v4978
      %v4980 = vpop.f32.mrb[0].mxu0
      %4981 = vmatprep.mubr.f32.mxu0 0.0
      %4982 = vmatmul.mubr.f32.gmra.mrb[0].mxu0 %v212
      %v4983 = vpop.f32.mrb[0].mxu0
      %v4984 = vadd.f32 0.0, %v4983
      %v4985 = vpop.f32.mrb[0].mxu0
      %4986 = vmatprep.mubr.f32.mxu0 0.0
      %4987 = vmatmul.mubr.f32.gmra.mrb[0].mxu0 %v215
      %v4988 = vpop.f32.mrb[0].mxu0
      %v4989 = vadd.f32 0.0, %v4988
      %v4990 = vpop.f32.mrb[0].mxu0
      %4991 = vdwg.mxu0
      %v4993 = vsel %vm217, %v4896, 0
      %4995 = vmatprep.subr.mxu0 0.0
      %4996 = vmatpush1.msra.mxu0 %v4993
      %4997 = vmatprep.subr.mxu0 0.0
      %4998 = vmatpush1.msra.mxu0 0.0
      %4999 = vmatprep.subr.mxu0 0.0
      %5000 = vmatpush1.msra.mxu0 0.0
      %5001 = vmatprep.subr.mxu0 0.0
      %5002 = vmatpush1.msra.mxu0 0.0
      %5003 = vmatprep.subr.mxu0 0.0
      %5004 = vmatpush1.msra.mxu0 0.0
      %5005 = vmatprep.subr.mxu0 0.0
      %5006 = vmatpush1.msra.mxu0 0.0
      %5007 = vmatprep.subr.mxu0 0.0
      %5008 = vmatpush1.msra.mxu0 0.0
      %5009 = vmatprep.subr.mxu0 0.0
      %5010 = vmatpush1.msra.mxu0 0.0
      %5011 = vmatprep.subr.mxu0 0.0
      %5012 = vmatpush1.msra.mxu0 0.0
      %5013 = vmatprep.subr.mxu0 0.0
      %5014 = vmatpush1.msra.mxu0 0.0
      %5015 = vmatprep.subr.mxu0 0.0
      %5016 = vmatpush1.msra.mxu0 0.0
      %5017 = vmatprep.subr.mxu0 0.0
      %5018 = vmatpush1.msra.mxu0 0.0
      %5019 = vmatprep.subr.mxu0 0.0
      %5020 = vmatpush1.msra.mxu0 0.0
      %5021 = vmatprep.subr.mxu0 0.0
      %5022 = vmatpush1.msra.mxu0 0.0
      %5023 = vmatprep.subr.mxu0 0.0
      %5024 = vmatpush1.msra.mxu0 0.0
      %5025 = vmatprep.subr.mxu0 0.0
      %5026 = vmatpush1.msra.mxu0 0.0
      %5027 = vmatprep.subr.mxu0 0.0
      %5028 = vmatpush1.msra.mxu0 0.0
      %5029 = vmatprep.subr.mxu0 0.0
      %5030 = vmatpush1.msra.mxu0 0.0
      %5031 = vmatprep.subr.mxu0 0.0
      %5032 = vmatpush1.msra.mxu0 0.0
      %5033 = vmatprep.subr.mxu0 0.0
      %5034 = vmatpush1.msra.mxu0 0.0
      %5035 = vmatprep.subr.mxu0 0.0
      %5036 = vmatpush1.msra.mxu0 0.0
      %5037 = vmatprep.subr.mxu0 0.0
      %5038 = vmatpush1.msra.mxu0 0.0
      %5039 = vmatprep.subr.mxu0 0.0
      %5040 = vmatpush1.msra.mxu0 0.0
      %5041 = vmatprep.subr.mxu0 0.0
      %5042 = vmatpush1.msra.mxu0 0.0
      %5043 = vmatprep.subr.mxu0 0.0
      %5044 = vmatpush1.msra.mxu0 0.0
      %5045 = vmatprep.subr.mxu0 0.0
      %5046 = vmatpush1.msra.mxu0 0.0
      %5047 = vmatprep.subr.mxu0 0.0
      %5048 = vmatpush1.msra.mxu0 0.0
      %5049 = vmatprep.subr.mxu0 0.0
      %5050 = vmatpush1.msra.mxu0 0.0
      %5051 = vmatprep.subr.mxu0 0.0
      %5052 = vmatpush1.msra.mxu0 0.0
      %5053 = vmatprep.subr.mxu0 0.0
      %5054 = vmatpush1.msra.mxu0 0.0
      %5055 = vmatprep.subr.mxu0 0.0
      %5056 = vmatpush1.msra.mxu0 0.0
      %5057 = vmatprep.subr.mxu0 0.0
      %5058 = vmatpush1.msra.mxu0 0.0
      %5059 = vmatprep.mubr.f32.mxu0 0.0
      %5060 = vmatmul.mubr.f32.gmra.mrb[0].mxu0 %v306
      %v5061 = vpop.f32.mrb[0].mxu0
      %v5062 = vadd.f32 %v4974, %v5061
      %v5063 = vpop.f32.mrb[0].mxu0
      %5064 = vmatprep.mubr.f32.mxu0 0.0
      %5065 = vmatmul.mubr.f32.gmra.mrb[0].mxu0 %v309
      %v5066 = vpop.f32.mrb[0].mxu0
      %v5067 = vadd.f32 %v4979, %v5066
      %v5068 = vpop.f32.mrb[0].mxu0
      %5069 = vmatprep.mubr.f32.mxu0 0.0
      %5070 = vmatmul.mubr.f32.gmra.mrb[0].mxu0 %v312
      %v5071 = vpop.f32.mrb[0].mxu0
      %v5072 = vadd.f32 %v4984, %v5071
      %v5073 = vpop.f32.mrb[0].mxu0
      %5074 = vmatprep.mubr.f32.mxu0 0.0
      %5075 = vmatmul.mubr.f32.gmra.mrb[0].mxu0 %v315
      %v5076 = vpop.f32.mrb[0].mxu0
      %v5077 = vadd.f32 %v4989, %v5076
      %v5078 = vpop.f32.mrb[0].mxu0
      %5079 = vdwg.mxu0
      %s5080 = scalar_lea.vmem %s165, 104
      %v5081 = vld [vmem:[%s5080] sm:$0xf]
      %v5083 = vsel %vm217, %v5081, 0
      %5085 = vmatprep.subr.mxu0 0.0
      %5086 = vmatpush1.msra.mxu0 %v5083
      %5087 = vmatprep.subr.mxu0 0.0
      %5088 = vmatpush1.msra.mxu0 0.0
      %5089 = vmatprep.subr.mxu0 0.0
      %5090 = vmatpush1.msra.mxu0 0.0
      %5091 = vmatprep.subr.mxu0 0.0
      %5092 = vmatpush1.msra.mxu0 0.0
      %5093 = vmatprep.subr.mxu0 0.0
      %5094 = vmatpush1.msra.mxu0 0.0
      %5095 = vmatprep.subr.mxu0 0.0
      %5096 = vmatpush1.msra.mxu0 0.0
      %5097 = vmatprep.subr.mxu0 0.0
      %5098 = vmatpush1.msra.mxu0 0.0
      %5099 = vmatprep.subr.mxu0 0.0
      %5100 = vmatpush1.msra.mxu0 0.0
      %5101 = vmatprep.subr.mxu0 0.0
      %5102 = vmatpush1.msra.mxu0 0.0
      %5103 = vmatprep.subr.mxu0 0.0
      %5104 = vmatpush1.msra.mxu0 0.0
      %5105 = vmatprep.subr.mxu0 0.0
      %5106 = vmatpush1.msra.mxu0 0.0
      %5107 = vmatprep.subr.mxu0 0.0
      %5108 = vmatpush1.msra.mxu0 0.0
      %5109 = vmatprep.subr.mxu0 0.0
      %5110 = vmatpush1.msra.mxu0 0.0
      %5111 = vmatprep.subr.mxu0 0.0
      %5112 = vmatpush1.msra.mxu0 0.0
      %5113 = vmatprep.subr.mxu0 0.0
      %5114 = vmatpush1.msra.mxu0 0.0
      %5115 = vmatprep.subr.mxu0 0.0
      %5116 = vmatpush1.msra.mxu0 0.0
      %5117 = vmatprep.subr.mxu0 0.0
      %5118 = vmatpush1.msra.mxu0 0.0
      %5119 = vmatprep.subr.mxu0 0.0
      %5120 = vmatpush1.msra.mxu0 0.0
      %5121 = vmatprep.subr.mxu0 0.0
      %5122 = vmatpush1.msra.mxu0 0.0
      %5123 = vmatprep.subr.mxu0 0.0
      %5124 = vmatpush1.msra.mxu0 0.0
      %5125 = vmatprep.subr.mxu0 0.0
      %5126 = vmatpush1.msra.mxu0 0.0
      %5127 = vmatprep.subr.mxu0 0.0
      %5128 = vmatpush1.msra.mxu0 0.0
      %5129 = vmatprep.subr.mxu0 0.0
      %5130 = vmatpush1.msra.mxu0 0.0
      %5131 = vmatprep.subr.mxu0 0.0
      %5132 = vmatpush1.msra.mxu0 0.0
      %5133 = vmatprep.subr.mxu0 0.0
      %5134 = vmatpush1.msra.mxu0 0.0
      %5135 = vmatprep.subr.mxu0 0.0
      %5136 = vmatpush1.msra.mxu0 0.0
      %5137 = vmatprep.subr.mxu0 0.0
      %5138 = vmatpush1.msra.mxu0 0.0
      %5139 = vmatprep.subr.mxu0 0.0
      %5140 = vmatpush1.msra.mxu0 0.0
      %5141 = vmatprep.subr.mxu0 0.0
      %5142 = vmatpush1.msra.mxu0 0.0
      %5143 = vmatprep.subr.mxu0 0.0
      %5144 = vmatpush1.msra.mxu0 0.0
      %5145 = vmatprep.subr.mxu0 0.0
      %5146 = vmatpush1.msra.mxu0 0.0
      %5147 = vmatprep.subr.mxu0 0.0
      %5148 = vmatpush1.msra.mxu0 0.0
      %5149 = vmatprep.mubr.f32.mxu0 0.0
      %5150 = vmatmul.mubr.f32.gmra.mrb[0].mxu0 %v408
      %v5151 = vpop.f32.mrb[0].mxu0
      %v5152 = vadd.f32 0.0, %v5151
      %v5153 = vpop.f32.mrb[0].mxu0
      %5154 = vmatprep.mubr.f32.mxu0 0.0
      %5155 = vmatmul.mubr.f32.gmra.mrb[0].mxu0 %v411
      %v5156 = vpop.f32.mrb[0].mxu0
      %v5157 = vadd.f32 0.0, %v5156
      %v5158 = vpop.f32.mrb[0].mxu0
      %5159 = vmatprep.mubr.f32.mxu0 0.0
      %5160 = vmatmul.mubr.f32.gmra.mrb[0].mxu0 %v414
      %v5161 = vpop.f32.mrb[0].mxu0
      %v5162 = vadd.f32 0.0, %v5161
      %v5163 = vpop.f32.mrb[0].mxu0
      %5164 = vmatprep.mubr.f32.mxu0 0.0
      %5165 = vmatmul.mubr.f32.gmra.mrb[0].mxu0 %v417
      %v5166 = vpop.f32.mrb[0].mxu0
      %v5167 = vadd.f32 0.0, %v5166
      %v5168 = vpop.f32.mrb[0].mxu0
      %5169 = vdwg.mxu0
      %v5170 = vadd.f32 %v5062, %v5152
      %v5171 = vadd.f32 %v5067, %v5157
      %v5172 = vadd.f32 %v5072, %v5162
      %v5173 = vadd.f32 %v5077, %v5167
      %v5174 = vld [vmem:[%s5080] sm:$0xff]
      %v5176 = vcombine.high %v5174, %v5174
      %5177 = vrot.lane.b32.xlu0 %v5174, 127
      %v5178 = vpop.permute.xlu0 %5177
      %5179 = vrot.lane.b32.xlu0 %v5176, 127
      %v5180 = vpop.permute.xlu0 %5179
      %v5181 = vsel %vm202, %v5178, %v5180
      %v5182 = vsel %vm217, %v5181, 0
      %5184 = vmatprep.subr.mxu0 0.0
      %5185 = vmatpush1.msra.mxu0 %v5182
      %5186 = vmatprep.subr.mxu0 0.0
      %5187 = vmatpush1.msra.mxu0 0.0
      %5188 = vmatprep.subr.mxu0 0.0
      %5189 = vmatpush1.msra.mxu0 0.0
      %5190 = vmatprep.subr.mxu0 0.0
      %5191 = vmatpush1.msra.mxu0 0.0
      %5192 = vmatprep.subr.mxu0 0.0
      %5193 = vmatpush1.msra.mxu0 0.0
      %5194 = vmatprep.subr.mxu0 0.0
      %5195 = vmatpush1.msra.mxu0 0.0
      %5196 = vmatprep.subr.mxu0 0.0
      %5197 = vmatpush1.msra.mxu0 0.0
      %5198 = vmatprep.subr.mxu0 0.0
      %5199 = vmatpush1.msra.mxu0 0.0
      %5200 = vmatprep.subr.mxu0 0.0
      %5201 = vmatpush1.msra.mxu0 0.0
      %5202 = vmatprep.subr.mxu0 0.0
      %5203 = vmatpush1.msra.mxu0 0.0
      %5204 = vmatprep.subr.mxu0 0.0
      %5205 = vmatpush1.msra.mxu0 0.0
      %5206 = vmatprep.subr.mxu0 0.0
      %5207 = vmatpush1.msra.mxu0 0.0
      %5208 = vmatprep.subr.mxu0 0.0
      %5209 = vmatpush1.msra.mxu0 0.0
      %5210 = vmatprep.subr.mxu0 0.0
      %5211 = vmatpush1.msra.mxu0 0.0
      %5212 = vmatprep.subr.mxu0 0.0
      %5213 = vmatpush1.msra.mxu0 0.0
      %5214 = vmatprep.subr.mxu0 0.0
      %5215 = vmatpush1.msra.mxu0 0.0
      %5216 = vmatprep.subr.mxu0 0.0
      %5217 = vmatpush1.msra.mxu0 0.0
      %5218 = vmatprep.subr.mxu0 0.0
      %5219 = vmatpush1.msra.mxu0 0.0
      %5220 = vmatprep.subr.mxu0 0.0
      %5221 = vmatpush1.msra.mxu0 0.0
      %5222 = vmatprep.subr.mxu0 0.0
      %5223 = vmatpush1.msra.mxu0 0.0
      %5224 = vmatprep.subr.mxu0 0.0
      %5225 = vmatpush1.msra.mxu0 0.0
      %5226 = vmatprep.subr.mxu0 0.0
      %5227 = vmatpush1.msra.mxu0 0.0
      %5228 = vmatprep.subr.mxu0 0.0
      %5229 = vmatpush1.msra.mxu0 0.0
      %5230 = vmatprep.subr.mxu0 0.0
      %5231 = vmatpush1.msra.mxu0 0.0
      %5232 = vmatprep.subr.mxu0 0.0
      %5233 = vmatpush1.msra.mxu0 0.0
      %5234 = vmatprep.subr.mxu0 0.0
      %5235 = vmatpush1.msra.mxu0 0.0
      %5236 = vmatprep.subr.mxu0 0.0
      %5237 = vmatpush1.msra.mxu0 0.0
      %5238 = vmatprep.subr.mxu0 0.0
      %5239 = vmatpush1.msra.mxu0 0.0
      %5240 = vmatprep.subr.mxu0 0.0
      %5241 = vmatpush1.msra.mxu0 0.0
      %5242 = vmatprep.subr.mxu0 0.0
      %5243 = vmatpush1.msra.mxu0 0.0
      %5244 = vmatprep.subr.mxu0 0.0
      %5245 = vmatpush1.msra.mxu0 0.0
      %5246 = vmatprep.subr.mxu0 0.0
      %5247 = vmatpush1.msra.mxu0 0.0
      %5248 = vmatprep.mubr.f32.mxu0 0.0
      %5249 = vmatmul.mubr.f32.gmra.mrb[0].mxu0 %v520
      %v5250 = vpop.f32.mrb[0].mxu0
      %v5251 = vadd.f32 0.0, %v5250
      %v5252 = vpop.f32.mrb[0].mxu0
      %5253 = vmatprep.mubr.f32.mxu0 0.0
      %5254 = vmatmul.mubr.f32.gmra.mrb[0].mxu0 %v523
      %v5255 = vpop.f32.mrb[0].mxu0
      %v5256 = vadd.f32 0.0, %v5255
      %v5257 = vpop.f32.mrb[0].mxu0
      %5258 = vmatprep.mubr.f32.mxu0 0.0
      %5259 = vmatmul.mubr.f32.gmra.mrb[0].mxu0 %v526
      %v5260 = vpop.f32.mrb[0].mxu0
      %v5261 = vadd.f32 0.0, %v5260
      %v5262 = vpop.f32.mrb[0].mxu0
      %5263 = vmatprep.mubr.f32.mxu0 0.0
      %5264 = vmatmul.mubr.f32.gmra.mrb[0].mxu0 %v529
      %v5265 = vpop.f32.mrb[0].mxu0
      %v5266 = vadd.f32 0.0, %v5265
      %v5267 = vpop.f32.mrb[0].mxu0
      %5268 = vdwg.mxu0
      %v5269 = vadd.f32 %v5170, %v5251
      %v5270 = vadd.f32 %v5171, %v5256
      %v5271 = vadd.f32 %v5172, %v5261
      %v5272 = vadd.f32 %v5173, %v5266
      %v5273 = vadd.f32 %v5269, %v625
      %v5274 = vadd.f32 %v5270, %v630
      %v5275 = vadd.f32 %v5271, %v635
      %v5276 = vadd.f32 %v5272, %v640
      %s5277 = scalar_lea.vmem %s170, 384
      %5278 = vst [vmem:[%s5277] sm:$0xff] %v5273
      %5279 = vst [vmem:[%s5277 + $0x8] sm:$0xff] %v5274
      %5280 = vst [vmem:[%s5277 + $0x10] sm:$0xff] %v5275
      %5281 = vst [vmem:[%s5277 + $0x18] sm:$0xff] %v5276
      %v5282 = vld [vmem:[%s5080] sm:$0xf]
      %v5283 = vld [vmem:[%s5080] sm:$0xff]
      %v5285 = vcombine.high %v5283, %v5283
      %5286 = vrot.lane.b32.xlu0 %v5283, 127
      %v5287 = vpop.permute.xlu0 %5286
      %5288 = vrot.lane.b32.xlu0 %v5285, 127
      %v5289 = vpop.permute.xlu0 %5288
      %v5290 = vsel %vm202, %v5287, %v5289
      %v5291 = vsel %vm217, %v5290, 0
      %5293 = vmatprep.subr.mxu0 0.0
      %5294 = vmatpush1.msra.mxu0 %v5291
      %5295 = vmatprep.subr.mxu0 0.0
      %5296 = vmatpush1.msra.mxu0 0.0
      %5297 = vmatprep.subr.mxu0 0.0
      %5298 = vmatpush1.msra.mxu0 0.0
      %5299 = vmatprep.subr.mxu0 0.0
      %5300 = vmatpush1.msra.mxu0 0.0
      %5301 = vmatprep.subr.mxu0 0.0
      %5302 = vmatpush1.msra.mxu0 0.0
      %5303 = vmatprep.subr.mxu0 0.0
      %5304 = vmatpush1.msra.mxu0 0.0
      %5305 = vmatprep.subr.mxu0 0.0
      %5306 = vmatpush1.msra.mxu0 0.0
      %5307 = vmatprep.subr.mxu0 0.0
      %5308 = vmatpush1.msra.mxu0 0.0
      %5309 = vmatprep.subr.mxu0 0.0
      %5310 = vmatpush1.msra.mxu0 0.0
      %5311 = vmatprep.subr.mxu0 0.0
      %5312 = vmatpush1.msra.mxu0 0.0
      %5313 = vmatprep.subr.mxu0 0.0
      %5314 = vmatpush1.msra.mxu0 0.0
      %5315 = vmatprep.subr.mxu0 0.0
      %5316 = vmatpush1.msra.mxu0 0.0
      %5317 = vmatprep.subr.mxu0 0.0
      %5318 = vmatpush1.msra.mxu0 0.0
      %5319 = vmatprep.subr.mxu0 0.0
      %5320 = vmatpush1.msra.mxu0 0.0
      %5321 = vmatprep.subr.mxu0 0.0
      %5322 = vmatpush1.msra.mxu0 0.0
      %5323 = vmatprep.subr.mxu0 0.0
      %5324 = vmatpush1.msra.mxu0 0.0
      %5325 = vmatprep.subr.mxu0 0.0
      %5326 = vmatpush1.msra.mxu0 0.0
      %5327 = vmatprep.subr.mxu0 0.0
      %5328 = vmatpush1.msra.mxu0 0.0
      %5329 = vmatprep.subr.mxu0 0.0
      %5330 = vmatpush1.msra.mxu0 0.0
      %5331 = vmatprep.subr.mxu0 0.0
      %5332 = vmatpush1.msra.mxu0 0.0
      %5333 = vmatprep.subr.mxu0 0.0
      %5334 = vmatpush1.msra.mxu0 0.0
      %5335 = vmatprep.subr.mxu0 0.0
      %5336 = vmatpush1.msra.mxu0 0.0
      %5337 = vmatprep.subr.mxu0 0.0
      %5338 = vmatpush1.msra.mxu0 0.0
      %5339 = vmatprep.subr.mxu0 0.0
      %5340 = vmatpush1.msra.mxu0 0.0
      %5341 = vmatprep.subr.mxu0 0.0
      %5342 = vmatpush1.msra.mxu0 0.0
      %5343 = vmatprep.subr.mxu0 0.0
      %5344 = vmatpush1.msra.mxu0 0.0
      %5345 = vmatprep.subr.mxu0 0.0
      %5346 = vmatpush1.msra.mxu0 0.0
      %5347 = vmatprep.subr.mxu0 0.0
      %5348 = vmatpush1.msra.mxu0 0.0
      %5349 = vmatprep.subr.mxu0 0.0
      %5350 = vmatpush1.msra.mxu0 0.0
      %5351 = vmatprep.subr.mxu0 0.0
      %5352 = vmatpush1.msra.mxu0 0.0
      %5353 = vmatprep.subr.mxu0 0.0
      %5354 = vmatpush1.msra.mxu0 0.0
      %5355 = vmatprep.subr.mxu0 0.0
      %5356 = vmatpush1.msra.mxu0 0.0
      %5357 = vmatprep.mubr.f32.mxu0 0.0
      %5358 = vmatmul.mubr.f32.gmra.mrb[0].mxu0 %v206
      %v5359 = vpop.f32.mrb[0].mxu0
      %v5360 = vadd.f32 0.0, %v5359
      %v5361 = vpop.f32.mrb[0].mxu0
      %5362 = vmatprep.mubr.f32.mxu0 0.0
      %5363 = vmatmul.mubr.f32.gmra.mrb[0].mxu0 %v209
      %v5364 = vpop.f32.mrb[0].mxu0
      %v5365 = vadd.f32 0.0, %v5364
      %v5366 = vpop.f32.mrb[0].mxu0
      %5367 = vmatprep.mubr.f32.mxu0 0.0
      %5368 = vmatmul.mubr.f32.gmra.mrb[0].mxu0 %v212
      %v5369 = vpop.f32.mrb[0].mxu0
      %v5370 = vadd.f32 0.0, %v5369
      %v5371 = vpop.f32.mrb[0].mxu0
      %5372 = vmatprep.mubr.f32.mxu0 0.0
      %5373 = vmatmul.mubr.f32.gmra.mrb[0].mxu0 %v215
      %v5374 = vpop.f32.mrb[0].mxu0
      %v5375 = vadd.f32 0.0, %v5374
      %v5376 = vpop.f32.mrb[0].mxu0
      %5377 = vdwg.mxu0
      %v5379 = vsel %vm217, %v5282, 0
      %5381 = vmatprep.subr.mxu0 0.0
      %5382 = vmatpush1.msra.mxu0 %v5379
      %5383 = vmatprep.subr.mxu0 0.0
      %5384 = vmatpush1.msra.mxu0 0.0
      %5385 = vmatprep.subr.mxu0 0.0
      %5386 = vmatpush1.msra.mxu0 0.0
      %5387 = vmatprep.subr.mxu0 0.0
      %5388 = vmatpush1.msra.mxu0 0.0
      %5389 = vmatprep.subr.mxu0 0.0
      %5390 = vmatpush1.msra.mxu0 0.0
      %5391 = vmatprep.subr.mxu0 0.0
      %5392 = vmatpush1.msra.mxu0 0.0
      %5393 = vmatprep.subr.mxu0 0.0
      %5394 = vmatpush1.msra.mxu0 0.0
      %5395 = vmatprep.subr.mxu0 0.0
      %5396 = vmatpush1.msra.mxu0 0.0
      %5397 = vmatprep.subr.mxu0 0.0
      %5398 = vmatpush1.msra.mxu0 0.0
      %5399 = vmatprep.subr.mxu0 0.0
      %5400 = vmatpush1.msra.mxu0 0.0
      %5401 = vmatprep.subr.mxu0 0.0
      %5402 = vmatpush1.msra.mxu0 0.0
      %5403 = vmatprep.subr.mxu0 0.0
      %5404 = vmatpush1.msra.mxu0 0.0
      %5405 = vmatprep.subr.mxu0 0.0
      %5406 = vmatpush1.msra.mxu0 0.0
      %5407 = vmatprep.subr.mxu0 0.0
      %5408 = vmatpush1.msra.mxu0 0.0
      %5409 = vmatprep.subr.mxu0 0.0
      %5410 = vmatpush1.msra.mxu0 0.0
      %5411 = vmatprep.subr.mxu0 0.0
      %5412 = vmatpush1.msra.mxu0 0.0
      %5413 = vmatprep.subr.mxu0 0.0
      %5414 = vmatpush1.msra.mxu0 0.0
      %5415 = vmatprep.subr.mxu0 0.0
      %5416 = vmatpush1.msra.mxu0 0.0
      %5417 = vmatprep.subr.mxu0 0.0
      %5418 = vmatpush1.msra.mxu0 0.0
      %5419 = vmatprep.subr.mxu0 0.0
      %5420 = vmatpush1.msra.mxu0 0.0
      %5421 = vmatprep.subr.mxu0 0.0
      %5422 = vmatpush1.msra.mxu0 0.0
      %5423 = vmatprep.subr.mxu0 0.0
      %5424 = vmatpush1.msra.mxu0 0.0
      %5425 = vmatprep.subr.mxu0 0.0
      %5426 = vmatpush1.msra.mxu0 0.0
      %5427 = vmatprep.subr.mxu0 0.0
      %5428 = vmatpush1.msra.mxu0 0.0
      %5429 = vmatprep.subr.mxu0 0.0
      %5430 = vmatpush1.msra.mxu0 0.0
      %5431 = vmatprep.subr.mxu0 0.0
      %5432 = vmatpush1.msra.mxu0 0.0
      %5433 = vmatprep.subr.mxu0 0.0
      %5434 = vmatpush1.msra.mxu0 0.0
      %5435 = vmatprep.subr.mxu0 0.0
      %5436 = vmatpush1.msra.mxu0 0.0
      %5437 = vmatprep.subr.mxu0 0.0
      %5438 = vmatpush1.msra.mxu0 0.0
      %5439 = vmatprep.subr.mxu0 0.0
      %5440 = vmatpush1.msra.mxu0 0.0
      %5441 = vmatprep.subr.mxu0 0.0
      %5442 = vmatpush1.msra.mxu0 0.0
      %5443 = vmatprep.subr.mxu0 0.0
      %5444 = vmatpush1.msra.mxu0 0.0
      %5445 = vmatprep.mubr.f32.mxu0 0.0
      %5446 = vmatmul.mubr.f32.gmra.mrb[0].mxu0 %v306
      %v5447 = vpop.f32.mrb[0].mxu0
      %v5448 = vadd.f32 %v5360, %v5447
      %v5449 = vpop.f32.mrb[0].mxu0
      %5450 = vmatprep.mubr.f32.mxu0 0.0
      %5451 = vmatmul.mubr.f32.gmra.mrb[0].mxu0 %v309
      %v5452 = vpop.f32.mrb[0].mxu0
      %v5453 = vadd.f32 %v5365, %v5452
      %v5454 = vpop.f32.mrb[0].mxu0
      %5455 = vmatprep.mubr.f32.mxu0 0.0
      %5456 = vmatmul.mubr.f32.gmra.mrb[0].mxu0 %v312
      %v5457 = vpop.f32.mrb[0].mxu0
      %v5458 = vadd.f32 %v5370, %v5457
      %v5459 = vpop.f32.mrb[0].mxu0
      %5460 = vmatprep.mubr.f32.mxu0 0.0
      %5461 = vmatmul.mubr.f32.gmra.mrb[0].mxu0 %v315
      %v5462 = vpop.f32.mrb[0].mxu0
      %v5463 = vadd.f32 %v5375, %v5462
      %v5464 = vpop.f32.mrb[0].mxu0
      %5465 = vdwg.mxu0
      %s5466 = scalar_lea.vmem %s165, 112
      %v5467 = vld [vmem:[%s5466] sm:$0xf]
      %v5469 = vsel %vm217, %v5467, 0
      %5471 = vmatprep.subr.mxu0 0.0
      %5472 = vmatpush1.msra.mxu0 %v5469
      %5473 = vmatprep.subr.mxu0 0.0
      %5474 = vmatpush1.msra.mxu0 0.0
      %5475 = vmatprep.subr.mxu0 0.0
      %5476 = vmatpush1.msra.mxu0 0.0
      %5477 = vmatprep.subr.mxu0 0.0
      %5478 = vmatpush1.msra.mxu0 0.0
      %5479 = vmatprep.subr.mxu0 0.0
      %5480 = vmatpush1.msra.mxu0 0.0
      %5481 = vmatprep.subr.mxu0 0.0
      %5482 = vmatpush1.msra.mxu0 0.0
      %5483 = vmatprep.subr.mxu0 0.0
      %5484 = vmatpush1.msra.mxu0 0.0
      %5485 = vmatprep.subr.mxu0 0.0
      %5486 = vmatpush1.msra.mxu0 0.0
      %5487 = vmatprep.subr.mxu0 0.0
      %5488 = vmatpush1.msra.mxu0 0.0
      %5489 = vmatprep.subr.mxu0 0.0
      %5490 = vmatpush1.msra.mxu0 0.0
      %5491 = vmatprep.subr.mxu0 0.0
      %5492 = vmatpush1.msra.mxu0 0.0
      %5493 = vmatprep.subr.mxu0 0.0
      %5494 = vmatpush1.msra.mxu0 0.0
      %5495 = vmatprep.subr.mxu0 0.0
      %5496 = vmatpush1.msra.mxu0 0.0
      %5497 = vmatprep.subr.mxu0 0.0
      %5498 = vmatpush1.msra.mxu0 0.0
      %5499 = vmatprep.subr.mxu0 0.0
      %5500 = vmatpush1.msra.mxu0 0.0
      %5501 = vmatprep.subr.mxu0 0.0
      %5502 = vmatpush1.msra.mxu0 0.0
      %5503 = vmatprep.subr.mxu0 0.0
      %5504 = vmatpush1.msra.mxu0 0.0
      %5505 = vmatprep.subr.mxu0 0.0
      %5506 = vmatpush1.msra.mxu0 0.0
      %5507 = vmatprep.subr.mxu0 0.0
      %5508 = vmatpush1.msra.mxu0 0.0
      %5509 = vmatprep.subr.mxu0 0.0
      %5510 = vmatpush1.msra.mxu0 0.0
      %5511 = vmatprep.subr.mxu0 0.0
      %5512 = vmatpush1.msra.mxu0 0.0
      %5513 = vmatprep.subr.mxu0 0.0
      %5514 = vmatpush1.msra.mxu0 0.0
      %5515 = vmatprep.subr.mxu0 0.0
      %5516 = vmatpush1.msra.mxu0 0.0
      %5517 = vmatprep.subr.mxu0 0.0
      %5518 = vmatpush1.msra.mxu0 0.0
      %5519 = vmatprep.subr.mxu0 0.0
      %5520 = vmatpush1.msra.mxu0 0.0
      %5521 = vmatprep.subr.mxu0 0.0
      %5522 = vmatpush1.msra.mxu0 0.0
      %5523 = vmatprep.subr.mxu0 0.0
      %5524 = vmatpush1.msra.mxu0 0.0
      %5525 = vmatprep.subr.mxu0 0.0
      %5526 = vmatpush1.msra.mxu0 0.0
      %5527 = vmatprep.subr.mxu0 0.0
      %5528 = vmatpush1.msra.mxu0 0.0
      %5529 = vmatprep.subr.mxu0 0.0
      %5530 = vmatpush1.msra.mxu0 0.0
      %5531 = vmatprep.subr.mxu0 0.0
      %5532 = vmatpush1.msra.mxu0 0.0
      %5533 = vmatprep.subr.mxu0 0.0
      %5534 = vmatpush1.msra.mxu0 0.0
      %5535 = vmatprep.mubr.f32.mxu0 0.0
      %5536 = vmatmul.mubr.f32.gmra.mrb[0].mxu0 %v408
      %v5537 = vpop.f32.mrb[0].mxu0
      %v5538 = vadd.f32 0.0, %v5537
      %v5539 = vpop.f32.mrb[0].mxu0
      %5540 = vmatprep.mubr.f32.mxu0 0.0
      %5541 = vmatmul.mubr.f32.gmra.mrb[0].mxu0 %v411
      %v5542 = vpop.f32.mrb[0].mxu0
      %v5543 = vadd.f32 0.0, %v5542
      %v5544 = vpop.f32.mrb[0].mxu0
      %5545 = vmatprep.mubr.f32.mxu0 0.0
      %5546 = vmatmul.mubr.f32.gmra.mrb[0].mxu0 %v414
      %v5547 = vpop.f32.mrb[0].mxu0
      %v5548 = vadd.f32 0.0, %v5547
      %v5549 = vpop.f32.mrb[0].mxu0
      %5550 = vmatprep.mubr.f32.mxu0 0.0
      %5551 = vmatmul.mubr.f32.gmra.mrb[0].mxu0 %v417
      %v5552 = vpop.f32.mrb[0].mxu0
      %v5553 = vadd.f32 0.0, %v5552
      %v5554 = vpop.f32.mrb[0].mxu0
      %5555 = vdwg.mxu0
      %v5556 = vadd.f32 %v5448, %v5538
      %v5557 = vadd.f32 %v5453, %v5543
      %v5558 = vadd.f32 %v5458, %v5548
      %v5559 = vadd.f32 %v5463, %v5553
      %v5560 = vld [vmem:[%s5466] sm:$0xff]
      %v5562 = vcombine.high %v5560, %v5560
      %5563 = vrot.lane.b32.xlu0 %v5560, 127
      %v5564 = vpop.permute.xlu0 %5563
      %5565 = vrot.lane.b32.xlu0 %v5562, 127
      %v5566 = vpop.permute.xlu0 %5565
      %v5567 = vsel %vm202, %v5564, %v5566
      %v5568 = vsel %vm217, %v5567, 0
      %5570 = vmatprep.subr.mxu0 0.0
      %5571 = vmatpush1.msra.mxu0 %v5568
      %5572 = vmatprep.subr.mxu0 0.0
      %5573 = vmatpush1.msra.mxu0 0.0
      %5574 = vmatprep.subr.mxu0 0.0
      %5575 = vmatpush1.msra.mxu0 0.0
      %5576 = vmatprep.subr.mxu0 0.0
      %5577 = vmatpush1.msra.mxu0 0.0
      %5578 = vmatprep.subr.mxu0 0.0
      %5579 = vmatpush1.msra.mxu0 0.0
      %5580 = vmatprep.subr.mxu0 0.0
      %5581 = vmatpush1.msra.mxu0 0.0
      %5582 = vmatprep.subr.mxu0 0.0
      %5583 = vmatpush1.msra.mxu0 0.0
      %5584 = vmatprep.subr.mxu0 0.0
      %5585 = vmatpush1.msra.mxu0 0.0
      %5586 = vmatprep.subr.mxu0 0.0
      %5587 = vmatpush1.msra.mxu0 0.0
      %5588 = vmatprep.subr.mxu0 0.0
      %5589 = vmatpush1.msra.mxu0 0.0
      %5590 = vmatprep.subr.mxu0 0.0
      %5591 = vmatpush1.msra.mxu0 0.0
      %5592 = vmatprep.subr.mxu0 0.0
      %5593 = vmatpush1.msra.mxu0 0.0
      %5594 = vmatprep.subr.mxu0 0.0
      %5595 = vmatpush1.msra.mxu0 0.0
      %5596 = vmatprep.subr.mxu0 0.0
      %5597 = vmatpush1.msra.mxu0 0.0
      %5598 = vmatprep.subr.mxu0 0.0
      %5599 = vmatpush1.msra.mxu0 0.0
      %5600 = vmatprep.subr.mxu0 0.0
      %5601 = vmatpush1.msra.mxu0 0.0
      %5602 = vmatprep.subr.mxu0 0.0
      %5603 = vmatpush1.msra.mxu0 0.0
      %5604 = vmatprep.subr.mxu0 0.0
      %5605 = vmatpush1.msra.mxu0 0.0
      %5606 = vmatprep.subr.mxu0 0.0
      %5607 = vmatpush1.msra.mxu0 0.0
      %5608 = vmatprep.subr.mxu0 0.0
      %5609 = vmatpush1.msra.mxu0 0.0
      %5610 = vmatprep.subr.mxu0 0.0
      %5611 = vmatpush1.msra.mxu0 0.0
      %5612 = vmatprep.subr.mxu0 0.0
      %5613 = vmatpush1.msra.mxu0 0.0
      %5614 = vmatprep.subr.mxu0 0.0
      %5615 = vmatpush1.msra.mxu0 0.0
      %5616 = vmatprep.subr.mxu0 0.0
      %5617 = vmatpush1.msra.mxu0 0.0
      %5618 = vmatprep.subr.mxu0 0.0
      %5619 = vmatpush1.msra.mxu0 0.0
      %5620 = vmatprep.subr.mxu0 0.0
      %5621 = vmatpush1.msra.mxu0 0.0
      %5622 = vmatprep.subr.mxu0 0.0
      %5623 = vmatpush1.msra.mxu0 0.0
      %5624 = vmatprep.subr.mxu0 0.0
      %5625 = vmatpush1.msra.mxu0 0.0
      %5626 = vmatprep.subr.mxu0 0.0
      %5627 = vmatpush1.msra.mxu0 0.0
      %5628 = vmatprep.subr.mxu0 0.0
      %5629 = vmatpush1.msra.mxu0 0.0
      %5630 = vmatprep.subr.mxu0 0.0
      %5631 = vmatpush1.msra.mxu0 0.0
      %5632 = vmatprep.subr.mxu0 0.0
      %5633 = vmatpush1.msra.mxu0 0.0
      %5634 = vmatprep.mubr.f32.mxu0 0.0
      %5635 = vmatmul.mubr.f32.gmra.mrb[0].mxu0 %v520
      %v5636 = vpop.f32.mrb[0].mxu0
      %v5637 = vadd.f32 0.0, %v5636
      %v5638 = vpop.f32.mrb[0].mxu0
      %5639 = vmatprep.mubr.f32.mxu0 0.0
      %5640 = vmatmul.mubr.f32.gmra.mrb[0].mxu0 %v523
      %v5641 = vpop.f32.mrb[0].mxu0
      %v5642 = vadd.f32 0.0, %v5641
      %v5643 = vpop.f32.mrb[0].mxu0
      %5644 = vmatprep.mubr.f32.mxu0 0.0
      %5645 = vmatmul.mubr.f32.gmra.mrb[0].mxu0 %v526
      %v5646 = vpop.f32.mrb[0].mxu0
      %v5647 = vadd.f32 0.0, %v5646
      %v5648 = vpop.f32.mrb[0].mxu0
      %5649 = vmatprep.mubr.f32.mxu0 0.0
      %5650 = vmatmul.mubr.f32.gmra.mrb[0].mxu0 %v529
      %v5651 = vpop.f32.mrb[0].mxu0
      %v5652 = vadd.f32 0.0, %v5651
      %v5653 = vpop.f32.mrb[0].mxu0
      %5654 = vdwg.mxu0
      %v5655 = vadd.f32 %v5556, %v5637
      %v5656 = vadd.f32 %v5557, %v5642
      %v5657 = vadd.f32 %v5558, %v5647
      %v5658 = vadd.f32 %v5559, %v5652
      %v5659 = vadd.f32 %v5655, %v625
      %v5660 = vadd.f32 %v5656, %v630
      %v5661 = vadd.f32 %v5657, %v635
      %v5662 = vadd.f32 %v5658, %v640
      %s5663 = scalar_lea.vmem %s170, 416
      %5664 = vst [vmem:[%s5663] sm:$0xff] %v5659
      %5665 = vst [vmem:[%s5663 + $0x8] sm:$0xff] %v5660
      %5666 = vst [vmem:[%s5663 + $0x10] sm:$0xff] %v5661
      %5667 = vst [vmem:[%s5663 + $0x18] sm:$0xff] %v5662
      %v5668 = vld [vmem:[%s5466] sm:$0xf]
      %v5669 = vld [vmem:[%s5466] sm:$0xff]
      %v5671 = vcombine.high %v5669, %v5669
      %5672 = vrot.lane.b32.xlu0 %v5669, 127
      %v5673 = vpop.permute.xlu0 %5672
      %5674 = vrot.lane.b32.xlu0 %v5671, 127
      %v5675 = vpop.permute.xlu0 %5674
      %v5676 = vsel %vm202, %v5673, %v5675
      %v5677 = vsel %vm217, %v5676, 0
      %5679 = vmatprep.subr.mxu0 0.0
      %5680 = vmatpush1.msra.mxu0 %v5677
      %5681 = vmatprep.subr.mxu0 0.0
      %5682 = vmatpush1.msra.mxu0 0.0
      %5683 = vmatprep.subr.mxu0 0.0
      %5684 = vmatpush1.msra.mxu0 0.0
      %5685 = vmatprep.subr.mxu0 0.0
      %5686 = vmatpush1.msra.mxu0 0.0
      %5687 = vmatprep.subr.mxu0 0.0
      %5688 = vmatpush1.msra.mxu0 0.0
      %5689 = vmatprep.subr.mxu0 0.0
      %5690 = vmatpush1.msra.mxu0 0.0
      %5691 = vmatprep.subr.mxu0 0.0
      %5692 = vmatpush1.msra.mxu0 0.0
      %5693 = vmatprep.subr.mxu0 0.0
      %5694 = vmatpush1.msra.mxu0 0.0
      %5695 = vmatprep.subr.mxu0 0.0
      %5696 = vmatpush1.msra.mxu0 0.0
      %5697 = vmatprep.subr.mxu0 0.0
      %5698 = vmatpush1.msra.mxu0 0.0
      %5699 = vmatprep.subr.mxu0 0.0
      %5700 = vmatpush1.msra.mxu0 0.0
      %5701 = vmatprep.subr.mxu0 0.0
      %5702 = vmatpush1.msra.mxu0 0.0
      %5703 = vmatprep.subr.mxu0 0.0
      %5704 = vmatpush1.msra.mxu0 0.0
      %5705 = vmatprep.subr.mxu0 0.0
      %5706 = vmatpush1.msra.mxu0 0.0
      %5707 = vmatprep.subr.mxu0 0.0
      %5708 = vmatpush1.msra.mxu0 0.0
      %5709 = vmatprep.subr.mxu0 0.0
      %5710 = vmatpush1.msra.mxu0 0.0
      %5711 = vmatprep.subr.mxu0 0.0
      %5712 = vmatpush1.msra.mxu0 0.0
      %5713 = vmatprep.subr.mxu0 0.0
      %5714 = vmatpush1.msra.mxu0 0.0
      %5715 = vmatprep.subr.mxu0 0.0
      %5716 = vmatpush1.msra.mxu0 0.0
      %5717 = vmatprep.subr.mxu0 0.0
      %5718 = vmatpush1.msra.mxu0 0.0
      %5719 = vmatprep.subr.mxu0 0.0
      %5720 = vmatpush1.msra.mxu0 0.0
      %5721 = vmatprep.subr.mxu0 0.0
      %5722 = vmatpush1.msra.mxu0 0.0
      %5723 = vmatprep.subr.mxu0 0.0
      %5724 = vmatpush1.msra.mxu0 0.0
      %5725 = vmatprep.subr.mxu0 0.0
      %5726 = vmatpush1.msra.mxu0 0.0
      %5727 = vmatprep.subr.mxu0 0.0
      %5728 = vmatpush1.msra.mxu0 0.0
      %5729 = vmatprep.subr.mxu0 0.0
      %5730 = vmatpush1.msra.mxu0 0.0
      %5731 = vmatprep.subr.mxu0 0.0
      %5732 = vmatpush1.msra.mxu0 0.0
      %5733 = vmatprep.subr.mxu0 0.0
      %5734 = vmatpush1.msra.mxu0 0.0
      %5735 = vmatprep.subr.mxu0 0.0
      %5736 = vmatpush1.msra.mxu0 0.0
      %5737 = vmatprep.subr.mxu0 0.0
      %5738 = vmatpush1.msra.mxu0 0.0
      %5739 = vmatprep.subr.mxu0 0.0
      %5740 = vmatpush1.msra.mxu0 0.0
      %5741 = vmatprep.subr.mxu0 0.0
      %5742 = vmatpush1.msra.mxu0 0.0
      %5743 = vmatprep.mubr.f32.mxu0 0.0
      %5744 = vmatmul.mubr.f32.gmra.mrb[0].mxu0 %v206
      %v5745 = vpop.f32.mrb[0].mxu0
      %v5746 = vadd.f32 0.0, %v5745
      %v5747 = vpop.f32.mrb[0].mxu0
      %5748 = vmatprep.mubr.f32.mxu0 0.0
      %5749 = vmatmul.mubr.f32.gmra.mrb[0].mxu0 %v209
      %v5750 = vpop.f32.mrb[0].mxu0
      %v5751 = vadd.f32 0.0, %v5750
      %v5752 = vpop.f32.mrb[0].mxu0
      %5753 = vmatprep.mubr.f32.mxu0 0.0
      %5754 = vmatmul.mubr.f32.gmra.mrb[0].mxu0 %v212
      %v5755 = vpop.f32.mrb[0].mxu0
      %v5756 = vadd.f32 0.0, %v5755
      %v5757 = vpop.f32.mrb[0].mxu0
      %5758 = vmatprep.mubr.f32.mxu0 0.0
      %5759 = vmatmul.mubr.f32.gmra.mrb[0].mxu0 %v215
      %v5760 = vpop.f32.mrb[0].mxu0
      %v5761 = vadd.f32 0.0, %v5760
      %v5762 = vpop.f32.mrb[0].mxu0
      %5763 = vdwg.mxu0
      %v5765 = vsel %vm217, %v5668, 0
      %5767 = vmatprep.subr.mxu0 0.0
      %5768 = vmatpush1.msra.mxu0 %v5765
      %5769 = vmatprep.subr.mxu0 0.0
      %5770 = vmatpush1.msra.mxu0 0.0
      %5771 = vmatprep.subr.mxu0 0.0
      %5772 = vmatpush1.msra.mxu0 0.0
      %5773 = vmatprep.subr.mxu0 0.0
      %5774 = vmatpush1.msra.mxu0 0.0
      %5775 = vmatprep.subr.mxu0 0.0
      %5776 = vmatpush1.msra.mxu0 0.0
      %5777 = vmatprep.subr.mxu0 0.0
      %5778 = vmatpush1.msra.mxu0 0.0
      %5779 = vmatprep.subr.mxu0 0.0
      %5780 = vmatpush1.msra.mxu0 0.0
      %5781 = vmatprep.subr.mxu0 0.0
      %5782 = vmatpush1.msra.mxu0 0.0
      %5783 = vmatprep.subr.mxu0 0.0
      %5784 = vmatpush1.msra.mxu0 0.0
      %5785 = vmatprep.subr.mxu0 0.0
      %5786 = vmatpush1.msra.mxu0 0.0
      %5787 = vmatprep.subr.mxu0 0.0
      %5788 = vmatpush1.msra.mxu0 0.0
      %5789 = vmatprep.subr.mxu0 0.0
      %5790 = vmatpush1.msra.mxu0 0.0
      %5791 = vmatprep.subr.mxu0 0.0
      %5792 = vmatpush1.msra.mxu0 0.0
      %5793 = vmatprep.subr.mxu0 0.0
      %5794 = vmatpush1.msra.mxu0 0.0
      %5795 = vmatprep.subr.mxu0 0.0
      %5796 = vmatpush1.msra.mxu0 0.0
      %5797 = vmatprep.subr.mxu0 0.0
      %5798 = vmatpush1.msra.mxu0 0.0
      %5799 = vmatprep.subr.mxu0 0.0
      %5800 = vmatpush1.msra.mxu0 0.0
      %5801 = vmatprep.subr.mxu0 0.0
      %5802 = vmatpush1.msra.mxu0 0.0
      %5803 = vmatprep.subr.mxu0 0.0
      %5804 = vmatpush1.msra.mxu0 0.0
      %5805 = vmatprep.subr.mxu0 0.0
      %5806 = vmatpush1.msra.mxu0 0.0
      %5807 = vmatprep.subr.mxu0 0.0
      %5808 = vmatpush1.msra.mxu0 0.0
      %5809 = vmatprep.subr.mxu0 0.0
      %5810 = vmatpush1.msra.mxu0 0.0
      %5811 = vmatprep.subr.mxu0 0.0
      %5812 = vmatpush1.msra.mxu0 0.0
      %5813 = vmatprep.subr.mxu0 0.0
      %5814 = vmatpush1.msra.mxu0 0.0
      %5815 = vmatprep.subr.mxu0 0.0
      %5816 = vmatpush1.msra.mxu0 0.0
      %5817 = vmatprep.subr.mxu0 0.0
      %5818 = vmatpush1.msra.mxu0 0.0
      %5819 = vmatprep.subr.mxu0 0.0
      %5820 = vmatpush1.msra.mxu0 0.0
      %5821 = vmatprep.subr.mxu0 0.0
      %5822 = vmatpush1.msra.mxu0 0.0
      %5823 = vmatprep.subr.mxu0 0.0
      %5824 = vmatpush1.msra.mxu0 0.0
      %5825 = vmatprep.subr.mxu0 0.0
      %5826 = vmatpush1.msra.mxu0 0.0
      %5827 = vmatprep.subr.mxu0 0.0
      %5828 = vmatpush1.msra.mxu0 0.0
      %5829 = vmatprep.subr.mxu0 0.0
      %5830 = vmatpush1.msra.mxu0 0.0
      %5831 = vmatprep.mubr.f32.mxu0 0.0
      %5832 = vmatmul.mubr.f32.gmra.mrb[0].mxu0 %v306
      %v5833 = vpop.f32.mrb[0].mxu0
      %v5834 = vadd.f32 %v5746, %v5833
      %v5835 = vpop.f32.mrb[0].mxu0
      %5836 = vmatprep.mubr.f32.mxu0 0.0
      %5837 = vmatmul.mubr.f32.gmra.mrb[0].mxu0 %v309
      %v5838 = vpop.f32.mrb[0].mxu0
      %v5839 = vadd.f32 %v5751, %v5838
      %v5840 = vpop.f32.mrb[0].mxu0
      %5841 = vmatprep.mubr.f32.mxu0 0.0
      %5842 = vmatmul.mubr.f32.gmra.mrb[0].mxu0 %v312
      %v5843 = vpop.f32.mrb[0].mxu0
      %v5844 = vadd.f32 %v5756, %v5843
      %v5845 = vpop.f32.mrb[0].mxu0
      %5846 = vmatprep.mubr.f32.mxu0 0.0
      %5847 = vmatmul.mubr.f32.gmra.mrb[0].mxu0 %v315
      %v5848 = vpop.f32.mrb[0].mxu0
      %v5849 = vadd.f32 %v5761, %v5848
      %v5850 = vpop.f32.mrb[0].mxu0
      %5851 = vdwg.mxu0
      %s5852 = scalar_lea.vmem %s165, 120
      %v5853 = vld [vmem:[%s5852] sm:$0xf]
      %v5855 = vsel %vm217, %v5853, 0
      %5857 = vmatprep.subr.mxu0 0.0
      %5858 = vmatpush1.msra.mxu0 %v5855
      %5859 = vmatprep.subr.mxu0 0.0
      %5860 = vmatpush1.msra.mxu0 0.0
      %5861 = vmatprep.subr.mxu0 0.0
      %5862 = vmatpush1.msra.mxu0 0.0
      %5863 = vmatprep.subr.mxu0 0.0
      %5864 = vmatpush1.msra.mxu0 0.0
      %5865 = vmatprep.subr.mxu0 0.0
      %5866 = vmatpush1.msra.mxu0 0.0
      %5867 = vmatprep.subr.mxu0 0.0
      %5868 = vmatpush1.msra.mxu0 0.0
      %5869 = vmatprep.subr.mxu0 0.0
      %5870 = vmatpush1.msra.mxu0 0.0
      %5871 = vmatprep.subr.mxu0 0.0
      %5872 = vmatpush1.msra.mxu0 0.0
      %5873 = vmatprep.subr.mxu0 0.0
      %5874 = vmatpush1.msra.mxu0 0.0
      %5875 = vmatprep.subr.mxu0 0.0
      %5876 = vmatpush1.msra.mxu0 0.0
      %5877 = vmatprep.subr.mxu0 0.0
      %5878 = vmatpush1.msra.mxu0 0.0
      %5879 = vmatprep.subr.mxu0 0.0
      %5880 = vmatpush1.msra.mxu0 0.0
      %5881 = vmatprep.subr.mxu0 0.0
      %5882 = vmatpush1.msra.mxu0 0.0
      %5883 = vmatprep.subr.mxu0 0.0
      %5884 = vmatpush1.msra.mxu0 0.0
      %5885 = vmatprep.subr.mxu0 0.0
      %5886 = vmatpush1.msra.mxu0 0.0
      %5887 = vmatprep.subr.mxu0 0.0
      %5888 = vmatpush1.msra.mxu0 0.0
      %5889 = vmatprep.subr.mxu0 0.0
      %5890 = vmatpush1.msra.mxu0 0.0
      %5891 = vmatprep.subr.mxu0 0.0
      %5892 = vmatpush1.msra.mxu0 0.0
      %5893 = vmatprep.subr.mxu0 0.0
      %5894 = vmatpush1.msra.mxu0 0.0
      %5895 = vmatprep.subr.mxu0 0.0
      %5896 = vmatpush1.msra.mxu0 0.0
      %5897 = vmatprep.subr.mxu0 0.0
      %5898 = vmatpush1.msra.mxu0 0.0
      %5899 = vmatprep.subr.mxu0 0.0
      %5900 = vmatpush1.msra.mxu0 0.0
      %5901 = vmatprep.subr.mxu0 0.0
      %5902 = vmatpush1.msra.mxu0 0.0
      %5903 = vmatprep.subr.mxu0 0.0
      %5904 = vmatpush1.msra.mxu0 0.0
      %5905 = vmatprep.subr.mxu0 0.0
      %5906 = vmatpush1.msra.mxu0 0.0
      %5907 = vmatprep.subr.mxu0 0.0
      %5908 = vmatpush1.msra.mxu0 0.0
      %5909 = vmatprep.subr.mxu0 0.0
      %5910 = vmatpush1.msra.mxu0 0.0
      %5911 = vmatprep.subr.mxu0 0.0
      %5912 = vmatpush1.msra.mxu0 0.0
      %5913 = vmatprep.subr.mxu0 0.0
      %5914 = vmatpush1.msra.mxu0 0.0
      %5915 = vmatprep.subr.mxu0 0.0
      %5916 = vmatpush1.msra.mxu0 0.0
      %5917 = vmatprep.subr.mxu0 0.0
      %5918 = vmatpush1.msra.mxu0 0.0
      %5919 = vmatprep.subr.mxu0 0.0
      %5920 = vmatpush1.msra.mxu0 0.0
      %5921 = vmatprep.mubr.f32.mxu0 0.0
      %5922 = vmatmul.mubr.f32.gmra.mrb[0].mxu0 %v408
      %v5923 = vpop.f32.mrb[0].mxu0
      %v5924 = vadd.f32 0.0, %v5923
      %v5925 = vpop.f32.mrb[0].mxu0
      %5926 = vmatprep.mubr.f32.mxu0 0.0
      %5927 = vmatmul.mubr.f32.gmra.mrb[0].mxu0 %v411
      %v5928 = vpop.f32.mrb[0].mxu0
      %v5929 = vadd.f32 0.0, %v5928
      %v5930 = vpop.f32.mrb[0].mxu0
      %5931 = vmatprep.mubr.f32.mxu0 0.0
      %5932 = vmatmul.mubr.f32.gmra.mrb[0].mxu0 %v414
      %v5933 = vpop.f32.mrb[0].mxu0
      %v5934 = vadd.f32 0.0, %v5933
      %v5935 = vpop.f32.mrb[0].mxu0
      %5936 = vmatprep.mubr.f32.mxu0 0.0
      %5937 = vmatmul.mubr.f32.gmra.mrb[0].mxu0 %v417
      %v5938 = vpop.f32.mrb[0].mxu0
      %v5939 = vadd.f32 0.0, %v5938
      %v5940 = vpop.f32.mrb[0].mxu0
      %5941 = vdwg.mxu0
      %v5942 = vadd.f32 %v5834, %v5924
      %v5943 = vadd.f32 %v5839, %v5929
      %v5944 = vadd.f32 %v5844, %v5934
      %v5945 = vadd.f32 %v5849, %v5939
      %v5946 = vld [vmem:[%s5852] sm:$0xff]
      %v5948 = vcombine.high %v5946, %v5946
      %5949 = vrot.lane.b32.xlu0 %v5946, 127
      %v5950 = vpop.permute.xlu0 %5949
      %5951 = vrot.lane.b32.xlu0 %v5948, 127
      %v5952 = vpop.permute.xlu0 %5951
      %v5953 = vsel %vm202, %v5950, %v5952
      %v5954 = vsel %vm217, %v5953, 0
      %5956 = vmatprep.subr.mxu0 0.0
      %5957 = vmatpush1.msra.mxu0 %v5954
      %5958 = vmatprep.subr.mxu0 0.0
      %5959 = vmatpush1.msra.mxu0 0.0
      %5960 = vmatprep.subr.mxu0 0.0
      %5961 = vmatpush1.msra.mxu0 0.0
      %5962 = vmatprep.subr.mxu0 0.0
      %5963 = vmatpush1.msra.mxu0 0.0
      %5964 = vmatprep.subr.mxu0 0.0
      %5965 = vmatpush1.msra.mxu0 0.0
      %5966 = vmatprep.subr.mxu0 0.0
      %5967 = vmatpush1.msra.mxu0 0.0
      %5968 = vmatprep.subr.mxu0 0.0
      %5969 = vmatpush1.msra.mxu0 0.0
      %5970 = vmatprep.subr.mxu0 0.0
      %5971 = vmatpush1.msra.mxu0 0.0
      %5972 = vmatprep.subr.mxu0 0.0
      %5973 = vmatpush1.msra.mxu0 0.0
      %5974 = vmatprep.subr.mxu0 0.0
      %5975 = vmatpush1.msra.mxu0 0.0
      %5976 = vmatprep.subr.mxu0 0.0
      %5977 = vmatpush1.msra.mxu0 0.0
      %5978 = vmatprep.subr.mxu0 0.0
      %5979 = vmatpush1.msra.mxu0 0.0
      %5980 = vmatprep.subr.mxu0 0.0
      %5981 = vmatpush1.msra.mxu0 0.0
      %5982 = vmatprep.subr.mxu0 0.0
      %5983 = vmatpush1.msra.mxu0 0.0
      %5984 = vmatprep.subr.mxu0 0.0
      %5985 = vmatpush1.msra.mxu0 0.0
      %5986 = vmatprep.subr.mxu0 0.0
      %5987 = vmatpush1.msra.mxu0 0.0
      %5988 = vmatprep.subr.mxu0 0.0
      %5989 = vmatpush1.msra.mxu0 0.0
      %5990 = vmatprep.subr.mxu0 0.0
      %5991 = vmatpush1.msra.mxu0 0.0
      %5992 = vmatprep.subr.mxu0 0.0
      %5993 = vmatpush1.msra.mxu0 0.0
      %5994 = vmatprep.subr.mxu0 0.0
      %5995 = vmatpush1.msra.mxu0 0.0
      %5996 = vmatprep.subr.mxu0 0.0
      %5997 = vmatpush1.msra.mxu0 0.0
      %5998 = vmatprep.subr.mxu0 0.0
      %5999 = vmatpush1.msra.mxu0 0.0
      %6000 = vmatprep.subr.mxu0 0.0
      %6001 = vmatpush1.msra.mxu0 0.0
      %6002 = vmatprep.subr.mxu0 0.0
      %6003 = vmatpush1.msra.mxu0 0.0
      %6004 = vmatprep.subr.mxu0 0.0
      %6005 = vmatpush1.msra.mxu0 0.0
      %6006 = vmatprep.subr.mxu0 0.0
      %6007 = vmatpush1.msra.mxu0 0.0
      %6008 = vmatprep.subr.mxu0 0.0
      %6009 = vmatpush1.msra.mxu0 0.0
      %6010 = vmatprep.subr.mxu0 0.0
      %6011 = vmatpush1.msra.mxu0 0.0
      %6012 = vmatprep.subr.mxu0 0.0
      %6013 = vmatpush1.msra.mxu0 0.0
      %6014 = vmatprep.subr.mxu0 0.0
      %6015 = vmatpush1.msra.mxu0 0.0
      %6016 = vmatprep.subr.mxu0 0.0
      %6017 = vmatpush1.msra.mxu0 0.0
      %6018 = vmatprep.subr.mxu0 0.0
      %6019 = vmatpush1.msra.mxu0 0.0
      %6020 = vmatprep.mubr.f32.mxu0 0.0
      %6021 = vmatmul.mubr.f32.gmra.mrb[0].mxu0 %v520
      %v6022 = vpop.f32.mrb[0].mxu0
      %v6023 = vadd.f32 0.0, %v6022
      %v6024 = vpop.f32.mrb[0].mxu0
      %6025 = vmatprep.mubr.f32.mxu0 0.0
      %6026 = vmatmul.mubr.f32.gmra.mrb[0].mxu0 %v523
      %v6027 = vpop.f32.mrb[0].mxu0
      %v6028 = vadd.f32 0.0, %v6027
      %v6029 = vpop.f32.mrb[0].mxu0
      %6030 = vmatprep.mubr.f32.mxu0 0.0
      %6031 = vmatmul.mubr.f32.gmra.mrb[0].mxu0 %v526
      %v6032 = vpop.f32.mrb[0].mxu0
      %v6033 = vadd.f32 0.0, %v6032
      %v6034 = vpop.f32.mrb[0].mxu0
      %6035 = vmatprep.mubr.f32.mxu0 0.0
      %6036 = vmatmul.mubr.f32.gmra.mrb[0].mxu0 %v529
      %v6037 = vpop.f32.mrb[0].mxu0
      %v6038 = vadd.f32 0.0, %v6037
      %v6039 = vpop.f32.mrb[0].mxu0
      %6040 = vdwg.mxu0
      %v6041 = vadd.f32 %v5942, %v6023
      %v6042 = vadd.f32 %v5943, %v6028
      %v6043 = vadd.f32 %v5944, %v6033
      %v6044 = vadd.f32 %v5945, %v6038
      %v6045 = vadd.f32 %v6041, %v625
      %v6046 = vadd.f32 %v6042, %v630
      %v6047 = vadd.f32 %v6043, %v635
      %v6048 = vadd.f32 %v6044, %v640
      %s6049 = scalar_lea.vmem %s170, 448
      %6050 = vst [vmem:[%s6049] sm:$0xff] %v6045
      %6051 = vst [vmem:[%s6049 + $0x8] sm:$0xff] %v6046
      %6052 = vst [vmem:[%s6049 + $0x10] sm:$0xff] %v6047
      %6053 = vst [vmem:[%s6049 + $0x18] sm:$0xff] %v6048
      %v6054 = vld [vmem:[%s5852] sm:$0xf]
      %v6055 = vld [vmem:[%s5852] sm:$0xff]
      %v6057 = vcombine.high %v6055, %v6055
      %6058 = vrot.lane.b32.xlu0 %v6055, 127
      %v6059 = vpop.permute.xlu0 %6058
      %6060 = vrot.lane.b32.xlu0 %v6057, 127
      %v6061 = vpop.permute.xlu0 %6060
      %v6062 = vsel %vm202, %v6059, %v6061
      %v6063 = vsel %vm217, %v6062, 0
      %6065 = vmatprep.subr.mxu0 0.0
      %6066 = vmatpush1.msra.mxu0 %v6063
      %6067 = vmatprep.subr.mxu0 0.0
      %6068 = vmatpush1.msra.mxu0 0.0
      %6069 = vmatprep.subr.mxu0 0.0
      %6070 = vmatpush1.msra.mxu0 0.0
      %6071 = vmatprep.subr.mxu0 0.0
      %6072 = vmatpush1.msra.mxu0 0.0
      %6073 = vmatprep.subr.mxu0 0.0
      %6074 = vmatpush1.msra.mxu0 0.0
      %6075 = vmatprep.subr.mxu0 0.0
      %6076 = vmatpush1.msra.mxu0 0.0
      %6077 = vmatprep.subr.mxu0 0.0
      %6078 = vmatpush1.msra.mxu0 0.0
      %6079 = vmatprep.subr.mxu0 0.0
      %6080 = vmatpush1.msra.mxu0 0.0
      %6081 = vmatprep.subr.mxu0 0.0
      %6082 = vmatpush1.msra.mxu0 0.0
      %6083 = vmatprep.subr.mxu0 0.0
      %6084 = vmatpush1.msra.mxu0 0.0
      %6085 = vmatprep.subr.mxu0 0.0
      %6086 = vmatpush1.msra.mxu0 0.0
      %6087 = vmatprep.subr.mxu0 0.0
      %6088 = vmatpush1.msra.mxu0 0.0
      %6089 = vmatprep.subr.mxu0 0.0
      %6090 = vmatpush1.msra.mxu0 0.0
      %6091 = vmatprep.subr.mxu0 0.0
      %6092 = vmatpush1.msra.mxu0 0.0
      %6093 = vmatprep.subr.mxu0 0.0
      %6094 = vmatpush1.msra.mxu0 0.0
      %6095 = vmatprep.subr.mxu0 0.0
      %6096 = vmatpush1.msra.mxu0 0.0
      %6097 = vmatprep.subr.mxu0 0.0
      %6098 = vmatpush1.msra.mxu0 0.0
      %6099 = vmatprep.subr.mxu0 0.0
      %6100 = vmatpush1.msra.mxu0 0.0
      %6101 = vmatprep.subr.mxu0 0.0
      %6102 = vmatpush1.msra.mxu0 0.0
      %6103 = vmatprep.subr.mxu0 0.0
      %6104 = vmatpush1.msra.mxu0 0.0
      %6105 = vmatprep.subr.mxu0 0.0
      %6106 = vmatpush1.msra.mxu0 0.0
      %6107 = vmatprep.subr.mxu0 0.0
      %6108 = vmatpush1.msra.mxu0 0.0
      %6109 = vmatprep.subr.mxu0 0.0
      %6110 = vmatpush1.msra.mxu0 0.0
      %6111 = vmatprep.subr.mxu0 0.0
      %6112 = vmatpush1.msra.mxu0 0.0
      %6113 = vmatprep.subr.mxu0 0.0
      %6114 = vmatpush1.msra.mxu0 0.0
      %6115 = vmatprep.subr.mxu0 0.0
      %6116 = vmatpush1.msra.mxu0 0.0
      %6117 = vmatprep.subr.mxu0 0.0
      %6118 = vmatpush1.msra.mxu0 0.0
      %6119 = vmatprep.subr.mxu0 0.0
      %6120 = vmatpush1.msra.mxu0 0.0
      %6121 = vmatprep.subr.mxu0 0.0
      %6122 = vmatpush1.msra.mxu0 0.0
      %6123 = vmatprep.subr.mxu0 0.0
      %6124 = vmatpush1.msra.mxu0 0.0
      %6125 = vmatprep.subr.mxu0 0.0
      %6126 = vmatpush1.msra.mxu0 0.0
      %6127 = vmatprep.subr.mxu0 0.0
      %6128 = vmatpush1.msra.mxu0 0.0
      %6129 = vmatprep.mubr.f32.mxu0 0.0
      %6130 = vmatmul.mubr.f32.gmra.mrb[0].mxu0 %v206
      %v6131 = vpop.f32.mrb[0].mxu0
      %v6132 = vadd.f32 0.0, %v6131
      %v6133 = vpop.f32.mrb[0].mxu0
      %6134 = vmatprep.mubr.f32.mxu0 0.0
      %6135 = vmatmul.mubr.f32.gmra.mrb[0].mxu0 %v209
      %v6136 = vpop.f32.mrb[0].mxu0
      %v6137 = vadd.f32 0.0, %v6136
      %v6138 = vpop.f32.mrb[0].mxu0
      %6139 = vmatprep.mubr.f32.mxu0 0.0
      %6140 = vmatmul.mubr.f32.gmra.mrb[0].mxu0 %v212
      %v6141 = vpop.f32.mrb[0].mxu0
      %v6142 = vadd.f32 0.0, %v6141
      %v6143 = vpop.f32.mrb[0].mxu0
      %6144 = vmatprep.mubr.f32.mxu0 0.0
      %6145 = vmatmul.mubr.f32.gmra.mrb[0].mxu0 %v215
      %v6146 = vpop.f32.mrb[0].mxu0
      %v6147 = vadd.f32 0.0, %v6146
      %v6148 = vpop.f32.mrb[0].mxu0
      %6149 = vdwg.mxu0
      %v6151 = vsel %vm217, %v6054, 0
      %6153 = vmatprep.subr.mxu0 0.0
      %6154 = vmatpush1.msra.mxu0 %v6151
      %6155 = vmatprep.subr.mxu0 0.0
      %6156 = vmatpush1.msra.mxu0 0.0
      %6157 = vmatprep.subr.mxu0 0.0
      %6158 = vmatpush1.msra.mxu0 0.0
      %6159 = vmatprep.subr.mxu0 0.0
      %6160 = vmatpush1.msra.mxu0 0.0
      %6161 = vmatprep.subr.mxu0 0.0
      %6162 = vmatpush1.msra.mxu0 0.0
      %6163 = vmatprep.subr.mxu0 0.0
      %6164 = vmatpush1.msra.mxu0 0.0
      %6165 = vmatprep.subr.mxu0 0.0
      %6166 = vmatpush1.msra.mxu0 0.0
      %6167 = vmatprep.subr.mxu0 0.0
      %6168 = vmatpush1.msra.mxu0 0.0
      %6169 = vmatprep.subr.mxu0 0.0
      %6170 = vmatpush1.msra.mxu0 0.0
      %6171 = vmatprep.subr.mxu0 0.0
      %6172 = vmatpush1.msra.mxu0 0.0
      %6173 = vmatprep.subr.mxu0 0.0
      %6174 = vmatpush1.msra.mxu0 0.0
      %6175 = vmatprep.subr.mxu0 0.0
      %6176 = vmatpush1.msra.mxu0 0.0
      %6177 = vmatprep.subr.mxu0 0.0
      %6178 = vmatpush1.msra.mxu0 0.0
      %6179 = vmatprep.subr.mxu0 0.0
      %6180 = vmatpush1.msra.mxu0 0.0
      %6181 = vmatprep.subr.mxu0 0.0
      %6182 = vmatpush1.msra.mxu0 0.0
      %6183 = vmatprep.subr.mxu0 0.0
      %6184 = vmatpush1.msra.mxu0 0.0
      %6185 = vmatprep.subr.mxu0 0.0
      %6186 = vmatpush1.msra.mxu0 0.0
      %6187 = vmatprep.subr.mxu0 0.0
      %6188 = vmatpush1.msra.mxu0 0.0
      %6189 = vmatprep.subr.mxu0 0.0
      %6190 = vmatpush1.msra.mxu0 0.0
      %6191 = vmatprep.subr.mxu0 0.0
      %6192 = vmatpush1.msra.mxu0 0.0
      %6193 = vmatprep.subr.mxu0 0.0
      %6194 = vmatpush1.msra.mxu0 0.0
      %6195 = vmatprep.subr.mxu0 0.0
      %6196 = vmatpush1.msra.mxu0 0.0
      %6197 = vmatprep.subr.mxu0 0.0
      %6198 = vmatpush1.msra.mxu0 0.0
      %6199 = vmatprep.subr.mxu0 0.0
      %6200 = vmatpush1.msra.mxu0 0.0
      %6201 = vmatprep.subr.mxu0 0.0
      %6202 = vmatpush1.msra.mxu0 0.0
      %6203 = vmatprep.subr.mxu0 0.0
      %6204 = vmatpush1.msra.mxu0 0.0
      %6205 = vmatprep.subr.mxu0 0.0
      %6206 = vmatpush1.msra.mxu0 0.0
      %6207 = vmatprep.subr.mxu0 0.0
      %6208 = vmatpush1.msra.mxu0 0.0
      %6209 = vmatprep.subr.mxu0 0.0
      %6210 = vmatpush1.msra.mxu0 0.0
      %6211 = vmatprep.subr.mxu0 0.0
      %6212 = vmatpush1.msra.mxu0 0.0
      %6213 = vmatprep.subr.mxu0 0.0
      %6214 = vmatpush1.msra.mxu0 0.0
      %6215 = vmatprep.subr.mxu0 0.0
      %6216 = vmatpush1.msra.mxu0 0.0
      %6217 = vmatprep.mubr.f32.mxu0 0.0
      %6218 = vmatmul.mubr.f32.gmra.mrb[0].mxu0 %v306
      %v6219 = vpop.f32.mrb[0].mxu0
      %v6220 = vadd.f32 %v6132, %v6219
      %v6221 = vpop.f32.mrb[0].mxu0
      %6222 = vmatprep.mubr.f32.mxu0 0.0
      %6223 = vmatmul.mubr.f32.gmra.mrb[0].mxu0 %v309
      %v6224 = vpop.f32.mrb[0].mxu0
      %v6225 = vadd.f32 %v6137, %v6224
      %v6226 = vpop.f32.mrb[0].mxu0
      %6227 = vmatprep.mubr.f32.mxu0 0.0
      %6228 = vmatmul.mubr.f32.gmra.mrb[0].mxu0 %v312
      %v6229 = vpop.f32.mrb[0].mxu0
      %v6230 = vadd.f32 %v6142, %v6229
      %v6231 = vpop.f32.mrb[0].mxu0
      %6232 = vmatprep.mubr.f32.mxu0 0.0
      %6233 = vmatmul.mubr.f32.gmra.mrb[0].mxu0 %v315
      %v6234 = vpop.f32.mrb[0].mxu0
      %v6235 = vadd.f32 %v6147, %v6234
      %v6236 = vpop.f32.mrb[0].mxu0
      %6237 = vdwg.mxu0
      %s6238 = scalar_lea.vmem %s165, 128
      %v6239 = vld [vmem:[%s6238] sm:$0xf]
      %v6241 = vsel %vm217, %v6239, 0
      %6243 = vmatprep.subr.mxu0 0.0
      %6244 = vmatpush1.msra.mxu0 %v6241
      %6245 = vmatprep.subr.mxu0 0.0
      %6246 = vmatpush1.msra.mxu0 0.0
      %6247 = vmatprep.subr.mxu0 0.0
      %6248 = vmatpush1.msra.mxu0 0.0
      %6249 = vmatprep.subr.mxu0 0.0
      %6250 = vmatpush1.msra.mxu0 0.0
      %6251 = vmatprep.subr.mxu0 0.0
      %6252 = vmatpush1.msra.mxu0 0.0
      %6253 = vmatprep.subr.mxu0 0.0
      %6254 = vmatpush1.msra.mxu0 0.0
      %6255 = vmatprep.subr.mxu0 0.0
      %6256 = vmatpush1.msra.mxu0 0.0
      %6257 = vmatprep.subr.mxu0 0.0
      %6258 = vmatpush1.msra.mxu0 0.0
      %6259 = vmatprep.subr.mxu0 0.0
      %6260 = vmatpush1.msra.mxu0 0.0
      %6261 = vmatprep.subr.mxu0 0.0
      %6262 = vmatpush1.msra.mxu0 0.0
      %6263 = vmatprep.subr.mxu0 0.0
      %6264 = vmatpush1.msra.mxu0 0.0
      %6265 = vmatprep.subr.mxu0 0.0
      %6266 = vmatpush1.msra.mxu0 0.0
      %6267 = vmatprep.subr.mxu0 0.0
      %6268 = vmatpush1.msra.mxu0 0.0
      %6269 = vmatprep.subr.mxu0 0.0
      %6270 = vmatpush1.msra.mxu0 0.0
      %6271 = vmatprep.subr.mxu0 0.0
      %6272 = vmatpush1.msra.mxu0 0.0
      %6273 = vmatprep.subr.mxu0 0.0
      %6274 = vmatpush1.msra.mxu0 0.0
      %6275 = vmatprep.subr.mxu0 0.0
      %6276 = vmatpush1.msra.mxu0 0.0
      %6277 = vmatprep.subr.mxu0 0.0
      %6278 = vmatpush1.msra.mxu0 0.0
      %6279 = vmatprep.subr.mxu0 0.0
      %6280 = vmatpush1.msra.mxu0 0.0
      %6281 = vmatprep.subr.mxu0 0.0
      %6282 = vmatpush1.msra.mxu0 0.0
      %6283 = vmatprep.subr.mxu0 0.0
      %6284 = vmatpush1.msra.mxu0 0.0
      %6285 = vmatprep.subr.mxu0 0.0
      %6286 = vmatpush1.msra.mxu0 0.0
      %6287 = vmatprep.subr.mxu0 0.0
      %6288 = vmatpush1.msra.mxu0 0.0
      %6289 = vmatprep.subr.mxu0 0.0
      %6290 = vmatpush1.msra.mxu0 0.0
      %6291 = vmatprep.subr.mxu0 0.0
      %6292 = vmatpush1.msra.mxu0 0.0
      %6293 = vmatprep.subr.mxu0 0.0
      %6294 = vmatpush1.msra.mxu0 0.0
      %6295 = vmatprep.subr.mxu0 0.0
      %6296 = vmatpush1.msra.mxu0 0.0
      %6297 = vmatprep.subr.mxu0 0.0
      %6298 = vmatpush1.msra.mxu0 0.0
      %6299 = vmatprep.subr.mxu0 0.0
      %6300 = vmatpush1.msra.mxu0 0.0
      %6301 = vmatprep.subr.mxu0 0.0
      %6302 = vmatpush1.msra.mxu0 0.0
      %6303 = vmatprep.subr.mxu0 0.0
      %6304 = vmatpush1.msra.mxu0 0.0
      %6305 = vmatprep.subr.mxu0 0.0
      %6306 = vmatpush1.msra.mxu0 0.0
      %6307 = vmatprep.mubr.f32.mxu0 0.0
      %6308 = vmatmul.mubr.f32.gmra.mrb[0].mxu0 %v408
      %v6309 = vpop.f32.mrb[0].mxu0
      %v6310 = vadd.f32 0.0, %v6309
      %v6311 = vpop.f32.mrb[0].mxu0
      %6312 = vmatprep.mubr.f32.mxu0 0.0
      %6313 = vmatmul.mubr.f32.gmra.mrb[0].mxu0 %v411
      %v6314 = vpop.f32.mrb[0].mxu0
      %v6315 = vadd.f32 0.0, %v6314
      %v6316 = vpop.f32.mrb[0].mxu0
      %6317 = vmatprep.mubr.f32.mxu0 0.0
      %6318 = vmatmul.mubr.f32.gmra.mrb[0].mxu0 %v414
      %v6319 = vpop.f32.mrb[0].mxu0
      %v6320 = vadd.f32 0.0, %v6319
      %v6321 = vpop.f32.mrb[0].mxu0
      %6322 = vmatprep.mubr.f32.mxu0 0.0
      %6323 = vmatmul.mubr.f32.gmra.mrb[0].mxu0 %v417
      %v6324 = vpop.f32.mrb[0].mxu0
      %v6325 = vadd.f32 0.0, %v6324
      %v6326 = vpop.f32.mrb[0].mxu0
      %6327 = vdwg.mxu0
      %v6328 = vadd.f32 %v6220, %v6310
      %v6329 = vadd.f32 %v6225, %v6315
      %v6330 = vadd.f32 %v6230, %v6320
      %v6331 = vadd.f32 %v6235, %v6325
      %v6332 = vld [vmem:[%s6238] sm:$0xff]
      %v6334 = vcombine.high %v6332, %v6332
      %6335 = vrot.lane.b32.xlu0 %v6332, 127
      %v6336 = vpop.permute.xlu0 %6335
      %6337 = vrot.lane.b32.xlu0 %v6334, 127
      %v6338 = vpop.permute.xlu0 %6337
      %v6339 = vsel %vm202, %v6336, %v6338
      %v6340 = vsel %vm217, %v6339, 0
      %6342 = vmatprep.subr.mxu0 0.0
      %6343 = vmatpush1.msra.mxu0 %v6340
      %6344 = vmatprep.subr.mxu0 0.0
      %6345 = vmatpush1.msra.mxu0 0.0
      %6346 = vmatprep.subr.mxu0 0.0
      %6347 = vmatpush1.msra.mxu0 0.0
      %6348 = vmatprep.subr.mxu0 0.0
      %6349 = vmatpush1.msra.mxu0 0.0
      %6350 = vmatprep.subr.mxu0 0.0
      %6351 = vmatpush1.msra.mxu0 0.0
      %6352 = vmatprep.subr.mxu0 0.0
      %6353 = vmatpush1.msra.mxu0 0.0
      %6354 = vmatprep.subr.mxu0 0.0
      %6355 = vmatpush1.msra.mxu0 0.0
      %6356 = vmatprep.subr.mxu0 0.0
      %6357 = vmatpush1.msra.mxu0 0.0
      %6358 = vmatprep.subr.mxu0 0.0
      %6359 = vmatpush1.msra.mxu0 0.0
      %6360 = vmatprep.subr.mxu0 0.0
      %6361 = vmatpush1.msra.mxu0 0.0
      %6362 = vmatprep.subr.mxu0 0.0
      %6363 = vmatpush1.msra.mxu0 0.0
      %6364 = vmatprep.subr.mxu0 0.0
      %6365 = vmatpush1.msra.mxu0 0.0
      %6366 = vmatprep.subr.mxu0 0.0
      %6367 = vmatpush1.msra.mxu0 0.0
      %6368 = vmatprep.subr.mxu0 0.0
      %6369 = vmatpush1.msra.mxu0 0.0
      %6370 = vmatprep.subr.mxu0 0.0
      %6371 = vmatpush1.msra.mxu0 0.0
      %6372 = vmatprep.subr.mxu0 0.0
      %6373 = vmatpush1.msra.mxu0 0.0
      %6374 = vmatprep.subr.mxu0 0.0
      %6375 = vmatpush1.msra.mxu0 0.0
      %6376 = vmatprep.subr.mxu0 0.0
      %6377 = vmatpush1.msra.mxu0 0.0
      %6378 = vmatprep.subr.mxu0 0.0
      %6379 = vmatpush1.msra.mxu0 0.0
      %6380 = vmatprep.subr.mxu0 0.0
      %6381 = vmatpush1.msra.mxu0 0.0
      %6382 = vmatprep.subr.mxu0 0.0
      %6383 = vmatpush1.msra.mxu0 0.0
      %6384 = vmatprep.subr.mxu0 0.0
      %6385 = vmatpush1.msra.mxu0 0.0
      %6386 = vmatprep.subr.mxu0 0.0
      %6387 = vmatpush1.msra.mxu0 0.0
      %6388 = vmatprep.subr.mxu0 0.0
      %6389 = vmatpush1.msra.mxu0 0.0
      %6390 = vmatprep.subr.mxu0 0.0
      %6391 = vmatpush1.msra.mxu0 0.0
      %6392 = vmatprep.subr.mxu0 0.0
      %6393 = vmatpush1.msra.mxu0 0.0
      %6394 = vmatprep.subr.mxu0 0.0
      %6395 = vmatpush1.msra.mxu0 0.0
      %6396 = vmatprep.subr.mxu0 0.0
      %6397 = vmatpush1.msra.mxu0 0.0
      %6398 = vmatprep.subr.mxu0 0.0
      %6399 = vmatpush1.msra.mxu0 0.0
      %6400 = vmatprep.subr.mxu0 0.0
      %6401 = vmatpush1.msra.mxu0 0.0
      %6402 = vmatprep.subr.mxu0 0.0
      %6403 = vmatpush1.msra.mxu0 0.0
      %6404 = vmatprep.subr.mxu0 0.0
      %6405 = vmatpush1.msra.mxu0 0.0
      %6406 = vmatprep.mubr.f32.mxu0 0.0
      %6407 = vmatmul.mubr.f32.gmra.mrb[0].mxu0 %v520
      %v6408 = vpop.f32.mrb[0].mxu0
      %v6409 = vadd.f32 0.0, %v6408
      %v6410 = vpop.f32.mrb[0].mxu0
      %6411 = vmatprep.mubr.f32.mxu0 0.0
      %6412 = vmatmul.mubr.f32.gmra.mrb[0].mxu0 %v523
      %v6413 = vpop.f32.mrb[0].mxu0
      %v6414 = vadd.f32 0.0, %v6413
      %v6415 = vpop.f32.mrb[0].mxu0
      %6416 = vmatprep.mubr.f32.mxu0 0.0
      %6417 = vmatmul.mubr.f32.gmra.mrb[0].mxu0 %v526
      %v6418 = vpop.f32.mrb[0].mxu0
      %v6419 = vadd.f32 0.0, %v6418
      %v6420 = vpop.f32.mrb[0].mxu0
      %6421 = vmatprep.mubr.f32.mxu0 0.0
      %6422 = vmatmul.mubr.f32.gmra.mrb[0].mxu0 %v529
      %v6423 = vpop.f32.mrb[0].mxu0
      %v6424 = vadd.f32 0.0, %v6423
      %v6425 = vpop.f32.mrb[0].mxu0
      %6426 = vdwg.mxu0
      %v6427 = vadd.f32 %v6328, %v6409
      %v6428 = vadd.f32 %v6329, %v6414
      %v6429 = vadd.f32 %v6330, %v6419
      %v6430 = vadd.f32 %v6331, %v6424
      %v6431 = vadd.f32 %v6427, %v625
      %v6432 = vadd.f32 %v6428, %v630
      %v6433 = vadd.f32 %v6429, %v635
      %v6434 = vadd.f32 %v6430, %v640
      %s6435 = scalar_lea.vmem %s170, 480
      %6436 = vst [vmem:[%s6435] sm:$0xff] %v6431
      %6437 = vst [vmem:[%s6435 + $0x8] sm:$0xff] %v6432
      %6438 = vst [vmem:[%s6435 + $0x10] sm:$0xff] %v6433
      %6439 = vst [vmem:[%s6435 + $0x18] sm:$0xff] %v6434
      %v6440 = vld [vmem:[%s6238] sm:$0xf]
      %v6441 = vld [vmem:[%s6238] sm:$0xff]
      %v6443 = vcombine.high %v6441, %v6441
      %6444 = vrot.lane.b32.xlu0 %v6441, 127
      %v6445 = vpop.permute.xlu0 %6444
      %6446 = vrot.lane.b32.xlu0 %v6443, 127
      %v6447 = vpop.permute.xlu0 %6446
      %v6448 = vsel %vm202, %v6445, %v6447
      %v6449 = vsel %vm217, %v6448, 0
      %6451 = vmatprep.subr.mxu0 0.0
      %6452 = vmatpush1.msra.mxu0 %v6449
      %6453 = vmatprep.subr.mxu0 0.0
      %6454 = vmatpush1.msra.mxu0 0.0
      %6455 = vmatprep.subr.mxu0 0.0
      %6456 = vmatpush1.msra.mxu0 0.0
      %6457 = vmatprep.subr.mxu0 0.0
      %6458 = vmatpush1.msra.mxu0 0.0
      %6459 = vmatprep.subr.mxu0 0.0
      %6460 = vmatpush1.msra.mxu0 0.0
      %6461 = vmatprep.subr.mxu0 0.0
      %6462 = vmatpush1.msra.mxu0 0.0
      %6463 = vmatprep.subr.mxu0 0.0
      %6464 = vmatpush1.msra.mxu0 0.0
      %6465 = vmatprep.subr.mxu0 0.0
      %6466 = vmatpush1.msra.mxu0 0.0
      %6467 = vmatprep.subr.mxu0 0.0
      %6468 = vmatpush1.msra.mxu0 0.0
      %6469 = vmatprep.subr.mxu0 0.0
      %6470 = vmatpush1.msra.mxu0 0.0
      %6471 = vmatprep.subr.mxu0 0.0
      %6472 = vmatpush1.msra.mxu0 0.0
      %6473 = vmatprep.subr.mxu0 0.0
      %6474 = vmatpush1.msra.mxu0 0.0
      %6475 = vmatprep.subr.mxu0 0.0
      %6476 = vmatpush1.msra.mxu0 0.0
      %6477 = vmatprep.subr.mxu0 0.0
      %6478 = vmatpush1.msra.mxu0 0.0
      %6479 = vmatprep.subr.mxu0 0.0
      %6480 = vmatpush1.msra.mxu0 0.0
      %6481 = vmatprep.subr.mxu0 0.0
      %6482 = vmatpush1.msra.mxu0 0.0
      %6483 = vmatprep.subr.mxu0 0.0
      %6484 = vmatpush1.msra.mxu0 0.0
      %6485 = vmatprep.subr.mxu0 0.0
      %6486 = vmatpush1.msra.mxu0 0.0
      %6487 = vmatprep.subr.mxu0 0.0
      %6488 = vmatpush1.msra.mxu0 0.0
      %6489 = vmatprep.subr.mxu0 0.0
      %6490 = vmatpush1.msra.mxu0 0.0
      %6491 = vmatprep.subr.mxu0 0.0
      %6492 = vmatpush1.msra.mxu0 0.0
      %6493 = vmatprep.subr.mxu0 0.0
      %6494 = vmatpush1.msra.mxu0 0.0
      %6495 = vmatprep.subr.mxu0 0.0
      %6496 = vmatpush1.msra.mxu0 0.0
      %6497 = vmatprep.subr.mxu0 0.0
      %6498 = vmatpush1.msra.mxu0 0.0
      %6499 = vmatprep.subr.mxu0 0.0
      %6500 = vmatpush1.msra.mxu0 0.0
      %6501 = vmatprep.subr.mxu0 0.0
      %6502 = vmatpush1.msra.mxu0 0.0
      %6503 = vmatprep.subr.mxu0 0.0
      %6504 = vmatpush1.msra.mxu0 0.0
      %6505 = vmatprep.subr.mxu0 0.0
      %6506 = vmatpush1.msra.mxu0 0.0
      %6507 = vmatprep.subr.mxu0 0.0
      %6508 = vmatpush1.msra.mxu0 0.0
      %6509 = vmatprep.subr.mxu0 0.0
      %6510 = vmatpush1.msra.mxu0 0.0
      %6511 = vmatprep.subr.mxu0 0.0
      %6512 = vmatpush1.msra.mxu0 0.0
      %6513 = vmatprep.subr.mxu0 0.0
      %6514 = vmatpush1.msra.mxu0 0.0
      %6515 = vmatprep.mubr.f32.mxu0 0.0
      %6516 = vmatmul.mubr.f32.gmra.mrb[0].mxu0 %v206
      %v6517 = vpop.f32.mrb[0].mxu0
      %v6518 = vadd.f32 0.0, %v6517
      %v6519 = vpop.f32.mrb[0].mxu0
      %6520 = vmatprep.mubr.f32.mxu0 0.0
      %6521 = vmatmul.mubr.f32.gmra.mrb[0].mxu0 %v209
      %v6522 = vpop.f32.mrb[0].mxu0
      %v6523 = vadd.f32 0.0, %v6522
      %v6524 = vpop.f32.mrb[0].mxu0
      %6525 = vmatprep.mubr.f32.mxu0 0.0
      %6526 = vmatmul.mubr.f32.gmra.mrb[0].mxu0 %v212
      %v6527 = vpop.f32.mrb[0].mxu0
      %v6528 = vadd.f32 0.0, %v6527
      %v6529 = vpop.f32.mrb[0].mxu0
      %6530 = vmatprep.mubr.f32.mxu0 0.0
      %6531 = vmatmul.mubr.f32.gmra.mrb[0].mxu0 %v215
      %v6532 = vpop.f32.mrb[0].mxu0
      %v6533 = vadd.f32 0.0, %v6532
      %v6534 = vpop.f32.mrb[0].mxu0
      %6535 = vdwg.mxu0
      %v6537 = vsel %vm217, %v6440, 0
      %6539 = vmatprep.subr.mxu0 0.0
      %6540 = vmatpush1.msra.mxu0 %v6537
      %6541 = vmatprep.subr.mxu0 0.0
      %6542 = vmatpush1.msra.mxu0 0.0
      %6543 = vmatprep.subr.mxu0 0.0
      %6544 = vmatpush1.msra.mxu0 0.0
      %6545 = vmatprep.subr.mxu0 0.0
      %6546 = vmatpush1.msra.mxu0 0.0
      %6547 = vmatprep.subr.mxu0 0.0
      %6548 = vmatpush1.msra.mxu0 0.0
      %6549 = vmatprep.subr.mxu0 0.0
      %6550 = vmatpush1.msra.mxu0 0.0
      %6551 = vmatprep.subr.mxu0 0.0
      %6552 = vmatpush1.msra.mxu0 0.0
      %6553 = vmatprep.subr.mxu0 0.0
      %6554 = vmatpush1.msra.mxu0 0.0
      %6555 = vmatprep.subr.mxu0 0.0
      %6556 = vmatpush1.msra.mxu0 0.0
      %6557 = vmatprep.subr.mxu0 0.0
      %6558 = vmatpush1.msra.mxu0 0.0
      %6559 = vmatprep.subr.mxu0 0.0
      %6560 = vmatpush1.msra.mxu0 0.0
      %6561 = vmatprep.subr.mxu0 0.0
      %6562 = vmatpush1.msra.mxu0 0.0
      %6563 = vmatprep.subr.mxu0 0.0
      %6564 = vmatpush1.msra.mxu0 0.0
      %6565 = vmatprep.subr.mxu0 0.0
      %6566 = vmatpush1.msra.mxu0 0.0
      %6567 = vmatprep.subr.mxu0 0.0
      %6568 = vmatpush1.msra.mxu0 0.0
      %6569 = vmatprep.subr.mxu0 0.0
      %6570 = vmatpush1.msra.mxu0 0.0
      %6571 = vmatprep.subr.mxu0 0.0
      %6572 = vmatpush1.msra.mxu0 0.0
      %6573 = vmatprep.subr.mxu0 0.0
      %6574 = vmatpush1.msra.mxu0 0.0
      %6575 = vmatprep.subr.mxu0 0.0
      %6576 = vmatpush1.msra.mxu0 0.0
      %6577 = vmatprep.subr.mxu0 0.0
      %6578 = vmatpush1.msra.mxu0 0.0
      %6579 = vmatprep.subr.mxu0 0.0
      %6580 = vmatpush1.msra.mxu0 0.0
      %6581 = vmatprep.subr.mxu0 0.0
      %6582 = vmatpush1.msra.mxu0 0.0
      %6583 = vmatprep.subr.mxu0 0.0
      %6584 = vmatpush1.msra.mxu0 0.0
      %6585 = vmatprep.subr.mxu0 0.0
      %6586 = vmatpush1.msra.mxu0 0.0
      %6587 = vmatprep.subr.mxu0 0.0
      %6588 = vmatpush1.msra.mxu0 0.0
      %6589 = vmatprep.subr.mxu0 0.0
      %6590 = vmatpush1.msra.mxu0 0.0
      %6591 = vmatprep.subr.mxu0 0.0
      %6592 = vmatpush1.msra.mxu0 0.0
      %6593 = vmatprep.subr.mxu0 0.0
      %6594 = vmatpush1.msra.mxu0 0.0
      %6595 = vmatprep.subr.mxu0 0.0
      %6596 = vmatpush1.msra.mxu0 0.0
      %6597 = vmatprep.subr.mxu0 0.0
      %6598 = vmatpush1.msra.mxu0 0.0
      %6599 = vmatprep.subr.mxu0 0.0
      %6600 = vmatpush1.msra.mxu0 0.0
      %6601 = vmatprep.subr.mxu0 0.0
      %6602 = vmatpush1.msra.mxu0 0.0
      %6603 = vmatprep.mubr.f32.mxu0 0.0
      %6604 = vmatmul.mubr.f32.gmra.mrb[0].mxu0 %v306
      %v6605 = vpop.f32.mrb[0].mxu0
      %v6606 = vadd.f32 %v6518, %v6605
      %v6607 = vpop.f32.mrb[0].mxu0
      %6608 = vmatprep.mubr.f32.mxu0 0.0
      %6609 = vmatmul.mubr.f32.gmra.mrb[0].mxu0 %v309
      %v6610 = vpop.f32.mrb[0].mxu0
      %v6611 = vadd.f32 %v6523, %v6610
      %v6612 = vpop.f32.mrb[0].mxu0
      %6613 = vmatprep.mubr.f32.mxu0 0.0
      %6614 = vmatmul.mubr.f32.gmra.mrb[0].mxu0 %v312
      %v6615 = vpop.f32.mrb[0].mxu0
      %v6616 = vadd.f32 %v6528, %v6615
      %v6617 = vpop.f32.mrb[0].mxu0
      %6618 = vmatprep.mubr.f32.mxu0 0.0
      %6619 = vmatmul.mubr.f32.gmra.mrb[0].mxu0 %v315
      %v6620 = vpop.f32.mrb[0].mxu0
      %v6621 = vadd.f32 %v6533, %v6620
      %v6622 = vpop.f32.mrb[0].mxu0
      %6623 = vdwg.mxu0
      %s6624 = scalar_lea.vmem %s165, 136
      %v6625 = vld [vmem:[%s6624] sm:$0xf]
      %v6627 = vsel %vm217, %v6625, 0
      %6629 = vmatprep.subr.mxu0 0.0
      %6630 = vmatpush1.msra.mxu0 %v6627
      %6631 = vmatprep.subr.mxu0 0.0
      %6632 = vmatpush1.msra.mxu0 0.0
      %6633 = vmatprep.subr.mxu0 0.0
      %6634 = vmatpush1.msra.mxu0 0.0
      %6635 = vmatprep.subr.mxu0 0.0
      %6636 = vmatpush1.msra.mxu0 0.0
      %6637 = vmatprep.subr.mxu0 0.0
      %6638 = vmatpush1.msra.mxu0 0.0
      %6639 = vmatprep.subr.mxu0 0.0
      %6640 = vmatpush1.msra.mxu0 0.0
      %6641 = vmatprep.subr.mxu0 0.0
      %6642 = vmatpush1.msra.mxu0 0.0
      %6643 = vmatprep.subr.mxu0 0.0
      %6644 = vmatpush1.msra.mxu0 0.0
      %6645 = vmatprep.subr.mxu0 0.0
      %6646 = vmatpush1.msra.mxu0 0.0
      %6647 = vmatprep.subr.mxu0 0.0
      %6648 = vmatpush1.msra.mxu0 0.0
      %6649 = vmatprep.subr.mxu0 0.0
      %6650 = vmatpush1.msra.mxu0 0.0
      %6651 = vmatprep.subr.mxu0 0.0
      %6652 = vmatpush1.msra.mxu0 0.0
      %6653 = vmatprep.subr.mxu0 0.0
      %6654 = vmatpush1.msra.mxu0 0.0
      %6655 = vmatprep.subr.mxu0 0.0
      %6656 = vmatpush1.msra.mxu0 0.0
      %6657 = vmatprep.subr.mxu0 0.0
      %6658 = vmatpush1.msra.mxu0 0.0
      %6659 = vmatprep.subr.mxu0 0.0
      %6660 = vmatpush1.msra.mxu0 0.0
      %6661 = vmatprep.subr.mxu0 0.0
      %6662 = vmatpush1.msra.mxu0 0.0
      %6663 = vmatprep.subr.mxu0 0.0
      %6664 = vmatpush1.msra.mxu0 0.0
      %6665 = vmatprep.subr.mxu0 0.0
      %6666 = vmatpush1.msra.mxu0 0.0
      %6667 = vmatprep.subr.mxu0 0.0
      %6668 = vmatpush1.msra.mxu0 0.0
      %6669 = vmatprep.subr.mxu0 0.0
      %6670 = vmatpush1.msra.mxu0 0.0
      %6671 = vmatprep.subr.mxu0 0.0
      %6672 = vmatpush1.msra.mxu0 0.0
      %6673 = vmatprep.subr.mxu0 0.0
      %6674 = vmatpush1.msra.mxu0 0.0
      %6675 = vmatprep.subr.mxu0 0.0
      %6676 = vmatpush1.msra.mxu0 0.0
      %6677 = vmatprep.subr.mxu0 0.0
      %6678 = vmatpush1.msra.mxu0 0.0
      %6679 = vmatprep.subr.mxu0 0.0
      %6680 = vmatpush1.msra.mxu0 0.0
      %6681 = vmatprep.subr.mxu0 0.0
      %6682 = vmatpush1.msra.mxu0 0.0
      %6683 = vmatprep.subr.mxu0 0.0
      %6684 = vmatpush1.msra.mxu0 0.0
      %6685 = vmatprep.subr.mxu0 0.0
      %6686 = vmatpush1.msra.mxu0 0.0
      %6687 = vmatprep.subr.mxu0 0.0
      %6688 = vmatpush1.msra.mxu0 0.0
      %6689 = vmatprep.subr.mxu0 0.0
      %6690 = vmatpush1.msra.mxu0 0.0
      %6691 = vmatprep.subr.mxu0 0.0
      %6692 = vmatpush1.msra.mxu0 0.0
      %6693 = vmatprep.mubr.f32.mxu0 0.0
      %6694 = vmatmul.mubr.f32.gmra.mrb[0].mxu0 %v408
      %v6695 = vpop.f32.mrb[0].mxu0
      %v6696 = vadd.f32 0.0, %v6695
      %v6697 = vpop.f32.mrb[0].mxu0
      %6698 = vmatprep.mubr.f32.mxu0 0.0
      %6699 = vmatmul.mubr.f32.gmra.mrb[0].mxu0 %v411
      %v6700 = vpop.f32.mrb[0].mxu0
      %v6701 = vadd.f32 0.0, %v6700
      %v6702 = vpop.f32.mrb[0].mxu0
      %6703 = vmatprep.mubr.f32.mxu0 0.0
      %6704 = vmatmul.mubr.f32.gmra.mrb[0].mxu0 %v414
      %v6705 = vpop.f32.mrb[0].mxu0
      %v6706 = vadd.f32 0.0, %v6705
      %v6707 = vpop.f32.mrb[0].mxu0
      %6708 = vmatprep.mubr.f32.mxu0 0.0
      %6709 = vmatmul.mubr.f32.gmra.mrb[0].mxu0 %v417
      %v6710 = vpop.f32.mrb[0].mxu0
      %v6711 = vadd.f32 0.0, %v6710
      %v6712 = vpop.f32.mrb[0].mxu0
      %6713 = vdwg.mxu0
      %v6714 = vadd.f32 %v6606, %v6696
      %v6715 = vadd.f32 %v6611, %v6701
      %v6716 = vadd.f32 %v6616, %v6706
      %v6717 = vadd.f32 %v6621, %v6711
      %v6718 = vld [vmem:[%s6624] sm:$0xff]
      %v6720 = vcombine.high %v6718, %v6718
      %6721 = vrot.lane.b32.xlu0 %v6718, 127
      %v6722 = vpop.permute.xlu0 %6721
      %6723 = vrot.lane.b32.xlu0 %v6720, 127
      %v6724 = vpop.permute.xlu0 %6723
      %v6725 = vsel %vm202, %v6722, %v6724
      %v6726 = vsel %vm217, %v6725, 0
      %6728 = vmatprep.subr.mxu0 0.0
      %6729 = vmatpush1.msra.mxu0 %v6726
      %6730 = vmatprep.subr.mxu0 0.0
      %6731 = vmatpush1.msra.mxu0 0.0
      %6732 = vmatprep.subr.mxu0 0.0
      %6733 = vmatpush1.msra.mxu0 0.0
      %6734 = vmatprep.subr.mxu0 0.0
      %6735 = vmatpush1.msra.mxu0 0.0
      %6736 = vmatprep.subr.mxu0 0.0
      %6737 = vmatpush1.msra.mxu0 0.0
      %6738 = vmatprep.subr.mxu0 0.0
      %6739 = vmatpush1.msra.mxu0 0.0
      %6740 = vmatprep.subr.mxu0 0.0
      %6741 = vmatpush1.msra.mxu0 0.0
      %6742 = vmatprep.subr.mxu0 0.0
      %6743 = vmatpush1.msra.mxu0 0.0
      %6744 = vmatprep.subr.mxu0 0.0
      %6745 = vmatpush1.msra.mxu0 0.0
      %6746 = vmatprep.subr.mxu0 0.0
      %6747 = vmatpush1.msra.mxu0 0.0
      %6748 = vmatprep.subr.mxu0 0.0
      %6749 = vmatpush1.msra.mxu0 0.0
      %6750 = vmatprep.subr.mxu0 0.0
      %6751 = vmatpush1.msra.mxu0 0.0
      %6752 = vmatprep.subr.mxu0 0.0
      %6753 = vmatpush1.msra.mxu0 0.0
      %6754 = vmatprep.subr.mxu0 0.0
      %6755 = vmatpush1.msra.mxu0 0.0
      %6756 = vmatprep.subr.mxu0 0.0
      %6757 = vmatpush1.msra.mxu0 0.0
      %6758 = vmatprep.subr.mxu0 0.0
      %6759 = vmatpush1.msra.mxu0 0.0
      %6760 = vmatprep.subr.mxu0 0.0
      %6761 = vmatpush1.msra.mxu0 0.0
      %6762 = vmatprep.subr.mxu0 0.0
      %6763 = vmatpush1.msra.mxu0 0.0
      %6764 = vmatprep.subr.mxu0 0.0
      %6765 = vmatpush1.msra.mxu0 0.0
      %6766 = vmatprep.subr.mxu0 0.0
      %6767 = vmatpush1.msra.mxu0 0.0
      %6768 = vmatprep.subr.mxu0 0.0
      %6769 = vmatpush1.msra.mxu0 0.0
      %6770 = vmatprep.subr.mxu0 0.0
      %6771 = vmatpush1.msra.mxu0 0.0
      %6772 = vmatprep.subr.mxu0 0.0
      %6773 = vmatpush1.msra.mxu0 0.0
      %6774 = vmatprep.subr.mxu0 0.0
      %6775 = vmatpush1.msra.mxu0 0.0
      %6776 = vmatprep.subr.mxu0 0.0
      %6777 = vmatpush1.msra.mxu0 0.0
      %6778 = vmatprep.subr.mxu0 0.0
      %6779 = vmatpush1.msra.mxu0 0.0
      %6780 = vmatprep.subr.mxu0 0.0
      %6781 = vmatpush1.msra.mxu0 0.0
      %6782 = vmatprep.subr.mxu0 0.0
      %6783 = vmatpush1.msra.mxu0 0.0
      %6784 = vmatprep.subr.mxu0 0.0
      %6785 = vmatpush1.msra.mxu0 0.0
      %6786 = vmatprep.subr.mxu0 0.0
      %6787 = vmatpush1.msra.mxu0 0.0
      %6788 = vmatprep.subr.mxu0 0.0
      %6789 = vmatpush1.msra.mxu0 0.0
      %6790 = vmatprep.subr.mxu0 0.0
      %6791 = vmatpush1.msra.mxu0 0.0
      %6792 = vmatprep.mubr.f32.mxu0 0.0
      %6793 = vmatmul.mubr.f32.gmra.mrb[0].mxu0 %v520
      %v6794 = vpop.f32.mrb[0].mxu0
      %v6795 = vadd.f32 0.0, %v6794
      %v6796 = vpop.f32.mrb[0].mxu0
      %6797 = vmatprep.mubr.f32.mxu0 0.0
      %6798 = vmatmul.mubr.f32.gmra.mrb[0].mxu0 %v523
      %v6799 = vpop.f32.mrb[0].mxu0
      %v6800 = vadd.f32 0.0, %v6799
      %v6801 = vpop.f32.mrb[0].mxu0
      %6802 = vmatprep.mubr.f32.mxu0 0.0
      %6803 = vmatmul.mubr.f32.gmra.mrb[0].mxu0 %v526
      %v6804 = vpop.f32.mrb[0].mxu0
      %v6805 = vadd.f32 0.0, %v6804
      %v6806 = vpop.f32.mrb[0].mxu0
      %6807 = vmatprep.mubr.f32.mxu0 0.0
      %6808 = vmatmul.mubr.f32.gmra.mrb[0].mxu0 %v529
      %v6809 = vpop.f32.mrb[0].mxu0
      %v6810 = vadd.f32 0.0, %v6809
      %v6811 = vpop.f32.mrb[0].mxu0
      %6812 = vdwg.mxu0
      %v6813 = vadd.f32 %v6714, %v6795
      %v6814 = vadd.f32 %v6715, %v6800
      %v6815 = vadd.f32 %v6716, %v6805
      %v6816 = vadd.f32 %v6717, %v6810
      %v6817 = vadd.f32 %v6813, %v625
      %v6818 = vadd.f32 %v6814, %v630
      %v6819 = vadd.f32 %v6815, %v635
      %v6820 = vadd.f32 %v6816, %v640
      %s6821 = scalar_lea.vmem %s170, 512
      %6822 = vst [vmem:[%s6821] sm:$0xff] %v6817
      %6823 = vst [vmem:[%s6821 + $0x8] sm:$0xff] %v6818
      %6824 = vst [vmem:[%s6821 + $0x10] sm:$0xff] %v6819
      %6825 = vst [vmem:[%s6821 + $0x18] sm:$0xff] %v6820
      %p6826 = scmp.lt.s32.totalorder %s14, 1
      %s6827 = scalar_select %p6826, %s14, 1
      %s6828 = smul.addr %s6827, 68
      %s6829 = smul.addr %s6828, 8
      %s6830 = scalar_lea.vmem %s3, %s6829
      // Predicated region
      $region33: #{deconv_forward.1} parent=31 // pred_check
        %p6831 = pneg %p100
      $region34: #{deconv_forward.1} parent=31 // pred_check_branch
        %6833 = sbr.rel (%p6831) target = $region36
      $region35: #{deconv_forward.1} parent=31 // pred_region
        _
      $region36: #{deconv_forward.1} parent=31 // pred_fallthru
        _
    $region32: #{deconv_forward.1} parent=5 // pred_fallthru
      _
    %p6834 = scmp.le.s32.totalorder 2, %s9
    // Predicated region
    $region37: #{deconv_forward.1} parent=5 // pred_check
      %p6835 = pneg %p6834
    $region38: #{deconv_forward.1} parent=5 // pred_check_branch
      %6837 = sbr.rel (%p6835) target = $region40
    $region39: #{deconv_forward.1} parent=5 // pred_region
      %s6838 = ssub.s32 %s9, 2
      // Predicated region
      $region41: #{deconv_forward.1} parent=39 // pred_check
        %p6839 = pneg %p106
      $region42: #{deconv_forward.1} parent=39 // pred_check_branch
        %6841 = sbr.rel (%p6839) target = $region44
      $region43: #{deconv_forward.1} parent=39 // pred_region
        %p6842 = scmp.lt.s32.totalorder %s15, 1
        %s6843 = scalar_select %p6842, %s15, 1
        %s6844 = smul.addr %s6843, 68
        %s6845 = smul.addr %s6844, 8
        %s6846 = scalar_lea.vmem %s3, %s6845
      $region44: #{deconv_forward.1} parent=39 // pred_fallthru
        _
    $region40: #{deconv_forward.1} parent=5 // pred_fallthru
      _
  $region6: #{deconv_forward.1} parent=0 // loop_footer
    %s13 = sadd.s32 1, %s9
  $region7: #{deconv_forward.1} parent=0 // loop_footer_branch
    %8 = sbr.rel target = $region3
  $region8: #{deconv_forward.1} parent=0 // loop_exit
    _

</llo_original>
